<compile_context>
chip_gen: v7x
topology: tpu7x:2x2x1
jax: 0.10.0
libtpu: 0.0.40
codegen_flags: <defaults>
</compile_context>

<pallas_src>
import functools
import numpy as np

import jax
import jax.numpy as jnp
from jax import lax
from jax.experimental import pallas as pl
from jax.experimental.pallas import tpu as pltpu


# ----------------------------------------------------------------------------
# Config (small, SwinTransformerSys-consistent)
# ----------------------------------------------------------------------------
class Config:
    IMG_SIZE = 32
    PATCH_SIZE = 4
    IN_CHANS = 3
    CLASS_NUMBER = 3
    EMBED_DIM = 32
    DEPTHS = (2, 2)
    NUM_HEADS = (2, 4)
    WINDOW_SIZE = 2
    DROP_RATE = 0.0        # dropout is identity (rate 0 / eval mode)
    DROP_PATH_RATE = 0.0   # drop-path is identity
    APE = False
    PATCH_NORM = True


_LN_EPS = 1e-5


# ----------------------------------------------------------------------------
# In-kernel helpers
# ----------------------------------------------------------------------------
def _ln(x, g, b):
    mu = jnp.mean(x, axis=-1, keepdims=True)
    var = jnp.mean((x - mu) ** 2, axis=-1, keepdims=True)
    return (x - mu) * lax.rsqrt(var + _LN_EPS) * g + b


def _gelu(x):
    # TODO(synk): tanh-approx GELU inside the kernel; torch nn.GELU uses the exact erf form.
    c = 0.7978845608028654  # sqrt(2/pi)
    return 0.5 * x * (1.0 + jnp.tanh(c * (x + 0.044715 * x * x * x)))


# ----------------------------------------------------------------------------
# Fused Linear kernel: [pre-LN] -> x @ W (+ b) -> [post-LN], tiled over tokens
# ----------------------------------------------------------------------------
def _fused_linear_kernel(*refs, ln_in, has_bias, ln_out):
    i = 0
    x_ref = refs[i]; i += 1
    if ln_in:
        gi_ref, bi_ref = refs[i], refs[i + 1]; i += 2
    w_ref = refs[i]; i += 1
    b_ref = None
    if has_bias:
        b_ref = refs[i]; i += 1
    if ln_out:
        go_ref, bo_ref = refs[i], refs[i + 1]; i += 2
    o_ref = refs[i]

    x = x_ref[...].astype(jnp.float32)
    if ln_in:
        x = _ln(x, gi_ref[...], bi_ref[...])
    y = jnp.dot(x.astype(jnp.bfloat16), w_ref[...],
                preferred_element_type=jnp.float32)
    if has_bias:
        y = y + b_ref[...]
    if ln_out:
        y = _ln(y, go_ref[...], bo_ref[...])
    o_ref[...] = y.astype(o_ref.dtype)


def _choose_tm(M):
    if M <= 512:
        return M
    for tm in (512, 256, 128, 64, 32, 16, 8):
        if M % tm == 0:
            return tm
    return M


@functools.lru_cache(maxsize=None)
def _build_fused_linear(M, K, N, TM, ln_in, has_bias, ln_out):
    in_specs = [pl.BlockSpec((TM, K), lambda i: (i, 0))]
    if ln_in:
        in_specs += [pl.BlockSpec((1, K), lambda i: (0, 0)),
                     pl.BlockSpec((1, K), lambda i: (0, 0))]
    in_specs += [pl.BlockSpec((K, N), lambda i: (0, 0))]
    if has_bias:
        in_specs += [pl.BlockSpec((1, N), lambda i: (0, 0))]
    if ln_out:
        in_specs += [pl.BlockSpec((1, N), lambda i: (0, 0)),
                     pl.BlockSpec((1, N), lambda i: (0, 0))]
    return pl.pallas_call(
        functools.partial(_fused_linear_kernel, ln_in=ln_in,
                          has_bias=has_bias, ln_out=ln_out),
        out_shape=jax.ShapeDtypeStruct((M, N), jnp.float32),
        grid=(M // TM,),
        in_specs=in_specs,
        out_specs=pl.BlockSpec((TM, N), lambda i: (i, 0)),
        compiler_params=pltpu.CompilerParams(dimension_semantics=("parallel",)),
    )


def pallas_linear(x, w_bf16, b=None, ln_in=None, ln_out=None):
    """y = [post-LN]( [pre-LN](x) @ W (+ b) ), all inside one Pallas kernel."""
    lead = x.shape[:-1]
    K = x.shape[-1]
    N = w_bf16.shape[1]
    x2 = x.reshape(-1, K)
    M = x2.shape[0]
    TM = _choose_tm(M)
    args = [x2]
    if ln_in is not None:
        args += [ln_in["g"].reshape(1, K), ln_in["b"].reshape(1, K)]
    args += [w_bf16]
    if b is not None:
        args += [b.reshape(1, N)]
    if ln_out is not None:
        args += [ln_out["g"].reshape(1, N), ln_out["b"].reshape(1, N)]
    out = _build_fused_linear(M, K, N, TM, ln_in is not None,
                              b is not None, ln_out is not None)(*args)
    return out.reshape(*lead, N)


# ----------------------------------------------------------------------------
# Standalone LayerNorm kernel (only used after the PatchExpand pixel shuffle)
# ----------------------------------------------------------------------------
def _ln_kernel(x_ref, g_ref, b_ref, o_ref):
    x = x_ref[...].astype(jnp.float32)
    o_ref[...] = _ln(x, g_ref[...], b_ref[...]).astype(o_ref.dtype)


@functools.lru_cache(maxsize=None)
def _build_ln(M, C, TM):
    return pl.pallas_call(
        _ln_kernel,
        out_shape=jax.ShapeDtypeStruct((M, C), jnp.float32),
        grid=(M // TM,),
        in_specs=[pl.BlockSpec((TM, C), lambda i: (i, 0)),
                  pl.BlockSpec((1, C), lambda i: (0, 0)),
                  pl.BlockSpec((1, C), lambda i: (0, 0))],
        out_specs=pl.BlockSpec((TM, C), lambda i: (i, 0)),
        compiler_params=pltpu.CompilerParams(dimension_semantics=("parallel",)),
    )


def pallas_ln(x, ln):
    lead = x.shape[:-1]
    C = x.shape[-1]
    x2 = x.reshape(-1, C)
    M = x2.shape[0]
    out = _build_ln(M, C, _choose_tm(M))(x2, ln["g"].reshape(1, C),
                                         ln["b"].reshape(1, C))
    return out.reshape(*lead, C)


# ----------------------------------------------------------------------------
# Fully-fused Swin block kernel (one pallas_call per block, grid over batch)
# ----------------------------------------------------------------------------
def _swin_block_kernel(x_ref, g1_ref, b1_ref,
                       wq_ref, bq_ref, wk_ref, bk_ref, wv_ref, bv_ref,
                       hm_ref, bias_ref, wp_ref, bp_ref,
                       g2_ref, b2_ref, w1_ref, bb1_ref, w2_ref, bb2_ref,
                       o_ref, *, heads, scale):
    f32 = jnp.float32
    bf16 = jnp.bfloat16

    x = x_ref[...].astype(f32)                                   # (L, C)
    xn = _ln(x, g1_ref[...], b1_ref[...])
    xb = xn.astype(bf16)

    q = jnp.dot(xb, wq_ref[...], preferred_element_type=f32) + bq_ref[...]
    k = jnp.dot(xb, wk_ref[...], preferred_element_type=f32) + bk_ref[...]
    v = jnp.dot(xb, wv_ref[...], preferred_element_type=f32) + bv_ref[...]

    hm = hm_ref[...].astype(f32)                                 # (heads, C) 0/1 mask
    kb = k.astype(bf16)
    attn_out = jnp.zeros_like(x)                                 # (L, C) f32
    for h in range(heads):
        m_h = hm[h:h + 1, :]                                     # (1, C)
        qh = (q * m_h) * scale
        # q_h @ k_h^T realized as masked full matmul (no reshapes / lane slicing).
        s = lax.dot_general(qh.astype(bf16), kb,
                            (((1,), (1,)), ((), ())),
                            preferred_element_type=f32)          # (L, L)
        s = s + bias_ref[h]                                      # rel bias + shift mask
        s = s - jnp.max(s, axis=-1, keepdims=True)               # (-1e9 kills x-window)
        e = jnp.exp(s)
        p = e * pl.reciprocal(jnp.sum(e, axis=-1, keepdims=True), approx=True)
        vh = (v * m_h).astype(bf16)
        attn_out = attn_out + jnp.dot(p.astype(bf16), vh,
                                      preferred_element_type=f32)

    o = jnp.dot(attn_out.astype(bf16), wp_ref[...],
                preferred_element_type=f32) + bp_ref[...]
    x1 = x + o                                                   # residual 1

    xn2 = _ln(x1, g2_ref[...], b2_ref[...])
    h1 = jnp.dot(xn2.astype(bf16), w1_ref[...],
                 preferred_element_type=f32) + bb1_ref[...]
    h1 = _gelu(h1)
    h2 = jnp.dot(h1.astype(bf16), w2_ref[...],
                 preferred_element_type=f32) + bb2_ref[...]
    o_ref[...] = (x1 + h2).astype(o_ref.dtype)                   # residual 2


@functools.lru_cache(maxsize=None)
def _build_swin_block(B, L, C, heads, hidden, scale):
    xmap = lambda i: (i, 0, 0)
    c2 = lambda i: (0, 0)
    c3 = lambda i: (0, 0, 0)
    in_specs = [
        pl.BlockSpec((None, L, C), xmap),                        # x (squeezed batch)
        pl.BlockSpec((1, C), c2), pl.BlockSpec((1, C), c2),      # ln1
        pl.BlockSpec((C, C), c2), pl.BlockSpec((1, C), c2),      # wq, bq
        pl.BlockSpec((C, C), c2), pl.BlockSpec((1, C), c2),      # wk, bk
        pl.BlockSpec((C, C), c2), pl.BlockSpec((1, C), c2),      # wv, bv
        pl.BlockSpec((heads, C), c2),                            # head mask
        pl.BlockSpec((heads, L, L), c3),                         # additive attn bias
        pl.BlockSpec((C, C), c2), pl.BlockSpec((1, C), c2),      # wp, bp
        pl.BlockSpec((1, C), c2), pl.BlockSpec((1, C), c2),      # ln2
        pl.BlockSpec((C, hidden), c2), pl.BlockSpec((1, hidden), c2),  # fc1
        pl.BlockSpec((hidden, C), c2), pl.BlockSpec((1, C), c2),       # fc2
    ]
    return pl.pallas_call(
        functools.partial(_swin_block_kernel, heads=heads, scale=scale),
        out_shape=jax.ShapeDtypeStruct((B, L, C), jnp.float32),
        grid=(B,),
        in_specs=in_specs,
        out_specs=pl.BlockSpec((None, L, C), xmap),
        compiler_params=pltpu.CompilerParams(dimension_semantics=("parallel",)),
    )


# ----------------------------------------------------------------------------
# Static (numpy) helpers: relative position index, shift mask, window permutation
# ----------------------------------------------------------------------------
@functools.lru_cache(maxsize=None)
def relative_position_index(ws):
    coords = np.stack(np.meshgrid(np.arange(ws), np.arange(ws), indexing="ij"))
    flat = coords.reshape(2, -1)
    rel = (flat[:, :, None] - flat[:, None, :]).transpose(1, 2, 0).astype(np.int64)
    rel[:, :, 0] += ws - 1
    rel[:, :, 1] += ws - 1
    rel[:, :, 0] *= 2 * ws - 1
    return rel.sum(-1)  # (ws*ws, ws*ws)


def shifted_window_mask_np(H, W, ws, shift):
    img_mask = np.zeros((H, W), np.float32)
    cnt = 0
    for hs in (slice(0, -ws), slice(-ws, -shift), slice(-shift, None)):
        for wsl in (slice(0, -ws), slice(-ws, -shift), slice(-shift, None)):
            img_mask[hs, wsl] = cnt
            cnt += 1
    mw = img_mask.reshape(H // ws, ws, W // ws, ws).transpose(0, 2, 1, 3).reshape(-1, ws * ws)
    diff = mw[:, None, :] - mw[:, :, None]
    return np.where(diff != 0, -100.0, 0.0).astype(np.float32)  # (nW, N, N)


@functools.lru_cache(maxsize=None)
def window_perm(H, W, ws, shift):
    """Permutation collapsing roll(-shift) + window_partition into one gather."""
    idx = np.arange(H * W).reshape(H, W)
    if shift > 0:
        idx = np.roll(idx, (-shift, -shift), axis=(0, 1))
    perm = idx.reshape(H // ws, ws, W // ws, ws).transpose(0, 2, 1, 3).reshape(-1)
    inv = np.argsort(perm)
    return perm.astype(np.int32), inv.astype(np.int32)


def eff_window_shift(res, ws, shift):
    # Same adjustment as SwinTransformerBlock.__init__
    if min(res) <= ws:
        return min(res), 0
    return ws, shift


def eff_ws(res, ws):
    m = min(res)
    return m if m <= ws else ws


# ----------------------------------------------------------------------------
# Deterministic parameter init (same layout as the previous version)
# ----------------------------------------------------------------------------
class KeyGen:
    def __init__(self, seed):
        self._key = jax.random.PRNGKey(seed)

    def __call__(self):
        self._key, k = jax.random.split(self._key)
        return k


def _normal(key, shape, std=0.02):
    return std * jax.random.normal(key, shape, jnp.float32)


def init_linear(kg, fin, fout, bias=True):
    p = {"w": _normal(kg(), (fin, fout))}
    if bias:
        p["b"] = jnp.zeros((fout,), jnp.float32)
    return p


def init_ln(dim):
    return {"g": jnp.ones((dim,), jnp.float32), "b": jnp.zeros((dim,), jnp.float32)}


def init_block(kg, dim, heads, ws, mlp_ratio=4):
    return {
        "norm1": init_ln(dim),
        "qkv": init_linear(kg, dim, 3 * dim),
        "rel_bias": _normal(kg(), ((2 * ws - 1) ** 2, heads)),
        "proj": init_linear(kg, dim, dim),
        "norm2": init_ln(dim),
        "fc1": init_linear(kg, dim, mlp_ratio * dim),
        "fc2": init_linear(kg, mlp_ratio * dim, dim),
    }


def init_params(cfg, seed=0):
    kg = KeyGen(seed)
    E, ps = cfg.EMBED_DIM, cfg.PATCH_SIZE
    pr = cfg.IMG_SIZE // ps
    nl = len(cfg.DEPTHS)
    p = {}
    p["patch_embed"] = {
        "w": _normal(kg(), (cfg.IN_CHANS * ps * ps, E)),
        "b": jnp.zeros((E,), jnp.float32),
        "norm": init_ln(E) if cfg.PATCH_NORM else None,
    }
    layers = []
    for i in range(nl):
        dim = E * (2 ** i)
        res = (pr // (2 ** i), pr // (2 ** i))
        ws_i = eff_ws(res, cfg.WINDOW_SIZE)
        layer = {"blocks": [init_block(kg, dim, cfg.NUM_HEADS[i], ws_i)
                            for _ in range(cfg.DEPTHS[i])]}
        if i < nl - 1:
            layer["downsample"] = {"norm": init_ln(4 * dim),
                                   "reduction": init_linear(kg, 4 * dim, 2 * dim, bias=False)}
        layers.append(layer)
    p["layers"] = layers
    p["norm"] = init_ln(E * (2 ** (nl - 1)))

    layers_up, concat_back = [], []
    for i in range(nl):
        dim = E * (2 ** (nl - 1 - i))
        res = (pr // (2 ** (nl - 1 - i)), pr // (2 ** (nl - 1 - i)))
        if i == 0:
            concat_back.append(None)
            layers_up.append({"patch_expand": {"expand": init_linear(kg, dim, 2 * dim, bias=False),
                                               "norm": init_ln(dim // 2)}})
        else:
            concat_back.append(init_linear(kg, 2 * dim, dim))
            ws_i = eff_ws(res, cfg.WINDOW_SIZE)
            layer = {"blocks": [init_block(kg, dim, cfg.NUM_HEADS[nl - 1 - i], ws_i)
                                for _ in range(cfg.DEPTHS[nl - 1 - i])]}
            if i < nl - 1:
                layer["upsample"] = {"expand": init_linear(kg, dim, 2 * dim, bias=False),
                                     "norm": init_ln(dim // 2)}
            layers_up.append(layer)
    p["layers_up"] = layers_up
    p["concat_back_dim"] = concat_back
    p["norm_up"] = init_ln(E)
    p["up_x4"] = {"expand": init_linear(kg, E, 16 * E, bias=False), "norm": init_ln(E)}
    p["output"] = {"w": _normal(kg(), (E, cfg.CLASS_NUMBER))}  # 1x1 conv, bias=False
    return p


# ----------------------------------------------------------------------------
# Inference-time parameter preparation (bf16 weights, fused attention biases)
# ----------------------------------------------------------------------------
def build_attn_bias(rel_table, heads, H, W, ws, shift):
    """(heads, L, L) additive bias: rel-pos bias + shift mask on window block-diagonal,
    -1e9 off-diagonal (kills cross-window attention in the dense softmax)."""
    N = ws * ws
    nW = (H // ws) * (W // ws)
    L = nW * N
    rel_idx = relative_position_index(ws).reshape(-1)
    rb = rel_table[rel_idx].reshape(N, N, heads)
    rb = jnp.transpose(rb, (2, 0, 1))                               # (heads, N, N)
    base = np.full((nW, N, nW, N), -1e9, np.float32)
    sm = (shifted_window_mask_np(H, W, ws, shift) if shift > 0
          else np.zeros((nW, N, N), np.float32))
    for w in range(nW):
        base[w, :, w, :] = sm[w]
    base = jnp.asarray(base.reshape(L, L))
    eye = np.eye(nW, dtype=np.float32)
    blockdiag = jnp.einsum("wv,hij->hwivj", eye, rb).reshape(heads, L, L)
    return (blockdiag + base[None]).astype(jnp.float32)


def prepare_block(p, heads, res, ws, shift):
    H, W = res
    ws_e, shift_e = eff_window_shift(res, ws, shift)
    C = p["qkv"]["w"].shape[0]
    hd = C // heads
    bf = jnp.bfloat16
    wqkv, bqkv = p["qkv"]["w"], p["qkv"]["b"]
    hmask = np.zeros((heads, C), np.float32)
    for h in range(heads):
        hmask[h, h * hd:(h + 1) * hd] = 1.0
    return {
        "ln1_g": p["norm1"]["g"].reshape(1, C), "ln1_b": p["norm1"]["b"].reshape(1, C),
        "wq": wqkv[:, :C].astype(bf), "bq": bqkv[:C].reshape(1, C),
        "wk": wqkv[:, C:2 * C].astype(bf), "bk": bqkv[C:2 * C].reshape(1, C),
        "wv": wqkv[:, 2 * C:].astype(bf), "bv": bqkv[2 * C:].reshape(1, C),
        "hmask": jnp.asarray(hmask),
        "bias": build_attn_bias(p["rel_bias"], heads, H, W, ws_e, shift_e),
        "wp": p["proj"]["w"].astype(bf), "bp": p["proj"]["b"].reshape(1, C),
        "ln2_g": p["norm2"]["g"].reshape(1, C), "ln2_b": p["norm2"]["b"].reshape(1, C),
        "fc1_w": p["fc1"]["w"].astype(bf), "fc1_b": p["fc1"]["b"].reshape(1, -1),
        "fc2_w": p["fc2"]["w"].astype(bf), "fc2_b": p["fc2"]["b"].reshape(1, C),
    }


def prepare_params(params, cfg):
    E, ps = cfg.EMBED_DIM, cfg.PATCH_SIZE
    pr = cfg.IMG_SIZE // ps
    nl = len(cfg.DEPTHS)
    bf = jnp.bfloat16
    rt = {}
    pe = params["patch_embed"]
    rt["patch_embed"] = {"w": pe["w"].astype(bf), "b": pe["b"], "norm": pe["norm"]}

    rt["layers"] = []
    for i in range(nl):
        res = (pr // (2 ** i), pr // (2 ** i))
        lp = params["layers"][i]
        blocks = []
        for d in range(cfg.DEPTHS[i]):
            shift = 0 if d % 2 == 0 else cfg.WINDOW_SIZE // 2
            blocks.append(prepare_block(lp["blocks"][d], cfg.NUM_HEADS[i],
                                        res, cfg.WINDOW_SIZE, shift))
        layer_rt = {"blocks": blocks}
        if "downsample" in lp:
            layer_rt["downsample"] = {"norm": lp["downsample"]["norm"],
                                      "w": lp["downsample"]["reduction"]["w"].astype(bf)}
        rt["layers"].append(layer_rt)
    rt["norm"] = params["norm"]

    rt["layers_up"] = []
    rt["concat_back"] = []
    for i in range(nl):
        res = (pr // (2 ** (nl - 1 - i)), pr // (2 ** (nl - 1 - i)))
        lup = params["layers_up"][i]
        cb = params["concat_back_dim"][i]
        if i == 0:
            rt["concat_back"].append(None)
            rt["layers_up"].append({"patch_expand": {
                "w": lup["patch_expand"]["expand"]["w"].astype(bf),
                "norm": lup["patch_expand"]["norm"]}})
        else:
            rt["concat_back"].append({"w": cb["w"].astype(bf), "b": cb["b"]})
            blocks = []
            for d in range(cfg.DEPTHS[nl - 1 - i]):
                shift = 0 if d % 2 == 0 else cfg.WINDOW_SIZE // 2
                blocks.append(prepare_block(lup["blocks"][d], cfg.NUM_HEADS[nl - 1 - i],
                                            res, cfg.WINDOW_SIZE, shift))
            layer_rt = {"blocks": blocks}
            if "upsample" in lup:
                layer_rt["upsample"] = {"w": lup["upsample"]["expand"]["w"].astype(bf),
                                        "norm": lup["upsample"]["norm"]}
            rt["layers_up"].append(layer_rt)
    rt["norm_up"] = params["norm_up"]
    rt["up_x4"] = {"w": params["up_x4"]["expand"]["w"].astype(bf),
                   "norm": params["up_x4"]["norm"]}
    rt["output_w"] = params["output"]["w"].astype(bf)
    return rt


# ----------------------------------------------------------------------------
# Forward pieces
# ----------------------------------------------------------------------------
def swin_block_apply(brt, x, res, ws, shift):
    H, W = res
    B, L, C = x.shape
    ws_e, shift_e = eff_window_shift(res, ws, shift)
    perm, inv = window_perm(H, W, ws_e, shift_e)
    xw = jnp.take(x, perm, axis=1)                 # roll + window_partition as one gather
    heads = brt["hmask"].shape[0]
    hidden = brt["fc1_w"].shape[1]
    scale = float((C // heads) ** -0.5)
    yw = _build_swin_block(B, L, C, heads, hidden, scale)(
        xw,
        brt["ln1_g"], brt["ln1_b"],
        brt["wq"], brt["bq"], brt["wk"], brt["bk"], brt["wv"], brt["bv"],
        brt["hmask"], brt["bias"],
        brt["wp"], brt["bp"],
        brt["ln2_g"], brt["ln2_b"],
        brt["fc1_w"], brt["fc1_b"], brt["fc2_w"], brt["fc2_b"])
    return jnp.take(yw, inv, axis=1)               # window_reverse + unroll


def patch_merging_apply(dp, x, res):
    H, W = res
    B, L, C = x.shape
    x = x.reshape(B, H, W, C)
    x0 = x[:, 0::2, 0::2, :]
    x1 = x[:, 1::2, 0::2, :]
    x2 = x[:, 0::2, 1::2, :]
    x3 = x[:, 1::2, 1::2, :]
    x = jnp.concatenate([x0, x1, x2, x3], -1).reshape(B, -1, 4 * C)
    return pallas_linear(x, dp["w"], ln_in=dp["norm"])   # fused LN + reduction


def pixel_shuffle(x, res, s):
    H, W = res
    B, L, C = x.shape
    c = C // (s * s)
    x = x.reshape(B, H, W, s, s, c)
    x = x.transpose(0, 1, 3, 2, 4, 5).reshape(B, H * s * W * s, c)
    return x


def swin_transformer_sys_forward(rt, x_nchw, cfg):
    B, C_in = x_nchw.shape[0], x_nchw.shape[1]
    E, ps = cfg.EMBED_DIM, cfg.PATCH_SIZE
    pr = cfg.IMG_SIZE // ps
    nl = len(cfg.DEPTHS)
    ws = cfg.WINDOW_SIZE

    # --- PatchEmbed: conv(k=ps, s=ps) as unfold + fused (matmul + LN) ---
    x = x_nchw.reshape(B, C_in, pr, ps, pr, ps).transpose(0, 2, 4, 1, 3, 5)
    x = x.reshape(B, pr * pr, C_in * ps * ps)
    pe = rt["patch_embed"]
    x = pallas_linear(x, pe["w"], pe["b"], ln_out=pe["norm"])
    # APE=False, drop_rate=0 -> identity

    # --- encoder ---
    x_down = []
    for i in range(nl):
        res = (pr // (2 ** i), pr // (2 ** i))
        x_down.append(x)
        lrt = rt["layers"][i]
        for d in range(cfg.DEPTHS[i]):
            shift = 0 if d % 2 == 0 else ws // 2
            x = swin_block_apply(lrt["blocks"][d], x, res, ws, shift)
        if "downsample" in lrt:
            x = patch_merging_apply(lrt["downsample"], x, res)

    # --- decoder (with skip connections) ---
    for i in range(nl):
        res = (pr // (2 ** (nl - 1 - i)), pr // (2 ** (nl - 1 - i)))
        if i == 0:
            # encoder-final norm fused as pre-LN of the first PatchExpand linear
            pe0 = rt["layers_up"][0]["patch_expand"]
            x = pallas_linear(x, pe0["w"], ln_in=rt["norm"])
            x = pixel_shuffle(x, res, 2)
            x = pallas_ln(x, pe0["norm"])
        else:
            skip = x_down[nl - 1 - i]
            x = jnp.concatenate([x, skip], axis=-1)
            cb = rt["concat_back"][i]
            x = pallas_linear(x, cb["w"], cb["b"])
            lrt = rt["layers_up"][i]
            for d in range(cfg.DEPTHS[nl - 1 - i]):
                shift = 0 if d % 2 == 0 else ws // 2
                x = swin_block_apply(lrt["blocks"][d], x, res, ws, shift)
            if "upsample" in lrt:
                up = lrt["upsample"]
                x = pallas_linear(x, up["w"])
                x = pixel_shuffle(x, res, 2)
                x = pallas_ln(x, up["norm"])

    # --- up_x4 (norm_up fused as pre-LN) + final LN fused with 1x1 output conv ---
    ux = rt["up_x4"]
    x = pallas_linear(x, ux["w"], ln_in=rt["norm_up"])        # (B, pr*pr, 16E)
    x = pixel_shuffle(x, (pr, pr), ps)                        # (B, (pr*ps)^2, E)
    x = pallas_linear(x, rt["output_w"], ln_in=ux["norm"])    # (B, HW, num_classes)
    return x.reshape(B, pr * ps, pr * ps, cfg.CLASS_NUMBER)   # NHWC


# ----------------------------------------------------------------------------
# SwinUnet wrapper (repeat 1->3 channels, pad to IMG_SIZE, crop; output NHWC,
# identical to torch's logits.permute(0, 2, 3, 1))
# ----------------------------------------------------------------------------
def swin_unet_forward(rt, x, cfg):
    B, C, H, W = x.shape
    if C == 1:
        x = jnp.tile(x, (1, 3, 1, 1))
    x_padded = jnp.zeros((B, x.shape[1], cfg.IMG_SIZE, cfg.IMG_SIZE), x.dtype)
    x_padded = x_padded.at[:, :, :H, :W].set(x)
    logits_nhwc = swin_transformer_sys_forward(rt, x_padded, cfg)
    return logits_nhwc[:, :H, :W, :]


if __name__ == "__main__":
    cfg = Config()
    params = init_params(cfg, seed=0)
    rt = prepare_params(params, cfg)

    key = jax.random.PRNGKey(0)
    # 1-channel input exercises the repeat(1,3,1,1) path; 20x24 exercises pad/crop.
    x = jax.random.normal(key, (2, 1, 20, 24), jnp.float32)

    fwd = jax.jit(functools.partial(swin_unet_forward, cfg=cfg))
    out = fwd(rt, x)
    out = jax.block_until_ready(out)

    assert out.shape == (2, 20, 24, cfg.CLASS_NUMBER), out.shape
    assert bool(jnp.all(jnp.isfinite(out)))
    print("KERNEL_OK")
</pallas_src>

<mosaic_0001>
module attributes {stable_mosaic.version = 11 : i64} {
  func.func @_fused_linear_kernel(%arg0: i32, %arg1: memref<128x48xf32, #tpu.memory_space<vmem>>, %arg2: memref<48x32xbf16, #tpu.memory_space<vmem>>, %arg3: memref<1x32xf32, #tpu.memory_space<vmem>>, %arg4: memref<1x32xf32, #tpu.memory_space<vmem>>, %arg5: memref<1x32xf32, #tpu.memory_space<vmem>>, %arg6: memref<128x32xf32, #tpu.memory_space<vmem>>) attributes {dimension_semantics = [#tpu.dimension_semantics<parallel>], iteration_bounds = array<i64: 1>, scalar_prefetch = 0 : i64, scratch_operands = 0 : i64, tpu.core_type = #tpu.core_type<tc>, window_params = [{transform_indices = @transform_0, window_bounds = array<i64: 128, 48>}, {pipeline_mode = #tpu.pipeline_mode<synchronous>, transform_indices = @transform_1, window_bounds = array<i64: 48, 32>}, {pipeline_mode = #tpu.pipeline_mode<synchronous>, transform_indices = @transform_2, window_bounds = array<i64: 1, 32>}, {pipeline_mode = #tpu.pipeline_mode<synchronous>, transform_indices = @transform_3, window_bounds = array<i64: 1, 32>}, {pipeline_mode = #tpu.pipeline_mode<synchronous>, transform_indices = @transform_4, window_bounds = array<i64: 1, 32>}, {transform_indices = @transform_5, window_bounds = array<i64: 128, 32>}]} {
    %c0 = arith.constant 0 : index
    %c0_0 = arith.constant 0 : index
    %0 = vector.load %arg1[%c0, %c0_0] : memref<128x48xf32, #tpu.memory_space<vmem>>, vector<128x48xf32>
    %1 = arith.truncf %0 : vector<128x48xf32> to vector<128x48xbf16>
    %c0_1 = arith.constant 0 : index
    %c0_2 = arith.constant 0 : index
    %2 = vector.load %arg2[%c0_1, %c0_2] : memref<48x32xbf16, #tpu.memory_space<vmem>>, vector<48x32xbf16>
    %cst = arith.constant dense<0.000000e+00> : vector<128x32xf32>
    %3 = tpu.matmul %1, %2, %cst {dimension_numbers = #tpu.dot_dimension_numbers<[1], [0], [0], [1], [0, 0, 1, 1], [], []>} : vector<128x48xbf16>, vector<48x32xbf16>, vector<128x32xf32> -> vector<128x32xf32>
    %c0_3 = arith.constant 0 : index
    %c0_4 = arith.constant 0 : index
    %4 = vector.load %arg3[%c0_3, %c0_4] : memref<1x32xf32, #tpu.memory_space<vmem>>, vector<1x32xf32>
    %5 = vector.broadcast %4 : vector<1x32xf32> to vector<128x32xf32>
    %6 = arith.addf %3, %5 : vector<128x32xf32>
    %c0_5 = arith.constant 0 : index
    %c0_6 = arith.constant 0 : index
    %7 = vector.load %arg4[%c0_5, %c0_6] : memref<1x32xf32, #tpu.memory_space<vmem>>, vector<1x32xf32>
    %c0_7 = arith.constant 0 : index
    %c0_8 = arith.constant 0 : index
    %8 = vector.load %arg5[%c0_7, %c0_8] : memref<1x32xf32, #tpu.memory_space<vmem>>, vector<1x32xf32>
    %cst_9 = arith.constant dense<0.000000e+00> : vector<128xf32>
    %9 = vector.multi_reduction <add>, %6, %cst_9 [1] : vector<128x32xf32> to vector<128xf32>
    %10 = vector.shape_cast %9 : vector<128xf32> to vector<128x1xf32>
    %cst_10 = arith.constant 3.200000e+01 : f32
    %11 = vector.broadcast %cst_10 : f32 to vector<128x1xf32>
    %12 = arith.divf %10, %11 : vector<128x1xf32>
    %13 = vector.broadcast %12 : vector<128x1xf32> to vector<128x32xf32>
    %14 = arith.subf %6, %13 : vector<128x32xf32>
    %15 = arith.mulf %14, %14 : vector<128x32xf32>
    %cst_11 = arith.constant dense<0.000000e+00> : vector<128xf32>
    %16 = vector.multi_reduction <add>, %15, %cst_11 [1] : vector<128x32xf32> to vector<128xf32>
    %17 = vector.shape_cast %16 : vector<128xf32> to vector<128x1xf32>
    %cst_12 = arith.constant 3.200000e+01 : f32
    %18 = vector.broadcast %cst_12 : f32 to vector<128x1xf32>
    %19 = arith.divf %17, %18 : vector<128x1xf32>
    %20 = vector.broadcast %12 : vector<128x1xf32> to vector<128x32xf32>
    %21 = arith.subf %6, %20 : vector<128x32xf32>
    %cst_13 = arith.constant 9.99999974E-6 : f32
    %22 = vector.broadcast %cst_13 : f32 to vector<128x1xf32>
    %23 = arith.addf %19, %22 : vector<128x1xf32>
    %24 = math.rsqrt %23 : vector<128x1xf32>
    %25 = vector.broadcast %24 : vector<128x1xf32> to vector<128x32xf32>
    %26 = arith.mulf %21, %25 : vector<128x32xf32>
    %27 = vector.broadcast %7 : vector<1x32xf32> to vector<128x32xf32>
    %28 = arith.mulf %26, %27 : vector<128x32xf32>
    %29 = vector.broadcast %8 : vector<1x32xf32> to vector<128x32xf32>
    %30 = arith.addf %28, %29 : vector<128x32xf32>
    %c0_14 = arith.constant 0 : index
    %c0_15 = arith.constant 0 : index
    %31 = vector.load %arg6[%c0_14, %c0_15] : memref<128x32xf32, #tpu.memory_space<vmem>>, vector<128x32xf32>
    tpu.vector_store %arg6[%c0_14, %c0_15], %30 {strides = array<i32>} : memref<128x32xf32, #tpu.memory_space<vmem>>, vector<128x32xf32>,
    return
  }
  func.func @transform_0(%arg0: i32) -> (i32, i32) {
    %c0_i32 = arith.constant 0 : i32
    %c0_i32_0 = arith.constant 0 : i32
    return %arg0, %c0_i32 : i32, i32
  }
  func.func @transform_1(%arg0: i32) -> (i32, i32) {
    %c0_i32 = arith.constant 0 : i32
    %c0_i32_0 = arith.constant 0 : i32
    %c0_i32_1 = arith.constant 0 : i32
    return %c0_i32, %c0_i32_0 : i32, i32
  }
  func.func @transform_2(%arg0: i32) -> (i32, i32) {
    %c0_i32 = arith.constant 0 : i32
    %c0_i32_0 = arith.constant 0 : i32
    %c0_i32_1 = arith.constant 0 : i32
    return %c0_i32, %c0_i32_0 : i32, i32
  }
  func.func @transform_3(%arg0: i32) -> (i32, i32) {
    %c0_i32 = arith.constant 0 : i32
    %c0_i32_0 = arith.constant 0 : i32
    %c0_i32_1 = arith.constant 0 : i32
    return %c0_i32, %c0_i32_0 : i32, i32
  }
  func.func @transform_4(%arg0: i32) -> (i32, i32) {
    %c0_i32 = arith.constant 0 : i32
    %c0_i32_0 = arith.constant 0 : i32
    %c0_i32_1 = arith.constant 0 : i32
    return %c0_i32, %c0_i32_0 : i32, i32
  }
  func.func @transform_5(%arg0: i32) -> (i32, i32) {
    %c0_i32 = arith.constant 0 : i32
    %c0_i32_0 = arith.constant 0 : i32
    return %arg0, %c0_i32 : i32, i32
  }
}

module attributes {stable_mosaic.version = 11 : i64} {
  func.func @_swin_block_kernel(%arg0: i32, %arg1: memref<1x64x32xf32, #tpu.memory_space<vmem>>, %arg2: memref<1x32xf32, #tpu.memory_space<vmem>>, %arg3: memref<1x32xf32, #tpu.memory_space<vmem>>, %arg4: memref<32x32xbf16, #tpu.memory_space<vmem>>, %arg5: memref<1x32xf32, #tpu.memory_space<vmem>>, %arg6: memref<32x32xbf16, #tpu.memory_space<vmem>>, %arg7: memref<1x32xf32, #tpu.memory_space<vmem>>, %arg8: memref<32x32xbf16, #tpu.memory_space<vmem>>, %arg9: memref<1x32xf32, #tpu.memory_space<vmem>>, %arg10: memref<2x32xf32, #tpu.memory_space<vmem>>, %arg11: memref<2x64x64xf32, #tpu.memory_space<vmem>>, %arg12: memref<32x32xbf16, #tpu.memory_space<vmem>>, %arg13: memref<1x32xf32, #tpu.memory_space<vmem>>, %arg14: memref<1x32xf32, #tpu.memory_space<vmem>>, %arg15: memref<1x32xf32, #tpu.memory_space<vmem>>, %arg16: memref<32x128xbf16, #tpu.memory_space<vmem>>, %arg17: memref<1x128xf32, #tpu.memory_space<vmem>>, %arg18: memref<128x32xbf16, #tpu.memory_space<vmem>>, %arg19: memref<1x32xf32, #tpu.memory_space<vmem>>, %arg20: memref<1x64x32xf32, #tpu.memory_space<vmem>>) attributes {dimension_semantics = [#tpu.dimension_semantics<parallel>], iteration_bounds = array<i64: 2>, scalar_prefetch = 0 : i64, scratch_operands = 0 : i64, tpu.core_type = #tpu.core_type<tc>, window_params = [{transform_indices = @transform_0, window_bounds = array<i64: 1, 64, 32>}, {pipeline_mode = #tpu.pipeline_mode<synchronous>, transform_indices = @transform_1, window_bounds = array<i64: 1, 32>}, {pipeline_mode = #tpu.pipeline_mode<synchronous>, transform_indices = @transform_2, window_bounds = array<i64: 1, 32>}, {pipeline_mode = #tpu.pipeline_mode<synchronous>, transform_indices = @transform_3, window_bounds = array<i64: 32, 32>}, {pipeline_mode = #tpu.pipeline_mode<synchronous>, transform_indices = @transform_4, window_bounds = array<i64: 1, 32>}, {pipeline_mode = #tpu.pipeline_mode<synchronous>, transform_indices = @transform_5, window_bounds = array<i64: 32, 32>}, {pipeline_mode = #tpu.pipeline_mode<synchronous>, transform_indices = @transform_6, window_bounds = array<i64: 1, 32>}, {pipeline_mode = #tpu.pipeline_mode<synchronous>, transform_indices = @transform_7, window_bounds = array<i64: 32, 32>}, {pipeline_mode = #tpu.pipeline_mode<synchronous>, transform_indices = @transform_8, window_bounds = array<i64: 1, 32>}, {pipeline_mode = #tpu.pipeline_mode<synchronous>, transform_indices = @transform_9, window_bounds = array<i64: 2, 32>}, {pipeline_mode = #tpu.pipeline_mode<synchronous>, transform_indices = @transform_10, window_bounds = array<i64: 2, 64, 64>}, {pipeline_mode = #tpu.pipeline_mode<synchronous>, transform_indices = @transform_11, window_bounds = array<i64: 32, 32>}, {pipeline_mode = #tpu.pipeline_mode<synchronous>, transform_indices = @transform_12, window_bounds = array<i64: 1, 32>}, {pipeline_mode = #tpu.pipeline_mode<synchronous>, transform_indices = @transform_13, window_bounds = array<i64: 1, 32>}, {pipeline_mode = #tpu.pipeline_mode<synchronous>, transform_indices = @transform_14, window_bounds = array<i64: 1, 32>}, {pipeline_mode = #tpu.pipeline_mode<synchronous>, transform_indices = @transform_15, window_bounds = array<i64: 32, 128>}, {pipeline_mode = #tpu.pipeline_mode<synchronous>, transform_indices = @transform_16, window_bounds = array<i64: 1, 128>}, {pipeline_mode = #tpu.pipeline_mode<synchronous>, transform_indices = @transform_17, window_bounds = array<i64: 128, 32>}, {pipeline_mode = #tpu.pipeline_mode<synchronous>, transform_indices = @transform_18, window_bounds = array<i64: 1, 32>}, {transform_indices = @transform_19, window_bounds = array<i64: 1, 64, 32>}]} {
    %c0 = arith.constant 0 : index
    %c0_0 = arith.constant 0 : index
    %c0_1 = arith.constant 0 : index
    %0 = vector.load %arg1[%c0, %c0_0, %c0_1] : memref<1x64x32xf32, #tpu.memory_space<vmem>>, vector<1x64x32xf32>
    %1 = vector.shape_cast %0 : vector<1x64x32xf32> to vector<64x32xf32>
    %c0_2 = arith.constant 0 : index
    %c0_3 = arith.constant 0 : index
    %2 = vector.load %arg2[%c0_2, %c0_3] : memref<1x32xf32, #tpu.memory_space<vmem>>, vector<1x32xf32>
    %c0_4 = arith.constant 0 : index
    %c0_5 = arith.constant 0 : index
    %3 = vector.load %arg3[%c0_4, %c0_5] : memref<1x32xf32, #tpu.memory_space<vmem>>, vector<1x32xf32>
    %cst = arith.constant dense<0.000000e+00> : vector<64xf32>
    %4 = vector.multi_reduction <add>, %1, %cst [1] : vector<64x32xf32> to vector<64xf32>
    %5 = vector.shape_cast %4 : vector<64xf32> to vector<64x1xf32>
    %cst_6 = arith.constant 3.200000e+01 : f32
    %6 = vector.broadcast %cst_6 : f32 to vector<64x1xf32>
    %7 = arith.divf %5, %6 : vector<64x1xf32>
    %8 = vector.broadcast %7 : vector<64x1xf32> to vector<64x32xf32>
    %9 = arith.subf %1, %8 : vector<64x32xf32>
    %10 = arith.mulf %9, %9 : vector<64x32xf32>
    %cst_7 = arith.constant dense<0.000000e+00> : vector<64xf32>
    %11 = vector.multi_reduction <add>, %10, %cst_7 [1] : vector<64x32xf32> to vector<64xf32>
    %12 = vector.shape_cast %11 : vector<64xf32> to vector<64x1xf32>
    %cst_8 = arith.constant 3.200000e+01 : f32
    %13 = vector.broadcast %cst_8 : f32 to vector<64x1xf32>
    %14 = arith.divf %12, %13 : vector<64x1xf32>
    %15 = vector.broadcast %7 : vector<64x1xf32> to vector<64x32xf32>
    %16 = arith.subf %1, %15 : vector<64x32xf32>
    %cst_9 = arith.constant 9.99999974E-6 : f32
    %17 = vector.broadcast %cst_9 : f32 to vector<64x1xf32>
    %18 = arith.addf %14, %17 : vector<64x1xf32>
    %19 = math.rsqrt %18 : vector<64x1xf32>
    %20 = vector.broadcast %19 : vector<64x1xf32> to vector<64x32xf32>
    %21 = arith.mulf %16, %20 : vector<64x32xf32>
    %22 = vector.broadcast %2 : vector<1x32xf32> to vector<64x32xf32>
    %23 = arith.mulf %21, %22 : vector<64x32xf32>
    %24 = vector.broadcast %3 : vector<1x32xf32> to vector<64x32xf32>
    %25 = arith.addf %23, %24 : vector<64x32xf32>
    %26 = arith.truncf %25 : vector<64x32xf32> to vector<64x32xbf16>
    %c0_10 = arith.constant 0 : index
    %c0_11 = arith.constant 0 : index
    %27 = vector.load %arg4[%c0_10, %c0_11] : memref<32x32xbf16, #tpu.memory_space<vmem>>, vector<32x32xbf16>
    %cst_12 = arith.constant dense<0.000000e+00> : vector<64x32xf32>
    %28 = tpu.matmul %26, %27, %cst_12 {dimension_numbers = #tpu.dot_dimension_numbers<[1], [0], [0], [1], [0, 0, 1, 1], [], []>} : vector<64x32xbf16>, vector<32x32xbf16>, vector<64x32xf32> -> vector<64x32xf32>
    %c0_13 = arith.constant 0 : index
    %c0_14 = arith.constant 0 : index
    %29 = vector.load %arg5[%c0_13, %c0_14] : memref<1x32xf32, #tpu.memory_space<vmem>>, vector<1x32xf32>
    %30 = vector.broadcast %29 : vector<1x32xf32> to vector<64x32xf32>
    %31 = arith.addf %28, %30 : vector<64x32xf32>
    %c0_15 = arith.constant 0 : index
    %c0_16 = arith.constant 0 : index
    %32 = vector.load %arg6[%c0_15, %c0_16] : memref<32x32xbf16, #tpu.memory_space<vmem>>, vector<32x32xbf16>
    %cst_17 = arith.constant dense<0.000000e+00> : vector<64x32xf32>
    %33 = tpu.matmul %26, %32, %cst_17 {dimension_numbers = #tpu.dot_dimension_numbers<[1], [0], [0], [1], [0, 0, 1, 1], [], []>} : vector<64x32xbf16>, vector<32x32xbf16>, vector<64x32xf32> -> vector<64x32xf32>
    %c0_18 = arith.constant 0 : index
    %c0_19 = arith.constant 0 : index
    %34 = vector.load %arg7[%c0_18, %c0_19] : memref<1x32xf32, #tpu.memory_space<vmem>>, vector<1x32xf32>
    %35 = vector.broadcast %34 : vector<1x32xf32> to vector<64x32xf32>
    %36 = arith.addf %33, %35 : vector<64x32xf32>
    %c0_20 = arith.constant 0 : index
    %c0_21 = arith.constant 0 : index
    %37 = vector.load %arg8[%c0_20, %c0_21] : memref<32x32xbf16, #tpu.memory_space<vmem>>, vector<32x32xbf16>
    %cst_22 = arith.constant dense<0.000000e+00> : vector<64x32xf32>
    %38 = tpu.matmul %26, %37, %cst_22 {dimension_numbers = #tpu.dot_dimension_numbers<[1], [0], [0], [1], [0, 0, 1, 1], [], []>} : vector<64x32xbf16>, vector<32x32xbf16>, vector<64x32xf32> -> vector<64x32xf32>
    %c0_23 = arith.constant 0 : index
    %c0_24 = arith.constant 0 : index
    %39 = vector.load %arg9[%c0_23, %c0_24] : memref<1x32xf32, #tpu.memory_space<vmem>>, vector<1x32xf32>
    %40 = vector.broadcast %39 : vector<1x32xf32> to vector<64x32xf32>
    %41 = arith.addf %38, %40 : vector<64x32xf32>
    %c0_25 = arith.constant 0 : index
    %c0_26 = arith.constant 0 : index
    %42 = vector.load %arg10[%c0_25, %c0_26] : memref<2x32xf32, #tpu.memory_space<vmem>>, vector<2x32xf32>
    %43 = arith.truncf %36 : vector<64x32xf32> to vector<64x32xbf16>
    %cst_27 = arith.constant 0.000000e+00 : f32
    %44 = vector.broadcast %cst_27 : f32 to vector<64x32xf32>
    %45 = vector.extract_strided_slice %42 {offsets = [0, 0], sizes = [1, 32], strides = [1, 1]} : vector<2x32xf32> to vector<1x32xf32>
    %46 = vector.broadcast %45 : vector<1x32xf32> to vector<64x32xf32>
    %47 = arith.mulf %31, %46 : vector<64x32xf32>
    %cst_28 = arith.constant 2.500000e-01 : f32
    %48 = vector.broadcast %cst_28 : f32 to vector<64x32xf32>
    %49 = arith.mulf %47, %48 : vector<64x32xf32>
    %50 = arith.truncf %49 : vector<64x32xf32> to vector<64x32xbf16>
    %cst_29 = arith.constant dense<0.000000e+00> : vector<64x64xf32>
    %51 = tpu.matmul %50, %43, %cst_29 {dimension_numbers = #tpu.dot_dimension_numbers<[1], [1], [0], [0], [0, 0, 1, 0], [], []>} : vector<64x32xbf16>, vector<64x32xbf16>, vector<64x64xf32> -> vector<64x64xf32>
    %c0_30 = arith.constant 0 : index
    %c0_31 = arith.constant 0 : index
    %c0_32 = arith.constant 0 : index
    %52 = vector.load %arg11[%c0_30, %c0_31, %c0_32] : memref<2x64x64xf32, #tpu.memory_space<vmem>>, vector<1x64x64xf32>
    %53 = vector.shape_cast %52 : vector<1x64x64xf32> to vector<64x64xf32>
    %54 = arith.addf %51, %53 : vector<64x64xf32>
    %cst_33 = arith.constant dense<0xFF800000> : vector<64xf32>
    %55 = vector.multi_reduction <maximumf>, %54, %cst_33 [1] : vector<64x64xf32> to vector<64xf32>
    %56 = vector.shape_cast %55 : vector<64xf32> to vector<64x1xf32>
    %57 = vector.broadcast %56 : vector<64x1xf32> to vector<64x64xf32>
    %58 = arith.subf %54, %57 : vector<64x64xf32>
    %59 = math.exp %58 : vector<64x64xf32>
    %cst_34 = arith.constant dense<0.000000e+00> : vector<64xf32>
    %60 = vector.multi_reduction <add>, %59, %cst_34 [1] : vector<64x64xf32> to vector<64xf32>
    %61 = vector.shape_cast %60 : vector<64xf32> to vector<64x1xf32>
    %62 = tpu.reciprocal %61 {approx = true} : vector<64x1xf32> -> vector<64x1xf32>
    %63 = vector.broadcast %62 : vector<64x1xf32> to vector<64x64xf32>
    %64 = arith.mulf %59, %63 : vector<64x64xf32>
    %65 = vector.broadcast %45 : vector<1x32xf32> to vector<64x32xf32>
    %66 = arith.mulf %41, %65 : vector<64x32xf32>
    %67 = arith.truncf %66 : vector<64x32xf32> to vector<64x32xbf16>
    %68 = arith.truncf %64 : vector<64x64xf32> to vector<64x64xbf16>
    %cst_35 = arith.constant dense<0.000000e+00> : vector<64x32xf32>
    %69 = tpu.matmul %68, %67, %cst_35 {dimension_numbers = #tpu.dot_dimension_numbers<[1], [0], [0], [1], [0, 0, 1, 1], [], []>} : vector<64x64xbf16>, vector<64x32xbf16>, vector<64x32xf32> -> vector<64x32xf32>
    %70 = arith.addf %44, %69 : vector<64x32xf32>
    %71 = vector.extract_strided_slice %42 {offsets = [1, 0], sizes = [1, 32], strides = [1, 1]} : vector<2x32xf32> to vector<1x32xf32>
    %72 = vector.broadcast %71 : vector<1x32xf32> to vector<64x32xf32>
    %73 = arith.mulf %31, %72 : vector<64x32xf32>
    %cst_36 = arith.constant 2.500000e-01 : f32
    %74 = vector.broadcast %cst_36 : f32 to vector<64x32xf32>
    %75 = arith.mulf %73, %74 : vector<64x32xf32>
    %76 = arith.truncf %75 : vector<64x32xf32> to vector<64x32xbf16>
    %cst_37 = arith.constant dense<0.000000e+00> : vector<64x64xf32>
    %77 = tpu.matmul %76, %43, %cst_37 {dimension_numbers = #tpu.dot_dimension_numbers<[1], [1], [0], [0], [0, 0, 1, 0], [], []>} : vector<64x32xbf16>, vector<64x32xbf16>, vector<64x64xf32> -> vector<64x64xf32>
    %c1 = arith.constant 1 : index
    %c0_38 = arith.constant 0 : index
    %c0_39 = arith.constant 0 : index
    %78 = vector.load %arg11[%c1, %c0_38, %c0_39] : memref<2x64x64xf32, #tpu.memory_space<vmem>>, vector<1x64x64xf32>
    %79 = vector.shape_cast %78 : vector<1x64x64xf32> to vector<64x64xf32>
    %80 = arith.addf %77, %79 : vector<64x64xf32>
    %cst_40 = arith.constant dense<0xFF800000> : vector<64xf32>
    %81 = vector.multi_reduction <maximumf>, %80, %cst_40 [1] : vector<64x64xf32> to vector<64xf32>
    %82 = vector.shape_cast %81 : vector<64xf32> to vector<64x1xf32>
    %83 = vector.broadcast %82 : vector<64x1xf32> to vector<64x64xf32>
    %84 = arith.subf %80, %83 : vector<64x64xf32>
    %85 = math.exp %84 : vector<64x64xf32>
    %cst_41 = arith.constant dense<0.000000e+00> : vector<64xf32>
    %86 = vector.multi_reduction <add>, %85, %cst_41 [1] : vector<64x64xf32> to vector<64xf32>
    %87 = vector.shape_cast %86 : vector<64xf32> to vector<64x1xf32>
    %88 = tpu.reciprocal %87 {approx = true} : vector<64x1xf32> -> vector<64x1xf32>
    %89 = vector.broadcast %88 : vector<64x1xf32> to vector<64x64xf32>
    %90 = arith.mulf %85, %89 : vector<64x64xf32>
    %91 = vector.broadcast %71 : vector<1x32xf32> to vector<64x32xf32>
    %92 = arith.mulf %41, %91 : vector<64x32xf32>
    %93 = arith.truncf %92 : vector<64x32xf32> to vector<64x32xbf16>
    %94 = arith.truncf %90 : vector<64x64xf32> to vector<64x64xbf16>
    %cst_42 = arith.constant dense<0.000000e+00> : vector<64x32xf32>
    %95 = tpu.matmul %94, %93, %cst_42 {dimension_numbers = #tpu.dot_dimension_numbers<[1], [0], [0], [1], [0, 0, 1, 1], [], []>} : vector<64x64xbf16>, vector<64x32xbf16>, vector<64x32xf32> -> vector<64x32xf32>
    %96 = arith.addf %70, %95 : vector<64x32xf32>
    %97 = arith.truncf %96 : vector<64x32xf32> to vector<64x32xbf16>
    %c0_43 = arith.constant 0 : index
    %c0_44 = arith.constant 0 : index
    %98 = vector.load %arg12[%c0_43, %c0_44] : memref<32x32xbf16, #tpu.memory_space<vmem>>, vector<32x32xbf16>
    %cst_45 = arith.constant dense<0.000000e+00> : vector<64x32xf32>
    %99 = tpu.matmul %97, %98, %cst_45 {dimension_numbers = #tpu.dot_dimension_numbers<[1], [0], [0], [1], [0, 0, 1, 1], [], []>} : vector<64x32xbf16>, vector<32x32xbf16>, vector<64x32xf32> -> vector<64x32xf32>
    %c0_46 = arith.constant 0 : index
    %c0_47 = arith.constant 0 : index
    %100 = vector.load %arg13[%c0_46, %c0_47] : memref<1x32xf32, #tpu.memory_space<vmem>>, vector<1x32xf32>
    %101 = vector.broadcast %100 : vector<1x32xf32> to vector<64x32xf32>
    %102 = arith.addf %99, %101 : vector<64x32xf32>
    %103 = arith.addf %1, %102 : vector<64x32xf32>
    %c0_48 = arith.constant 0 : index
    %c0_49 = arith.constant 0 : index
    %104 = vector.load %arg14[%c0_48, %c0_49] : memref<1x32xf32, #tpu.memory_space<vmem>>, vector<1x32xf32>
    %c0_50 = arith.constant 0 : index
    %c0_51 = arith.constant 0 : index
    %105 = vector.load %arg15[%c0_50, %c0_51] : memref<1x32xf32, #tpu.memory_space<vmem>>, vector<1x32xf32>
    %cst_52 = arith.constant dense<0.000000e+00> : vector<64xf32>
    %106 = vector.multi_reduction <add>, %103, %cst_52 [1] : vector<64x32xf32> to vector<64xf32>
    %107 = vector.shape_cast %106 : vector<64xf32> to vector<64x1xf32>
    %cst_53 = arith.constant 3.200000e+01 : f32
    %108 = vector.broadcast %cst_53 : f32 to vector<64x1xf32>
    %109 = arith.divf %107, %108 : vector<64x1xf32>
    %110 = vector.broadcast %109 : vector<64x1xf32> to vector<64x32xf32>
    %111 = arith.subf %103, %110 : vector<64x32xf32>
    %112 = arith.mulf %111, %111 : vector<64x32xf32>
    %cst_54 = arith.constant dense<0.000000e+00> : vector<64xf32>
    %113 = vector.multi_reduction <add>, %112, %cst_54 [1] : vector<64x32xf32> to vector<64xf32>
    %114 = vector.shape_cast %113 : vector<64xf32> to vector<64x1xf32>
    %cst_55 = arith.constant 3.200000e+01 : f32
    %115 = vector.broadcast %cst_55 : f32 to vector<64x1xf32>
    %116 = arith.divf %114, %115 : vector<64x1xf32>
    %117 = vector.broadcast %109 : vector<64x1xf32> to vector<64x32xf32>
    %118 = arith.subf %103, %117 : vector<64x32xf32>
    %cst_56 = arith.constant 9.99999974E-6 : f32
    %119 = vector.broadcast %cst_56 : f32 to vector<64x1xf32>
    %120 = arith.addf %116, %119 : vector<64x1xf32>
    %121 = math.rsqrt %120 : vector<64x1xf32>
    %122 = vector.broadcast %121 : vector<64x1xf32> to vector<64x32xf32>
    %123 = arith.mulf %118, %122 : vector<64x32xf32>
    %124 = vector.broadcast %104 : vector<1x32xf32> to vector<64x32xf32>
    %125 = arith.mulf %123, %124 : vector<64x32xf32>
    %126 = vector.broadcast %105 : vector<1x32xf32> to vector<64x32xf32>
    %127 = arith.addf %125, %126 : vector<64x32xf32>
    %128 = arith.truncf %127 : vector<64x32xf32> to vector<64x32xbf16>
    %c0_57 = arith.constant 0 : index
    %c0_58 = arith.constant 0 : index
    %129 = vector.load %arg16[%c0_57, %c0_58] : memref<32x128xbf16, #tpu.memory_space<vmem>>, vector<32x128xbf16>
    %cst_59 = arith.constant dense<0.000000e+00> : vector<64x128xf32>
    %130 = tpu.matmul %128, %129, %cst_59 {dimension_numbers = #tpu.dot_dimension_numbers<[1], [0], [0], [1], [0, 0, 1, 1], [], []>} : vector<64x32xbf16>, vector<32x128xbf16>, vector<64x128xf32> -> vector<64x128xf32>
    %c0_60 = arith.constant 0 : index
    %c0_61 = arith.constant 0 : index
    %131 = vector.load %arg17[%c0_60, %c0_61] : memref<1x128xf32, #tpu.memory_space<vmem>>, vector<1x128xf32>
    %132 = vector.broadcast %131 : vector<1x128xf32> to vector<64x128xf32>
    %133 = arith.addf %130, %132 : vector<64x128xf32>
    %cst_62 = arith.constant 5.000000e-01 : f32
    %134 = vector.broadcast %cst_62 : f32 to vector<64x128xf32>
    %135 = arith.mulf %134, %133 : vector<64x128xf32>
    %cst_63 = arith.constant 4.471500e-02 : f32
    %136 = vector.broadcast %cst_63 : f32 to vector<64x128xf32>
    %137 = arith.mulf %136, %133 : vector<64x128xf32>
    %138 = arith.mulf %137, %133 : vector<64x128xf32>
    %139 = arith.mulf %138, %133 : vector<64x128xf32>
    %140 = arith.addf %133, %139 : vector<64x128xf32>
    %cst_64 = arith.constant 0.797884583 : f32
    %141 = vector.broadcast %cst_64 : f32 to vector<64x128xf32>
    %142 = arith.mulf %141, %140 : vector<64x128xf32>
    %143 = math.tanh %142 : vector<64x128xf32>
    %cst_65 = arith.constant 1.000000e+00 : f32
    %144 = vector.broadcast %cst_65 : f32 to vector<64x128xf32>
    %145 = arith.addf %144, %143 : vector<64x128xf32>
    %146 = arith.mulf %135, %145 : vector<64x128xf32>
    %147 = arith.truncf %146 : vector<64x128xf32> to vector<64x128xbf16>
    %c0_66 = arith.constant 0 : index
    %c0_67 = arith.constant 0 : index
    %148 = vector.load %arg18[%c0_66, %c0_67] : memref<128x32xbf16, #tpu.memory_space<vmem>>, vector<128x32xbf16>
    %cst_68 = arith.constant dense<0.000000e+00> : vector<64x32xf32>
    %149 = tpu.matmul %147, %148, %cst_68 {dimension_numbers = #tpu.dot_dimension_numbers<[1], [0], [0], [1], [0, 0, 1, 1], [], []>} : vector<64x128xbf16>, vector<128x32xbf16>, vector<64x32xf32> -> vector<64x32xf32>
    %c0_69 = arith.constant 0 : index
    %c0_70 = arith.constant 0 : index
    %150 = vector.load %arg19[%c0_69, %c0_70] : memref<1x32xf32, #tpu.memory_space<vmem>>, vector<1x32xf32>
    %151 = vector.broadcast %150 : vector<1x32xf32> to vector<64x32xf32>
    %152 = arith.addf %149, %151 : vector<64x32xf32>
    %153 = arith.addf %103, %152 : vector<64x32xf32>
    %c0_71 = arith.constant 0 : index
    %c0_72 = arith.constant 0 : index
    %c0_73 = arith.constant 0 : index
    %154 = vector.load %arg20[%c0_71, %c0_72, %c0_73] : memref<1x64x32xf32, #tpu.memory_space<vmem>>, vector<1x64x32xf32>
    %155 = vector.shape_cast %154 : vector<1x64x32xf32> to vector<64x32xf32>
    %156 = vector.shape_cast %153 : vector<64x32xf32> to vector<1x64x32xf32>
    tpu.vector_store %arg20[%c0_71, %c0_72, %c0_73], %156 {strides = array<i32>} : memref<1x64x32xf32, #tpu.memory_space<vmem>>, vector<1x64x32xf32>,
    return
  }
  func.func @transform_0(%arg0: i32) -> (i32, i32, i32) {
    %c0_i32 = arith.constant 0 : i32
    %c0_i32_0 = arith.constant 0 : i32
    %c0_i32_1 = arith.constant 0 : i32
    return %arg0, %c0_i32, %c0_i32_0 : i32, i32, i32
  }
  func.func @transform_1(%arg0: i32) -> (i32, i32) {
    %c0_i32 = arith.constant 0 : i32
    %c0_i32_0 = arith.constant 0 : i32
    %c0_i32_1 = arith.constant 0 : i32
    return %c0_i32, %c0_i32_0 : i32, i32
  }
  func.func @transform_2(%arg0: i32) -> (i32, i32) {
    %c0_i32 = arith.constant 0 : i32
    %c0_i32_0 = arith.constant 0 : i32
    %c0_i32_1 = arith.constant 0 : i32
    return %c0_i32, %c0_i32_0 : i32, i32
  }
  func.func @transform_3(%arg0: i32) -> (i32, i32) {
    %c0_i32 = arith.constant 0 : i32
    %c0_i32_0 = arith.constant 0 : i32
    %c0_i32_1 = arith.constant 0 : i32
    return %c0_i32, %c0_i32_0 : i32, i32
  }
  func.func @transform_4(%arg0: i32) -> (i32, i32) {
    %c0_i32 = arith.constant 0 : i32
    %c0_i32_0 = arith.constant 0 : i32
    %c0_i32_1 = arith.constant 0 : i32
    return %c0_i32, %c0_i32_0 : i32, i32
  }
  func.func @transform_5(%arg0: i32) -> (i32, i32) {
    %c0_i32 = arith.constant 0 : i32
    %c0_i32_0 = arith.constant 0 : i32
    %c0_i32_1 = arith.constant 0 : i32
    return %c0_i32, %c0_i32_0 : i32, i32
  }
  func.func @transform_6(%arg0: i32) -> (i32, i32) {
    %c0_i32 = arith.constant 0 : i32
    %c0_i32_0 = arith.constant 0 : i32
    %c0_i32_1 = arith.constant 0 : i32
    return %c0_i32, %c0_i32_0 : i32, i32
  }
  func.func @transform_7(%arg0: i32) -> (i32, i32) {
    %c0_i32 = arith.constant 0 : i32
    %c0_i32_0 = arith.constant 0 : i32
    %c0_i32_1 = arith.constant 0 : i32
    return %c0_i32, %c0_i32_0 : i32, i32
  }
  func.func @transform_8(%arg0: i32) -> (i32, i32) {
    %c0_i32 = arith.constant 0 : i32
    %c0_i32_0 = arith.constant 0 : i32
    %c0_i32_1 = arith.constant 0 : i32
    return %c0_i32, %c0_i32_0 : i32, i32
  }
  func.func @transform_9(%arg0: i32) -> (i32, i32) {
    %c0_i32 = arith.constant 0 : i32
    %c0_i32_0 = arith.constant 0 : i32
    %c0_i32_1 = arith.constant 0 : i32
    return %c0_i32, %c0_i32_0 : i32, i32
  }
  func.func @transform_10(%arg0: i32) -> (i32, i32, i32) {
    %c0_i32 = arith.constant 0 : i32
    %c0_i32_0 = arith.constant 0 : i32
    %c0_i32_1 = arith.constant 0 : i32
    %c0_i32_2 = arith.constant 0 : i32
    return %c0_i32, %c0_i32_0, %c0_i32_1 : i32, i32, i32
  }
  func.func @transform_11(%arg0: i32) -> (i32, i32) {
    %c0_i32 = arith.constant 0 : i32
    %c0_i32_0 = arith.constant 0 : i32
    %c0_i32_1 = arith.constant 0 : i32
    return %c0_i32, %c0_i32_0 : i32, i32
  }
  func.func @transform_12(%arg0: i32) -> (i32, i32) {
    %c0_i32 = arith.constant 0 : i32
    %c0_i32_0 = arith.constant 0 : i32
    %c0_i32_1 = arith.constant 0 : i32
    return %c0_i32, %c0_i32_0 : i32, i32
  }
  func.func @transform_13(%arg0: i32) -> (i32, i32) {
    %c0_i32 = arith.constant 0 : i32
    %c0_i32_0 = arith.constant 0 : i32
    %c0_i32_1 = arith.constant 0 : i32
    return %c0_i32, %c0_i32_0 : i32, i32
  }
  func.func @transform_14(%arg0: i32) -> (i32, i32) {
    %c0_i32 = arith.constant 0 : i32
    %c0_i32_0 = arith.constant 0 : i32
    %c0_i32_1 = arith.constant 0 : i32
    return %c0_i32, %c0_i32_0 : i32, i32
  }
  func.func @transform_15(%arg0: i32) -> (i32, i32) {
    %c0_i32 = arith.constant 0 : i32
    %c0_i32_0 = arith.constant 0 : i32
    %c0_i32_1 = arith.constant 0 : i32
    return %c0_i32, %c0_i32_0 : i32, i32
  }
  func.func @transform_16(%arg0: i32) -> (i32, i32) {
    %c0_i32 = arith.constant 0 : i32
    %c0_i32_0 = arith.constant 0 : i32
    %c0_i32_1 = arith.constant 0 : i32
    return %c0_i32, %c0_i32_0 : i32, i32
  }
  func.func @transform_17(%arg0: i32) -> (i32, i32) {
    %c0_i32 = arith.constant 0 : i32
    %c0_i32_0 = arith.constant 0 : i32
    %c0_i32_1 = arith.constant 0 : i32
    return %c0_i32, %c0_i32_0 : i32, i32
  }
  func.func @transform_18(%arg0: i32) -> (i32, i32) {
    %c0_i32 = arith.constant 0 : i32
    %c0_i32_0 = arith.constant 0 : i32
    %c0_i32_1 = arith.constant 0 : i32
    return %c0_i32, %c0_i32_0 : i32, i32
  }
  func.func @transform_19(%arg0: i32) -> (i32, i32, i32) {
    %c0_i32 = arith.constant 0 : i32
    %c0_i32_0 = arith.constant 0 : i32
    %c0_i32_1 = arith.constant 0 : i32
    return %arg0, %c0_i32, %c0_i32_0 : i32, i32, i32
  }
}

module attributes {stable_mosaic.version = 11 : i64} {
  func.func @_fused_linear_kernel(%arg0: i32, %arg1: memref<32x128xf32, #tpu.memory_space<vmem>>, %arg2: memref<1x128xf32, #tpu.memory_space<vmem>>, %arg3: memref<1x128xf32, #tpu.memory_space<vmem>>, %arg4: memref<128x64xbf16, #tpu.memory_space<vmem>>, %arg5: memref<32x64xf32, #tpu.memory_space<vmem>>) attributes {dimension_semantics = [#tpu.dimension_semantics<parallel>], iteration_bounds = array<i64: 1>, scalar_prefetch = 0 : i64, scratch_operands = 0 : i64, tpu.core_type = #tpu.core_type<tc>, window_params = [{transform_indices = @transform_0, window_bounds = array<i64: 32, 128>}, {pipeline_mode = #tpu.pipeline_mode<synchronous>, transform_indices = @transform_1, window_bounds = array<i64: 1, 128>}, {pipeline_mode = #tpu.pipeline_mode<synchronous>, transform_indices = @transform_2, window_bounds = array<i64: 1, 128>}, {pipeline_mode = #tpu.pipeline_mode<synchronous>, transform_indices = @transform_3, window_bounds = array<i64: 128, 64>}, {transform_indices = @transform_4, window_bounds = array<i64: 32, 64>}]} {
    %c0 = arith.constant 0 : index
    %c0_0 = arith.constant 0 : index
    %0 = vector.load %arg1[%c0, %c0_0] : memref<32x128xf32, #tpu.memory_space<vmem>>, vector<32x128xf32>
    %c0_1 = arith.constant 0 : index
    %c0_2 = arith.constant 0 : index
    %1 = vector.load %arg2[%c0_1, %c0_2] : memref<1x128xf32, #tpu.memory_space<vmem>>, vector<1x128xf32>
    %c0_3 = arith.constant 0 : index
    %c0_4 = arith.constant 0 : index
    %2 = vector.load %arg3[%c0_3, %c0_4] : memref<1x128xf32, #tpu.memory_space<vmem>>, vector<1x128xf32>
    %cst = arith.constant dense<0.000000e+00> : vector<32xf32>
    %3 = vector.multi_reduction <add>, %0, %cst [1] : vector<32x128xf32> to vector<32xf32>
    %4 = vector.shape_cast %3 : vector<32xf32> to vector<32x1xf32>
    %cst_5 = arith.constant 1.280000e+02 : f32
    %5 = vector.broadcast %cst_5 : f32 to vector<32x1xf32>
    %6 = arith.divf %4, %5 : vector<32x1xf32>
    %7 = vector.broadcast %6 : vector<32x1xf32> to vector<32x128xf32>
    %8 = arith.subf %0, %7 : vector<32x128xf32>
    %9 = arith.mulf %8, %8 : vector<32x128xf32>
    %cst_6 = arith.constant dense<0.000000e+00> : vector<32xf32>
    %10 = vector.multi_reduction <add>, %9, %cst_6 [1] : vector<32x128xf32> to vector<32xf32>
    %11 = vector.shape_cast %10 : vector<32xf32> to vector<32x1xf32>
    %cst_7 = arith.constant 1.280000e+02 : f32
    %12 = vector.broadcast %cst_7 : f32 to vector<32x1xf32>
    %13 = arith.divf %11, %12 : vector<32x1xf32>
    %14 = vector.broadcast %6 : vector<32x1xf32> to vector<32x128xf32>
    %15 = arith.subf %0, %14 : vector<32x128xf32>
    %cst_8 = arith.constant 9.99999974E-6 : f32
    %16 = vector.broadcast %cst_8 : f32 to vector<32x1xf32>
    %17 = arith.addf %13, %16 : vector<32x1xf32>
    %18 = math.rsqrt %17 : vector<32x1xf32>
    %19 = vector.broadcast %18 : vector<32x1xf32> to vector<32x128xf32>
    %20 = arith.mulf %15, %19 : vector<32x128xf32>
    %21 = vector.broadcast %1 : vector<1x128xf32> to vector<32x128xf32>
    %22 = arith.mulf %20, %21 : vector<32x128xf32>
    %23 = vector.broadcast %2 : vector<1x128xf32> to vector<32x128xf32>
    %24 = arith.addf %22, %23 : vector<32x128xf32>
    %25 = arith.truncf %24 : vector<32x128xf32> to vector<32x128xbf16>
    %c0_9 = arith.constant 0 : index
    %c0_10 = arith.constant 0 : index
    %26 = vector.load %arg4[%c0_9, %c0_10] : memref<128x64xbf16, #tpu.memory_space<vmem>>, vector<128x64xbf16>
    %cst_11 = arith.constant dense<0.000000e+00> : vector<32x64xf32>
    %27 = tpu.matmul %25, %26, %cst_11 {dimension_numbers = #tpu.dot_dimension_numbers<[1], [0], [0], [1], [0, 0, 1, 1], [], []>} : vector<32x128xbf16>, vector<128x64xbf16>, vector<32x64xf32> -> vector<32x64xf32>
    %c0_12 = arith.constant 0 : index
    %c0_13 = arith.constant 0 : index
    %28 = vector.load %arg5[%c0_12, %c0_13] : memref<32x64xf32, #tpu.memory_space<vmem>>, vector<32x64xf32>
    tpu.vector_store %arg5[%c0_12, %c0_13], %27 {strides = array<i32>} : memref<32x64xf32, #tpu.memory_space<vmem>>, vector<32x64xf32>,
    return
  }
  func.func @transform_0(%arg0: i32) -> (i32, i32) {
    %c0_i32 = arith.constant 0 : i32
    %c0_i32_0 = arith.constant 0 : i32
    return %arg0, %c0_i32 : i32, i32
  }
  func.func @transform_1(%arg0: i32) -> (i32, i32) {
    %c0_i32 = arith.constant 0 : i32
    %c0_i32_0 = arith.constant 0 : i32
    %c0_i32_1 = arith.constant 0 : i32
    return %c0_i32, %c0_i32_0 : i32, i32
  }
  func.func @transform_2(%arg0: i32) -> (i32, i32) {
    %c0_i32 = arith.constant 0 : i32
    %c0_i32_0 = arith.constant 0 : i32
    %c0_i32_1 = arith.constant 0 : i32
    return %c0_i32, %c0_i32_0 : i32, i32
  }
  func.func @transform_3(%arg0: i32) -> (i32, i32) {
    %c0_i32 = arith.constant 0 : i32
    %c0_i32_0 = arith.constant 0 : i32
    %c0_i32_1 = arith.constant 0 : i32
    return %c0_i32, %c0_i32_0 : i32, i32
  }
  func.func @transform_4(%arg0: i32) -> (i32, i32) {
    %c0_i32 = arith.constant 0 : i32
    %c0_i32_0 = arith.constant 0 : i32
    return %arg0, %c0_i32 : i32, i32
  }
}

module attributes {stable_mosaic.version = 11 : i64} {
  func.func @_swin_block_kernel(%arg0: i32, %arg1: memref<1x16x64xf32, #tpu.memory_space<vmem>>, %arg2: memref<1x64xf32, #tpu.memory_space<vmem>>, %arg3: memref<1x64xf32, #tpu.memory_space<vmem>>, %arg4: memref<64x64xbf16, #tpu.memory_space<vmem>>, %arg5: memref<1x64xf32, #tpu.memory_space<vmem>>, %arg6: memref<64x64xbf16, #tpu.memory_space<vmem>>, %arg7: memref<1x64xf32, #tpu.memory_space<vmem>>, %arg8: memref<64x64xbf16, #tpu.memory_space<vmem>>, %arg9: memref<1x64xf32, #tpu.memory_space<vmem>>, %arg10: memref<4x64xf32, #tpu.memory_space<vmem>>, %arg11: memref<4x16x16xf32, #tpu.memory_space<vmem>>, %arg12: memref<64x64xbf16, #tpu.memory_space<vmem>>, %arg13: memref<1x64xf32, #tpu.memory_space<vmem>>, %arg14: memref<1x64xf32, #tpu.memory_space<vmem>>, %arg15: memref<1x64xf32, #tpu.memory_space<vmem>>, %arg16: memref<64x256xbf16, #tpu.memory_space<vmem>>, %arg17: memref<1x256xf32, #tpu.memory_space<vmem>>, %arg18: memref<256x64xbf16, #tpu.memory_space<vmem>>, %arg19: memref<1x64xf32, #tpu.memory_space<vmem>>, %arg20: memref<1x16x64xf32, #tpu.memory_space<vmem>>) attributes {dimension_semantics = [#tpu.dimension_semantics<parallel>], iteration_bounds = array<i64: 2>, scalar_prefetch = 0 : i64, scratch_operands = 0 : i64, tpu.core_type = #tpu.core_type<tc>, window_params = [{transform_indices = @transform_0, window_bounds = array<i64: 1, 16, 64>}, {pipeline_mode = #tpu.pipeline_mode<synchronous>, transform_indices = @transform_1, window_bounds = array<i64: 1, 64>}, {pipeline_mode = #tpu.pipeline_mode<synchronous>, transform_indices = @transform_2, window_bounds = array<i64: 1, 64>}, {pipeline_mode = #tpu.pipeline_mode<synchronous>, transform_indices = @transform_3, window_bounds = array<i64: 64, 64>}, {pipeline_mode = #tpu.pipeline_mode<synchronous>, transform_indices = @transform_4, window_bounds = array<i64: 1, 64>}, {pipeline_mode = #tpu.pipeline_mode<synchronous>, transform_indices = @transform_5, window_bounds = array<i64: 64, 64>}, {pipeline_mode = #tpu.pipeline_mode<synchronous>, transform_indices = @transform_6, window_bounds = array<i64: 1, 64>}, {pipeline_mode = #tpu.pipeline_mode<synchronous>, transform_indices = @transform_7, window_bounds = array<i64: 64, 64>}, {pipeline_mode = #tpu.pipeline_mode<synchronous>, transform_indices = @transform_8, window_bounds = array<i64: 1, 64>}, {pipeline_mode = #tpu.pipeline_mode<synchronous>, transform_indices = @transform_9, window_bounds = array<i64: 4, 64>}, {pipeline_mode = #tpu.pipeline_mode<synchronous>, transform_indices = @transform_10, window_bounds = array<i64: 4, 16, 16>}, {pipeline_mode = #tpu.pipeline_mode<synchronous>, transform_indices = @transform_11, window_bounds = array<i64: 64, 64>}, {pipeline_mode = #tpu.pipeline_mode<synchronous>, transform_indices = @transform_12, window_bounds = array<i64: 1, 64>}, {pipeline_mode = #tpu.pipeline_mode<synchronous>, transform_indices = @transform_13, window_bounds = array<i64: 1, 64>}, {pipeline_mode = #tpu.pipeline_mode<synchronous>, transform_indices = @transform_14, window_bounds = array<i64: 1, 64>}, {pipeline_mode = #tpu.pipeline_mode<synchronous>, transform_indices = @transform_15, window_bounds = array<i64: 64, 256>}, {pipeline_mode = #tpu.pipeline_mode<synchronous>, transform_indices = @transform_16, window_bounds = array<i64: 1, 256>}, {pipeline_mode = #tpu.pipeline_mode<synchronous>, transform_indices = @transform_17, window_bounds = array<i64: 256, 64>}, {pipeline_mode = #tpu.pipeline_mode<synchronous>, transform_indices = @transform_18, window_bounds = array<i64: 1, 64>}, {transform_indices = @transform_19, window_bounds = array<i64: 1, 16, 64>}]} {
    %c0 = arith.constant 0 : index
    %c0_0 = arith.constant 0 : index
    %c0_1 = arith.constant 0 : index
    %0 = vector.load %arg1[%c0, %c0_0, %c0_1] : memref<1x16x64xf32, #tpu.memory_space<vmem>>, vector<1x16x64xf32>
    %1 = vector.shape_cast %0 : vector<1x16x64xf32> to vector<16x64xf32>
    %c0_2 = arith.constant 0 : index
    %c0_3 = arith.constant 0 : index
    %2 = vector.load %arg2[%c0_2, %c0_3] : memref<1x64xf32, #tpu.memory_space<vmem>>, vector<1x64xf32>
    %c0_4 = arith.constant 0 : index
    %c0_5 = arith.constant 0 : index
    %3 = vector.load %arg3[%c0_4, %c0_5] : memref<1x64xf32, #tpu.memory_space<vmem>>, vector<1x64xf32>
    %cst = arith.constant dense<0.000000e+00> : vector<16xf32>
    %4 = vector.multi_reduction <add>, %1, %cst [1] : vector<16x64xf32> to vector<16xf32>
    %5 = vector.shape_cast %4 : vector<16xf32> to vector<16x1xf32>
    %cst_6 = arith.constant 6.400000e+01 : f32
    %6 = vector.broadcast %cst_6 : f32 to vector<16x1xf32>
    %7 = arith.divf %5, %6 : vector<16x1xf32>
    %8 = vector.broadcast %7 : vector<16x1xf32> to vector<16x64xf32>
    %9 = arith.subf %1, %8 : vector<16x64xf32>
    %10 = arith.mulf %9, %9 : vector<16x64xf32>
    %cst_7 = arith.constant dense<0.000000e+00> : vector<16xf32>
    %11 = vector.multi_reduction <add>, %10, %cst_7 [1] : vector<16x64xf32> to vector<16xf32>
    %12 = vector.shape_cast %11 : vector<16xf32> to vector<16x1xf32>
    %cst_8 = arith.constant 6.400000e+01 : f32
    %13 = vector.broadcast %cst_8 : f32 to vector<16x1xf32>
    %14 = arith.divf %12, %13 : vector<16x1xf32>
    %15 = vector.broadcast %7 : vector<16x1xf32> to vector<16x64xf32>
    %16 = arith.subf %1, %15 : vector<16x64xf32>
    %cst_9 = arith.constant 9.99999974E-6 : f32
    %17 = vector.broadcast %cst_9 : f32 to vector<16x1xf32>
    %18 = arith.addf %14, %17 : vector<16x1xf32>
    %19 = math.rsqrt %18 : vector<16x1xf32>
    %20 = vector.broadcast %19 : vector<16x1xf32> to vector<16x64xf32>
    %21 = arith.mulf %16, %20 : vector<16x64xf32>
    %22 = vector.broadcast %2 : vector<1x64xf32> to vector<16x64xf32>
    %23 = arith.mulf %21, %22 : vector<16x64xf32>
    %24 = vector.broadcast %3 : vector<1x64xf32> to vector<16x64xf32>
    %25 = arith.addf %23, %24 : vector<16x64xf32>
    %26 = arith.truncf %25 : vector<16x64xf32> to vector<16x64xbf16>
    %c0_10 = arith.constant 0 : index
    %c0_11 = arith.constant 0 : index
    %27 = vector.load %arg4[%c0_10, %c0_11] : memref<64x64xbf16, #tpu.memory_space<vmem>>, vector<64x64xbf16>
    %cst_12 = arith.constant dense<0.000000e+00> : vector<16x64xf32>
    %28 = tpu.matmul %26, %27, %cst_12 {dimension_numbers = #tpu.dot_dimension_numbers<[1], [0], [0], [1], [0, 0, 1, 1], [], []>} : vector<16x64xbf16>, vector<64x64xbf16>, vector<16x64xf32> -> vector<16x64xf32>
    %c0_13 = arith.constant 0 : index
    %c0_14 = arith.constant 0 : index
    %29 = vector.load %arg5[%c0_13, %c0_14] : memref<1x64xf32, #tpu.memory_space<vmem>>, vector<1x64xf32>
    %30 = vector.broadcast %29 : vector<1x64xf32> to vector<16x64xf32>
    %31 = arith.addf %28, %30 : vector<16x64xf32>
    %c0_15 = arith.constant 0 : index
    %c0_16 = arith.constant 0 : index
    %32 = vector.load %arg6[%c0_15, %c0_16] : memref<64x64xbf16, #tpu.memory_space<vmem>>, vector<64x64xbf16>
    %cst_17 = arith.constant dense<0.000000e+00> : vector<16x64xf32>
    %33 = tpu.matmul %26, %32, %cst_17 {dimension_numbers = #tpu.dot_dimension_numbers<[1], [0], [0], [1], [0, 0, 1, 1], [], []>} : vector<16x64xbf16>, vector<64x64xbf16>, vector<16x64xf32> -> vector<16x64xf32>
    %c0_18 = arith.constant 0 : index
    %c0_19 = arith.constant 0 : index
    %34 = vector.load %arg7[%c0_18, %c0_19] : memref<1x64xf32, #tpu.memory_space<vmem>>, vector<1x64xf32>
    %35 = vector.broadcast %34 : vector<1x64xf32> to vector<16x64xf32>
    %36 = arith.addf %33, %35 : vector<16x64xf32>
    %c0_20 = arith.constant 0 : index
    %c0_21 = arith.constant 0 : index
    %37 = vector.load %arg8[%c0_20, %c0_21] : memref<64x64xbf16, #tpu.memory_space<vmem>>, vector<64x64xbf16>
    %cst_22 = arith.constant dense<0.000000e+00> : vector<16x64xf32>
    %38 = tpu.matmul %26, %37, %cst_22 {dimension_numbers = #tpu.dot_dimension_numbers<[1], [0], [0], [1], [0, 0, 1, 1], [], []>} : vector<16x64xbf16>, vector<64x64xbf16>, vector<16x64xf32> -> vector<16x64xf32>
    %c0_23 = arith.constant 0 : index
    %c0_24 = arith.constant 0 : index
    %39 = vector.load %arg9[%c0_23, %c0_24] : memref<1x64xf32, #tpu.memory_space<vmem>>, vector<1x64xf32>
    %40 = vector.broadcast %39 : vector<1x64xf32> to vector<16x64xf32>
    %41 = arith.addf %38, %40 : vector<16x64xf32>
    %c0_25 = arith.constant 0 : index
    %c0_26 = arith.constant 0 : index
    %42 = vector.load %arg10[%c0_25, %c0_26] : memref<4x64xf32, #tpu.memory_space<vmem>>, vector<4x64xf32>
    %43 = arith.truncf %36 : vector<16x64xf32> to vector<16x64xbf16>
    %cst_27 = arith.constant 0.000000e+00 : f32
    %44 = vector.broadcast %cst_27 : f32 to vector<16x64xf32>
    %45 = vector.extract_strided_slice %42 {offsets = [0, 0], sizes = [1, 64], strides = [1, 1]} : vector<4x64xf32> to vector<1x64xf32>
    %46 = vector.broadcast %45 : vector<1x64xf32> to vector<16x64xf32>
    %47 = arith.mulf %31, %46 : vector<16x64xf32>
    %cst_28 = arith.constant 2.500000e-01 : f32
    %48 = vector.broadcast %cst_28 : f32 to vector<16x64xf32>
    %49 = arith.mulf %47, %48 : vector<16x64xf32>
    %50 = arith.truncf %49 : vector<16x64xf32> to vector<16x64xbf16>
    %cst_29 = arith.constant dense<0.000000e+00> : vector<16x16xf32>
    %51 = tpu.matmul %50, %43, %cst_29 {dimension_numbers = #tpu.dot_dimension_numbers<[1], [1], [0], [0], [0, 0, 1, 0], [], []>} : vector<16x64xbf16>, vector<16x64xbf16>, vector<16x16xf32> -> vector<16x16xf32>
    %c0_30 = arith.constant 0 : index
    %c0_31 = arith.constant 0 : index
    %c0_32 = arith.constant 0 : index
    %52 = vector.load %arg11[%c0_30, %c0_31, %c0_32] : memref<4x16x16xf32, #tpu.memory_space<vmem>>, vector<1x16x16xf32>
    %53 = vector.shape_cast %52 : vector<1x16x16xf32> to vector<16x16xf32>
    %54 = arith.addf %51, %53 : vector<16x16xf32>
    %cst_33 = arith.constant dense<0xFF800000> : vector<16xf32>
    %55 = vector.multi_reduction <maximumf>, %54, %cst_33 [1] : vector<16x16xf32> to vector<16xf32>
    %56 = vector.shape_cast %55 : vector<16xf32> to vector<16x1xf32>
    %57 = vector.broadcast %56 : vector<16x1xf32> to vector<16x16xf32>
    %58 = arith.subf %54, %57 : vector<16x16xf32>
    %59 = math.exp %58 : vector<16x16xf32>
    %cst_34 = arith.constant dense<0.000000e+00> : vector<16xf32>
    %60 = vector.multi_reduction <add>, %59, %cst_34 [1] : vector<16x16xf32> to vector<16xf32>
    %61 = vector.shape_cast %60 : vector<16xf32> to vector<16x1xf32>
    %62 = tpu.reciprocal %61 {approx = true} : vector<16x1xf32> -> vector<16x1xf32>
    %63 = vector.broadcast %62 : vector<16x1xf32> to vector<16x16xf32>
    %64 = arith.mulf %59, %63 : vector<16x16xf32>
    %65 = vector.broadcast %45 : vector<1x64xf32> to vector<16x64xf32>
    %66 = arith.mulf %41, %65 : vector<16x64xf32>
    %67 = arith.truncf %66 : vector<16x64xf32> to vector<16x64xbf16>
    %68 = arith.truncf %64 : vector<16x16xf32> to vector<16x16xbf16>
    %cst_35 = arith.constant dense<0.000000e+00> : vector<16x64xf32>
    %69 = tpu.matmul %68, %67, %cst_35 {dimension_numbers = #tpu.dot_dimension_numbers<[1], [0], [0], [1], [0, 0, 1, 1], [], []>} : vector<16x16xbf16>, vector<16x64xbf16>, vector<16x64xf32> -> vector<16x64xf32>
    %70 = arith.addf %44, %69 : vector<16x64xf32>
    %71 = vector.extract_strided_slice %42 {offsets = [1, 0], sizes = [1, 64], strides = [1, 1]} : vector<4x64xf32> to vector<1x64xf32>
    %72 = vector.broadcast %71 : vector<1x64xf32> to vector<16x64xf32>
    %73 = arith.mulf %31, %72 : vector<16x64xf32>
    %cst_36 = arith.constant 2.500000e-01 : f32
    %74 = vector.broadcast %cst_36 : f32 to vector<16x64xf32>
    %75 = arith.mulf %73, %74 : vector<16x64xf32>
    %76 = arith.truncf %75 : vector<16x64xf32> to vector<16x64xbf16>
    %cst_37 = arith.constant dense<0.000000e+00> : vector<16x16xf32>
    %77 = tpu.matmul %76, %43, %cst_37 {dimension_numbers = #tpu.dot_dimension_numbers<[1], [1], [0], [0], [0, 0, 1, 0], [], []>} : vector<16x64xbf16>, vector<16x64xbf16>, vector<16x16xf32> -> vector<16x16xf32>
    %c1 = arith.constant 1 : index
    %c0_38 = arith.constant 0 : index
    %c0_39 = arith.constant 0 : index
    %78 = vector.load %arg11[%c1, %c0_38, %c0_39] : memref<4x16x16xf32, #tpu.memory_space<vmem>>, vector<1x16x16xf32>
    %79 = vector.shape_cast %78 : vector<1x16x16xf32> to vector<16x16xf32>
    %80 = arith.addf %77, %79 : vector<16x16xf32>
    %cst_40 = arith.constant dense<0xFF800000> : vector<16xf32>
    %81 = vector.multi_reduction <maximumf>, %80, %cst_40 [1] : vector<16x16xf32> to vector<16xf32>
    %82 = vector.shape_cast %81 : vector<16xf32> to vector<16x1xf32>
    %83 = vector.broadcast %82 : vector<16x1xf32> to vector<16x16xf32>
    %84 = arith.subf %80, %83 : vector<16x16xf32>
    %85 = math.exp %84 : vector<16x16xf32>
    %cst_41 = arith.constant dense<0.000000e+00> : vector<16xf32>
    %86 = vector.multi_reduction <add>, %85, %cst_41 [1] : vector<16x16xf32> to vector<16xf32>
    %87 = vector.shape_cast %86 : vector<16xf32> to vector<16x1xf32>
    %88 = tpu.reciprocal %87 {approx = true} : vector<16x1xf32> -> vector<16x1xf32>
    %89 = vector.broadcast %88 : vector<16x1xf32> to vector<16x16xf32>
    %90 = arith.mulf %85, %89 : vector<16x16xf32>
    %91 = vector.broadcast %71 : vector<1x64xf32> to vector<16x64xf32>
    %92 = arith.mulf %41, %91 : vector<16x64xf32>
    %93 = arith.truncf %92 : vector<16x64xf32> to vector<16x64xbf16>
    %94 = arith.truncf %90 : vector<16x16xf32> to vector<16x16xbf16>
    %cst_42 = arith.constant dense<0.000000e+00> : vector<16x64xf32>
    %95 = tpu.matmul %94, %93, %cst_42 {dimension_numbers = #tpu.dot_dimension_numbers<[1], [0], [0], [1], [0, 0, 1, 1], [], []>} : vector<16x16xbf16>, vector<16x64xbf16>, vector<16x64xf32> -> vector<16x64xf32>
    %96 = arith.addf %70, %95 : vector<16x64xf32>
    %97 = vector.extract_strided_slice %42 {offsets = [2, 0], sizes = [1, 64], strides = [1, 1]} : vector<4x64xf32> to vector<1x64xf32>
    %98 = vector.broadcast %97 : vector<1x64xf32> to vector<16x64xf32>
    %99 = arith.mulf %31, %98 : vector<16x64xf32>
    %cst_43 = arith.constant 2.500000e-01 : f32
    %100 = vector.broadcast %cst_43 : f32 to vector<16x64xf32>
    %101 = arith.mulf %99, %100 : vector<16x64xf32>
    %102 = arith.truncf %101 : vector<16x64xf32> to vector<16x64xbf16>
    %cst_44 = arith.constant dense<0.000000e+00> : vector<16x16xf32>
    %103 = tpu.matmul %102, %43, %cst_44 {dimension_numbers = #tpu.dot_dimension_numbers<[1], [1], [0], [0], [0, 0, 1, 0], [], []>} : vector<16x64xbf16>, vector<16x64xbf16>, vector<16x16xf32> -> vector<16x16xf32>
    %c2 = arith.constant 2 : index
    %c0_45 = arith.constant 0 : index
    %c0_46 = arith.constant 0 : index
    %104 = vector.load %arg11[%c2, %c0_45, %c0_46] : memref<4x16x16xf32, #tpu.memory_space<vmem>>, vector<1x16x16xf32>
    %105 = vector.shape_cast %104 : vector<1x16x16xf32> to vector<16x16xf32>
    %106 = arith.addf %103, %105 : vector<16x16xf32>
    %cst_47 = arith.constant dense<0xFF800000> : vector<16xf32>
    %107 = vector.multi_reduction <maximumf>, %106, %cst_47 [1] : vector<16x16xf32> to vector<16xf32>
    %108 = vector.shape_cast %107 : vector<16xf32> to vector<16x1xf32>
    %109 = vector.broadcast %108 : vector<16x1xf32> to vector<16x16xf32>
    %110 = arith.subf %106, %109 : vector<16x16xf32>
    %111 = math.exp %110 : vector<16x16xf32>
    %cst_48 = arith.constant dense<0.000000e+00> : vector<16xf32>
    %112 = vector.multi_reduction <add>, %111, %cst_48 [1] : vector<16x16xf32> to vector<16xf32>
    %113 = vector.shape_cast %112 : vector<16xf32> to vector<16x1xf32>
    %114 = tpu.reciprocal %113 {approx = true} : vector<16x1xf32> -> vector<16x1xf32>
    %115 = vector.broadcast %114 : vector<16x1xf32> to vector<16x16xf32>
    %116 = arith.mulf %111, %115 : vector<16x16xf32>
    %117 = vector.broadcast %97 : vector<1x64xf32> to vector<16x64xf32>
    %118 = arith.mulf %41, %117 : vector<16x64xf32>
    %119 = arith.truncf %118 : vector<16x64xf32> to vector<16x64xbf16>
    %120 = arith.truncf %116 : vector<16x16xf32> to vector<16x16xbf16>
    %cst_49 = arith.constant dense<0.000000e+00> : vector<16x64xf32>
    %121 = tpu.matmul %120, %119, %cst_49 {dimension_numbers = #tpu.dot_dimension_numbers<[1], [0], [0], [1], [0, 0, 1, 1], [], []>} : vector<16x16xbf16>, vector<16x64xbf16>, vector<16x64xf32> -> vector<16x64xf32>
    %122 = arith.addf %96, %121 : vector<16x64xf32>
    %123 = vector.extract_strided_slice %42 {offsets = [3, 0], sizes = [1, 64], strides = [1, 1]} : vector<4x64xf32> to vector<1x64xf32>
    %124 = vector.broadcast %123 : vector<1x64xf32> to vector<16x64xf32>
    %125 = arith.mulf %31, %124 : vector<16x64xf32>
    %cst_50 = arith.constant 2.500000e-01 : f32
    %126 = vector.broadcast %cst_50 : f32 to vector<16x64xf32>
    %127 = arith.mulf %125, %126 : vector<16x64xf32>
    %128 = arith.truncf %127 : vector<16x64xf32> to vector<16x64xbf16>
    %cst_51 = arith.constant dense<0.000000e+00> : vector<16x16xf32>
    %129 = tpu.matmul %128, %43, %cst_51 {dimension_numbers = #tpu.dot_dimension_numbers<[1], [1], [0], [0], [0, 0, 1, 0], [], []>} : vector<16x64xbf16>, vector<16x64xbf16>, vector<16x16xf32> -> vector<16x16xf32>
    %c3 = arith.constant 3 : index
    %c0_52 = arith.constant 0 : index
    %c0_53 = arith.constant 0 : index
    %130 = vector.load %arg11[%c3, %c0_52, %c0_53] : memref<4x16x16xf32, #tpu.memory_space<vmem>>, vector<1x16x16xf32>
    %131 = vector.shape_cast %130 : vector<1x16x16xf32> to vector<16x16xf32>
    %132 = arith.addf %129, %131 : vector<16x16xf32>
    %cst_54 = arith.constant dense<0xFF800000> : vector<16xf32>
    %133 = vector.multi_reduction <maximumf>, %132, %cst_54 [1] : vector<16x16xf32> to vector<16xf32>
    %134 = vector.shape_cast %133 : vector<16xf32> to vector<16x1xf32>
    %135 = vector.broadcast %134 : vector<16x1xf32> to vector<16x16xf32>
    %136 = arith.subf %132, %135 : vector<16x16xf32>
    %137 = math.exp %136 : vector<16x16xf32>
    %cst_55 = arith.constant dense<0.000000e+00> : vector<16xf32>
    %138 = vector.multi_reduction <add>, %137, %cst_55 [1] : vector<16x16xf32> to vector<16xf32>
    %139 = vector.shape_cast %138 : vector<16xf32> to vector<16x1xf32>
    %140 = tpu.reciprocal %139 {approx = true} : vector<16x1xf32> -> vector<16x1xf32>
    %141 = vector.broadcast %140 : vector<16x1xf32> to vector<16x16xf32>
    %142 = arith.mulf %137, %141 : vector<16x16xf32>
    %143 = vector.broadcast %123 : vector<1x64xf32> to vector<16x64xf32>
    %144 = arith.mulf %41, %143 : vector<16x64xf32>
    %145 = arith.truncf %144 : vector<16x64xf32> to vector<16x64xbf16>
    %146 = arith.truncf %142 : vector<16x16xf32> to vector<16x16xbf16>
    %cst_56 = arith.constant dense<0.000000e+00> : vector<16x64xf32>
    %147 = tpu.matmul %146, %145, %cst_56 {dimension_numbers = #tpu.dot_dimension_numbers<[1], [0], [0], [1], [0, 0, 1, 1], [], []>} : vector<16x16xbf16>, vector<16x64xbf16>, vector<16x64xf32> -> vector<16x64xf32>
    %148 = arith.addf %122, %147 : vector<16x64xf32>
    %149 = arith.truncf %148 : vector<16x64xf32> to vector<16x64xbf16>
    %c0_57 = arith.constant 0 : index
    %c0_58 = arith.constant 0 : index
    %150 = vector.load %arg12[%c0_57, %c0_58] : memref<64x64xbf16, #tpu.memory_space<vmem>>, vector<64x64xbf16>
    %cst_59 = arith.constant dense<0.000000e+00> : vector<16x64xf32>
    %151 = tpu.matmul %149, %150, %cst_59 {dimension_numbers = #tpu.dot_dimension_numbers<[1], [0], [0], [1], [0, 0, 1, 1], [], []>} : vector<16x64xbf16>, vector<64x64xbf16>, vector<16x64xf32> -> vector<16x64xf32>
    %c0_60 = arith.constant 0 : index
    %c0_61 = arith.constant 0 : index
    %152 = vector.load %arg13[%c0_60, %c0_61] : memref<1x64xf32, #tpu.memory_space<vmem>>, vector<1x64xf32>
    %153 = vector.broadcast %152 : vector<1x64xf32> to vector<16x64xf32>
    %154 = arith.addf %151, %153 : vector<16x64xf32>
    %155 = arith.addf %1, %154 : vector<16x64xf32>
    %c0_62 = arith.constant 0 : index
    %c0_63 = arith.constant 0 : index
    %156 = vector.load %arg14[%c0_62, %c0_63] : memref<1x64xf32, #tpu.memory_space<vmem>>, vector<1x64xf32>
    %c0_64 = arith.constant 0 : index
    %c0_65 = arith.constant 0 : index
    %157 = vector.load %arg15[%c0_64, %c0_65] : memref<1x64xf32, #tpu.memory_space<vmem>>, vector<1x64xf32>
    %cst_66 = arith.constant dense<0.000000e+00> : vector<16xf32>
    %158 = vector.multi_reduction <add>, %155, %cst_66 [1] : vector<16x64xf32> to vector<16xf32>
    %159 = vector.shape_cast %158 : vector<16xf32> to vector<16x1xf32>
    %cst_67 = arith.constant 6.400000e+01 : f32
    %160 = vector.broadcast %cst_67 : f32 to vector<16x1xf32>
    %161 = arith.divf %159, %160 : vector<16x1xf32>
    %162 = vector.broadcast %161 : vector<16x1xf32> to vector<16x64xf32>
    %163 = arith.subf %155, %162 : vector<16x64xf32>
    %164 = arith.mulf %163, %163 : vector<16x64xf32>
    %cst_68 = arith.constant dense<0.000000e+00> : vector<16xf32>
    %165 = vector.multi_reduction <add>, %164, %cst_68 [1] : vector<16x64xf32> to vector<16xf32>
    %166 = vector.shape_cast %165 : vector<16xf32> to vector<16x1xf32>
    %cst_69 = arith.constant 6.400000e+01 : f32
    %167 = vector.broadcast %cst_69 : f32 to vector<16x1xf32>
    %168 = arith.divf %166, %167 : vector<16x1xf32>
    %169 = vector.broadcast %161 : vector<16x1xf32> to vector<16x64xf32>
    %170 = arith.subf %155, %169 : vector<16x64xf32>
    %cst_70 = arith.constant 9.99999974E-6 : f32
    %171 = vector.broadcast %cst_70 : f32 to vector<16x1xf32>
    %172 = arith.addf %168, %171 : vector<16x1xf32>
    %173 = math.rsqrt %172 : vector<16x1xf32>
    %174 = vector.broadcast %173 : vector<16x1xf32> to vector<16x64xf32>
    %175 = arith.mulf %170, %174 : vector<16x64xf32>
    %176 = vector.broadcast %156 : vector<1x64xf32> to vector<16x64xf32>
    %177 = arith.mulf %175, %176 : vector<16x64xf32>
    %178 = vector.broadcast %157 : vector<1x64xf32> to vector<16x64xf32>
    %179 = arith.addf %177, %178 : vector<16x64xf32>
    %180 = arith.truncf %179 : vector<16x64xf32> to vector<16x64xbf16>
    %c0_71 = arith.constant 0 : index
    %c0_72 = arith.constant 0 : index
    %181 = vector.load %arg16[%c0_71, %c0_72] : memref<64x256xbf16, #tpu.memory_space<vmem>>, vector<64x256xbf16>
    %cst_73 = arith.constant dense<0.000000e+00> : vector<16x256xf32>
    %182 = tpu.matmul %180, %181, %cst_73 {dimension_numbers = #tpu.dot_dimension_numbers<[1], [0], [0], [1], [0, 0, 1, 1], [], []>} : vector<16x64xbf16>, vector<64x256xbf16>, vector<16x256xf32> -> vector<16x256xf32>
    %c0_74 = arith.constant 0 : index
    %c0_75 = arith.constant 0 : index
    %183 = vector.load %arg17[%c0_74, %c0_75] : memref<1x256xf32, #tpu.memory_space<vmem>>, vector<1x256xf32>
    %184 = vector.broadcast %183 : vector<1x256xf32> to vector<16x256xf32>
    %185 = arith.addf %182, %184 : vector<16x256xf32>
    %cst_76 = arith.constant 5.000000e-01 : f32
    %186 = vector.broadcast %cst_76 : f32 to vector<16x256xf32>
    %187 = arith.mulf %186, %185 : vector<16x256xf32>
    %cst_77 = arith.constant 4.471500e-02 : f32
    %188 = vector.broadcast %cst_77 : f32 to vector<16x256xf32>
    %189 = arith.mulf %188, %185 : vector<16x256xf32>
    %190 = arith.mulf %189, %185 : vector<16x256xf32>
    %191 = arith.mulf %190, %185 : vector<16x256xf32>
    %192 = arith.addf %185, %191 : vector<16x256xf32>
    %cst_78 = arith.constant 0.797884583 : f32
    %193 = vector.broadcast %cst_78 : f32 to vector<16x256xf32>
    %194 = arith.mulf %193, %192 : vector<16x256xf32>
    %195 = math.tanh %194 : vector<16x256xf32>
    %cst_79 = arith.constant 1.000000e+00 : f32
    %196 = vector.broadcast %cst_79 : f32 to vector<16x256xf32>
    %197 = arith.addf %196, %195 : vector<16x256xf32>
    %198 = arith.mulf %187, %197 : vector<16x256xf32>
    %199 = arith.truncf %198 : vector<16x256xf32> to vector<16x256xbf16>
    %c0_80 = arith.constant 0 : index
    %c0_81 = arith.constant 0 : index
    %200 = vector.load %arg18[%c0_80, %c0_81] : memref<256x64xbf16, #tpu.memory_space<vmem>>, vector<256x64xbf16>
    %cst_82 = arith.constant dense<0.000000e+00> : vector<16x64xf32>
    %201 = tpu.matmul %199, %200, %cst_82 {dimension_numbers = #tpu.dot_dimension_numbers<[1], [0], [0], [1], [0, 0, 1, 1], [], []>} : vector<16x256xbf16>, vector<256x64xbf16>, vector<16x64xf32> -> vector<16x64xf32>
    %c0_83 = arith.constant 0 : index
    %c0_84 = arith.constant 0 : index
    %202 = vector.load %arg19[%c0_83, %c0_84] : memref<1x64xf32, #tpu.memory_space<vmem>>, vector<1x64xf32>
    %203 = vector.broadcast %202 : vector<1x64xf32> to vector<16x64xf32>
    %204 = arith.addf %201, %203 : vector<16x64xf32>
    %205 = arith.addf %155, %204 : vector<16x64xf32>
    %c0_85 = arith.constant 0 : index
    %c0_86 = arith.constant 0 : index
    %c0_87 = arith.constant 0 : index
    %206 = vector.load %arg20[%c0_85, %c0_86, %c0_87] : memref<1x16x64xf32, #tpu.memory_space<vmem>>, vector<1x16x64xf32>
    %207 = vector.shape_cast %206 : vector<1x16x64xf32> to vector<16x64xf32>
    %208 = vector.shape_cast %205 : vector<16x64xf32> to vector<1x16x64xf32>
    tpu.vector_store %arg20[%c0_85, %c0_86, %c0_87], %208 {strides = array<i32>} : memref<1x16x64xf32, #tpu.memory_space<vmem>>, vector<1x16x64xf32>,
    return
  }
  func.func @transform_0(%arg0: i32) -> (i32, i32, i32) {
    %c0_i32 = arith.constant 0 : i32
    %c0_i32_0 = arith.constant 0 : i32
    %c0_i32_1 = arith.constant 0 : i32
    return %arg0, %c0_i32, %c0_i32_0 : i32, i32, i32
  }
  func.func @transform_1(%arg0: i32) -> (i32, i32) {
    %c0_i32 = arith.constant 0 : i32
    %c0_i32_0 = arith.constant 0 : i32
    %c0_i32_1 = arith.constant 0 : i32
    return %c0_i32, %c0_i32_0 : i32, i32
  }
  func.func @transform_2(%arg0: i32) -> (i32, i32) {
    %c0_i32 = arith.constant 0 : i32
    %c0_i32_0 = arith.constant 0 : i32
    %c0_i32_1 = arith.constant 0 : i32
    return %c0_i32, %c0_i32_0 : i32, i32
  }
  func.func @transform_3(%arg0: i32) -> (i32, i32) {
    %c0_i32 = arith.constant 0 : i32
    %c0_i32_0 = arith.constant 0 : i32
    %c0_i32_1 = arith.constant 0 : i32
    return %c0_i32, %c0_i32_0 : i32, i32
  }
  func.func @transform_4(%arg0: i32) -> (i32, i32) {
    %c0_i32 = arith.constant 0 : i32
    %c0_i32_0 = arith.constant 0 : i32
    %c0_i32_1 = arith.constant 0 : i32
    return %c0_i32, %c0_i32_0 : i32, i32
  }
  func.func @transform_5(%arg0: i32) -> (i32, i32) {
    %c0_i32 = arith.constant 0 : i32
    %c0_i32_0 = arith.constant 0 : i32
    %c0_i32_1 = arith.constant 0 : i32
    return %c0_i32, %c0_i32_0 : i32, i32
  }
  func.func @transform_6(%arg0: i32) -> (i32, i32) {
    %c0_i32 = arith.constant 0 : i32
    %c0_i32_0 = arith.constant 0 : i32
    %c0_i32_1 = arith.constant 0 : i32
    return %c0_i32, %c0_i32_0 : i32, i32
  }
  func.func @transform_7(%arg0: i32) -> (i32, i32) {
    %c0_i32 = arith.constant 0 : i32
    %c0_i32_0 = arith.constant 0 : i32
    %c0_i32_1 = arith.constant 0 : i32
    return %c0_i32, %c0_i32_0 : i32, i32
  }
  func.func @transform_8(%arg0: i32) -> (i32, i32) {
    %c0_i32 = arith.constant 0 : i32
    %c0_i32_0 = arith.constant 0 : i32
    %c0_i32_1 = arith.constant 0 : i32
    return %c0_i32, %c0_i32_0 : i32, i32
  }
  func.func @transform_9(%arg0: i32) -> (i32, i32) {
    %c0_i32 = arith.constant 0 : i32
    %c0_i32_0 = arith.constant 0 : i32
    %c0_i32_1 = arith.constant 0 : i32
    return %c0_i32, %c0_i32_0 : i32, i32
  }
  func.func @transform_10(%arg0: i32) -> (i32, i32, i32) {
    %c0_i32 = arith.constant 0 : i32
    %c0_i32_0 = arith.constant 0 : i32
    %c0_i32_1 = arith.constant 0 : i32
    %c0_i32_2 = arith.constant 0 : i32
    return %c0_i32, %c0_i32_0, %c0_i32_1 : i32, i32, i32
  }
  func.func @transform_11(%arg0: i32) -> (i32, i32) {
    %c0_i32 = arith.constant 0 : i32
    %c0_i32_0 = arith.constant 0 : i32
    %c0_i32_1 = arith.constant 0 : i32
    return %c0_i32, %c0_i32_0 : i32, i32
  }
  func.func @transform_12(%arg0: i32) -> (i32, i32) {
    %c0_i32 = arith.constant 0 : i32
    %c0_i32_0 = arith.constant 0 : i32
    %c0_i32_1 = arith.constant 0 : i32
    return %c0_i32, %c0_i32_0 : i32, i32
  }
  func.func @transform_13(%arg0: i32) -> (i32, i32) {
    %c0_i32 = arith.constant 0 : i32
    %c0_i32_0 = arith.constant 0 : i32
    %c0_i32_1 = arith.constant 0 : i32
    return %c0_i32, %c0_i32_0 : i32, i32
  }
  func.func @transform_14(%arg0: i32) -> (i32, i32) {
    %c0_i32 = arith.constant 0 : i32
    %c0_i32_0 = arith.constant 0 : i32
    %c0_i32_1 = arith.constant 0 : i32
    return %c0_i32, %c0_i32_0 : i32, i32
  }
  func.func @transform_15(%arg0: i32) -> (i32, i32) {
    %c0_i32 = arith.constant 0 : i32
    %c0_i32_0 = arith.constant 0 : i32
    %c0_i32_1 = arith.constant 0 : i32
    return %c0_i32, %c0_i32_0 : i32, i32
  }
  func.func @transform_16(%arg0: i32) -> (i32, i32) {
    %c0_i32 = arith.constant 0 : i32
    %c0_i32_0 = arith.constant 0 : i32
    %c0_i32_1 = arith.constant 0 : i32
    return %c0_i32, %c0_i32_0 : i32, i32
  }
  func.func @transform_17(%arg0: i32) -> (i32, i32) {
    %c0_i32 = arith.constant 0 : i32
    %c0_i32_0 = arith.constant 0 : i32
    %c0_i32_1 = arith.constant 0 : i32
    return %c0_i32, %c0_i32_0 : i32, i32
  }
  func.func @transform_18(%arg0: i32) -> (i32, i32) {
    %c0_i32 = arith.constant 0 : i32
    %c0_i32_0 = arith.constant 0 : i32
    %c0_i32_1 = arith.constant 0 : i32
    return %c0_i32, %c0_i32_0 : i32, i32
  }
  func.func @transform_19(%arg0: i32) -> (i32, i32, i32) {
    %c0_i32 = arith.constant 0 : i32
    %c0_i32_0 = arith.constant 0 : i32
    %c0_i32_1 = arith.constant 0 : i32
    return %arg0, %c0_i32, %c0_i32_0 : i32, i32, i32
  }
}

module attributes {stable_mosaic.version = 11 : i64} {
  func.func @_fused_linear_kernel(%arg0: i32, %arg1: memref<32x64xf32, #tpu.memory_space<vmem>>, %arg2: memref<1x64xf32, #tpu.memory_space<vmem>>, %arg3: memref<1x64xf32, #tpu.memory_space<vmem>>, %arg4: memref<64x128xbf16, #tpu.memory_space<vmem>>, %arg5: memref<32x128xf32, #tpu.memory_space<vmem>>) attributes {dimension_semantics = [#tpu.dimension_semantics<parallel>], iteration_bounds = array<i64: 1>, scalar_prefetch = 0 : i64, scratch_operands = 0 : i64, tpu.core_type = #tpu.core_type<tc>, window_params = [{transform_indices = @transform_0, window_bounds = array<i64: 32, 64>}, {pipeline_mode = #tpu.pipeline_mode<synchronous>, transform_indices = @transform_1, window_bounds = array<i64: 1, 64>}, {pipeline_mode = #tpu.pipeline_mode<synchronous>, transform_indices = @transform_2, window_bounds = array<i64: 1, 64>}, {pipeline_mode = #tpu.pipeline_mode<synchronous>, transform_indices = @transform_3, window_bounds = array<i64: 64, 128>}, {transform_indices = @transform_4, window_bounds = array<i64: 32, 128>}]} {
    %c0 = arith.constant 0 : index
    %c0_0 = arith.constant 0 : index
    %0 = vector.load %arg1[%c0, %c0_0] : memref<32x64xf32, #tpu.memory_space<vmem>>, vector<32x64xf32>
    %c0_1 = arith.constant 0 : index
    %c0_2 = arith.constant 0 : index
    %1 = vector.load %arg2[%c0_1, %c0_2] : memref<1x64xf32, #tpu.memory_space<vmem>>, vector<1x64xf32>
    %c0_3 = arith.constant 0 : index
    %c0_4 = arith.constant 0 : index
    %2 = vector.load %arg3[%c0_3, %c0_4] : memref<1x64xf32, #tpu.memory_space<vmem>>, vector<1x64xf32>
    %cst = arith.constant dense<0.000000e+00> : vector<32xf32>
    %3 = vector.multi_reduction <add>, %0, %cst [1] : vector<32x64xf32> to vector<32xf32>
    %4 = vector.shape_cast %3 : vector<32xf32> to vector<32x1xf32>
    %cst_5 = arith.constant 6.400000e+01 : f32
    %5 = vector.broadcast %cst_5 : f32 to vector<32x1xf32>
    %6 = arith.divf %4, %5 : vector<32x1xf32>
    %7 = vector.broadcast %6 : vector<32x1xf32> to vector<32x64xf32>
    %8 = arith.subf %0, %7 : vector<32x64xf32>
    %9 = arith.mulf %8, %8 : vector<32x64xf32>
    %cst_6 = arith.constant dense<0.000000e+00> : vector<32xf32>
    %10 = vector.multi_reduction <add>, %9, %cst_6 [1] : vector<32x64xf32> to vector<32xf32>
    %11 = vector.shape_cast %10 : vector<32xf32> to vector<32x1xf32>
    %cst_7 = arith.constant 6.400000e+01 : f32
    %12 = vector.broadcast %cst_7 : f32 to vector<32x1xf32>
    %13 = arith.divf %11, %12 : vector<32x1xf32>
    %14 = vector.broadcast %6 : vector<32x1xf32> to vector<32x64xf32>
    %15 = arith.subf %0, %14 : vector<32x64xf32>
    %cst_8 = arith.constant 9.99999974E-6 : f32
    %16 = vector.broadcast %cst_8 : f32 to vector<32x1xf32>
    %17 = arith.addf %13, %16 : vector<32x1xf32>
    %18 = math.rsqrt %17 : vector<32x1xf32>
    %19 = vector.broadcast %18 : vector<32x1xf32> to vector<32x64xf32>
    %20 = arith.mulf %15, %19 : vector<32x64xf32>
    %21 = vector.broadcast %1 : vector<1x64xf32> to vector<32x64xf32>
    %22 = arith.mulf %20, %21 : vector<32x64xf32>
    %23 = vector.broadcast %2 : vector<1x64xf32> to vector<32x64xf32>
    %24 = arith.addf %22, %23 : vector<32x64xf32>
    %25 = arith.truncf %24 : vector<32x64xf32> to vector<32x64xbf16>
    %c0_9 = arith.constant 0 : index
    %c0_10 = arith.constant 0 : index
    %26 = vector.load %arg4[%c0_9, %c0_10] : memref<64x128xbf16, #tpu.memory_space<vmem>>, vector<64x128xbf16>
    %cst_11 = arith.constant dense<0.000000e+00> : vector<32x128xf32>
    %27 = tpu.matmul %25, %26, %cst_11 {dimension_numbers = #tpu.dot_dimension_numbers<[1], [0], [0], [1], [0, 0, 1, 1], [], []>} : vector<32x64xbf16>, vector<64x128xbf16>, vector<32x128xf32> -> vector<32x128xf32>
    %c0_12 = arith.constant 0 : index
    %c0_13 = arith.constant 0 : index
    %28 = vector.load %arg5[%c0_12, %c0_13] : memref<32x128xf32, #tpu.memory_space<vmem>>, vector<32x128xf32>
    tpu.vector_store %arg5[%c0_12, %c0_13], %27 {strides = array<i32>} : memref<32x128xf32, #tpu.memory_space<vmem>>, vector<32x128xf32>,
    return
  }
  func.func @transform_0(%arg0: i32) -> (i32, i32) {
    %c0_i32 = arith.constant 0 : i32
    %c0_i32_0 = arith.constant 0 : i32
    return %arg0, %c0_i32 : i32, i32
  }
  func.func @transform_1(%arg0: i32) -> (i32, i32) {
    %c0_i32 = arith.constant 0 : i32
    %c0_i32_0 = arith.constant 0 : i32
    %c0_i32_1 = arith.constant 0 : i32
    return %c0_i32, %c0_i32_0 : i32, i32
  }
  func.func @transform_2(%arg0: i32) -> (i32, i32) {
    %c0_i32 = arith.constant 0 : i32
    %c0_i32_0 = arith.constant 0 : i32
    %c0_i32_1 = arith.constant 0 : i32
    return %c0_i32, %c0_i32_0 : i32, i32
  }
  func.func @transform_3(%arg0: i32) -> (i32, i32) {
    %c0_i32 = arith.constant 0 : i32
    %c0_i32_0 = arith.constant 0 : i32
    %c0_i32_1 = arith.constant 0 : i32
    return %c0_i32, %c0_i32_0 : i32, i32
  }
  func.func @transform_4(%arg0: i32) -> (i32, i32) {
    %c0_i32 = arith.constant 0 : i32
    %c0_i32_0 = arith.constant 0 : i32
    return %arg0, %c0_i32 : i32, i32
  }
}

module attributes {stable_mosaic.version = 11 : i64} {
  func.func @_ln_kernel(%arg0: i32, %arg1: memref<128x32xf32, #tpu.memory_space<vmem>>, %arg2: memref<1x32xf32, #tpu.memory_space<vmem>>, %arg3: memref<1x32xf32, #tpu.memory_space<vmem>>, %arg4: memref<128x32xf32, #tpu.memory_space<vmem>>) attributes {dimension_semantics = [#tpu.dimension_semantics<parallel>], iteration_bounds = array<i64: 1>, scalar_prefetch = 0 : i64, scratch_operands = 0 : i64, tpu.core_type = #tpu.core_type<tc>, window_params = [{transform_indices = @transform_0, window_bounds = array<i64: 128, 32>}, {pipeline_mode = #tpu.pipeline_mode<synchronous>, transform_indices = @transform_1, window_bounds = array<i64: 1, 32>}, {pipeline_mode = #tpu.pipeline_mode<synchronous>, transform_indices = @transform_2, window_bounds = array<i64: 1, 32>}, {transform_indices = @transform_3, window_bounds = array<i64: 128, 32>}]} {
    %c0 = arith.constant 0 : index
    %c0_0 = arith.constant 0 : index
    %0 = vector.load %arg1[%c0, %c0_0] : memref<128x32xf32, #tpu.memory_space<vmem>>, vector<128x32xf32>
    %c0_1 = arith.constant 0 : index
    %c0_2 = arith.constant 0 : index
    %1 = vector.load %arg2[%c0_1, %c0_2] : memref<1x32xf32, #tpu.memory_space<vmem>>, vector<1x32xf32>
    %c0_3 = arith.constant 0 : index
    %c0_4 = arith.constant 0 : index
    %2 = vector.load %arg3[%c0_3, %c0_4] : memref<1x32xf32, #tpu.memory_space<vmem>>, vector<1x32xf32>
    %cst = arith.constant dense<0.000000e+00> : vector<128xf32>
    %3 = vector.multi_reduction <add>, %0, %cst [1] : vector<128x32xf32> to vector<128xf32>
    %4 = vector.shape_cast %3 : vector<128xf32> to vector<128x1xf32>
    %cst_5 = arith.constant 3.200000e+01 : f32
    %5 = vector.broadcast %cst_5 : f32 to vector<128x1xf32>
    %6 = arith.divf %4, %5 : vector<128x1xf32>
    %7 = vector.broadcast %6 : vector<128x1xf32> to vector<128x32xf32>
    %8 = arith.subf %0, %7 : vector<128x32xf32>
    %9 = arith.mulf %8, %8 : vector<128x32xf32>
    %cst_6 = arith.constant dense<0.000000e+00> : vector<128xf32>
    %10 = vector.multi_reduction <add>, %9, %cst_6 [1] : vector<128x32xf32> to vector<128xf32>
    %11 = vector.shape_cast %10 : vector<128xf32> to vector<128x1xf32>
    %cst_7 = arith.constant 3.200000e+01 : f32
    %12 = vector.broadcast %cst_7 : f32 to vector<128x1xf32>
    %13 = arith.divf %11, %12 : vector<128x1xf32>
    %14 = vector.broadcast %6 : vector<128x1xf32> to vector<128x32xf32>
    %15 = arith.subf %0, %14 : vector<128x32xf32>
    %cst_8 = arith.constant 9.99999974E-6 : f32
    %16 = vector.broadcast %cst_8 : f32 to vector<128x1xf32>
    %17 = arith.addf %13, %16 : vector<128x1xf32>
    %18 = math.rsqrt %17 : vector<128x1xf32>
    %19 = vector.broadcast %18 : vector<128x1xf32> to vector<128x32xf32>
    %20 = arith.mulf %15, %19 : vector<128x32xf32>
    %21 = vector.broadcast %1 : vector<1x32xf32> to vector<128x32xf32>
    %22 = arith.mulf %20, %21 : vector<128x32xf32>
    %23 = vector.broadcast %2 : vector<1x32xf32> to vector<128x32xf32>
    %24 = arith.addf %22, %23 : vector<128x32xf32>
    %c0_9 = arith.constant 0 : index
    %c0_10 = arith.constant 0 : index
    %25 = vector.load %arg4[%c0_9, %c0_10] : memref<128x32xf32, #tpu.memory_space<vmem>>, vector<128x32xf32>
    tpu.vector_store %arg4[%c0_9, %c0_10], %24 {strides = array<i32>} : memref<128x32xf32, #tpu.memory_space<vmem>>, vector<128x32xf32>,
    return
  }
  func.func @transform_0(%arg0: i32) -> (i32, i32) {
    %c0_i32 = arith.constant 0 : i32
    %c0_i32_0 = arith.constant 0 : i32
    return %arg0, %c0_i32 : i32, i32
  }
  func.func @transform_1(%arg0: i32) -> (i32, i32) {
    %c0_i32 = arith.constant 0 : i32
    %c0_i32_0 = arith.constant 0 : i32
    %c0_i32_1 = arith.constant 0 : i32
    return %c0_i32, %c0_i32_0 : i32, i32
  }
  func.func @transform_2(%arg0: i32) -> (i32, i32) {
    %c0_i32 = arith.constant 0 : i32
    %c0_i32_0 = arith.constant 0 : i32
    %c0_i32_1 = arith.constant 0 : i32
    return %c0_i32, %c0_i32_0 : i32, i32
  }
  func.func @transform_3(%arg0: i32) -> (i32, i32) {
    %c0_i32 = arith.constant 0 : i32
    %c0_i32_0 = arith.constant 0 : i32
    return %arg0, %c0_i32 : i32, i32
  }
}

module attributes {stable_mosaic.version = 11 : i64} {
  func.func @_fused_linear_kernel(%arg0: i32, %arg1: memref<128x64xf32, #tpu.memory_space<vmem>>, %arg2: memref<64x32xbf16, #tpu.memory_space<vmem>>, %arg3: memref<1x32xf32, #tpu.memory_space<vmem>>, %arg4: memref<128x32xf32, #tpu.memory_space<vmem>>) attributes {dimension_semantics = [#tpu.dimension_semantics<parallel>], iteration_bounds = array<i64: 1>, scalar_prefetch = 0 : i64, scratch_operands = 0 : i64, tpu.core_type = #tpu.core_type<tc>, window_params = [{transform_indices = @transform_0, window_bounds = array<i64: 128, 64>}, {pipeline_mode = #tpu.pipeline_mode<synchronous>, transform_indices = @transform_1, window_bounds = array<i64: 64, 32>}, {pipeline_mode = #tpu.pipeline_mode<synchronous>, transform_indices = @transform_2, window_bounds = array<i64: 1, 32>}, {transform_indices = @transform_3, window_bounds = array<i64: 128, 32>}]} {
    %c0 = arith.constant 0 : index
    %c0_0 = arith.constant 0 : index
    %0 = vector.load %arg1[%c0, %c0_0] : memref<128x64xf32, #tpu.memory_space<vmem>>, vector<128x64xf32>
    %1 = arith.truncf %0 : vector<128x64xf32> to vector<128x64xbf16>
    %c0_1 = arith.constant 0 : index
    %c0_2 = arith.constant 0 : index
    %2 = vector.load %arg2[%c0_1, %c0_2] : memref<64x32xbf16, #tpu.memory_space<vmem>>, vector<64x32xbf16>
    %cst = arith.constant dense<0.000000e+00> : vector<128x32xf32>
    %3 = tpu.matmul %1, %2, %cst {dimension_numbers = #tpu.dot_dimension_numbers<[1], [0], [0], [1], [0, 0, 1, 1], [], []>} : vector<128x64xbf16>, vector<64x32xbf16>, vector<128x32xf32> -> vector<128x32xf32>
    %c0_3 = arith.constant 0 : index
    %c0_4 = arith.constant 0 : index
    %4 = vector.load %arg3[%c0_3, %c0_4] : memref<1x32xf32, #tpu.memory_space<vmem>>, vector<1x32xf32>
    %5 = vector.broadcast %4 : vector<1x32xf32> to vector<128x32xf32>
    %6 = arith.addf %3, %5 : vector<128x32xf32>
    %c0_5 = arith.constant 0 : index
    %c0_6 = arith.constant 0 : index
    %7 = vector.load %arg4[%c0_5, %c0_6] : memref<128x32xf32, #tpu.memory_space<vmem>>, vector<128x32xf32>
    tpu.vector_store %arg4[%c0_5, %c0_6], %6 {strides = array<i32>} : memref<128x32xf32, #tpu.memory_space<vmem>>, vector<128x32xf32>,
    return
  }
  func.func @transform_0(%arg0: i32) -> (i32, i32) {
    %c0_i32 = arith.constant 0 : i32
    %c0_i32_0 = arith.constant 0 : i32
    return %arg0, %c0_i32 : i32, i32
  }
  func.func @transform_1(%arg0: i32) -> (i32, i32) {
    %c0_i32 = arith.constant 0 : i32
    %c0_i32_0 = arith.constant 0 : i32
    %c0_i32_1 = arith.constant 0 : i32
    return %c0_i32, %c0_i32_0 : i32, i32
  }
  func.func @transform_2(%arg0: i32) -> (i32, i32) {
    %c0_i32 = arith.constant 0 : i32
    %c0_i32_0 = arith.constant 0 : i32
    %c0_i32_1 = arith.constant 0 : i32
    return %c0_i32, %c0_i32_0 : i32, i32
  }
  func.func @transform_3(%arg0: i32) -> (i32, i32) {
    %c0_i32 = arith.constant 0 : i32
    %c0_i32_0 = arith.constant 0 : i32
    return %arg0, %c0_i32 : i32, i32
  }
}

module attributes {stable_mosaic.version = 11 : i64} {
  func.func @_fused_linear_kernel(%arg0: i32, %arg1: memref<128x32xf32, #tpu.memory_space<vmem>>, %arg2: memref<1x32xf32, #tpu.memory_space<vmem>>, %arg3: memref<1x32xf32, #tpu.memory_space<vmem>>, %arg4: memref<32x512xbf16, #tpu.memory_space<vmem>>, %arg5: memref<128x512xf32, #tpu.memory_space<vmem>>) attributes {dimension_semantics = [#tpu.dimension_semantics<parallel>], iteration_bounds = array<i64: 1>, scalar_prefetch = 0 : i64, scratch_operands = 0 : i64, tpu.core_type = #tpu.core_type<tc>, window_params = [{transform_indices = @transform_0, window_bounds = array<i64: 128, 32>}, {pipeline_mode = #tpu.pipeline_mode<synchronous>, transform_indices = @transform_1, window_bounds = array<i64: 1, 32>}, {pipeline_mode = #tpu.pipeline_mode<synchronous>, transform_indices = @transform_2, window_bounds = array<i64: 1, 32>}, {pipeline_mode = #tpu.pipeline_mode<synchronous>, transform_indices = @transform_3, window_bounds = array<i64: 32, 512>}, {transform_indices = @transform_4, window_bounds = array<i64: 128, 512>}]} {
    %c0 = arith.constant 0 : index
    %c0_0 = arith.constant 0 : index
    %0 = vector.load %arg1[%c0, %c0_0] : memref<128x32xf32, #tpu.memory_space<vmem>>, vector<128x32xf32>
    %c0_1 = arith.constant 0 : index
    %c0_2 = arith.constant 0 : index
    %1 = vector.load %arg2[%c0_1, %c0_2] : memref<1x32xf32, #tpu.memory_space<vmem>>, vector<1x32xf32>
    %c0_3 = arith.constant 0 : index
    %c0_4 = arith.constant 0 : index
    %2 = vector.load %arg3[%c0_3, %c0_4] : memref<1x32xf32, #tpu.memory_space<vmem>>, vector<1x32xf32>
    %cst = arith.constant dense<0.000000e+00> : vector<128xf32>
    %3 = vector.multi_reduction <add>, %0, %cst [1] : vector<128x32xf32> to vector<128xf32>
    %4 = vector.shape_cast %3 : vector<128xf32> to vector<128x1xf32>
    %cst_5 = arith.constant 3.200000e+01 : f32
    %5 = vector.broadcast %cst_5 : f32 to vector<128x1xf32>
    %6 = arith.divf %4, %5 : vector<128x1xf32>
    %7 = vector.broadcast %6 : vector<128x1xf32> to vector<128x32xf32>
    %8 = arith.subf %0, %7 : vector<128x32xf32>
    %9 = arith.mulf %8, %8 : vector<128x32xf32>
    %cst_6 = arith.constant dense<0.000000e+00> : vector<128xf32>
    %10 = vector.multi_reduction <add>, %9, %cst_6 [1] : vector<128x32xf32> to vector<128xf32>
    %11 = vector.shape_cast %10 : vector<128xf32> to vector<128x1xf32>
    %cst_7 = arith.constant 3.200000e+01 : f32
    %12 = vector.broadcast %cst_7 : f32 to vector<128x1xf32>
    %13 = arith.divf %11, %12 : vector<128x1xf32>
    %14 = vector.broadcast %6 : vector<128x1xf32> to vector<128x32xf32>
    %15 = arith.subf %0, %14 : vector<128x32xf32>
    %cst_8 = arith.constant 9.99999974E-6 : f32
    %16 = vector.broadcast %cst_8 : f32 to vector<128x1xf32>
    %17 = arith.addf %13, %16 : vector<128x1xf32>
    %18 = math.rsqrt %17 : vector<128x1xf32>
    %19 = vector.broadcast %18 : vector<128x1xf32> to vector<128x32xf32>
    %20 = arith.mulf %15, %19 : vector<128x32xf32>
    %21 = vector.broadcast %1 : vector<1x32xf32> to vector<128x32xf32>
    %22 = arith.mulf %20, %21 : vector<128x32xf32>
    %23 = vector.broadcast %2 : vector<1x32xf32> to vector<128x32xf32>
    %24 = arith.addf %22, %23 : vector<128x32xf32>
    %25 = arith.truncf %24 : vector<128x32xf32> to vector<128x32xbf16>
    %c0_9 = arith.constant 0 : index
    %c0_10 = arith.constant 0 : index
    %26 = vector.load %arg4[%c0_9, %c0_10] : memref<32x512xbf16, #tpu.memory_space<vmem>>, vector<32x512xbf16>
    %cst_11 = arith.constant dense<0.000000e+00> : vector<128x512xf32>
    %27 = tpu.matmul %25, %26, %cst_11 {dimension_numbers = #tpu.dot_dimension_numbers<[1], [0], [0], [1], [0, 0, 1, 1], [], []>} : vector<128x32xbf16>, vector<32x512xbf16>, vector<128x512xf32> -> vector<128x512xf32>
    %c0_12 = arith.constant 0 : index
    %c0_13 = arith.constant 0 : index
    %28 = vector.load %arg5[%c0_12, %c0_13] : memref<128x512xf32, #tpu.memory_space<vmem>>, vector<128x512xf32>
    tpu.vector_store %arg5[%c0_12, %c0_13], %27 {strides = array<i32>} : memref<128x512xf32, #tpu.memory_space<vmem>>, vector<128x512xf32>,
    return
  }
  func.func @transform_0(%arg0: i32) -> (i32, i32) {
    %c0_i32 = arith.constant 0 : i32
    %c0_i32_0 = arith.constant 0 : i32
    return %arg0, %c0_i32 : i32, i32
  }
  func.func @transform_1(%arg0: i32) -> (i32, i32) {
    %c0_i32 = arith.constant 0 : i32
    %c0_i32_0 = arith.constant 0 : i32
    %c0_i32_1 = arith.constant 0 : i32
    return %c0_i32, %c0_i32_0 : i32, i32
  }
  func.func @transform_2(%arg0: i32) -> (i32, i32) {
    %c0_i32 = arith.constant 0 : i32
    %c0_i32_0 = arith.constant 0 : i32
    %c0_i32_1 = arith.constant 0 : i32
    return %c0_i32, %c0_i32_0 : i32, i32
  }
  func.func @transform_3(%arg0: i32) -> (i32, i32) {
    %c0_i32 = arith.constant 0 : i32
    %c0_i32_0 = arith.constant 0 : i32
    %c0_i32_1 = arith.constant 0 : i32
    return %c0_i32, %c0_i32_0 : i32, i32
  }
  func.func @transform_4(%arg0: i32) -> (i32, i32) {
    %c0_i32 = arith.constant 0 : i32
    %c0_i32_0 = arith.constant 0 : i32
    return %arg0, %c0_i32 : i32, i32
  }
}

module attributes {stable_mosaic.version = 11 : i64} {
  func.func @_fused_linear_kernel(%arg0: i32, %arg1: memref<512x32xf32, #tpu.memory_space<vmem>>, %arg2: memref<1x32xf32, #tpu.memory_space<vmem>>, %arg3: memref<1x32xf32, #tpu.memory_space<vmem>>, %arg4: memref<32x3xbf16, #tpu.memory_space<vmem>>, %arg5: memref<512x3xf32, #tpu.memory_space<vmem>>) attributes {dimension_semantics = [#tpu.dimension_semantics<parallel>], iteration_bounds = array<i64: 4>, scalar_prefetch = 0 : i64, scratch_operands = 0 : i64, tpu.core_type = #tpu.core_type<tc>, window_params = [{transform_indices = @transform_0, window_bounds = array<i64: 512, 32>}, {pipeline_mode = #tpu.pipeline_mode<synchronous>, transform_indices = @transform_1, window_bounds = array<i64: 1, 32>}, {pipeline_mode = #tpu.pipeline_mode<synchronous>, transform_indices = @transform_2, window_bounds = array<i64: 1, 32>}, {pipeline_mode = #tpu.pipeline_mode<synchronous>, transform_indices = @transform_3, window_bounds = array<i64: 32, 3>}, {transform_indices = @transform_4, window_bounds = array<i64: 512, 3>}]} {
    %c0 = arith.constant 0 : index
    %c0_0 = arith.constant 0 : index
    %0 = vector.load %arg1[%c0, %c0_0] : memref<512x32xf32, #tpu.memory_space<vmem>>, vector<512x32xf32>
    %c0_1 = arith.constant 0 : index
    %c0_2 = arith.constant 0 : index
    %1 = vector.load %arg2[%c0_1, %c0_2] : memref<1x32xf32, #tpu.memory_space<vmem>>, vector<1x32xf32>
    %c0_3 = arith.constant 0 : index
    %c0_4 = arith.constant 0 : index
    %2 = vector.load %arg3[%c0_3, %c0_4] : memref<1x32xf32, #tpu.memory_space<vmem>>, vector<1x32xf32>
    %cst = arith.constant dense<0.000000e+00> : vector<512xf32>
    %3 = vector.multi_reduction <add>, %0, %cst [1] : vector<512x32xf32> to vector<512xf32>
    %4 = vector.shape_cast %3 : vector<512xf32> to vector<512x1xf32>
    %cst_5 = arith.constant 3.200000e+01 : f32
    %5 = vector.broadcast %cst_5 : f32 to vector<512x1xf32>
    %6 = arith.divf %4, %5 : vector<512x1xf32>
    %7 = vector.broadcast %6 : vector<512x1xf32> to vector<512x32xf32>
    %8 = arith.subf %0, %7 : vector<512x32xf32>
    %9 = arith.mulf %8, %8 : vector<512x32xf32>
    %cst_6 = arith.constant dense<0.000000e+00> : vector<512xf32>
    %10 = vector.multi_reduction <add>, %9, %cst_6 [1] : vector<512x32xf32> to vector<512xf32>
    %11 = vector.shape_cast %10 : vector<512xf32> to vector<512x1xf32>
    %cst_7 = arith.constant 3.200000e+01 : f32
    %12 = vector.broadcast %cst_7 : f32 to vector<512x1xf32>
    %13 = arith.divf %11, %12 : vector<512x1xf32>
    %14 = vector.broadcast %6 : vector<512x1xf32> to vector<512x32xf32>
    %15 = arith.subf %0, %14 : vector<512x32xf32>
    %cst_8 = arith.constant 9.99999974E-6 : f32
    %16 = vector.broadcast %cst_8 : f32 to vector<512x1xf32>
    %17 = arith.addf %13, %16 : vector<512x1xf32>
    %18 = math.rsqrt %17 : vector<512x1xf32>
    %19 = vector.broadcast %18 : vector<512x1xf32> to vector<512x32xf32>
    %20 = arith.mulf %15, %19 : vector<512x32xf32>
    %21 = vector.broadcast %1 : vector<1x32xf32> to vector<512x32xf32>
    %22 = arith.mulf %20, %21 : vector<512x32xf32>
    %23 = vector.broadcast %2 : vector<1x32xf32> to vector<512x32xf32>
    %24 = arith.addf %22, %23 : vector<512x32xf32>
    %25 = arith.truncf %24 : vector<512x32xf32> to vector<512x32xbf16>
    %c0_9 = arith.constant 0 : index
    %c0_10 = arith.constant 0 : index
    %26 = vector.load %arg4[%c0_9, %c0_10] : memref<32x3xbf16, #tpu.memory_space<vmem>>, vector<32x3xbf16>
    %cst_11 = arith.constant dense<0.000000e+00> : vector<512x3xf32>
    %27 = tpu.matmul %25, %26, %cst_11 {dimension_numbers = #tpu.dot_dimension_numbers<[1], [0], [0], [1], [0, 0, 1, 1], [], []>} : vector<512x32xbf16>, vector<32x3xbf16>, vector<512x3xf32> -> vector<512x3xf32>
    %c0_12 = arith.constant 0 : index
    %c0_13 = arith.constant 0 : index
    %28 = vector.load %arg5[%c0_12, %c0_13] : memref<512x3xf32, #tpu.memory_space<vmem>>, vector<512x3xf32>
    tpu.vector_store %arg5[%c0_12, %c0_13], %27 {strides = array<i32>} : memref<512x3xf32, #tpu.memory_space<vmem>>, vector<512x3xf32>,
    return
  }
  func.func @transform_0(%arg0: i32) -> (i32, i32) {
    %c0_i32 = arith.constant 0 : i32
    %c0_i32_0 = arith.constant 0 : i32
    return %arg0, %c0_i32 : i32, i32
  }
  func.func @transform_1(%arg0: i32) -> (i32, i32) {
    %c0_i32 = arith.constant 0 : i32
    %c0_i32_0 = arith.constant 0 : i32
    %c0_i32_1 = arith.constant 0 : i32
    return %c0_i32, %c0_i32_0 : i32, i32
  }
  func.func @transform_2(%arg0: i32) -> (i32, i32) {
    %c0_i32 = arith.constant 0 : i32
    %c0_i32_0 = arith.constant 0 : i32
    %c0_i32_1 = arith.constant 0 : i32
    return %c0_i32, %c0_i32_0 : i32, i32
  }
  func.func @transform_3(%arg0: i32) -> (i32, i32) {
    %c0_i32 = arith.constant 0 : i32
    %c0_i32_0 = arith.constant 0 : i32
    %c0_i32_1 = arith.constant 0 : i32
    return %c0_i32, %c0_i32_0 : i32, i32
  }
  func.func @transform_4(%arg0: i32) -> (i32, i32) {
    %c0_i32 = arith.constant 0 : i32
    %c0_i32_0 = arith.constant 0 : i32
    return %arg0, %c0_i32 : i32, i32
  }
}

</mosaic_0001>

<llo_original>
// kernel: swin_unet_forward.13
$region0: #{swin_unet_forward.13}
  #allocation0 [shape = 'u32[]', space=smem, size = 0x4, offset = 0x4, fixed_abs, tag = 'smem constant byte address 0x4 - core index']
  #allocation1 [shape = 'u32[144,128]{1,0:T(1,128)}', space=vmem, size = 0x12000, scoped, tag = 'internal scratch']
  %s0 = inlined_call_operand.vmem [shape: f32[128,48], index: 0, kind: input, shape index: {}]
  %s1 = inlined_call_operand.vmem [shape: bf16[48,32], index: 1, kind: input, shape index: {}]
  %s2 = inlined_call_operand.vmem [shape: f32[1,32], index: 2, kind: input, shape index: {}]
  %s3 = inlined_call_operand.vmem [shape: f32[1,32], index: 3, kind: input, shape index: {}]
  %s4 = inlined_call_operand.vmem [shape: f32[1,32], index: 4, kind: input, shape index: {}]
  %s5 = inlined_call_operand.vmem [shape: f32[128,32], index: 5, kind: output, shape index: {}]
  %s6 = sld [smem:[#allocation0]]
  $region30: #{swin_unet_forward.13} parent=0
    _
  %s8 = ssub.s32 1, %s6
  %s9 = scalar_select 0, %s8, %s6
  // Predicated region
  $region2: #{swin_unet_forward.13} parent=0 // pred_check
    _
  $region3: #{swin_unet_forward.13} parent=0 // pred_check_branch
    %11 = sbr.rel (0) target = $region5
  $region4: #{swin_unet_forward.13} parent=0 // pred_region
    _
  $region5: #{swin_unet_forward.13} parent=0 // pred_fallthru
    _
  // Predicated region
  $region6: #{swin_unet_forward.13} parent=0 // pred_check
    _
  $region7: #{swin_unet_forward.13} parent=0 // pred_check_branch
    %13 = sbr.rel (0) target = $region9
  $region8: #{swin_unet_forward.13} parent=0 // pred_region
    _
  $region9: #{swin_unet_forward.13} parent=0 // pred_fallthru
    _
  // Predicated region
  $region10: #{swin_unet_forward.13} parent=0 // pred_check
    _
  $region11: #{swin_unet_forward.13} parent=0 // pred_check_branch
    %15 = sbr.rel (0) target = $region13
  $region12: #{swin_unet_forward.13} parent=0 // pred_region
    _
  $region13: #{swin_unet_forward.13} parent=0 // pred_fallthru
    _
  // Predicated region
  $region14: #{swin_unet_forward.13} parent=0 // pred_check
    _
  $region15: #{swin_unet_forward.13} parent=0 // pred_check_branch
    %17 = sbr.rel (0) target = $region17
  $region16: #{swin_unet_forward.13} parent=0 // pred_region
    _
  $region17: #{swin_unet_forward.13} parent=0 // pred_fallthru
    _
  // Predicated region
  $region18: #{swin_unet_forward.13} parent=0 // pred_check
    _
  $region19: #{swin_unet_forward.13} parent=0 // pred_check_branch
    %19 = sbr.rel (0) target = $region21
  $region20: #{swin_unet_forward.13} parent=0 // pred_region
    _
  $region21: #{swin_unet_forward.13} parent=0 // pred_fallthru
    _
  %v21 = vld [vmem:[%s0] sm:$0xff]
  %v22 = vld [vmem:[%s0 + $0x8] sm:$0xff]
  %v23 = vld [vmem:[%s0 + $0x10] sm:$0xff]
  %v24 = vld [vmem:[%s0 + $0x18] sm:$0xff]
  %v25 = vld [vmem:[%s0 + $0x20] sm:$0xff]
  %v26 = vld [vmem:[%s0 + $0x28] sm:$0xff]
  %v27 = vld [vmem:[%s0 + $0x30] sm:$0xff]
  %v28 = vld [vmem:[%s0 + $0x38] sm:$0xff]
  %v29 = vld [vmem:[%s0 + $0x40] sm:$0xff]
  %v30 = vld [vmem:[%s0 + $0x48] sm:$0xff]
  %v31 = vld [vmem:[%s0 + $0x50] sm:$0xff]
  %v32 = vld [vmem:[%s0 + $0x58] sm:$0xff]
  %v33 = vld [vmem:[%s0 + $0x60] sm:$0xff]
  %v34 = vld [vmem:[%s0 + $0x68] sm:$0xff]
  %v35 = vld [vmem:[%s0 + $0x70] sm:$0xff]
  %v36 = vld [vmem:[%s0 + $0x78] sm:$0xff]
  %v37 = vpack.c.bf16 %v22, %v21
  %v38 = vpack.c.bf16 %v24, %v23
  %v39 = vpack.c.bf16 %v26, %v25
  %v40 = vpack.c.bf16 %v28, %v27
  %v41 = vpack.c.bf16 %v30, %v29
  %v42 = vpack.c.bf16 %v32, %v31
  %v43 = vpack.c.bf16 %v34, %v33
  %v44 = vpack.c.bf16 %v36, %v35
  %v45 = vld [vmem:[%s1] sm:$0xf]
  %v46 = vld [vmem:[%s1 + $0x4] sm:$0xf]
  %v47 = vld [vmem:[%s1 + $0x8] sm:$0xf]
  %v48 = vld [vmem:[%s1 + $0xc] sm:$0xf]
  %v49 = vld [vmem:[%s1 + $0x10] sm:$0xf]
  %v50 = vld [vmem:[%s1 + $0x14] sm:$0xf]
  %v51 = vld [vmem:[%s2] sm:$0x1]
  %v53 = vlaneseq
  %v54 = vshrl.u32 %v53, 7
  %v55 = vsub.s32 0, %v54
  %v56 = vrot.slane %v51, %v55
  %v64 = vunpack.c.l.b16 %v45
  %v65 = vunpack.c.l.b16 %v46
  %v66 = vunpack.c.l.b16 %v47
  %v67 = vunpack.c.l.b16 %v48
  %v68 = vunpack.c.l.b16 %v49
  %v69 = vunpack.c.l.b16 %v50
  %v70 = vpack.c.b16 %v65, %v64
  %v71 = vpack.c.b16 %v67, %v66
  %v72 = vpack.c.b16 %v69, %v68
  %vm76 = vcmask 392192
  %v78 = vsel %vm76, %v37, 0
  %v81 = vsel %vm76, %v38, 0
  %v84 = vsel %vm76, %v39, 0
  %v87 = vsel %vm76, %v40, 0
  %v90 = vsel %vm76, %v41, 0
  %v93 = vsel %vm76, %v42, 0
  %v96 = vsel %vm76, %v43, 0
  %v99 = vsel %vm76, %v44, 0
  %101 = vmatprep.subr.bf16.mxu0 0
  %102 = vmatpush1.bf16.msra.mxu0 %v70
  %103 = vmatprep.subr.bf16.mxu0 0
  %104 = vmatpush1.bf16.msra.mxu0 %v71
  %105 = vmatprep.subr.bf16.mxu0 0
  %106 = vmatpush1.bf16.msra.mxu0 %v72
  %107 = vmatprep.subr.bf16.mxu0 0
  %108 = vmatpush1.bf16.msra.mxu0 0
  %109 = vmatprep.subr.bf16.mxu0 0
  %110 = vmatpush1.bf16.msra.mxu0 0
  %111 = vmatprep.subr.bf16.mxu0 0
  %112 = vmatpush1.bf16.msra.mxu0 0
  %113 = vmatprep.subr.bf16.mxu0 0
  %114 = vmatpush1.bf16.msra.mxu0 0
  %115 = vmatprep.subr.bf16.mxu0 0
  %116 = vmatpush1.bf16.msra.mxu0 0
  %117 = vmatprep.subr.bf16.mxu0 0
  %118 = vmatpush1.bf16.msra.mxu0 0
  %119 = vmatprep.subr.bf16.mxu0 0
  %120 = vmatpush1.bf16.msra.mxu0 0
  %121 = vmatprep.subr.bf16.mxu0 0
  %122 = vmatpush1.bf16.msra.mxu0 0
  %123 = vmatprep.subr.bf16.mxu0 0
  %124 = vmatpush1.bf16.msra.mxu0 0
  %125 = vmatprep.subr.bf16.mxu0 0
  %126 = vmatpush1.bf16.msra.mxu0 0
  %127 = vmatprep.subr.bf16.mxu0 0
  %128 = vmatpush1.bf16.msra.mxu0 0
  %129 = vmatprep.subr.bf16.mxu0 0
  %130 = vmatpush1.bf16.msra.mxu0 0
  %131 = vmatprep.subr.bf16.mxu0 0
  %132 = vmatpush1.bf16.msra.mxu0 0
  %133 = vmatprep.mubr.bf16.mxu0 0
  %134 = vmatmul.mubr.bf16.gmra.mrb[0].mxu0 %v78
  %v135 = vpop.f32.mrb[0].mxu0
  %v136 = vadd.f32 %v56, %v135
  %v137 = vpop.f32.mrb[0].mxu0
  %v138 = vpop.f32.mrb[0].mxu0
  %v139 = vadd.f32 %v56, %v138
  %v140 = vpop.f32.mrb[0].mxu0
  %141 = vmatprep.mubr.bf16.mxu0 0
  %142 = vmatmul.mubr.bf16.gmra.mrb[0].mxu0 %v81
  %v143 = vpop.f32.mrb[0].mxu0
  %v144 = vadd.f32 %v56, %v143
  %v145 = vpop.f32.mrb[0].mxu0
  %v146 = vpop.f32.mrb[0].mxu0
  %v147 = vadd.f32 %v56, %v146
  %v148 = vpop.f32.mrb[0].mxu0
  %149 = vmatprep.mubr.bf16.mxu0 0
  %150 = vmatmul.mubr.bf16.gmra.mrb[0].mxu0 %v84
  %v151 = vpop.f32.mrb[0].mxu0
  %v152 = vadd.f32 %v56, %v151
  %v153 = vpop.f32.mrb[0].mxu0
  %v154 = vpop.f32.mrb[0].mxu0
  %v155 = vadd.f32 %v56, %v154
  %v156 = vpop.f32.mrb[0].mxu0
  %157 = vmatprep.mubr.bf16.mxu0 0
  %158 = vmatmul.mubr.bf16.gmra.mrb[0].mxu0 %v87
  %v159 = vpop.f32.mrb[0].mxu0
  %v160 = vadd.f32 %v56, %v159
  %v161 = vpop.f32.mrb[0].mxu0
  %v162 = vpop.f32.mrb[0].mxu0
  %v163 = vadd.f32 %v56, %v162
  %v164 = vpop.f32.mrb[0].mxu0
  %165 = vmatprep.mubr.bf16.mxu0 0
  %166 = vmatmul.mubr.bf16.gmra.mrb[0].mxu0 %v90
  %v167 = vpop.f32.mrb[0].mxu0
  %v168 = vadd.f32 %v56, %v167
  %v169 = vpop.f32.mrb[0].mxu0
  %v170 = vpop.f32.mrb[0].mxu0
  %v171 = vadd.f32 %v56, %v170
  %v172 = vpop.f32.mrb[0].mxu0
  %173 = vmatprep.mubr.bf16.mxu0 0
  %174 = vmatmul.mubr.bf16.gmra.mrb[0].mxu0 %v93
  %v175 = vpop.f32.mrb[0].mxu0
  %v176 = vadd.f32 %v56, %v175
  %v177 = vpop.f32.mrb[0].mxu0
  %v178 = vpop.f32.mrb[0].mxu0
  %v179 = vadd.f32 %v56, %v178
  %v180 = vpop.f32.mrb[0].mxu0
  %181 = vmatprep.mubr.bf16.mxu0 0
  %182 = vmatmul.mubr.bf16.gmra.mrb[0].mxu0 %v96
  %v183 = vpop.f32.mrb[0].mxu0
  %v184 = vadd.f32 %v56, %v183
  %v185 = vpop.f32.mrb[0].mxu0
  %v186 = vpop.f32.mrb[0].mxu0
  %v187 = vadd.f32 %v56, %v186
  %v188 = vpop.f32.mrb[0].mxu0
  %189 = vmatprep.mubr.bf16.mxu0 0
  %190 = vmatmul.mubr.bf16.gmra.mrb[0].mxu0 %v99
  %v191 = vpop.f32.mrb[0].mxu0
  %v192 = vadd.f32 %v56, %v191
  %v193 = vpop.f32.mrb[0].mxu0
  %v194 = vpop.f32.mrb[0].mxu0
  %v195 = vadd.f32 %v56, %v194
  %v196 = vpop.f32.mrb[0].mxu0
  %197 = vdwg.mxu0
  %v198 = vld [vmem:[%s3] sm:$0x1]
  %v199 = vld [vmem:[%s4] sm:$0x1]
  %vm200 = vcmask 261120
  %v201 = vsel %vm200, %v136, 0.0
  %202 = vadd.xlane.f32.xlu0 %v201
  %v203 = vpop.xlane.xlu0 %202
  %v204 = vsel %vm200, %v139, 0.0
  %205 = vadd.xlane.f32.xlu0 %v204
  %v206 = vpop.xlane.xlu0 %205
  %v207 = vsel %vm200, %v144, 0.0
  %208 = vadd.xlane.f32.xlu0 %v207
  %v209 = vpop.xlane.xlu0 %208
  %v210 = vsel %vm200, %v147, 0.0
  %211 = vadd.xlane.f32.xlu0 %v210
  %v212 = vpop.xlane.xlu0 %211
  %v213 = vsel %vm200, %v152, 0.0
  %214 = vadd.xlane.f32.xlu0 %v213
  %v215 = vpop.xlane.xlu0 %214
  %v216 = vsel %vm200, %v155, 0.0
  %217 = vadd.xlane.f32.xlu0 %v216
  %v218 = vpop.xlane.xlu0 %217
  %v219 = vsel %vm200, %v160, 0.0
  %220 = vadd.xlane.f32.xlu0 %v219
  %v221 = vpop.xlane.xlu0 %220
  %v222 = vsel %vm200, %v163, 0.0
  %223 = vadd.xlane.f32.xlu0 %v222
  %v224 = vpop.xlane.xlu0 %223
  %v225 = vsel %vm200, %v168, 0.0
  %226 = vadd.xlane.f32.xlu0 %v225
  %v227 = vpop.xlane.xlu0 %226
  %v228 = vsel %vm200, %v171, 0.0
  %229 = vadd.xlane.f32.xlu0 %v228
  %v230 = vpop.xlane.xlu0 %229
  %v231 = vsel %vm200, %v176, 0.0
  %232 = vadd.xlane.f32.xlu0 %v231
  %v233 = vpop.xlane.xlu0 %232
  %v234 = vsel %vm200, %v179, 0.0
  %235 = vadd.xlane.f32.xlu0 %v234
  %v236 = vpop.xlane.xlu0 %235
  %v237 = vsel %vm200, %v184, 0.0
  %238 = vadd.xlane.f32.xlu0 %v237
  %v239 = vpop.xlane.xlu0 %238
  %v240 = vsel %vm200, %v187, 0.0
  %241 = vadd.xlane.f32.xlu0 %v240
  %v242 = vpop.xlane.xlu0 %241
  %v243 = vsel %vm200, %v192, 0.0
  %244 = vadd.xlane.f32.xlu0 %v243
  %v245 = vpop.xlane.xlu0 %244
  %v246 = vsel %vm200, %v195, 0.0
  %247 = vadd.xlane.f32.xlu0 %v246
  %v248 = vpop.xlane.xlu0 %247
  %v249 = vrcp.pop 32.0
  %v250 = vmul.f32 %v203, %v249
  %v251 = vmul.f32 %v206, %v249
  %v252 = vmul.f32 %v209, %v249
  %v253 = vmul.f32 %v212, %v249
  %v254 = vmul.f32 %v215, %v249
  %v255 = vmul.f32 %v218, %v249
  %v256 = vmul.f32 %v221, %v249
  %v257 = vmul.f32 %v224, %v249
  %v258 = vmul.f32 %v227, %v249
  %v259 = vmul.f32 %v230, %v249
  %v260 = vmul.f32 %v233, %v249
  %v261 = vmul.f32 %v236, %v249
  %v262 = vmul.f32 %v239, %v249
  %v263 = vmul.f32 %v242, %v249
  %v264 = vmul.f32 %v245, %v249
  %v265 = vmul.f32 %v248, %v249
  %v266 = vsub.f32 %v136, %v250
  %v267 = vsub.f32 %v139, %v251
  %v268 = vsub.f32 %v144, %v252
  %v269 = vsub.f32 %v147, %v253
  %v270 = vsub.f32 %v152, %v254
  %v271 = vsub.f32 %v155, %v255
  %v272 = vsub.f32 %v160, %v256
  %v273 = vsub.f32 %v163, %v257
  %v274 = vsub.f32 %v168, %v258
  %v275 = vsub.f32 %v171, %v259
  %v276 = vsub.f32 %v176, %v260
  %v277 = vsub.f32 %v179, %v261
  %v278 = vsub.f32 %v184, %v262
  %v279 = vsub.f32 %v187, %v263
  %v280 = vsub.f32 %v192, %v264
  %v281 = vsub.f32 %v195, %v265
  %v282 = vmul.f32 %v266, %v266
  %v283 = vmul.f32 %v267, %v267
  %v284 = vmul.f32 %v268, %v268
  %v285 = vmul.f32 %v269, %v269
  %v286 = vmul.f32 %v270, %v270
  %v287 = vmul.f32 %v271, %v271
  %v288 = vmul.f32 %v272, %v272
  %v289 = vmul.f32 %v273, %v273
  %v290 = vmul.f32 %v274, %v274
  %v291 = vmul.f32 %v275, %v275
  %v292 = vmul.f32 %v276, %v276
  %v293 = vmul.f32 %v277, %v277
  %v294 = vmul.f32 %v278, %v278
  %v295 = vmul.f32 %v279, %v279
  %v296 = vmul.f32 %v280, %v280
  %v297 = vmul.f32 %v281, %v281
  %v298 = vsel %vm200, %v282, 0.0
  %299 = vadd.xlane.f32.xlu0 %v298
  %v300 = vpop.xlane.xlu0 %299
  %v301 = vsel %vm200, %v283, 0.0
  %302 = vadd.xlane.f32.xlu0 %v301
  %v303 = vpop.xlane.xlu0 %302
  %v304 = vsel %vm200, %v284, 0.0
  %305 = vadd.xlane.f32.xlu0 %v304
  %v306 = vpop.xlane.xlu0 %305
  %v307 = vsel %vm200, %v285, 0.0
  %308 = vadd.xlane.f32.xlu0 %v307
  %v309 = vpop.xlane.xlu0 %308
  %v310 = vsel %vm200, %v286, 0.0
  %311 = vadd.xlane.f32.xlu0 %v310
  %v312 = vpop.xlane.xlu0 %311
  %v313 = vsel %vm200, %v287, 0.0
  %314 = vadd.xlane.f32.xlu0 %v313
  %v315 = vpop.xlane.xlu0 %314
  %v316 = vsel %vm200, %v288, 0.0
  %317 = vadd.xlane.f32.xlu0 %v316
  %v318 = vpop.xlane.xlu0 %317
  %v319 = vsel %vm200, %v289, 0.0
  %320 = vadd.xlane.f32.xlu0 %v319
  %v321 = vpop.xlane.xlu0 %320
  %v322 = vsel %vm200, %v290, 0.0
  %323 = vadd.xlane.f32.xlu0 %v322
  %v324 = vpop.xlane.xlu0 %323
  %v325 = vsel %vm200, %v291, 0.0
  %326 = vadd.xlane.f32.xlu0 %v325
  %v327 = vpop.xlane.xlu0 %326
  %v328 = vsel %vm200, %v292, 0.0
  %329 = vadd.xlane.f32.xlu0 %v328
  %v330 = vpop.xlane.xlu0 %329
  %v331 = vsel %vm200, %v293, 0.0
  %332 = vadd.xlane.f32.xlu0 %v331
  %v333 = vpop.xlane.xlu0 %332
  %v334 = vsel %vm200, %v294, 0.0
  %335 = vadd.xlane.f32.xlu0 %v334
  %v336 = vpop.xlane.xlu0 %335
  %v337 = vsel %vm200, %v295, 0.0
  %338 = vadd.xlane.f32.xlu0 %v337
  %v339 = vpop.xlane.xlu0 %338
  %v340 = vsel %vm200, %v296, 0.0
  %341 = vadd.xlane.f32.xlu0 %v340
  %v342 = vpop.xlane.xlu0 %341
  %v343 = vsel %vm200, %v297, 0.0
  %344 = vadd.xlane.f32.xlu0 %v343
  %v345 = vpop.xlane.xlu0 %344
  %v346 = vmul.f32 %v300, %v249
  %v347 = vmul.f32 %v303, %v249
  %v348 = vmul.f32 %v306, %v249
  %v349 = vmul.f32 %v309, %v249
  %v350 = vmul.f32 %v312, %v249
  %v351 = vmul.f32 %v315, %v249
  %v352 = vmul.f32 %v318, %v249
  %v353 = vmul.f32 %v321, %v249
  %v354 = vmul.f32 %v324, %v249
  %v355 = vmul.f32 %v327, %v249
  %v356 = vmul.f32 %v330, %v249
  %v357 = vmul.f32 %v333, %v249
  %v358 = vmul.f32 %v336, %v249
  %v359 = vmul.f32 %v339, %v249
  %v360 = vmul.f32 %v342, %v249
  %v361 = vmul.f32 %v345, %v249
  %v362 = vadd.f32 %v346, 1e-05
  %v363 = vadd.f32 %v347, 1e-05
  %v364 = vadd.f32 %v348, 1e-05
  %v365 = vadd.f32 %v349, 1e-05
  %v366 = vadd.f32 %v350, 1e-05
  %v367 = vadd.f32 %v351, 1e-05
  %v368 = vadd.f32 %v352, 1e-05
  %v369 = vadd.f32 %v353, 1e-05
  %v370 = vadd.f32 %v354, 1e-05
  %v371 = vadd.f32 %v355, 1e-05
  %v372 = vadd.f32 %v356, 1e-05
  %v373 = vadd.f32 %v357, 1e-05
  %v374 = vadd.f32 %v358, 1e-05
  %v375 = vadd.f32 %v359, 1e-05
  %v376 = vadd.f32 %v360, 1e-05
  %v377 = vadd.f32 %v361, 1e-05
  %v378 = vrsqrt.pop %v362
  %v379 = vrsqrt.pop %v363
  %v380 = vrsqrt.pop %v364
  %v381 = vrsqrt.pop %v365
  %v382 = vrsqrt.pop %v366
  %v383 = vrsqrt.pop %v367
  %v384 = vrsqrt.pop %v368
  %v385 = vrsqrt.pop %v369
  %v386 = vrsqrt.pop %v370
  %v387 = vrsqrt.pop %v371
  %v388 = vrsqrt.pop %v372
  %v389 = vrsqrt.pop %v373
  %v390 = vrsqrt.pop %v374
  %v391 = vrsqrt.pop %v375
  %v392 = vrsqrt.pop %v376
  %v393 = vrsqrt.pop %v377
  %v394 = vmul.f32 %v266, %v378
  %v395 = vmul.f32 %v267, %v379
  %v396 = vmul.f32 %v268, %v380
  %v397 = vmul.f32 %v269, %v381
  %v398 = vmul.f32 %v270, %v382
  %v399 = vmul.f32 %v271, %v383
  %v400 = vmul.f32 %v272, %v384
  %v401 = vmul.f32 %v273, %v385
  %v402 = vmul.f32 %v274, %v386
  %v403 = vmul.f32 %v275, %v387
  %v404 = vmul.f32 %v276, %v388
  %v405 = vmul.f32 %v277, %v389
  %v406 = vmul.f32 %v278, %v390
  %v407 = vmul.f32 %v279, %v391
  %v408 = vmul.f32 %v280, %v392
  %v409 = vmul.f32 %v281, %v393
  %v411 = vlaneseq
  %v412 = vshrl.u32 %v411, 7
  %v413 = vsub.s32 0, %v412
  %v414 = vrot.slane %v198, %v413
  %v416 = vmul.f32 %v394, %v414
  %v417 = vmul.f32 %v395, %v414
  %v418 = vmul.f32 %v396, %v414
  %v419 = vmul.f32 %v397, %v414
  %v420 = vmul.f32 %v398, %v414
  %v421 = vmul.f32 %v399, %v414
  %v422 = vmul.f32 %v400, %v414
  %v423 = vmul.f32 %v401, %v414
  %v424 = vmul.f32 %v402, %v414
  %v425 = vmul.f32 %v403, %v414
  %v426 = vmul.f32 %v404, %v414
  %v427 = vmul.f32 %v405, %v414
  %v428 = vmul.f32 %v406, %v414
  %v429 = vmul.f32 %v407, %v414
  %v430 = vmul.f32 %v408, %v414
  %v431 = vmul.f32 %v409, %v414
  %v433 = vlaneseq
  %v434 = vshrl.u32 %v433, 7
  %v435 = vsub.s32 0, %v434
  %v436 = vrot.slane %v199, %v435
  %v438 = vadd.f32 %v416, %v436
  %v439 = vadd.f32 %v417, %v436
  %v440 = vadd.f32 %v418, %v436
  %v441 = vadd.f32 %v419, %v436
  %v442 = vadd.f32 %v420, %v436
  %v443 = vadd.f32 %v421, %v436
  %v444 = vadd.f32 %v422, %v436
  %v445 = vadd.f32 %v423, %v436
  %v446 = vadd.f32 %v424, %v436
  %v447 = vadd.f32 %v425, %v436
  %v448 = vadd.f32 %v426, %v436
  %v449 = vadd.f32 %v427, %v436
  %v450 = vadd.f32 %v428, %v436
  %v451 = vadd.f32 %v429, %v436
  %v452 = vadd.f32 %v430, %v436
  %v453 = vadd.f32 %v431, %v436
  %454 = vst.msk [vmem:[%s5] sm:$0xff] %vm200, %v438
  %455 = vst.msk [vmem:[%s5 + $0x8] sm:$0xff] %vm200, %v439
  %456 = vst.msk [vmem:[%s5 + $0x10] sm:$0xff] %vm200, %v440
  %457 = vst.msk [vmem:[%s5 + $0x18] sm:$0xff] %vm200, %v441
  %458 = vst.msk [vmem:[%s5 + $0x20] sm:$0xff] %vm200, %v442
  %459 = vst.msk [vmem:[%s5 + $0x28] sm:$0xff] %vm200, %v443
  %460 = vst.msk [vmem:[%s5 + $0x30] sm:$0xff] %vm200, %v444
  %461 = vst.msk [vmem:[%s5 + $0x38] sm:$0xff] %vm200, %v445
  %462 = vst.msk [vmem:[%s5 + $0x40] sm:$0xff] %vm200, %v446
  %463 = vst.msk [vmem:[%s5 + $0x48] sm:$0xff] %vm200, %v447
  %464 = vst.msk [vmem:[%s5 + $0x50] sm:$0xff] %vm200, %v448
  %465 = vst.msk [vmem:[%s5 + $0x58] sm:$0xff] %vm200, %v449
  %466 = vst.msk [vmem:[%s5 + $0x60] sm:$0xff] %vm200, %v450
  %467 = vst.msk [vmem:[%s5 + $0x68] sm:$0xff] %vm200, %v451
  %468 = vst.msk [vmem:[%s5 + $0x70] sm:$0xff] %vm200, %v452
  %469 = vst.msk [vmem:[%s5 + $0x78] sm:$0xff] %vm200, %v453
  // Predicated region
  $region22: #{swin_unet_forward.13} parent=0 // pred_check
    _
  $region23: #{swin_unet_forward.13} parent=0 // pred_check_branch
    %471 = sbr.rel (0) target = $region25
  $region24: #{swin_unet_forward.13} parent=0 // pred_region
    _
  $region25: #{swin_unet_forward.13} parent=0 // pred_fallthru
    _
  // Predicated region
  $region26: #{swin_unet_forward.13} parent=0 // pred_check
    _
  $region27: #{swin_unet_forward.13} parent=0 // pred_check_branch
    %473 = sbr.rel (0) target = $region29
  $region28: #{swin_unet_forward.13} parent=0 // pred_region
    _
  $region29: #{swin_unet_forward.13} parent=0 // pred_fallthru
    _

// kernel: swin_unet_forward.16
$region0: #{swin_unet_forward.16}
  #allocation0 [shape = 'u32[]', space=smem, size = 0x4, offset = 0x4, fixed_abs, tag = 'smem constant byte address 0x4 - core index']
  #allocation1 [shape = 'u32[144,128]{1,0:T(1,128)}', space=vmem, size = 0x12000, scoped, tag = 'internal scratch']
  %s0 = inlined_call_operand.vmem [shape: f32[32,128], index: 0, kind: input, shape index: {}]
  %s1 = inlined_call_operand.vmem [shape: f32[1,128], index: 1, kind: input, shape index: {}]
  %s2 = inlined_call_operand.vmem [shape: f32[1,128], index: 2, kind: input, shape index: {}]
  %s3 = inlined_call_operand.vmem [shape: bf16[128,64], index: 3, kind: input, shape index: {}]
  %s4 = inlined_call_operand.vmem [shape: f32[32,64], index: 4, kind: output, shape index: {}]
  %s5 = sld [smem:[#allocation0]]
  $region26: #{swin_unet_forward.16} parent=0
    _
  %s7 = ssub.s32 1, %s5
  %s8 = scalar_select 0, %s7, %s5
  // Predicated region
  $region2: #{swin_unet_forward.16} parent=0 // pred_check
    _
  $region3: #{swin_unet_forward.16} parent=0 // pred_check_branch
    %10 = sbr.rel (0) target = $region5
  $region4: #{swin_unet_forward.16} parent=0 // pred_region
    _
  $region5: #{swin_unet_forward.16} parent=0 // pred_fallthru
    _
  // Predicated region
  $region6: #{swin_unet_forward.16} parent=0 // pred_check
    _
  $region7: #{swin_unet_forward.16} parent=0 // pred_check_branch
    %12 = sbr.rel (0) target = $region9
  $region8: #{swin_unet_forward.16} parent=0 // pred_region
    _
  $region9: #{swin_unet_forward.16} parent=0 // pred_fallthru
    _
  // Predicated region
  $region10: #{swin_unet_forward.16} parent=0 // pred_check
    _
  $region11: #{swin_unet_forward.16} parent=0 // pred_check_branch
    %14 = sbr.rel (0) target = $region13
  $region12: #{swin_unet_forward.16} parent=0 // pred_region
    _
  $region13: #{swin_unet_forward.16} parent=0 // pred_fallthru
    _
  // Predicated region
  $region14: #{swin_unet_forward.16} parent=0 // pred_check
    _
  $region15: #{swin_unet_forward.16} parent=0 // pred_check_branch
    %16 = sbr.rel (0) target = $region17
  $region16: #{swin_unet_forward.16} parent=0 // pred_region
    _
  $region17: #{swin_unet_forward.16} parent=0 // pred_fallthru
    _
  %v18 = vld [vmem:[%s0] sm:$0xff]
  %v19 = vld [vmem:[%s0 + $0x8] sm:$0xff]
  %v20 = vld [vmem:[%s0 + $0x10] sm:$0xff]
  %v21 = vld [vmem:[%s0 + $0x18] sm:$0xff]
  %v22 = vld [vmem:[%s1] sm:$0x1]
  %v23 = vld [vmem:[%s2] sm:$0x1]
  %24 = vadd.xlane.f32.xlu0 %v18
  %v25 = vpop.xlane.xlu0 %24
  %26 = vadd.xlane.f32.xlu0 %v19
  %v27 = vpop.xlane.xlu0 %26
  %28 = vadd.xlane.f32.xlu0 %v20
  %v29 = vpop.xlane.xlu0 %28
  %30 = vadd.xlane.f32.xlu0 %v21
  %v31 = vpop.xlane.xlu0 %30
  %v32 = vrcp.pop 128.0
  %v33 = vmul.f32 %v25, %v32
  %v34 = vmul.f32 %v27, %v32
  %v35 = vmul.f32 %v29, %v32
  %v36 = vmul.f32 %v31, %v32
  %v37 = vsub.f32 %v18, %v33
  %v38 = vsub.f32 %v19, %v34
  %v39 = vsub.f32 %v20, %v35
  %v40 = vsub.f32 %v21, %v36
  %v41 = vmul.f32 %v37, %v37
  %v42 = vmul.f32 %v38, %v38
  %v43 = vmul.f32 %v39, %v39
  %v44 = vmul.f32 %v40, %v40
  %45 = vadd.xlane.f32.xlu0 %v41
  %v46 = vpop.xlane.xlu0 %45
  %47 = vadd.xlane.f32.xlu0 %v42
  %v48 = vpop.xlane.xlu0 %47
  %49 = vadd.xlane.f32.xlu0 %v43
  %v50 = vpop.xlane.xlu0 %49
  %51 = vadd.xlane.f32.xlu0 %v44
  %v52 = vpop.xlane.xlu0 %51
  %v53 = vmul.f32 %v46, %v32
  %v54 = vmul.f32 %v48, %v32
  %v55 = vmul.f32 %v50, %v32
  %v56 = vmul.f32 %v52, %v32
  %v57 = vadd.f32 %v53, 1e-05
  %v58 = vadd.f32 %v54, 1e-05
  %v59 = vadd.f32 %v55, 1e-05
  %v60 = vadd.f32 %v56, 1e-05
  %v61 = vrsqrt.pop %v57
  %v62 = vrsqrt.pop %v58
  %v63 = vrsqrt.pop %v59
  %v64 = vrsqrt.pop %v60
  %v65 = vmul.f32 %v37, %v61
  %v66 = vmul.f32 %v38, %v62
  %v67 = vmul.f32 %v39, %v63
  %v68 = vmul.f32 %v40, %v64
  %v70 = vlaneseq
  %v71 = vshrl.u32 %v70, 7
  %v72 = vsub.s32 0, %v71
  %v73 = vrot.slane %v22, %v72
  %v75 = vmul.f32 %v65, %v73
  %v76 = vmul.f32 %v66, %v73
  %v77 = vmul.f32 %v67, %v73
  %v78 = vmul.f32 %v68, %v73
  %v80 = vlaneseq
  %v81 = vshrl.u32 %v80, 7
  %v82 = vsub.s32 0, %v81
  %v83 = vrot.slane %v23, %v82
  %v85 = vadd.f32 %v75, %v83
  %v86 = vadd.f32 %v76, %v83
  %v87 = vadd.f32 %v77, %v83
  %v88 = vadd.f32 %v78, %v83
  %v89 = vpack.c.bf16 %v86, %v85
  %v90 = vpack.c.bf16 %v88, %v87
  %v91 = vld [vmem:[%s3] sm:$0xf]
  %v92 = vld [vmem:[%s3 + $0x4] sm:$0xf]
  %v93 = vld [vmem:[%s3 + $0x8] sm:$0xf]
  %v94 = vld [vmem:[%s3 + $0xc] sm:$0xf]
  %v95 = vld [vmem:[%s3 + $0x10] sm:$0xf]
  %v96 = vld [vmem:[%s3 + $0x14] sm:$0xf]
  %v97 = vld [vmem:[%s3 + $0x18] sm:$0xf]
  %v98 = vld [vmem:[%s3 + $0x1c] sm:$0xf]
  %v99 = vld [vmem:[%s3 + $0x20] sm:$0xf]
  %v100 = vld [vmem:[%s3 + $0x24] sm:$0xf]
  %v101 = vld [vmem:[%s3 + $0x28] sm:$0xf]
  %v102 = vld [vmem:[%s3 + $0x2c] sm:$0xf]
  %v103 = vld [vmem:[%s3 + $0x30] sm:$0xf]
  %v104 = vld [vmem:[%s3 + $0x34] sm:$0xf]
  %v105 = vld [vmem:[%s3 + $0x38] sm:$0xf]
  %v106 = vld [vmem:[%s3 + $0x3c] sm:$0xf]
  %v123 = vunpack.c.l.b16 %v91
  %v124 = vunpack.c.l.b16 %v92
  %v125 = vunpack.c.l.b16 %v93
  %v126 = vunpack.c.l.b16 %v94
  %v127 = vunpack.c.l.b16 %v95
  %v128 = vunpack.c.l.b16 %v96
  %v129 = vunpack.c.l.b16 %v97
  %v130 = vunpack.c.l.b16 %v98
  %v131 = vunpack.c.l.b16 %v99
  %v132 = vunpack.c.l.b16 %v100
  %v133 = vunpack.c.l.b16 %v101
  %v134 = vunpack.c.l.b16 %v102
  %v135 = vunpack.c.l.b16 %v103
  %v136 = vunpack.c.l.b16 %v104
  %v137 = vunpack.c.l.b16 %v105
  %v138 = vunpack.c.l.b16 %v106
  %v139 = vpack.c.b16 %v124, %v123
  %v140 = vpack.c.b16 %v126, %v125
  %v141 = vpack.c.b16 %v128, %v127
  %v142 = vpack.c.b16 %v130, %v129
  %v143 = vpack.c.b16 %v132, %v131
  %v144 = vpack.c.b16 %v134, %v133
  %v145 = vpack.c.b16 %v136, %v135
  %v146 = vpack.c.b16 %v138, %v137
  %155 = vmatprep.subr.bf16.mxu0 0
  %156 = vmatpush1.bf16.msra.mxu0 %v139
  %157 = vmatprep.subr.bf16.mxu0 0
  %158 = vmatpush1.bf16.msra.mxu0 %v140
  %159 = vmatprep.subr.bf16.mxu0 0
  %160 = vmatpush1.bf16.msra.mxu0 %v141
  %161 = vmatprep.subr.bf16.mxu0 0
  %162 = vmatpush1.bf16.msra.mxu0 %v142
  %163 = vmatprep.subr.bf16.mxu0 0
  %164 = vmatpush1.bf16.msra.mxu0 %v143
  %165 = vmatprep.subr.bf16.mxu0 0
  %166 = vmatpush1.bf16.msra.mxu0 %v144
  %167 = vmatprep.subr.bf16.mxu0 0
  %168 = vmatpush1.bf16.msra.mxu0 %v145
  %169 = vmatprep.subr.bf16.mxu0 0
  %170 = vmatpush1.bf16.msra.mxu0 %v146
  %171 = vmatprep.subr.bf16.mxu0 0
  %172 = vmatpush1.bf16.msra.mxu0 0
  %173 = vmatprep.subr.bf16.mxu0 0
  %174 = vmatpush1.bf16.msra.mxu0 0
  %175 = vmatprep.subr.bf16.mxu0 0
  %176 = vmatpush1.bf16.msra.mxu0 0
  %177 = vmatprep.subr.bf16.mxu0 0
  %178 = vmatpush1.bf16.msra.mxu0 0
  %179 = vmatprep.subr.bf16.mxu0 0
  %180 = vmatpush1.bf16.msra.mxu0 0
  %181 = vmatprep.subr.bf16.mxu0 0
  %182 = vmatpush1.bf16.msra.mxu0 0
  %183 = vmatprep.subr.bf16.mxu0 0
  %184 = vmatpush1.bf16.msra.mxu0 0
  %185 = vmatprep.subr.bf16.mxu0 0
  %186 = vmatpush1.bf16.msra.mxu0 0
  %187 = vmatprep.mubr.bf16.mxu0 0
  %188 = vmatmul.mubr.bf16.gmra.mrb[0].mxu0 %v89
  %v189 = vpop.f32.mrb[0].mxu0
  %v190 = vadd.f32 0.0, %v189
  %v191 = vpop.f32.mrb[0].mxu0
  %v192 = vpop.f32.mrb[0].mxu0
  %v193 = vadd.f32 0.0, %v192
  %v194 = vpop.f32.mrb[0].mxu0
  %195 = vmatprep.mubr.bf16.mxu0 0
  %196 = vmatmul.mubr.bf16.gmra.mrb[0].mxu0 %v90
  %v197 = vpop.f32.mrb[0].mxu0
  %v198 = vadd.f32 0.0, %v197
  %v199 = vpop.f32.mrb[0].mxu0
  %v200 = vpop.f32.mrb[0].mxu0
  %v201 = vadd.f32 0.0, %v200
  %v202 = vpop.f32.mrb[0].mxu0
  %203 = vdwg.mxu0
  %vm204 = vcmask 523264
  %205 = vst.msk [vmem:[%s4] sm:$0xff] %vm204, %v190
  %206 = vst.msk [vmem:[%s4 + $0x8] sm:$0xff] %vm204, %v193
  %207 = vst.msk [vmem:[%s4 + $0x10] sm:$0xff] %vm204, %v198
  %208 = vst.msk [vmem:[%s4 + $0x18] sm:$0xff] %vm204, %v201
  // Predicated region
  $region18: #{swin_unet_forward.16} parent=0 // pred_check
    _
  $region19: #{swin_unet_forward.16} parent=0 // pred_check_branch
    %210 = sbr.rel (0) target = $region21
  $region20: #{swin_unet_forward.16} parent=0 // pred_region
    _
  $region21: #{swin_unet_forward.16} parent=0 // pred_fallthru
    _
  // Predicated region
  $region22: #{swin_unet_forward.16} parent=0 // pred_check
    _
  $region23: #{swin_unet_forward.16} parent=0 // pred_check_branch
    %212 = sbr.rel (0) target = $region25
  $region24: #{swin_unet_forward.16} parent=0 // pred_region
    _
  $region25: #{swin_unet_forward.16} parent=0 // pred_fallthru
    _

// kernel: swin_unet_forward.14
$region0: #{swin_unet_forward.14}
  #allocation0 [shape = 'u32[]', space=smem, size = 0x4, offset = 0x4, fixed_abs, tag = 'smem constant byte address 0x4 - core index']
  #allocation1 [shape = 'u32[144,128]{1,0:T(1,128)}', space=vmem, size = 0x12000, scoped, tag = 'internal scratch']
  %s0 = inlined_call_operand.vmem [shape: f32[2,64,32], index: 0, kind: input, shape index: {}]
  %s1 = inlined_call_operand.vmem [shape: f32[1,32], index: 1, kind: input, shape index: {}]
  %s2 = inlined_call_operand.vmem [shape: f32[1,32], index: 2, kind: input, shape index: {}]
  %s3 = inlined_call_operand.vmem [shape: bf16[32,32], index: 3, kind: input, shape index: {}]
  %s4 = inlined_call_operand.vmem [shape: f32[1,32], index: 4, kind: input, shape index: {}]
  %s5 = inlined_call_operand.vmem [shape: bf16[32,32], index: 5, kind: input, shape index: {}]
  %s6 = inlined_call_operand.vmem [shape: f32[1,32], index: 6, kind: input, shape index: {}]
  %s7 = inlined_call_operand.vmem [shape: bf16[32,32], index: 7, kind: input, shape index: {}]
  %s8 = inlined_call_operand.vmem [shape: f32[1,32], index: 8, kind: input, shape index: {}]
  %s9 = inlined_call_operand.vmem [shape: f32[2,32], index: 9, kind: input, shape index: {}]
  %s10 = inlined_call_operand.vmem [shape: f32[2,64,64], index: 10, kind: input, shape index: {}]
  %s11 = inlined_call_operand.vmem [shape: bf16[32,32], index: 11, kind: input, shape index: {}]
  %s12 = inlined_call_operand.vmem [shape: f32[1,32], index: 12, kind: input, shape index: {}]
  %s13 = inlined_call_operand.vmem [shape: f32[1,32], index: 13, kind: input, shape index: {}]
  %s14 = inlined_call_operand.vmem [shape: f32[1,32], index: 14, kind: input, shape index: {}]
  %s15 = inlined_call_operand.vmem [shape: bf16[32,128], index: 15, kind: input, shape index: {}]
  %s16 = inlined_call_operand.vmem [shape: f32[1,128], index: 16, kind: input, shape index: {}]
  %s17 = inlined_call_operand.vmem [shape: bf16[128,32], index: 17, kind: input, shape index: {}]
  %s18 = inlined_call_operand.vmem [shape: f32[1,32], index: 18, kind: input, shape index: {}]
  %s19 = inlined_call_operand.vmem [shape: f32[2,64,32], index: 19, kind: output, shape index: {}]
  %s20 = sld [smem:[#allocation0]]
  $region109: #{swin_unet_forward.14} parent=0
    _
  %s22 = ssub.s32 1, %s20
  %s23 = scalar_select 0, %s22, %s20
  loop: start=0, step=1, limit=4
  $region2: #{swin_unet_forward.14} parent=0 // loop_pre_header
    _
  $region3: #{swin_unet_forward.14} parent=0 // loop_header
    %s25 = sphi 0, %s29
    %p26 = scmp.ge.s32.totalorder %s25, 4
    %s35 = sphi 0, %s37
    %s38 = sphi 0, %s35
    %s39 = sphi 0, %s38
    %s55 = sphi 0, %s39
    %s59 = sphi 0, %s59
    %s61 = sphi 0, %s59
    %s62 = sphi 0, %s61
    %s76 = sphi 0, %s62
    %s80 = sphi 0, %s80
    %s82 = sphi 0, %s80
    %s83 = sphi 0, %s82
    %s97 = sphi 0, %s83
    %s101 = sphi 0, %s101
    %s103 = sphi 0, %s101
    %s104 = sphi 0, %s103
    %s118 = sphi 0, %s104
    %s122 = sphi 0, %s122
    %s124 = sphi 0, %s122
    %s125 = sphi 0, %s124
    %s139 = sphi 0, %s125
    %s143 = sphi 0, %s143
    %s145 = sphi 0, %s143
    %s146 = sphi 0, %s145
    %s160 = sphi 0, %s146
    %s164 = sphi 0, %s164
    %s166 = sphi 0, %s164
    %s167 = sphi 0, %s166
    %s181 = sphi 0, %s167
    %s185 = sphi 0, %s185
    %s187 = sphi 0, %s185
    %s188 = sphi 0, %s187
    %s202 = sphi 0, %s188
    %s206 = sphi 0, %s206
    %s208 = sphi 0, %s206
    %s209 = sphi 0, %s208
    %s223 = sphi 0, %s209
    %s227 = sphi 0, %s227
    %s229 = sphi 0, %s227
    %s230 = sphi 0, %s229
    %s244 = sphi 0, %s230
    %s248 = sphi 0, %s248
    %s250 = sphi 0, %s248
    %s251 = sphi 0, %s250
    %s265 = sphi 0, %s251
    %s269 = sphi 0, %s269
    %s271 = sphi 0, %s269
    %s272 = sphi 0, %s271
    %s286 = sphi 0, %s272
    %s290 = sphi 0, %s290
    %s292 = sphi 0, %s290
    %s293 = sphi 0, %s292
    %s307 = sphi 0, %s293
    %s311 = sphi 0, %s311
    %s313 = sphi 0, %s311
    %s314 = sphi 0, %s313
    %s328 = sphi 0, %s314
    %s332 = sphi 0, %s332
    %s334 = sphi 0, %s332
    %s335 = sphi 0, %s334
    %s349 = sphi 0, %s335
    %s353 = sphi 0, %s353
    %s355 = sphi 0, %s353
    %s356 = sphi 0, %s355
    %s370 = sphi 0, %s356
    %s374 = sphi 0, %s374
    %s376 = sphi 0, %s374
    %s377 = sphi 0, %s376
    %s391 = sphi 0, %s377
    %s395 = sphi 0, %s395
    %s397 = sphi 0, %s395
    %s398 = sphi 0, %s397
    %s412 = sphi 0, %s398
    %s416 = sphi 0, %s416
    %s418 = sphi 0, %s416
    %s419 = sphi 0, %s418
    %s433 = sphi 0, %s419
    %s439 = sphi 0, %s441
    %s442 = sphi 0, %s439
    %s443 = sphi 0, %s442
    %s459 = sphi 0, %s443
  $region4: #{swin_unet_forward.14} parent=0 // loop_header_branch
    %28 = sbr.rel (%p26) target = $region8
  $region5: #{swin_unet_forward.14} parent=0 // loop_body
    %s30 = ssub.s32 %s25, 1
    %s31 = ssub.s32 %s25, 2
    %s32 = sadd.s32 %s25, 1
    %s33 = ssub.s32 %s25, %s32
    %p34 = scmp.eq.s32.totalorder %s33, 0
    %s36 = sadd.s32 %s35, 1
    %s37 = scalar_select %p34, %s35, %s36
    %p40 = pneg %p34
    %p41 = scmp.eq.s32.totalorder %s25, 1
    %p42 = por %p40, %p41
    %p43 = scmp.ne.s32.totalorder %s35, %s38
    %p44 = scmp.eq.s32.totalorder %s25, 0
    %p45 = por %p43, %p44
    %p46 = scmp.ne.s32.totalorder %s35, %s38
    %p47 = scmp.eq.s32.totalorder %s30, 1
    %p48 = por %p46, %p47
    %p49 = scmp.ne.s32.totalorder %s38, %s39
    %p50 = scmp.eq.s32.totalorder %s30, 0
    %p51 = por %p49, %p50
    %p52 = scmp.ne.s32.totalorder %s38, %s39
    %p53 = scmp.eq.s32.totalorder %s31, 1
    %p54 = por %p52, %p53
    %p56 = scmp.ne.s32.totalorder %s39, %s55
    %p57 = scmp.eq.s32.totalorder %s31, 0
    %p58 = por %p56, %p57
    %s60 = sadd.s32 %s59, 1
    %p63 = scmp.eq.s32.totalorder %s25, 1
    %p64 = scmp.ne.s32.totalorder %s59, %s61
    %p65 = scmp.eq.s32.totalorder %s25, 0
    %p66 = por %p64, %p65
    %p67 = scmp.ne.s32.totalorder %s59, %s61
    %p68 = scmp.eq.s32.totalorder %s30, 1
    %p69 = por %p67, %p68
    %p70 = scmp.ne.s32.totalorder %s61, %s62
    %p71 = scmp.eq.s32.totalorder %s30, 0
    %p72 = por %p70, %p71
    %p73 = scmp.ne.s32.totalorder %s61, %s62
    %p74 = scmp.eq.s32.totalorder %s31, 1
    %p75 = por %p73, %p74
    %p77 = scmp.ne.s32.totalorder %s62, %s76
    %p78 = scmp.eq.s32.totalorder %s31, 0
    %p79 = por %p77, %p78
    %s81 = sadd.s32 %s80, 1
    %p84 = scmp.eq.s32.totalorder %s25, 1
    %p85 = scmp.ne.s32.totalorder %s80, %s82
    %p86 = scmp.eq.s32.totalorder %s25, 0
    %p87 = por %p85, %p86
    %p88 = scmp.ne.s32.totalorder %s80, %s82
    %p89 = scmp.eq.s32.totalorder %s30, 1
    %p90 = por %p88, %p89
    %p91 = scmp.ne.s32.totalorder %s82, %s83
    %p92 = scmp.eq.s32.totalorder %s30, 0
    %p93 = por %p91, %p92
    %p94 = scmp.ne.s32.totalorder %s82, %s83
    %p95 = scmp.eq.s32.totalorder %s31, 1
    %p96 = por %p94, %p95
    %p98 = scmp.ne.s32.totalorder %s83, %s97
    %p99 = scmp.eq.s32.totalorder %s31, 0
    %p100 = por %p98, %p99
    %s102 = sadd.s32 %s101, 1
    %p105 = scmp.eq.s32.totalorder %s25, 1
    %p106 = scmp.ne.s32.totalorder %s101, %s103
    %p107 = scmp.eq.s32.totalorder %s25, 0
    %p108 = por %p106, %p107
    %p109 = scmp.ne.s32.totalorder %s101, %s103
    %p110 = scmp.eq.s32.totalorder %s30, 1
    %p111 = por %p109, %p110
    %p112 = scmp.ne.s32.totalorder %s103, %s104
    %p113 = scmp.eq.s32.totalorder %s30, 0
    %p114 = por %p112, %p113
    %p115 = scmp.ne.s32.totalorder %s103, %s104
    %p116 = scmp.eq.s32.totalorder %s31, 1
    %p117 = por %p115, %p116
    %p119 = scmp.ne.s32.totalorder %s104, %s118
    %p120 = scmp.eq.s32.totalorder %s31, 0
    %p121 = por %p119, %p120
    %s123 = sadd.s32 %s122, 1
    %p126 = scmp.eq.s32.totalorder %s25, 1
    %p127 = scmp.ne.s32.totalorder %s122, %s124
    %p128 = scmp.eq.s32.totalorder %s25, 0
    %p129 = por %p127, %p128
    %p130 = scmp.ne.s32.totalorder %s122, %s124
    %p131 = scmp.eq.s32.totalorder %s30, 1
    %p132 = por %p130, %p131
    %p133 = scmp.ne.s32.totalorder %s124, %s125
    %p134 = scmp.eq.s32.totalorder %s30, 0
    %p135 = por %p133, %p134
    %p136 = scmp.ne.s32.totalorder %s124, %s125
    %p137 = scmp.eq.s32.totalorder %s31, 1
    %p138 = por %p136, %p137
    %p140 = scmp.ne.s32.totalorder %s125, %s139
    %p141 = scmp.eq.s32.totalorder %s31, 0
    %p142 = por %p140, %p141
    %s144 = sadd.s32 %s143, 1
    %p147 = scmp.eq.s32.totalorder %s25, 1
    %p148 = scmp.ne.s32.totalorder %s143, %s145
    %p149 = scmp.eq.s32.totalorder %s25, 0
    %p150 = por %p148, %p149
    %p151 = scmp.ne.s32.totalorder %s143, %s145
    %p152 = scmp.eq.s32.totalorder %s30, 1
    %p153 = por %p151, %p152
    %p154 = scmp.ne.s32.totalorder %s145, %s146
    %p155 = scmp.eq.s32.totalorder %s30, 0
    %p156 = por %p154, %p155
    %p157 = scmp.ne.s32.totalorder %s145, %s146
    %p158 = scmp.eq.s32.totalorder %s31, 1
    %p159 = por %p157, %p158
    %p161 = scmp.ne.s32.totalorder %s146, %s160
    %p162 = scmp.eq.s32.totalorder %s31, 0
    %p163 = por %p161, %p162
    %s165 = sadd.s32 %s164, 1
    %p168 = scmp.eq.s32.totalorder %s25, 1
    %p169 = scmp.ne.s32.totalorder %s164, %s166
    %p170 = scmp.eq.s32.totalorder %s25, 0
    %p171 = por %p169, %p170
    %p172 = scmp.ne.s32.totalorder %s164, %s166
    %p173 = scmp.eq.s32.totalorder %s30, 1
    %p174 = por %p172, %p173
    %p175 = scmp.ne.s32.totalorder %s166, %s167
    %p176 = scmp.eq.s32.totalorder %s30, 0
    %p177 = por %p175, %p176
    %p178 = scmp.ne.s32.totalorder %s166, %s167
    %p179 = scmp.eq.s32.totalorder %s31, 1
    %p180 = por %p178, %p179
    %p182 = scmp.ne.s32.totalorder %s167, %s181
    %p183 = scmp.eq.s32.totalorder %s31, 0
    %p184 = por %p182, %p183
    %s186 = sadd.s32 %s185, 1
    %p189 = scmp.eq.s32.totalorder %s25, 1
    %p190 = scmp.ne.s32.totalorder %s185, %s187
    %p191 = scmp.eq.s32.totalorder %s25, 0
    %p192 = por %p190, %p191
    %p193 = scmp.ne.s32.totalorder %s185, %s187
    %p194 = scmp.eq.s32.totalorder %s30, 1
    %p195 = por %p193, %p194
    %p196 = scmp.ne.s32.totalorder %s187, %s188
    %p197 = scmp.eq.s32.totalorder %s30, 0
    %p198 = por %p196, %p197
    %p199 = scmp.ne.s32.totalorder %s187, %s188
    %p200 = scmp.eq.s32.totalorder %s31, 1
    %p201 = por %p199, %p200
    %p203 = scmp.ne.s32.totalorder %s188, %s202
    %p204 = scmp.eq.s32.totalorder %s31, 0
    %p205 = por %p203, %p204
    %s207 = sadd.s32 %s206, 1
    %p210 = scmp.eq.s32.totalorder %s25, 1
    %p211 = scmp.ne.s32.totalorder %s206, %s208
    %p212 = scmp.eq.s32.totalorder %s25, 0
    %p213 = por %p211, %p212
    %p214 = scmp.ne.s32.totalorder %s206, %s208
    %p215 = scmp.eq.s32.totalorder %s30, 1
    %p216 = por %p214, %p215
    %p217 = scmp.ne.s32.totalorder %s208, %s209
    %p218 = scmp.eq.s32.totalorder %s30, 0
    %p219 = por %p217, %p218
    %p220 = scmp.ne.s32.totalorder %s208, %s209
    %p221 = scmp.eq.s32.totalorder %s31, 1
    %p222 = por %p220, %p221
    %p224 = scmp.ne.s32.totalorder %s209, %s223
    %p225 = scmp.eq.s32.totalorder %s31, 0
    %p226 = por %p224, %p225
    %s228 = sadd.s32 %s227, 1
    %p231 = scmp.eq.s32.totalorder %s25, 1
    %p232 = scmp.ne.s32.totalorder %s227, %s229
    %p233 = scmp.eq.s32.totalorder %s25, 0
    %p234 = por %p232, %p233
    %p235 = scmp.ne.s32.totalorder %s227, %s229
    %p236 = scmp.eq.s32.totalorder %s30, 1
    %p237 = por %p235, %p236
    %p238 = scmp.ne.s32.totalorder %s229, %s230
    %p239 = scmp.eq.s32.totalorder %s30, 0
    %p240 = por %p238, %p239
    %p241 = scmp.ne.s32.totalorder %s229, %s230
    %p242 = scmp.eq.s32.totalorder %s31, 1
    %p243 = por %p241, %p242
    %p245 = scmp.ne.s32.totalorder %s230, %s244
    %p246 = scmp.eq.s32.totalorder %s31, 0
    %p247 = por %p245, %p246
    %s249 = sadd.s32 %s248, 1
    %p252 = scmp.eq.s32.totalorder %s25, 1
    %p253 = scmp.ne.s32.totalorder %s248, %s250
    %p254 = scmp.eq.s32.totalorder %s25, 0
    %p255 = por %p253, %p254
    %p256 = scmp.ne.s32.totalorder %s248, %s250
    %p257 = scmp.eq.s32.totalorder %s30, 1
    %p258 = por %p256, %p257
    %p259 = scmp.ne.s32.totalorder %s250, %s251
    %p260 = scmp.eq.s32.totalorder %s30, 0
    %p261 = por %p259, %p260
    %p262 = scmp.ne.s32.totalorder %s250, %s251
    %p263 = scmp.eq.s32.totalorder %s31, 1
    %p264 = por %p262, %p263
    %p266 = scmp.ne.s32.totalorder %s251, %s265
    %p267 = scmp.eq.s32.totalorder %s31, 0
    %p268 = por %p266, %p267
    %s270 = sadd.s32 %s269, 1
    %p273 = scmp.eq.s32.totalorder %s25, 1
    %p274 = scmp.ne.s32.totalorder %s269, %s271
    %p275 = scmp.eq.s32.totalorder %s25, 0
    %p276 = por %p274, %p275
    %p277 = scmp.ne.s32.totalorder %s269, %s271
    %p278 = scmp.eq.s32.totalorder %s30, 1
    %p279 = por %p277, %p278
    %p280 = scmp.ne.s32.totalorder %s271, %s272
    %p281 = scmp.eq.s32.totalorder %s30, 0
    %p282 = por %p280, %p281
    %p283 = scmp.ne.s32.totalorder %s271, %s272
    %p284 = scmp.eq.s32.totalorder %s31, 1
    %p285 = por %p283, %p284
    %p287 = scmp.ne.s32.totalorder %s272, %s286
    %p288 = scmp.eq.s32.totalorder %s31, 0
    %p289 = por %p287, %p288
    %s291 = sadd.s32 %s290, 1
    %p294 = scmp.eq.s32.totalorder %s25, 1
    %p295 = scmp.ne.s32.totalorder %s290, %s292
    %p296 = scmp.eq.s32.totalorder %s25, 0
    %p297 = por %p295, %p296
    %p298 = scmp.ne.s32.totalorder %s290, %s292
    %p299 = scmp.eq.s32.totalorder %s30, 1
    %p300 = por %p298, %p299
    %p301 = scmp.ne.s32.totalorder %s292, %s293
    %p302 = scmp.eq.s32.totalorder %s30, 0
    %p303 = por %p301, %p302
    %p304 = scmp.ne.s32.totalorder %s292, %s293
    %p305 = scmp.eq.s32.totalorder %s31, 1
    %p306 = por %p304, %p305
    %p308 = scmp.ne.s32.totalorder %s293, %s307
    %p309 = scmp.eq.s32.totalorder %s31, 0
    %p310 = por %p308, %p309
    %s312 = sadd.s32 %s311, 1
    %p315 = scmp.eq.s32.totalorder %s25, 1
    %p316 = scmp.ne.s32.totalorder %s311, %s313
    %p317 = scmp.eq.s32.totalorder %s25, 0
    %p318 = por %p316, %p317
    %p319 = scmp.ne.s32.totalorder %s311, %s313
    %p320 = scmp.eq.s32.totalorder %s30, 1
    %p321 = por %p319, %p320
    %p322 = scmp.ne.s32.totalorder %s313, %s314
    %p323 = scmp.eq.s32.totalorder %s30, 0
    %p324 = por %p322, %p323
    %p325 = scmp.ne.s32.totalorder %s313, %s314
    %p326 = scmp.eq.s32.totalorder %s31, 1
    %p327 = por %p325, %p326
    %p329 = scmp.ne.s32.totalorder %s314, %s328
    %p330 = scmp.eq.s32.totalorder %s31, 0
    %p331 = por %p329, %p330
    %s333 = sadd.s32 %s332, 1
    %p336 = scmp.eq.s32.totalorder %s25, 1
    %p337 = scmp.ne.s32.totalorder %s332, %s334
    %p338 = scmp.eq.s32.totalorder %s25, 0
    %p339 = por %p337, %p338
    %p340 = scmp.ne.s32.totalorder %s332, %s334
    %p341 = scmp.eq.s32.totalorder %s30, 1
    %p342 = por %p340, %p341
    %p343 = scmp.ne.s32.totalorder %s334, %s335
    %p344 = scmp.eq.s32.totalorder %s30, 0
    %p345 = por %p343, %p344
    %p346 = scmp.ne.s32.totalorder %s334, %s335
    %p347 = scmp.eq.s32.totalorder %s31, 1
    %p348 = por %p346, %p347
    %p350 = scmp.ne.s32.totalorder %s335, %s349
    %p351 = scmp.eq.s32.totalorder %s31, 0
    %p352 = por %p350, %p351
    %s354 = sadd.s32 %s353, 1
    %p357 = scmp.eq.s32.totalorder %s25, 1
    %p358 = scmp.ne.s32.totalorder %s353, %s355
    %p359 = scmp.eq.s32.totalorder %s25, 0
    %p360 = por %p358, %p359
    %p361 = scmp.ne.s32.totalorder %s353, %s355
    %p362 = scmp.eq.s32.totalorder %s30, 1
    %p363 = por %p361, %p362
    %p364 = scmp.ne.s32.totalorder %s355, %s356
    %p365 = scmp.eq.s32.totalorder %s30, 0
    %p366 = por %p364, %p365
    %p367 = scmp.ne.s32.totalorder %s355, %s356
    %p368 = scmp.eq.s32.totalorder %s31, 1
    %p369 = por %p367, %p368
    %p371 = scmp.ne.s32.totalorder %s356, %s370
    %p372 = scmp.eq.s32.totalorder %s31, 0
    %p373 = por %p371, %p372
    %s375 = sadd.s32 %s374, 1
    %p378 = scmp.eq.s32.totalorder %s25, 1
    %p379 = scmp.ne.s32.totalorder %s374, %s376
    %p380 = scmp.eq.s32.totalorder %s25, 0
    %p381 = por %p379, %p380
    %p382 = scmp.ne.s32.totalorder %s374, %s376
    %p383 = scmp.eq.s32.totalorder %s30, 1
    %p384 = por %p382, %p383
    %p385 = scmp.ne.s32.totalorder %s376, %s377
    %p386 = scmp.eq.s32.totalorder %s30, 0
    %p387 = por %p385, %p386
    %p388 = scmp.ne.s32.totalorder %s376, %s377
    %p389 = scmp.eq.s32.totalorder %s31, 1
    %p390 = por %p388, %p389
    %p392 = scmp.ne.s32.totalorder %s377, %s391
    %p393 = scmp.eq.s32.totalorder %s31, 0
    %p394 = por %p392, %p393
    %s396 = sadd.s32 %s395, 1
    %p399 = scmp.eq.s32.totalorder %s25, 1
    %p400 = scmp.ne.s32.totalorder %s395, %s397
    %p401 = scmp.eq.s32.totalorder %s25, 0
    %p402 = por %p400, %p401
    %p403 = scmp.ne.s32.totalorder %s395, %s397
    %p404 = scmp.eq.s32.totalorder %s30, 1
    %p405 = por %p403, %p404
    %p406 = scmp.ne.s32.totalorder %s397, %s398
    %p407 = scmp.eq.s32.totalorder %s30, 0
    %p408 = por %p406, %p407
    %p409 = scmp.ne.s32.totalorder %s397, %s398
    %p410 = scmp.eq.s32.totalorder %s31, 1
    %p411 = por %p409, %p410
    %p413 = scmp.ne.s32.totalorder %s398, %s412
    %p414 = scmp.eq.s32.totalorder %s31, 0
    %p415 = por %p413, %p414
    %s417 = sadd.s32 %s416, 1
    %p420 = scmp.eq.s32.totalorder %s25, 1
    %p421 = scmp.ne.s32.totalorder %s416, %s418
    %p422 = scmp.eq.s32.totalorder %s25, 0
    %p423 = por %p421, %p422
    %p424 = scmp.ne.s32.totalorder %s416, %s418
    %p425 = scmp.eq.s32.totalorder %s30, 1
    %p426 = por %p424, %p425
    %p427 = scmp.ne.s32.totalorder %s418, %s419
    %p428 = scmp.eq.s32.totalorder %s30, 0
    %p429 = por %p427, %p428
    %p430 = scmp.ne.s32.totalorder %s418, %s419
    %p431 = scmp.eq.s32.totalorder %s31, 1
    %p432 = por %p430, %p431
    %p434 = scmp.ne.s32.totalorder %s419, %s433
    %p435 = scmp.eq.s32.totalorder %s31, 0
    %p436 = por %p434, %p435
    %s437 = ssub.s32 %s25, %s32
    %p438 = scmp.eq.s32.totalorder %s437, 0
    %s440 = sadd.s32 %s439, 1
    %s441 = scalar_select %p438, %s439, %s440
    %p444 = pneg %p438
    %p445 = scmp.eq.s32.totalorder %s25, 1
    %p446 = por %p444, %p445
    %p447 = scmp.ne.s32.totalorder %s439, %s442
    %p448 = scmp.eq.s32.totalorder %s25, 0
    %p449 = por %p447, %p448
    %p450 = scmp.ne.s32.totalorder %s439, %s442
    %p451 = scmp.eq.s32.totalorder %s30, 1
    %p452 = por %p450, %p451
    %p453 = scmp.ne.s32.totalorder %s442, %s443
    %p454 = scmp.eq.s32.totalorder %s30, 0
    %p455 = por %p453, %p454
    %p456 = scmp.ne.s32.totalorder %s442, %s443
    %p457 = scmp.eq.s32.totalorder %s31, 1
    %p458 = por %p456, %p457
    %p460 = scmp.ne.s32.totalorder %s443, %s459
    %p461 = scmp.eq.s32.totalorder %s31, 0
    %p462 = por %p460, %p461
    %p463 = scmp.le.s32.totalorder 1, %s25
    %p464 = scmp.lt.s32.totalorder %s25, 3
    %p465 = pnand %p463, %p464
    %p466 = pneg %p465
    // Predicated region
    $region9: #{swin_unet_forward.14} parent=5 // pred_check
      _
    $region10: #{swin_unet_forward.14} parent=5 // pred_check_branch
      %468 = sbr.rel (%p465) target = $region12
    $region11: #{swin_unet_forward.14} parent=5 // pred_region
      %s469 = ssub.s32 %s25, 1
      // Predicated region
      $region13: #{swin_unet_forward.14} parent=11 // pred_check
        %p470 = pneg %p72
      $region14: #{swin_unet_forward.14} parent=11 // pred_check_branch
        %472 = sbr.rel (%p470) target = $region16
      $region15: #{swin_unet_forward.14} parent=11 // pred_region
        _
      $region16: #{swin_unet_forward.14} parent=11 // pred_fallthru
        _
      // Predicated region
      $region17: #{swin_unet_forward.14} parent=11 // pred_check
        %p473 = pneg %p93
      $region18: #{swin_unet_forward.14} parent=11 // pred_check_branch
        %475 = sbr.rel (%p473) target = $region20
      $region19: #{swin_unet_forward.14} parent=11 // pred_region
        _
      $region20: #{swin_unet_forward.14} parent=11 // pred_fallthru
        _
      // Predicated region
      $region21: #{swin_unet_forward.14} parent=11 // pred_check
        %p476 = pneg %p114
      $region22: #{swin_unet_forward.14} parent=11 // pred_check_branch
        %478 = sbr.rel (%p476) target = $region24
      $region23: #{swin_unet_forward.14} parent=11 // pred_region
        _
      $region24: #{swin_unet_forward.14} parent=11 // pred_fallthru
        _
      // Predicated region
      $region25: #{swin_unet_forward.14} parent=11 // pred_check
        %p479 = pneg %p135
      $region26: #{swin_unet_forward.14} parent=11 // pred_check_branch
        %481 = sbr.rel (%p479) target = $region28
      $region27: #{swin_unet_forward.14} parent=11 // pred_region
        _
      $region28: #{swin_unet_forward.14} parent=11 // pred_fallthru
        _
      // Predicated region
      $region29: #{swin_unet_forward.14} parent=11 // pred_check
        %p482 = pneg %p156
      $region30: #{swin_unet_forward.14} parent=11 // pred_check_branch
        %484 = sbr.rel (%p482) target = $region32
      $region31: #{swin_unet_forward.14} parent=11 // pred_region
        _
      $region32: #{swin_unet_forward.14} parent=11 // pred_fallthru
        _
      // Predicated region
      $region33: #{swin_unet_forward.14} parent=11 // pred_check
        %p485 = pneg %p177
      $region34: #{swin_unet_forward.14} parent=11 // pred_check_branch
        %487 = sbr.rel (%p485) target = $region36
      $region35: #{swin_unet_forward.14} parent=11 // pred_region
        _
      $region36: #{swin_unet_forward.14} parent=11 // pred_fallthru
        _
      // Predicated region
      $region37: #{swin_unet_forward.14} parent=11 // pred_check
        %p488 = pneg %p198
      $region38: #{swin_unet_forward.14} parent=11 // pred_check_branch
        %490 = sbr.rel (%p488) target = $region40
      $region39: #{swin_unet_forward.14} parent=11 // pred_region
        _
      $region40: #{swin_unet_forward.14} parent=11 // pred_fallthru
        _
      // Predicated region
      $region41: #{swin_unet_forward.14} parent=11 // pred_check
        %p491 = pneg %p219
      $region42: #{swin_unet_forward.14} parent=11 // pred_check_branch
        %493 = sbr.rel (%p491) target = $region44
      $region43: #{swin_unet_forward.14} parent=11 // pred_region
        _
      $region44: #{swin_unet_forward.14} parent=11 // pred_fallthru
        _
      // Predicated region
      $region45: #{swin_unet_forward.14} parent=11 // pred_check
        %p494 = pneg %p240
      $region46: #{swin_unet_forward.14} parent=11 // pred_check_branch
        %496 = sbr.rel (%p494) target = $region48
      $region47: #{swin_unet_forward.14} parent=11 // pred_region
        _
      $region48: #{swin_unet_forward.14} parent=11 // pred_fallthru
        _
      // Predicated region
      $region49: #{swin_unet_forward.14} parent=11 // pred_check
        %p497 = pneg %p261
      $region50: #{swin_unet_forward.14} parent=11 // pred_check_branch
        %499 = sbr.rel (%p497) target = $region52
      $region51: #{swin_unet_forward.14} parent=11 // pred_region
        _
      $region52: #{swin_unet_forward.14} parent=11 // pred_fallthru
        _
      // Predicated region
      $region53: #{swin_unet_forward.14} parent=11 // pred_check
        %p500 = pneg %p282
      $region54: #{swin_unet_forward.14} parent=11 // pred_check_branch
        %502 = sbr.rel (%p500) target = $region56
      $region55: #{swin_unet_forward.14} parent=11 // pred_region
        _
      $region56: #{swin_unet_forward.14} parent=11 // pred_fallthru
        _
      // Predicated region
      $region57: #{swin_unet_forward.14} parent=11 // pred_check
        %p503 = pneg %p303
      $region58: #{swin_unet_forward.14} parent=11 // pred_check_branch
        %505 = sbr.rel (%p503) target = $region60
      $region59: #{swin_unet_forward.14} parent=11 // pred_region
        _
      $region60: #{swin_unet_forward.14} parent=11 // pred_fallthru
        _
      // Predicated region
      $region61: #{swin_unet_forward.14} parent=11 // pred_check
        %p506 = pneg %p324
      $region62: #{swin_unet_forward.14} parent=11 // pred_check_branch
        %508 = sbr.rel (%p506) target = $region64
      $region63: #{swin_unet_forward.14} parent=11 // pred_region
        _
      $region64: #{swin_unet_forward.14} parent=11 // pred_fallthru
        _
      // Predicated region
      $region65: #{swin_unet_forward.14} parent=11 // pred_check
        %p509 = pneg %p345
      $region66: #{swin_unet_forward.14} parent=11 // pred_check_branch
        %511 = sbr.rel (%p509) target = $region68
      $region67: #{swin_unet_forward.14} parent=11 // pred_region
        _
      $region68: #{swin_unet_forward.14} parent=11 // pred_fallthru
        _
      // Predicated region
      $region69: #{swin_unet_forward.14} parent=11 // pred_check
        %p512 = pneg %p366
      $region70: #{swin_unet_forward.14} parent=11 // pred_check_branch
        %514 = sbr.rel (%p512) target = $region72
      $region71: #{swin_unet_forward.14} parent=11 // pred_region
        _
      $region72: #{swin_unet_forward.14} parent=11 // pred_fallthru
        _
      // Predicated region
      $region73: #{swin_unet_forward.14} parent=11 // pred_check
        %p515 = pneg %p387
      $region74: #{swin_unet_forward.14} parent=11 // pred_check_branch
        %517 = sbr.rel (%p515) target = $region76
      $region75: #{swin_unet_forward.14} parent=11 // pred_region
        _
      $region76: #{swin_unet_forward.14} parent=11 // pred_fallthru
        _
      // Predicated region
      $region77: #{swin_unet_forward.14} parent=11 // pred_check
        %p518 = pneg %p408
      $region78: #{swin_unet_forward.14} parent=11 // pred_check_branch
        %520 = sbr.rel (%p518) target = $region80
      $region79: #{swin_unet_forward.14} parent=11 // pred_region
        _
      $region80: #{swin_unet_forward.14} parent=11 // pred_fallthru
        _
      // Predicated region
      $region81: #{swin_unet_forward.14} parent=11 // pred_check
        %p521 = pneg %p429
      $region82: #{swin_unet_forward.14} parent=11 // pred_check_branch
        %523 = sbr.rel (%p521) target = $region84
      $region83: #{swin_unet_forward.14} parent=11 // pred_region
        _
      $region84: #{swin_unet_forward.14} parent=11 // pred_fallthru
        _
    $region12: #{swin_unet_forward.14} parent=5 // pred_fallthru
      _
    %p524 = scmp.lt.s32.totalorder %s25, 2
    // Predicated region
    $region85: #{swin_unet_forward.14} parent=5 // pred_check
      %p525 = pneg %p524
    $region86: #{swin_unet_forward.14} parent=5 // pred_check_branch
      %527 = sbr.rel (%p525) target = $region88
    $region87: #{swin_unet_forward.14} parent=5 // pred_region
      // Predicated region
      $region89: #{swin_unet_forward.14} parent=87 // pred_check
        %p528 = pneg %p45
      $region90: #{swin_unet_forward.14} parent=87 // pred_check_branch
        %530 = sbr.rel (%p528) target = $region92
      $region91: #{swin_unet_forward.14} parent=87 // pred_region
        %p531 = scmp.lt.s32.totalorder %s25, 1
        %s532 = scalar_select %p531, %s25, 1
        %s533 = smul.addr %s532, 8
        %s534 = smul.addr %s533, 8
        %s535 = scalar_lea.vmem %s0, %s534
      $region92: #{swin_unet_forward.14} parent=87 // pred_fallthru
        _
    $region88: #{swin_unet_forward.14} parent=5 // pred_fallthru
      _
    %p536 = scmp.le.s32.totalorder 1, %s25
    %p537 = scmp.lt.s32.totalorder %s25, 3
    %p538 = pnand %p536, %p537
    %p539 = pneg %p538
    // Predicated region
    $region93: #{swin_unet_forward.14} parent=5 // pred_check
      _
    $region94: #{swin_unet_forward.14} parent=5 // pred_check_branch
      %541 = sbr.rel (%p538) target = $region96
    $region95: #{swin_unet_forward.14} parent=5 // pred_region
      %s542 = ssub.s32 %s25, 1
      %p543 = scmp.lt.s32.totalorder %s30, 1
      %s544 = scalar_select %p543, %s30, 1
      %s545 = smul.addr %s544, 8
      %s546 = smul.addr %s545, 8
      %s547 = scalar_lea.vmem %s0, %s546
      %p548 = pneg %p51
      %p549 = pneg %p48
      %p550 = pneg %p72
      %p551 = pneg %p69
      %p552 = pneg %p93
      %p553 = pneg %p90
      %p554 = pneg %p114
      %p555 = pneg %p111
      %p556 = pneg %p135
      %p557 = pneg %p132
      %p558 = pneg %p156
      %p559 = pneg %p153
      %p560 = pneg %p177
      %p561 = pneg %p174
      %p562 = pneg %p198
      %p563 = pneg %p195
      %p564 = pneg %p219
      %p565 = pneg %p216
      %p566 = pneg %p240
      %p567 = pneg %p237
      %p568 = pneg %p261
      %p569 = pneg %p258
      %p570 = pneg %p282
      %p571 = pneg %p279
      %p572 = pneg %p303
      %p573 = pneg %p300
      %p574 = pneg %p324
      %p575 = pneg %p321
      %p576 = pneg %p345
      %p577 = pneg %p342
      %p578 = pneg %p366
      %p579 = pneg %p363
      %p580 = pneg %p387
      %p581 = pneg %p384
      %p582 = pneg %p408
      %p583 = pneg %p405
      %p584 = pneg %p429
      %p585 = pneg %p426
      %p586 = pneg %p455
      %p587 = pneg %p452
      %p588 = scmp.lt.s32.totalorder %s30, 1
      %s589 = scalar_select %p588, %s30, 1
      %s590 = smul.addr %s589, 8
      %s591 = smul.addr %s590, 8
      %s592 = scalar_lea.vmem %s19, %s591
      %p593 = scmp.lt.s32.totalorder %s30, 1
      %s594 = scalar_select %p593, %s30, 1
      %s595 = smul.addr %s594, 8
      %s596 = smul.addr %s595, 8
      %s597 = scalar_lea.vmem %s0, %s596
      %p598 = scmp.lt.s32.totalorder %s30, 1
      %s599 = scalar_select %p598, %s30, 1
      %s600 = smul.addr %s599, 8
      %s601 = smul.addr %s600, 8
      %s602 = scalar_lea.vmem %s19, %s601
      %v604 = vld [vmem:[%s597] sm:$0xff]
      %v605 = vld [vmem:[%s597 + $0x8] sm:$0xff]
      %v606 = vld [vmem:[%s597 + $0x10] sm:$0xff]
      %v607 = vld [vmem:[%s597 + $0x18] sm:$0xff]
      %v608 = vld [vmem:[%s597 + $0x20] sm:$0xff]
      %v609 = vld [vmem:[%s597 + $0x28] sm:$0xff]
      %v610 = vld [vmem:[%s597 + $0x30] sm:$0xff]
      %v611 = vld [vmem:[%s597 + $0x38] sm:$0xff]
      %v612 = vld [vmem:[%s1] sm:$0x1]
      %v613 = vld [vmem:[%s2] sm:$0x1]
      %vm614 = vcmask 261120
      %v615 = vsel %vm614, %v604, 0.0
      %616 = vadd.xlane.f32.xlu0 %v615
      %v617 = vpop.xlane.xlu0 %616
      %v618 = vsel %vm614, %v605, 0.0
      %619 = vadd.xlane.f32.xlu0 %v618
      %v620 = vpop.xlane.xlu0 %619
      %v621 = vsel %vm614, %v606, 0.0
      %622 = vadd.xlane.f32.xlu0 %v621
      %v623 = vpop.xlane.xlu0 %622
      %v624 = vsel %vm614, %v607, 0.0
      %625 = vadd.xlane.f32.xlu0 %v624
      %v626 = vpop.xlane.xlu0 %625
      %v627 = vsel %vm614, %v608, 0.0
      %628 = vadd.xlane.f32.xlu0 %v627
      %v629 = vpop.xlane.xlu0 %628
      %v630 = vsel %vm614, %v609, 0.0
      %631 = vadd.xlane.f32.xlu0 %v630
      %v632 = vpop.xlane.xlu0 %631
      %v633 = vsel %vm614, %v610, 0.0
      %634 = vadd.xlane.f32.xlu0 %v633
      %v635 = vpop.xlane.xlu0 %634
      %v636 = vsel %vm614, %v611, 0.0
      %637 = vadd.xlane.f32.xlu0 %v636
      %v638 = vpop.xlane.xlu0 %637
      %v639 = vrcp.pop 32.0
      %v640 = vmul.f32 %v617, %v639
      %v641 = vmul.f32 %v620, %v639
      %v642 = vmul.f32 %v623, %v639
      %v643 = vmul.f32 %v626, %v639
      %v644 = vmul.f32 %v629, %v639
      %v645 = vmul.f32 %v632, %v639
      %v646 = vmul.f32 %v635, %v639
      %v647 = vmul.f32 %v638, %v639
      %v648 = vsub.f32 %v604, %v640
      %v649 = vsub.f32 %v605, %v641
      %v650 = vsub.f32 %v606, %v642
      %v651 = vsub.f32 %v607, %v643
      %v652 = vsub.f32 %v608, %v644
      %v653 = vsub.f32 %v609, %v645
      %v654 = vsub.f32 %v610, %v646
      %v655 = vsub.f32 %v611, %v647
      %v656 = vmul.f32 %v648, %v648
      %v657 = vmul.f32 %v649, %v649
      %v658 = vmul.f32 %v650, %v650
      %v659 = vmul.f32 %v651, %v651
      %v660 = vmul.f32 %v652, %v652
      %v661 = vmul.f32 %v653, %v653
      %v662 = vmul.f32 %v654, %v654
      %v663 = vmul.f32 %v655, %v655
      %v664 = vsel %vm614, %v656, 0.0
      %665 = vadd.xlane.f32.xlu0 %v664
      %v666 = vpop.xlane.xlu0 %665
      %v667 = vsel %vm614, %v657, 0.0
      %668 = vadd.xlane.f32.xlu0 %v667
      %v669 = vpop.xlane.xlu0 %668
      %v670 = vsel %vm614, %v658, 0.0
      %671 = vadd.xlane.f32.xlu0 %v670
      %v672 = vpop.xlane.xlu0 %671
      %v673 = vsel %vm614, %v659, 0.0
      %674 = vadd.xlane.f32.xlu0 %v673
      %v675 = vpop.xlane.xlu0 %674
      %v676 = vsel %vm614, %v660, 0.0
      %677 = vadd.xlane.f32.xlu0 %v676
      %v678 = vpop.xlane.xlu0 %677
      %v679 = vsel %vm614, %v661, 0.0
      %680 = vadd.xlane.f32.xlu0 %v679
      %v681 = vpop.xlane.xlu0 %680
      %v682 = vsel %vm614, %v662, 0.0
      %683 = vadd.xlane.f32.xlu0 %v682
      %v684 = vpop.xlane.xlu0 %683
      %v685 = vsel %vm614, %v663, 0.0
      %686 = vadd.xlane.f32.xlu0 %v685
      %v687 = vpop.xlane.xlu0 %686
      %v688 = vmul.f32 %v666, %v639
      %v689 = vmul.f32 %v669, %v639
      %v690 = vmul.f32 %v672, %v639
      %v691 = vmul.f32 %v675, %v639
      %v692 = vmul.f32 %v678, %v639
      %v693 = vmul.f32 %v681, %v639
      %v694 = vmul.f32 %v684, %v639
      %v695 = vmul.f32 %v687, %v639
      %v696 = vadd.f32 %v688, 1e-05
      %v697 = vadd.f32 %v689, 1e-05
      %v698 = vadd.f32 %v690, 1e-05
      %v699 = vadd.f32 %v691, 1e-05
      %v700 = vadd.f32 %v692, 1e-05
      %v701 = vadd.f32 %v693, 1e-05
      %v702 = vadd.f32 %v694, 1e-05
      %v703 = vadd.f32 %v695, 1e-05
      %v704 = vrsqrt.pop %v696
      %v705 = vrsqrt.pop %v697
      %v706 = vrsqrt.pop %v698
      %v707 = vrsqrt.pop %v699
      %v708 = vrsqrt.pop %v700
      %v709 = vrsqrt.pop %v701
      %v710 = vrsqrt.pop %v702
      %v711 = vrsqrt.pop %v703
      %v712 = vmul.f32 %v648, %v704
      %v713 = vmul.f32 %v649, %v705
      %v714 = vmul.f32 %v650, %v706
      %v715 = vmul.f32 %v651, %v707
      %v716 = vmul.f32 %v652, %v708
      %v717 = vmul.f32 %v653, %v709
      %v718 = vmul.f32 %v654, %v710
      %v719 = vmul.f32 %v655, %v711
      %v721 = vlaneseq
      %v722 = vshrl.u32 %v721, 7
      %v723 = vsub.s32 0, %v722
      %v724 = vrot.slane %v612, %v723
      %v726 = vmul.f32 %v712, %v724
      %v727 = vmul.f32 %v713, %v724
      %v728 = vmul.f32 %v714, %v724
      %v729 = vmul.f32 %v715, %v724
      %v730 = vmul.f32 %v716, %v724
      %v731 = vmul.f32 %v717, %v724
      %v732 = vmul.f32 %v718, %v724
      %v733 = vmul.f32 %v719, %v724
      %v735 = vlaneseq
      %v736 = vshrl.u32 %v735, 7
      %v737 = vsub.s32 0, %v736
      %v738 = vrot.slane %v613, %v737
      %v740 = vadd.f32 %v726, %v738
      %v741 = vadd.f32 %v727, %v738
      %v742 = vadd.f32 %v728, %v738
      %v743 = vadd.f32 %v729, %v738
      %v744 = vadd.f32 %v730, %v738
      %v745 = vadd.f32 %v731, %v738
      %v746 = vadd.f32 %v732, %v738
      %v747 = vadd.f32 %v733, %v738
      %v748 = vpack.c.bf16 %v741, %v740
      %v749 = vpack.c.bf16 %v743, %v742
      %v750 = vpack.c.bf16 %v745, %v744
      %v751 = vpack.c.bf16 %v747, %v746
      %v752 = vld [vmem:[%s3] sm:$0xf]
      %v753 = vld [vmem:[%s3 + $0x4] sm:$0xf]
      %v754 = vld [vmem:[%s3 + $0x8] sm:$0xf]
      %v755 = vld [vmem:[%s3 + $0xc] sm:$0xf]
      %v756 = vld [vmem:[%s4] sm:$0x1]
      %v758 = vlaneseq
      %v759 = vshrl.u32 %v758, 7
      %v760 = vsub.s32 0, %v759
      %v761 = vrot.slane %v756, %v760
      %v767 = vunpack.c.l.b16 %v752
      %v768 = vunpack.c.l.b16 %v753
      %v769 = vunpack.c.l.b16 %v754
      %v770 = vunpack.c.l.b16 %v755
      %v771 = vpack.c.b16 %v768, %v767
      %v772 = vpack.c.b16 %v770, %v769
      %v776 = vsel %vm614, %v748, 0
      %v779 = vsel %vm614, %v749, 0
      %v782 = vsel %vm614, %v750, 0
      %v785 = vsel %vm614, %v751, 0
      %787 = vmatprep.subr.bf16.mxu0 0
      %788 = vmatpush1.bf16.msra.mxu0 %v771
      %789 = vmatprep.subr.bf16.mxu0 0
      %790 = vmatpush1.bf16.msra.mxu0 %v772
      %791 = vmatprep.subr.bf16.mxu0 0
      %792 = vmatpush1.bf16.msra.mxu0 0
      %793 = vmatprep.subr.bf16.mxu0 0
      %794 = vmatpush1.bf16.msra.mxu0 0
      %795 = vmatprep.subr.bf16.mxu0 0
      %796 = vmatpush1.bf16.msra.mxu0 0
      %797 = vmatprep.subr.bf16.mxu0 0
      %798 = vmatpush1.bf16.msra.mxu0 0
      %799 = vmatprep.subr.bf16.mxu0 0
      %800 = vmatpush1.bf16.msra.mxu0 0
      %801 = vmatprep.subr.bf16.mxu0 0
      %802 = vmatpush1.bf16.msra.mxu0 0
      %803 = vmatprep.subr.bf16.mxu0 0
      %804 = vmatpush1.bf16.msra.mxu0 0
      %805 = vmatprep.subr.bf16.mxu0 0
      %806 = vmatpush1.bf16.msra.mxu0 0
      %807 = vmatprep.subr.bf16.mxu0 0
      %808 = vmatpush1.bf16.msra.mxu0 0
      %809 = vmatprep.subr.bf16.mxu0 0
      %810 = vmatpush1.bf16.msra.mxu0 0
      %811 = vmatprep.subr.bf16.mxu0 0
      %812 = vmatpush1.bf16.msra.mxu0 0
      %813 = vmatprep.subr.bf16.mxu0 0
      %814 = vmatpush1.bf16.msra.mxu0 0
      %815 = vmatprep.subr.bf16.mxu0 0
      %816 = vmatpush1.bf16.msra.mxu0 0
      %817 = vmatprep.subr.bf16.mxu0 0
      %818 = vmatpush1.bf16.msra.mxu0 0
      %819 = vmatprep.mubr.bf16.mxu0 0
      %820 = vmatmul.mubr.bf16.gmra.mrb[0].mxu0 %v776
      %v821 = vpop.f32.mrb[0].mxu0
      %v822 = vadd.f32 %v761, %v821
      %v823 = vpop.f32.mrb[0].mxu0
      %v824 = vpop.f32.mrb[0].mxu0
      %v825 = vadd.f32 %v761, %v824
      %v826 = vpop.f32.mrb[0].mxu0
      %827 = vmatprep.mubr.bf16.mxu0 0
      %828 = vmatmul.mubr.bf16.gmra.mrb[0].mxu0 %v779
      %v829 = vpop.f32.mrb[0].mxu0
      %v830 = vadd.f32 %v761, %v829
      %v831 = vpop.f32.mrb[0].mxu0
      %v832 = vpop.f32.mrb[0].mxu0
      %v833 = vadd.f32 %v761, %v832
      %v834 = vpop.f32.mrb[0].mxu0
      %835 = vmatprep.mubr.bf16.mxu0 0
      %836 = vmatmul.mubr.bf16.gmra.mrb[0].mxu0 %v782
      %v837 = vpop.f32.mrb[0].mxu0
      %v838 = vadd.f32 %v761, %v837
      %v839 = vpop.f32.mrb[0].mxu0
      %v840 = vpop.f32.mrb[0].mxu0
      %v841 = vadd.f32 %v761, %v840
      %v842 = vpop.f32.mrb[0].mxu0
      %843 = vmatprep.mubr.bf16.mxu0 0
      %844 = vmatmul.mubr.bf16.gmra.mrb[0].mxu0 %v785
      %v845 = vpop.f32.mrb[0].mxu0
      %v846 = vadd.f32 %v761, %v845
      %v847 = vpop.f32.mrb[0].mxu0
      %v848 = vpop.f32.mrb[0].mxu0
      %v849 = vadd.f32 %v761, %v848
      %v850 = vpop.f32.mrb[0].mxu0
      %851 = vdwg.mxu0
      %v852 = vld [vmem:[%s5] sm:$0xf]
      %v853 = vld [vmem:[%s5 + $0x4] sm:$0xf]
      %v854 = vld [vmem:[%s5 + $0x8] sm:$0xf]
      %v855 = vld [vmem:[%s5 + $0xc] sm:$0xf]
      %v856 = vld [vmem:[%s6] sm:$0x1]
      %v858 = vlaneseq
      %v859 = vshrl.u32 %v858, 7
      %v860 = vsub.s32 0, %v859
      %v861 = vrot.slane %v856, %v860
      %v867 = vunpack.c.l.b16 %v852
      %v868 = vunpack.c.l.b16 %v853
      %v869 = vunpack.c.l.b16 %v854
      %v870 = vunpack.c.l.b16 %v855
      %v871 = vpack.c.b16 %v868, %v867
      %v872 = vpack.c.b16 %v870, %v869
      %875 = vmatprep.subr.bf16.mxu0 0
      %876 = vmatpush1.bf16.msra.mxu0 %v871
      %877 = vmatprep.subr.bf16.mxu0 0
      %878 = vmatpush1.bf16.msra.mxu0 %v872
      %879 = vmatprep.subr.bf16.mxu0 0
      %880 = vmatpush1.bf16.msra.mxu0 0
      %881 = vmatprep.subr.bf16.mxu0 0
      %882 = vmatpush1.bf16.msra.mxu0 0
      %883 = vmatprep.subr.bf16.mxu0 0
      %884 = vmatpush1.bf16.msra.mxu0 0
      %885 = vmatprep.subr.bf16.mxu0 0
      %886 = vmatpush1.bf16.msra.mxu0 0
      %887 = vmatprep.subr.bf16.mxu0 0
      %888 = vmatpush1.bf16.msra.mxu0 0
      %889 = vmatprep.subr.bf16.mxu0 0
      %890 = vmatpush1.bf16.msra.mxu0 0
      %891 = vmatprep.subr.bf16.mxu0 0
      %892 = vmatpush1.bf16.msra.mxu0 0
      %893 = vmatprep.subr.bf16.mxu0 0
      %894 = vmatpush1.bf16.msra.mxu0 0
      %895 = vmatprep.subr.bf16.mxu0 0
      %896 = vmatpush1.bf16.msra.mxu0 0
      %897 = vmatprep.subr.bf16.mxu0 0
      %898 = vmatpush1.bf16.msra.mxu0 0
      %899 = vmatprep.subr.bf16.mxu0 0
      %900 = vmatpush1.bf16.msra.mxu0 0
      %901 = vmatprep.subr.bf16.mxu0 0
      %902 = vmatpush1.bf16.msra.mxu0 0
      %903 = vmatprep.subr.bf16.mxu0 0
      %904 = vmatpush1.bf16.msra.mxu0 0
      %905 = vmatprep.subr.bf16.mxu0 0
      %906 = vmatpush1.bf16.msra.mxu0 0
      %907 = vmatprep.mubr.bf16.mxu0 0
      %908 = vmatmul.mubr.bf16.gmra.mrb[0].mxu0 %v776
      %v909 = vpop.f32.mrb[0].mxu0
      %v910 = vadd.f32 %v861, %v909
      %v911 = vpop.f32.mrb[0].mxu0
      %v912 = vpop.f32.mrb[0].mxu0
      %v913 = vadd.f32 %v861, %v912
      %v914 = vpop.f32.mrb[0].mxu0
      %915 = vmatprep.mubr.bf16.mxu0 0
      %916 = vmatmul.mubr.bf16.gmra.mrb[0].mxu0 %v779
      %v917 = vpop.f32.mrb[0].mxu0
      %v918 = vadd.f32 %v861, %v917
      %v919 = vpop.f32.mrb[0].mxu0
      %v920 = vpop.f32.mrb[0].mxu0
      %v921 = vadd.f32 %v861, %v920
      %v922 = vpop.f32.mrb[0].mxu0
      %923 = vmatprep.mubr.bf16.mxu0 0
      %924 = vmatmul.mubr.bf16.gmra.mrb[0].mxu0 %v782
      %v925 = vpop.f32.mrb[0].mxu0
      %v926 = vadd.f32 %v861, %v925
      %v927 = vpop.f32.mrb[0].mxu0
      %v928 = vpop.f32.mrb[0].mxu0
      %v929 = vadd.f32 %v861, %v928
      %v930 = vpop.f32.mrb[0].mxu0
      %931 = vmatprep.mubr.bf16.mxu0 0
      %932 = vmatmul.mubr.bf16.gmra.mrb[0].mxu0 %v785
      %v933 = vpop.f32.mrb[0].mxu0
      %v934 = vadd.f32 %v861, %v933
      %v935 = vpop.f32.mrb[0].mxu0
      %v936 = vpop.f32.mrb[0].mxu0
      %v937 = vadd.f32 %v861, %v936
      %v938 = vpop.f32.mrb[0].mxu0
      %939 = vdwg.mxu0
      %v940 = vld [vmem:[%s7] sm:$0xf]
      %v941 = vld [vmem:[%s7 + $0x4] sm:$0xf]
      %v942 = vld [vmem:[%s7 + $0x8] sm:$0xf]
      %v943 = vld [vmem:[%s7 + $0xc] sm:$0xf]
      %v944 = vld [vmem:[%s8] sm:$0x1]
      %v946 = vlaneseq
      %v947 = vshrl.u32 %v946, 7
      %v948 = vsub.s32 0, %v947
      %v949 = vrot.slane %v944, %v948
      %v955 = vunpack.c.l.b16 %v940
      %v956 = vunpack.c.l.b16 %v941
      %v957 = vunpack.c.l.b16 %v942
      %v958 = vunpack.c.l.b16 %v943
      %v959 = vpack.c.b16 %v956, %v955
      %v960 = vpack.c.b16 %v958, %v957
      %963 = vmatprep.subr.bf16.mxu0 0
      %964 = vmatpush1.bf16.msra.mxu0 %v959
      %965 = vmatprep.subr.bf16.mxu0 0
      %966 = vmatpush1.bf16.msra.mxu0 %v960
      %967 = vmatprep.subr.bf16.mxu0 0
      %968 = vmatpush1.bf16.msra.mxu0 0
      %969 = vmatprep.subr.bf16.mxu0 0
      %970 = vmatpush1.bf16.msra.mxu0 0
      %971 = vmatprep.subr.bf16.mxu0 0
      %972 = vmatpush1.bf16.msra.mxu0 0
      %973 = vmatprep.subr.bf16.mxu0 0
      %974 = vmatpush1.bf16.msra.mxu0 0
      %975 = vmatprep.subr.bf16.mxu0 0
      %976 = vmatpush1.bf16.msra.mxu0 0
      %977 = vmatprep.subr.bf16.mxu0 0
      %978 = vmatpush1.bf16.msra.mxu0 0
      %979 = vmatprep.subr.bf16.mxu0 0
      %980 = vmatpush1.bf16.msra.mxu0 0
      %981 = vmatprep.subr.bf16.mxu0 0
      %982 = vmatpush1.bf16.msra.mxu0 0
      %983 = vmatprep.subr.bf16.mxu0 0
      %984 = vmatpush1.bf16.msra.mxu0 0
      %985 = vmatprep.subr.bf16.mxu0 0
      %986 = vmatpush1.bf16.msra.mxu0 0
      %987 = vmatprep.subr.bf16.mxu0 0
      %988 = vmatpush1.bf16.msra.mxu0 0
      %989 = vmatprep.subr.bf16.mxu0 0
      %990 = vmatpush1.bf16.msra.mxu0 0
      %991 = vmatprep.subr.bf16.mxu0 0
      %992 = vmatpush1.bf16.msra.mxu0 0
      %993 = vmatprep.subr.bf16.mxu0 0
      %994 = vmatpush1.bf16.msra.mxu0 0
      %995 = vmatprep.mubr.bf16.mxu0 0
      %996 = vmatmul.mubr.bf16.gmra.mrb[0].mxu0 %v776
      %v997 = vpop.f32.mrb[0].mxu0
      %v998 = vadd.f32 %v949, %v997
      %v999 = vpop.f32.mrb[0].mxu0
      %v1000 = vpop.f32.mrb[0].mxu0
      %v1001 = vadd.f32 %v949, %v1000
      %v1002 = vpop.f32.mrb[0].mxu0
      %1003 = vmatprep.mubr.bf16.mxu0 0
      %1004 = vmatmul.mubr.bf16.gmra.mrb[0].mxu0 %v779
      %v1005 = vpop.f32.mrb[0].mxu0
      %v1006 = vadd.f32 %v949, %v1005
      %v1007 = vpop.f32.mrb[0].mxu0
      %v1008 = vpop.f32.mrb[0].mxu0
      %v1009 = vadd.f32 %v949, %v1008
      %v1010 = vpop.f32.mrb[0].mxu0
      %1011 = vmatprep.mubr.bf16.mxu0 0
      %1012 = vmatmul.mubr.bf16.gmra.mrb[0].mxu0 %v782
      %v1013 = vpop.f32.mrb[0].mxu0
      %v1014 = vadd.f32 %v949, %v1013
      %v1015 = vpop.f32.mrb[0].mxu0
      %v1016 = vpop.f32.mrb[0].mxu0
      %v1017 = vadd.f32 %v949, %v1016
      %v1018 = vpop.f32.mrb[0].mxu0
      %1019 = vmatprep.mubr.bf16.mxu0 0
      %1020 = vmatmul.mubr.bf16.gmra.mrb[0].mxu0 %v785
      %v1021 = vpop.f32.mrb[0].mxu0
      %v1022 = vadd.f32 %v949, %v1021
      %v1023 = vpop.f32.mrb[0].mxu0
      %v1024 = vpop.f32.mrb[0].mxu0
      %v1025 = vadd.f32 %v949, %v1024
      %v1026 = vpop.f32.mrb[0].mxu0
      %1027 = vdwg.mxu0
      %v1028 = vld [vmem:[%s9] sm:$0x3]
      %v1029 = vpack.c.bf16 %v913, %v910
      %v1030 = vpack.c.bf16 %v921, %v918
      %v1031 = vpack.c.bf16 %v929, %v926
      %v1032 = vpack.c.bf16 %v937, %v934
      %v1033 = vlaneseq
      %v1034 = vshrl.u32 %v1033, 7
      %v1035 = vsub.s32 0, %v1034
      %v1036 = vrot.slane %v1028, %v1035
      %v1037 = vmul.f32 %v822, %v1036
      %v1038 = vmul.f32 %v825, %v1036
      %v1039 = vmul.f32 %v830, %v1036
      %v1040 = vmul.f32 %v833, %v1036
      %v1041 = vmul.f32 %v838, %v1036
      %v1042 = vmul.f32 %v841, %v1036
      %v1043 = vmul.f32 %v846, %v1036
      %v1044 = vmul.f32 %v849, %v1036
      %v1045 = vmul.f32 %v1037, 0.25
      %v1046 = vmul.f32 %v1038, 0.25
      %v1047 = vmul.f32 %v1039, 0.25
      %v1048 = vmul.f32 %v1040, 0.25
      %v1049 = vmul.f32 %v1041, 0.25
      %v1050 = vmul.f32 %v1042, 0.25
      %v1051 = vmul.f32 %v1043, 0.25
      %v1052 = vmul.f32 %v1044, 0.25
      %v1053 = vpack.c.bf16 %v1046, %v1045
      %v1054 = vpack.c.bf16 %v1048, %v1047
      %v1055 = vpack.c.bf16 %v1050, %v1049
      %v1056 = vpack.c.bf16 %v1052, %v1051
      %v1057 = vld [vmem:[%s10] sm:$0xff]
      %v1058 = vld [vmem:[%s10 + $0x8] sm:$0xff]
      %v1059 = vld [vmem:[%s10 + $0x10] sm:$0xff]
      %v1060 = vld [vmem:[%s10 + $0x18] sm:$0xff]
      %v1061 = vld [vmem:[%s10 + $0x20] sm:$0xff]
      %v1062 = vld [vmem:[%s10 + $0x28] sm:$0xff]
      %v1063 = vld [vmem:[%s10 + $0x30] sm:$0xff]
      %v1064 = vld [vmem:[%s10 + $0x38] sm:$0xff]
      %v1066 = vsel %vm614, %v1053, 0
      %v1069 = vsel %vm614, %v1054, 0
      %v1072 = vsel %vm614, %v1055, 0
      %v1075 = vsel %vm614, %v1056, 0
      %v1078 = vsel %vm614, %v1029, 0
      %v1081 = vsel %vm614, %v1030, 0
      %v1084 = vsel %vm614, %v1031, 0
      %v1087 = vsel %vm614, %v1032, 0
      %1089 = vmatprep.subr.bf16.mxu0 0
      %1090 = vmatpush1.bf16.xpose.msra.mxu0 %v1078
      %1091 = vmatprep.subr.bf16.mxu0 0
      %1092 = vmatpush1.bf16.xpose.msra.mxu0 %v1081
      %1093 = vmatprep.subr.bf16.mxu0 0
      %1094 = vmatpush1.bf16.xpose.msra.mxu0 %v1084
      %1095 = vmatprep.subr.bf16.mxu0 0
      %1096 = vmatpush1.bf16.xpose.msra.mxu0 %v1087
      %1097 = vmatprep.subr.bf16.mxu0 0
      %1098 = vmatpush1.bf16.xpose.msra.mxu0 0
      %1099 = vmatprep.subr.bf16.mxu0 0
      %1100 = vmatpush1.bf16.xpose.msra.mxu0 0
      %1101 = vmatprep.subr.bf16.mxu0 0
      %1102 = vmatpush1.bf16.xpose.msra.mxu0 0
      %1103 = vmatprep.subr.bf16.mxu0 0
      %1104 = vmatpush1.bf16.xpose.msra.mxu0 0
      %1105 = vmatprep.subr.bf16.mxu0 0
      %1106 = vmatpush1.bf16.xpose.msra.mxu0 0
      %1107 = vmatprep.subr.bf16.mxu0 0
      %1108 = vmatpush1.bf16.xpose.msra.mxu0 0
      %1109 = vmatprep.subr.bf16.mxu0 0
      %1110 = vmatpush1.bf16.xpose.msra.mxu0 0
      %1111 = vmatprep.subr.bf16.mxu0 0
      %1112 = vmatpush1.bf16.xpose.msra.mxu0 0
      %1113 = vmatprep.subr.bf16.mxu0 0
      %1114 = vmatpush1.bf16.xpose.msra.mxu0 0
      %1115 = vmatprep.subr.bf16.mxu0 0
      %1116 = vmatpush1.bf16.xpose.msra.mxu0 0
      %1117 = vmatprep.subr.bf16.mxu0 0
      %1118 = vmatpush1.bf16.xpose.msra.mxu0 0
      %1119 = vmatprep.subr.bf16.mxu0 0
      %1120 = vmatpush1.bf16.xpose.msra.mxu0 0
      %1121 = vmatprep.mubr.bf16.mxu0 0
      %1122 = vmatmul.mubr.bf16.gmra.mrb[0].mxu0 %v1066
      %v1123 = vpop.f32.mrb[0].mxu0
      %v1124 = vadd.f32 %v1057, %v1123
      %v1125 = vpop.f32.mrb[0].mxu0
      %v1126 = vpop.f32.mrb[0].mxu0
      %v1127 = vadd.f32 %v1058, %v1126
      %v1128 = vpop.f32.mrb[0].mxu0
      %1129 = vmatprep.mubr.bf16.mxu0 0
      %1130 = vmatmul.mubr.bf16.gmra.mrb[0].mxu0 %v1069
      %v1131 = vpop.f32.mrb[0].mxu0
      %v1132 = vadd.f32 %v1059, %v1131
      %v1133 = vpop.f32.mrb[0].mxu0
      %v1134 = vpop.f32.mrb[0].mxu0
      %v1135 = vadd.f32 %v1060, %v1134
      %v1136 = vpop.f32.mrb[0].mxu0
      %1137 = vmatprep.mubr.bf16.mxu0 0
      %1138 = vmatmul.mubr.bf16.gmra.mrb[0].mxu0 %v1072
      %v1139 = vpop.f32.mrb[0].mxu0
      %v1140 = vadd.f32 %v1061, %v1139
      %v1141 = vpop.f32.mrb[0].mxu0
      %v1142 = vpop.f32.mrb[0].mxu0
      %v1143 = vadd.f32 %v1062, %v1142
      %v1144 = vpop.f32.mrb[0].mxu0
      %1145 = vmatprep.mubr.bf16.mxu0 0
      %1146 = vmatmul.mubr.bf16.gmra.mrb[0].mxu0 %v1075
      %v1147 = vpop.f32.mrb[0].mxu0
      %v1148 = vadd.f32 %v1063, %v1147
      %v1149 = vpop.f32.mrb[0].mxu0
      %v1150 = vpop.f32.mrb[0].mxu0
      %v1151 = vadd.f32 %v1064, %v1150
      %v1152 = vpop.f32.mrb[0].mxu0
      %1153 = vdwg.mxu0
      %vm1154 = vcmask 523264
      %v1155 = vsel %vm1154, %v1124, -inf
      %1156 = vmax.xlane.f32.xlu0 %v1155
      %v1157 = vpop.xlane.xlu0 %1156
      %v1158 = vsel %vm1154, %v1127, -inf
      %1159 = vmax.xlane.f32.xlu0 %v1158
      %v1160 = vpop.xlane.xlu0 %1159
      %v1161 = vsel %vm1154, %v1132, -inf
      %1162 = vmax.xlane.f32.xlu0 %v1161
      %v1163 = vpop.xlane.xlu0 %1162
      %v1164 = vsel %vm1154, %v1135, -inf
      %1165 = vmax.xlane.f32.xlu0 %v1164
      %v1166 = vpop.xlane.xlu0 %1165
      %v1167 = vsel %vm1154, %v1140, -inf
      %1168 = vmax.xlane.f32.xlu0 %v1167
      %v1169 = vpop.xlane.xlu0 %1168
      %v1170 = vsel %vm1154, %v1143, -inf
      %1171 = vmax.xlane.f32.xlu0 %v1170
      %v1172 = vpop.xlane.xlu0 %1171
      %v1173 = vsel %vm1154, %v1148, -inf
      %1174 = vmax.xlane.f32.xlu0 %v1173
      %v1175 = vpop.xlane.xlu0 %1174
      %v1176 = vsel %vm1154, %v1151, -inf
      %1177 = vmax.xlane.f32.xlu0 %v1176
      %v1178 = vpop.xlane.xlu0 %1177
      %v1179 = vsub.f32 %v1124, %v1157
      %v1180 = vsub.f32 %v1127, %v1160
      %v1181 = vsub.f32 %v1132, %v1163
      %v1182 = vsub.f32 %v1135, %v1166
      %v1183 = vsub.f32 %v1140, %v1169
      %v1184 = vsub.f32 %v1143, %v1172
      %v1185 = vsub.f32 %v1148, %v1175
      %v1186 = vsub.f32 %v1151, %v1178
      %v1187 = vmul.f32 %v1179, 1.442695
      %v1188 = vpow.pop %v1187
      %v1189 = vmul.f32 %v1180, 1.442695
      %v1190 = vpow.pop %v1189
      %v1191 = vmul.f32 %v1181, 1.442695
      %v1192 = vpow.pop %v1191
      %v1193 = vmul.f32 %v1182, 1.442695
      %v1194 = vpow.pop %v1193
      %v1195 = vmul.f32 %v1183, 1.442695
      %v1196 = vpow.pop %v1195
      %v1197 = vmul.f32 %v1184, 1.442695
      %v1198 = vpow.pop %v1197
      %v1199 = vmul.f32 %v1185, 1.442695
      %v1200 = vpow.pop %v1199
      %v1201 = vmul.f32 %v1186, 1.442695
      %v1202 = vpow.pop %v1201
      %v1203 = vsel %vm1154, %v1188, 0.0
      %1204 = vadd.xlane.f32.xlu0 %v1203
      %v1205 = vpop.xlane.xlu0 %1204
      %v1206 = vsel %vm1154, %v1190, 0.0
      %1207 = vadd.xlane.f32.xlu0 %v1206
      %v1208 = vpop.xlane.xlu0 %1207
      %v1209 = vsel %vm1154, %v1192, 0.0
      %1210 = vadd.xlane.f32.xlu0 %v1209
      %v1211 = vpop.xlane.xlu0 %1210
      %v1212 = vsel %vm1154, %v1194, 0.0
      %1213 = vadd.xlane.f32.xlu0 %v1212
      %v1214 = vpop.xlane.xlu0 %1213
      %v1215 = vsel %vm1154, %v1196, 0.0
      %1216 = vadd.xlane.f32.xlu0 %v1215
      %v1217 = vpop.xlane.xlu0 %1216
      %v1218 = vsel %vm1154, %v1198, 0.0
      %1219 = vadd.xlane.f32.xlu0 %v1218
      %v1220 = vpop.xlane.xlu0 %1219
      %v1221 = vsel %vm1154, %v1200, 0.0
      %1222 = vadd.xlane.f32.xlu0 %v1221
      %v1223 = vpop.xlane.xlu0 %1222
      %v1224 = vsel %vm1154, %v1202, 0.0
      %1225 = vadd.xlane.f32.xlu0 %v1224
      %v1226 = vpop.xlane.xlu0 %1225
      %v1227 = vrcp.pop %v1205
      %v1228 = vrcp.pop %v1208
      %v1229 = vrcp.pop %v1211
      %v1230 = vrcp.pop %v1214
      %v1231 = vrcp.pop %v1217
      %v1232 = vrcp.pop %v1220
      %v1233 = vrcp.pop %v1223
      %v1234 = vrcp.pop %v1226
      %v1235 = vmul.f32 %v1188, %v1227
      %v1236 = vmul.f32 %v1190, %v1228
      %v1237 = vmul.f32 %v1192, %v1229
      %v1238 = vmul.f32 %v1194, %v1230
      %v1239 = vmul.f32 %v1196, %v1231
      %v1240 = vmul.f32 %v1198, %v1232
      %v1241 = vmul.f32 %v1200, %v1233
      %v1242 = vmul.f32 %v1202, %v1234
      %v1243 = vmul.f32 %v998, %v1036
      %v1244 = vmul.f32 %v1001, %v1036
      %v1245 = vmul.f32 %v1006, %v1036
      %v1246 = vmul.f32 %v1009, %v1036
      %v1247 = vmul.f32 %v1014, %v1036
      %v1248 = vmul.f32 %v1017, %v1036
      %v1249 = vmul.f32 %v1022, %v1036
      %v1250 = vmul.f32 %v1025, %v1036
      %v1251 = vpack.c.bf16 %v1244, %v1243
      %v1252 = vpack.c.bf16 %v1246, %v1245
      %v1253 = vpack.c.bf16 %v1248, %v1247
      %v1254 = vpack.c.bf16 %v1250, %v1249
      %v1255 = vpack.c.bf16 %v1236, %v1235
      %v1256 = vpack.c.bf16 %v1238, %v1237
      %v1257 = vpack.c.bf16 %v1240, %v1239
      %v1258 = vpack.c.bf16 %v1242, %v1241
      %v1259 = vlaneseq
      %v1260 = vshrl.u32 %v1259, 7
      %v1261 = vsub.s32 1, %v1260
      %v1262 = vrot.slane %v1028, %v1261
      %v1263 = vmul.f32 %v822, %v1262
      %v1264 = vmul.f32 %v825, %v1262
      %v1265 = vmul.f32 %v830, %v1262
      %v1266 = vmul.f32 %v833, %v1262
      %v1267 = vmul.f32 %v838, %v1262
      %v1268 = vmul.f32 %v841, %v1262
      %v1269 = vmul.f32 %v846, %v1262
      %v1270 = vmul.f32 %v849, %v1262
      %v1271 = vmul.f32 %v1263, 0.25
      %v1272 = vmul.f32 %v1264, 0.25
      %v1273 = vmul.f32 %v1265, 0.25
      %v1274 = vmul.f32 %v1266, 0.25
      %v1275 = vmul.f32 %v1267, 0.25
      %v1276 = vmul.f32 %v1268, 0.25
      %v1277 = vmul.f32 %v1269, 0.25
      %v1278 = vmul.f32 %v1270, 0.25
      %v1279 = vpack.c.bf16 %v1272, %v1271
      %v1280 = vpack.c.bf16 %v1274, %v1273
      %v1281 = vpack.c.bf16 %v1276, %v1275
      %v1282 = vpack.c.bf16 %v1278, %v1277
      %s1283 = scalar_lea.vmem %s10, 64
      %v1284 = vld [vmem:[%s1283] sm:$0xff]
      %v1285 = vld [vmem:[%s1283 + $0x8] sm:$0xff]
      %v1286 = vld [vmem:[%s1283 + $0x10] sm:$0xff]
      %v1287 = vld [vmem:[%s1283 + $0x18] sm:$0xff]
      %v1288 = vld [vmem:[%s1283 + $0x20] sm:$0xff]
      %v1289 = vld [vmem:[%s1283 + $0x28] sm:$0xff]
      %v1290 = vld [vmem:[%s1283 + $0x30] sm:$0xff]
      %v1291 = vld [vmem:[%s1283 + $0x38] sm:$0xff]
      %v1293 = vsel %vm614, %v1279, 0
      %v1296 = vsel %vm614, %v1280, 0
      %v1299 = vsel %vm614, %v1281, 0
      %v1302 = vsel %vm614, %v1282, 0
      %1304 = vmatprep.subr.bf16.mxu0 0
      %1305 = vmatpush1.bf16.xpose.msra.mxu0 %v1078
      %1306 = vmatprep.subr.bf16.mxu0 0
      %1307 = vmatpush1.bf16.xpose.msra.mxu0 %v1081
      %1308 = vmatprep.subr.bf16.mxu0 0
      %1309 = vmatpush1.bf16.xpose.msra.mxu0 %v1084
      %1310 = vmatprep.subr.bf16.mxu0 0
      %1311 = vmatpush1.bf16.xpose.msra.mxu0 %v1087
      %1312 = vmatprep.subr.bf16.mxu0 0
      %1313 = vmatpush1.bf16.xpose.msra.mxu0 0
      %1314 = vmatprep.subr.bf16.mxu0 0
      %1315 = vmatpush1.bf16.xpose.msra.mxu0 0
      %1316 = vmatprep.subr.bf16.mxu0 0
      %1317 = vmatpush1.bf16.xpose.msra.mxu0 0
      %1318 = vmatprep.subr.bf16.mxu0 0
      %1319 = vmatpush1.bf16.xpose.msra.mxu0 0
      %1320 = vmatprep.subr.bf16.mxu0 0
      %1321 = vmatpush1.bf16.xpose.msra.mxu0 0
      %1322 = vmatprep.subr.bf16.mxu0 0
      %1323 = vmatpush1.bf16.xpose.msra.mxu0 0
      %1324 = vmatprep.subr.bf16.mxu0 0
      %1325 = vmatpush1.bf16.xpose.msra.mxu0 0
      %1326 = vmatprep.subr.bf16.mxu0 0
      %1327 = vmatpush1.bf16.xpose.msra.mxu0 0
      %1328 = vmatprep.subr.bf16.mxu0 0
      %1329 = vmatpush1.bf16.xpose.msra.mxu0 0
      %1330 = vmatprep.subr.bf16.mxu0 0
      %1331 = vmatpush1.bf16.xpose.msra.mxu0 0
      %1332 = vmatprep.subr.bf16.mxu0 0
      %1333 = vmatpush1.bf16.xpose.msra.mxu0 0
      %1334 = vmatprep.subr.bf16.mxu0 0
      %1335 = vmatpush1.bf16.xpose.msra.mxu0 0
      %1336 = vmatprep.mubr.bf16.mxu0 0
      %1337 = vmatmul.mubr.bf16.gmra.mrb[0].mxu0 %v1293
      %v1338 = vpop.f32.mrb[0].mxu0
      %v1339 = vadd.f32 %v1284, %v1338
      %v1340 = vpop.f32.mrb[0].mxu0
      %v1341 = vpop.f32.mrb[0].mxu0
      %v1342 = vadd.f32 %v1285, %v1341
      %v1343 = vpop.f32.mrb[0].mxu0
      %1344 = vmatprep.mubr.bf16.mxu0 0
      %1345 = vmatmul.mubr.bf16.gmra.mrb[0].mxu0 %v1296
      %v1346 = vpop.f32.mrb[0].mxu0
      %v1347 = vadd.f32 %v1286, %v1346
      %v1348 = vpop.f32.mrb[0].mxu0
      %v1349 = vpop.f32.mrb[0].mxu0
      %v1350 = vadd.f32 %v1287, %v1349
      %v1351 = vpop.f32.mrb[0].mxu0
      %1352 = vmatprep.mubr.bf16.mxu0 0
      %1353 = vmatmul.mubr.bf16.gmra.mrb[0].mxu0 %v1299
      %v1354 = vpop.f32.mrb[0].mxu0
      %v1355 = vadd.f32 %v1288, %v1354
      %v1356 = vpop.f32.mrb[0].mxu0
      %v1357 = vpop.f32.mrb[0].mxu0
      %v1358 = vadd.f32 %v1289, %v1357
      %v1359 = vpop.f32.mrb[0].mxu0
      %1360 = vmatprep.mubr.bf16.mxu0 0
      %1361 = vmatmul.mubr.bf16.gmra.mrb[0].mxu0 %v1302
      %v1362 = vpop.f32.mrb[0].mxu0
      %v1363 = vadd.f32 %v1290, %v1362
      %v1364 = vpop.f32.mrb[0].mxu0
      %v1365 = vpop.f32.mrb[0].mxu0
      %v1366 = vadd.f32 %v1291, %v1365
      %v1367 = vpop.f32.mrb[0].mxu0
      %1368 = vdwg.mxu0
      %v1369 = vsel %vm1154, %v1339, -inf
      %1370 = vmax.xlane.f32.xlu0 %v1369
      %v1371 = vpop.xlane.xlu0 %1370
      %v1372 = vsel %vm1154, %v1342, -inf
      %1373 = vmax.xlane.f32.xlu0 %v1372
      %v1374 = vpop.xlane.xlu0 %1373
      %v1375 = vsel %vm1154, %v1347, -inf
      %1376 = vmax.xlane.f32.xlu0 %v1375
      %v1377 = vpop.xlane.xlu0 %1376
      %v1378 = vsel %vm1154, %v1350, -inf
      %1379 = vmax.xlane.f32.xlu0 %v1378
      %v1380 = vpop.xlane.xlu0 %1379
      %v1381 = vsel %vm1154, %v1355, -inf
      %1382 = vmax.xlane.f32.xlu0 %v1381
      %v1383 = vpop.xlane.xlu0 %1382
      %v1384 = vsel %vm1154, %v1358, -inf
      %1385 = vmax.xlane.f32.xlu0 %v1384
      %v1386 = vpop.xlane.xlu0 %1385
      %v1387 = vsel %vm1154, %v1363, -inf
      %1388 = vmax.xlane.f32.xlu0 %v1387
      %v1389 = vpop.xlane.xlu0 %1388
      %v1390 = vsel %vm1154, %v1366, -inf
      %1391 = vmax.xlane.f32.xlu0 %v1390
      %v1392 = vpop.xlane.xlu0 %1391
      %v1393 = vsub.f32 %v1339, %v1371
      %v1394 = vsub.f32 %v1342, %v1374
      %v1395 = vsub.f32 %v1347, %v1377
      %v1396 = vsub.f32 %v1350, %v1380
      %v1397 = vsub.f32 %v1355, %v1383
      %v1398 = vsub.f32 %v1358, %v1386
      %v1399 = vsub.f32 %v1363, %v1389
      %v1400 = vsub.f32 %v1366, %v1392
      %v1401 = vmul.f32 %v1393, 1.442695
      %v1402 = vpow.pop %v1401
      %v1403 = vmul.f32 %v1394, 1.442695
      %v1404 = vpow.pop %v1403
      %v1405 = vmul.f32 %v1395, 1.442695
      %v1406 = vpow.pop %v1405
      %v1407 = vmul.f32 %v1396, 1.442695
      %v1408 = vpow.pop %v1407
      %v1409 = vmul.f32 %v1397, 1.442695
      %v1410 = vpow.pop %v1409
      %v1411 = vmul.f32 %v1398, 1.442695
      %v1412 = vpow.pop %v1411
      %v1413 = vmul.f32 %v1399, 1.442695
      %v1414 = vpow.pop %v1413
      %v1415 = vmul.f32 %v1400, 1.442695
      %v1416 = vpow.pop %v1415
      %v1417 = vsel %vm1154, %v1402, 0.0
      %1418 = vadd.xlane.f32.xlu0 %v1417
      %v1419 = vpop.xlane.xlu0 %1418
      %v1420 = vsel %vm1154, %v1404, 0.0
      %1421 = vadd.xlane.f32.xlu0 %v1420
      %v1422 = vpop.xlane.xlu0 %1421
      %v1423 = vsel %vm1154, %v1406, 0.0
      %1424 = vadd.xlane.f32.xlu0 %v1423
      %v1425 = vpop.xlane.xlu0 %1424
      %v1426 = vsel %vm1154, %v1408, 0.0
      %1427 = vadd.xlane.f32.xlu0 %v1426
      %v1428 = vpop.xlane.xlu0 %1427
      %v1429 = vsel %vm1154, %v1410, 0.0
      %1430 = vadd.xlane.f32.xlu0 %v1429
      %v1431 = vpop.xlane.xlu0 %1430
      %v1432 = vsel %vm1154, %v1412, 0.0
      %1433 = vadd.xlane.f32.xlu0 %v1432
      %v1434 = vpop.xlane.xlu0 %1433
      %v1435 = vsel %vm1154, %v1414, 0.0
      %1436 = vadd.xlane.f32.xlu0 %v1435
      %v1437 = vpop.xlane.xlu0 %1436
      %v1438 = vsel %vm1154, %v1416, 0.0
      %1439 = vadd.xlane.f32.xlu0 %v1438
      %v1440 = vpop.xlane.xlu0 %1439
      %v1441 = vrcp.pop %v1419
      %v1442 = vrcp.pop %v1422
      %v1443 = vrcp.pop %v1425
      %v1444 = vrcp.pop %v1428
      %v1445 = vrcp.pop %v1431
      %v1446 = vrcp.pop %v1434
      %v1447 = vrcp.pop %v1437
      %v1448 = vrcp.pop %v1440
      %v1449 = vmul.f32 %v1402, %v1441
      %v1450 = vmul.f32 %v1404, %v1442
      %v1451 = vmul.f32 %v1406, %v1443
      %v1452 = vmul.f32 %v1408, %v1444
      %v1453 = vmul.f32 %v1410, %v1445
      %v1454 = vmul.f32 %v1412, %v1446
      %v1455 = vmul.f32 %v1414, %v1447
      %v1456 = vmul.f32 %v1416, %v1448
      %v1457 = vmul.f32 %v998, %v1262
      %v1458 = vmul.f32 %v1001, %v1262
      %v1459 = vmul.f32 %v1006, %v1262
      %v1460 = vmul.f32 %v1009, %v1262
      %v1461 = vmul.f32 %v1014, %v1262
      %v1462 = vmul.f32 %v1017, %v1262
      %v1463 = vmul.f32 %v1022, %v1262
      %v1464 = vmul.f32 %v1025, %v1262
      %v1465 = vpack.c.bf16 %v1458, %v1457
      %v1466 = vpack.c.bf16 %v1460, %v1459
      %v1467 = vpack.c.bf16 %v1462, %v1461
      %v1468 = vpack.c.bf16 %v1464, %v1463
      %v1469 = vpack.c.bf16 %v1450, %v1449
      %v1470 = vpack.c.bf16 %v1452, %v1451
      %v1471 = vpack.c.bf16 %v1454, %v1453
      %v1472 = vpack.c.bf16 %v1456, %v1455
      %v1474 = vsel %vm1154, %v1469, 0
      %v1477 = vsel %vm1154, %v1470, 0
      %v1480 = vsel %vm1154, %v1471, 0
      %v1483 = vsel %vm1154, %v1472, 0
      %1485 = vmatprep.subr.bf16.mxu0 0
      %1486 = vmatpush1.bf16.msra.mxu0 %v1465
      %1487 = vmatprep.subr.bf16.mxu0 0
      %1488 = vmatpush1.bf16.msra.mxu0 %v1466
      %1489 = vmatprep.subr.bf16.mxu0 0
      %1490 = vmatpush1.bf16.msra.mxu0 %v1467
      %1491 = vmatprep.subr.bf16.mxu0 0
      %1492 = vmatpush1.bf16.msra.mxu0 %v1468
      %1493 = vmatprep.subr.bf16.mxu0 0
      %1494 = vmatpush1.bf16.msra.mxu0 0
      %1495 = vmatprep.subr.bf16.mxu0 0
      %1496 = vmatpush1.bf16.msra.mxu0 0
      %1497 = vmatprep.subr.bf16.mxu0 0
      %1498 = vmatpush1.bf16.msra.mxu0 0
      %1499 = vmatprep.subr.bf16.mxu0 0
      %1500 = vmatpush1.bf16.msra.mxu0 0
      %1501 = vmatprep.subr.bf16.mxu0 0
      %1502 = vmatpush1.bf16.msra.mxu0 0
      %1503 = vmatprep.subr.bf16.mxu0 0
      %1504 = vmatpush1.bf16.msra.mxu0 0
      %1505 = vmatprep.subr.bf16.mxu0 0
      %1506 = vmatpush1.bf16.msra.mxu0 0
      %1507 = vmatprep.subr.bf16.mxu0 0
      %1508 = vmatpush1.bf16.msra.mxu0 0
      %1509 = vmatprep.subr.bf16.mxu0 0
      %1510 = vmatpush1.bf16.msra.mxu0 0
      %1511 = vmatprep.subr.bf16.mxu0 0
      %1512 = vmatpush1.bf16.msra.mxu0 0
      %1513 = vmatprep.subr.bf16.mxu0 0
      %1514 = vmatpush1.bf16.msra.mxu0 0
      %1515 = vmatprep.subr.bf16.mxu0 0
      %1516 = vmatpush1.bf16.msra.mxu0 0
      %1517 = vmatprep.mubr.bf16.mxu0 0
      %1518 = vmatmul.mubr.bf16.gmra.mrb[0].mxu0 %v1474
      %v1519 = vpop.f32.mrb[0].mxu0
      %v1520 = vadd.f32 0.0, %v1519
      %v1521 = vpop.f32.mrb[0].mxu0
      %v1522 = vpop.f32.mrb[0].mxu0
      %v1523 = vadd.f32 0.0, %v1522
      %v1524 = vpop.f32.mrb[0].mxu0
      %1525 = vmatprep.mubr.bf16.mxu0 0
      %1526 = vmatmul.mubr.bf16.gmra.mrb[0].mxu0 %v1477
      %v1527 = vpop.f32.mrb[0].mxu0
      %v1528 = vadd.f32 0.0, %v1527
      %v1529 = vpop.f32.mrb[0].mxu0
      %v1530 = vpop.f32.mrb[0].mxu0
      %v1531 = vadd.f32 0.0, %v1530
      %v1532 = vpop.f32.mrb[0].mxu0
      %1533 = vmatprep.mubr.bf16.mxu0 0
      %1534 = vmatmul.mubr.bf16.gmra.mrb[0].mxu0 %v1480
      %v1535 = vpop.f32.mrb[0].mxu0
      %v1536 = vadd.f32 0.0, %v1535
      %v1537 = vpop.f32.mrb[0].mxu0
      %v1538 = vpop.f32.mrb[0].mxu0
      %v1539 = vadd.f32 0.0, %v1538
      %v1540 = vpop.f32.mrb[0].mxu0
      %1541 = vmatprep.mubr.bf16.mxu0 0
      %1542 = vmatmul.mubr.bf16.gmra.mrb[0].mxu0 %v1483
      %v1543 = vpop.f32.mrb[0].mxu0
      %v1544 = vadd.f32 0.0, %v1543
      %v1545 = vpop.f32.mrb[0].mxu0
      %v1546 = vpop.f32.mrb[0].mxu0
      %v1547 = vadd.f32 0.0, %v1546
      %v1548 = vpop.f32.mrb[0].mxu0
      %1549 = vdwg.mxu0
      %v1551 = vsel %vm1154, %v1255, 0
      %v1554 = vsel %vm1154, %v1256, 0
      %v1557 = vsel %vm1154, %v1257, 0
      %v1560 = vsel %vm1154, %v1258, 0
      %1562 = vmatprep.subr.bf16.mxu0 0
      %1563 = vmatpush1.bf16.msra.mxu0 %v1251
      %1564 = vmatprep.subr.bf16.mxu0 0
      %1565 = vmatpush1.bf16.msra.mxu0 %v1252
      %1566 = vmatprep.subr.bf16.mxu0 0
      %1567 = vmatpush1.bf16.msra.mxu0 %v1253
      %1568 = vmatprep.subr.bf16.mxu0 0
      %1569 = vmatpush1.bf16.msra.mxu0 %v1254
      %1570 = vmatprep.subr.bf16.mxu0 0
      %1571 = vmatpush1.bf16.msra.mxu0 0
      %1572 = vmatprep.subr.bf16.mxu0 0
      %1573 = vmatpush1.bf16.msra.mxu0 0
      %1574 = vmatprep.subr.bf16.mxu0 0
      %1575 = vmatpush1.bf16.msra.mxu0 0
      %1576 = vmatprep.subr.bf16.mxu0 0
      %1577 = vmatpush1.bf16.msra.mxu0 0
      %1578 = vmatprep.subr.bf16.mxu0 0
      %1579 = vmatpush1.bf16.msra.mxu0 0
      %1580 = vmatprep.subr.bf16.mxu0 0
      %1581 = vmatpush1.bf16.msra.mxu0 0
      %1582 = vmatprep.subr.bf16.mxu0 0
      %1583 = vmatpush1.bf16.msra.mxu0 0
      %1584 = vmatprep.subr.bf16.mxu0 0
      %1585 = vmatpush1.bf16.msra.mxu0 0
      %1586 = vmatprep.subr.bf16.mxu0 0
      %1587 = vmatpush1.bf16.msra.mxu0 0
      %1588 = vmatprep.subr.bf16.mxu0 0
      %1589 = vmatpush1.bf16.msra.mxu0 0
      %1590 = vmatprep.subr.bf16.mxu0 0
      %1591 = vmatpush1.bf16.msra.mxu0 0
      %1592 = vmatprep.subr.bf16.mxu0 0
      %1593 = vmatpush1.bf16.msra.mxu0 0
      %1594 = vmatprep.mubr.bf16.mxu0 0
      %1595 = vmatmul.mubr.bf16.gmra.mrb[0].mxu0 %v1551
      %v1596 = vpop.f32.mrb[0].mxu0
      %v1597 = vadd.f32 %v1520, %v1596
      %v1598 = vpop.f32.mrb[0].mxu0
      %v1599 = vpop.f32.mrb[0].mxu0
      %v1600 = vadd.f32 %v1523, %v1599
      %v1601 = vpop.f32.mrb[0].mxu0
      %1602 = vmatprep.mubr.bf16.mxu0 0
      %1603 = vmatmul.mubr.bf16.gmra.mrb[0].mxu0 %v1554
      %v1604 = vpop.f32.mrb[0].mxu0
      %v1605 = vadd.f32 %v1528, %v1604
      %v1606 = vpop.f32.mrb[0].mxu0
      %v1607 = vpop.f32.mrb[0].mxu0
      %v1608 = vadd.f32 %v1531, %v1607
      %v1609 = vpop.f32.mrb[0].mxu0
      %1610 = vmatprep.mubr.bf16.mxu0 0
      %1611 = vmatmul.mubr.bf16.gmra.mrb[0].mxu0 %v1557
      %v1612 = vpop.f32.mrb[0].mxu0
      %v1613 = vadd.f32 %v1536, %v1612
      %v1614 = vpop.f32.mrb[0].mxu0
      %v1615 = vpop.f32.mrb[0].mxu0
      %v1616 = vadd.f32 %v1539, %v1615
      %v1617 = vpop.f32.mrb[0].mxu0
      %1618 = vmatprep.mubr.bf16.mxu0 0
      %1619 = vmatmul.mubr.bf16.gmra.mrb[0].mxu0 %v1560
      %v1620 = vpop.f32.mrb[0].mxu0
      %v1621 = vadd.f32 %v1544, %v1620
      %v1622 = vpop.f32.mrb[0].mxu0
      %v1623 = vpop.f32.mrb[0].mxu0
      %v1624 = vadd.f32 %v1547, %v1623
      %v1625 = vpop.f32.mrb[0].mxu0
      %1626 = vdwg.mxu0
      %v1627 = vpack.c.bf16 %v1600, %v1597
      %v1628 = vpack.c.bf16 %v1608, %v1605
      %v1629 = vpack.c.bf16 %v1616, %v1613
      %v1630 = vpack.c.bf16 %v1624, %v1621
      %v1631 = vld [vmem:[%s11] sm:$0xf]
      %v1632 = vld [vmem:[%s11 + $0x4] sm:$0xf]
      %v1633 = vld [vmem:[%s11 + $0x8] sm:$0xf]
      %v1634 = vld [vmem:[%s11 + $0xc] sm:$0xf]
      %v1635 = vld [vmem:[%s12] sm:$0x1]
      %v1637 = vlaneseq
      %v1638 = vshrl.u32 %v1637, 7
      %v1639 = vsub.s32 0, %v1638
      %v1640 = vrot.slane %v1635, %v1639
      %v1646 = vunpack.c.l.b16 %v1631
      %v1647 = vunpack.c.l.b16 %v1632
      %v1648 = vunpack.c.l.b16 %v1633
      %v1649 = vunpack.c.l.b16 %v1634
      %v1650 = vpack.c.b16 %v1647, %v1646
      %v1651 = vpack.c.b16 %v1649, %v1648
      %v1655 = vsel %vm614, %v1627, 0
      %v1658 = vsel %vm614, %v1628, 0
      %v1661 = vsel %vm614, %v1629, 0
      %v1664 = vsel %vm614, %v1630, 0
      %1666 = vmatprep.subr.bf16.mxu0 0
      %1667 = vmatpush1.bf16.msra.mxu0 %v1650
      %1668 = vmatprep.subr.bf16.mxu0 0
      %1669 = vmatpush1.bf16.msra.mxu0 %v1651
      %1670 = vmatprep.subr.bf16.mxu0 0
      %1671 = vmatpush1.bf16.msra.mxu0 0
      %1672 = vmatprep.subr.bf16.mxu0 0
      %1673 = vmatpush1.bf16.msra.mxu0 0
      %1674 = vmatprep.subr.bf16.mxu0 0
      %1675 = vmatpush1.bf16.msra.mxu0 0
      %1676 = vmatprep.subr.bf16.mxu0 0
      %1677 = vmatpush1.bf16.msra.mxu0 0
      %1678 = vmatprep.subr.bf16.mxu0 0
      %1679 = vmatpush1.bf16.msra.mxu0 0
      %1680 = vmatprep.subr.bf16.mxu0 0
      %1681 = vmatpush1.bf16.msra.mxu0 0
      %1682 = vmatprep.subr.bf16.mxu0 0
      %1683 = vmatpush1.bf16.msra.mxu0 0
      %1684 = vmatprep.subr.bf16.mxu0 0
      %1685 = vmatpush1.bf16.msra.mxu0 0
      %1686 = vmatprep.subr.bf16.mxu0 0
      %1687 = vmatpush1.bf16.msra.mxu0 0
      %1688 = vmatprep.subr.bf16.mxu0 0
      %1689 = vmatpush1.bf16.msra.mxu0 0
      %1690 = vmatprep.subr.bf16.mxu0 0
      %1691 = vmatpush1.bf16.msra.mxu0 0
      %1692 = vmatprep.subr.bf16.mxu0 0
      %1693 = vmatpush1.bf16.msra.mxu0 0
      %1694 = vmatprep.subr.bf16.mxu0 0
      %1695 = vmatpush1.bf16.msra.mxu0 0
      %1696 = vmatprep.subr.bf16.mxu0 0
      %1697 = vmatpush1.bf16.msra.mxu0 0
      %1698 = vmatprep.mubr.bf16.mxu0 0
      %1699 = vmatmul.mubr.bf16.gmra.mrb[0].mxu0 %v1655
      %v1700 = vpop.f32.mrb[0].mxu0
      %v1701 = vadd.f32 %v1640, %v1700
      %v1702 = vpop.f32.mrb[0].mxu0
      %v1703 = vpop.f32.mrb[0].mxu0
      %v1704 = vadd.f32 %v1640, %v1703
      %v1705 = vpop.f32.mrb[0].mxu0
      %1706 = vmatprep.mubr.bf16.mxu0 0
      %1707 = vmatmul.mubr.bf16.gmra.mrb[0].mxu0 %v1658
      %v1708 = vpop.f32.mrb[0].mxu0
      %v1709 = vadd.f32 %v1640, %v1708
      %v1710 = vpop.f32.mrb[0].mxu0
      %v1711 = vpop.f32.mrb[0].mxu0
      %v1712 = vadd.f32 %v1640, %v1711
      %v1713 = vpop.f32.mrb[0].mxu0
      %1714 = vmatprep.mubr.bf16.mxu0 0
      %1715 = vmatmul.mubr.bf16.gmra.mrb[0].mxu0 %v1661
      %v1716 = vpop.f32.mrb[0].mxu0
      %v1717 = vadd.f32 %v1640, %v1716
      %v1718 = vpop.f32.mrb[0].mxu0
      %v1719 = vpop.f32.mrb[0].mxu0
      %v1720 = vadd.f32 %v1640, %v1719
      %v1721 = vpop.f32.mrb[0].mxu0
      %1722 = vmatprep.mubr.bf16.mxu0 0
      %1723 = vmatmul.mubr.bf16.gmra.mrb[0].mxu0 %v1664
      %v1724 = vpop.f32.mrb[0].mxu0
      %v1725 = vadd.f32 %v1640, %v1724
      %v1726 = vpop.f32.mrb[0].mxu0
      %v1727 = vpop.f32.mrb[0].mxu0
      %v1728 = vadd.f32 %v1640, %v1727
      %v1729 = vpop.f32.mrb[0].mxu0
      %1730 = vdwg.mxu0
      %v1731 = vadd.f32 %v604, %v1701
      %v1732 = vadd.f32 %v605, %v1704
      %v1733 = vadd.f32 %v606, %v1709
      %v1734 = vadd.f32 %v607, %v1712
      %v1735 = vadd.f32 %v608, %v1717
      %v1736 = vadd.f32 %v609, %v1720
      %v1737 = vadd.f32 %v610, %v1725
      %v1738 = vadd.f32 %v611, %v1728
      %v1739 = vld [vmem:[%s13] sm:$0x1]
      %v1740 = vld [vmem:[%s14] sm:$0x1]
      %v1741 = vsel %vm614, %v1731, 0.0
      %1742 = vadd.xlane.f32.xlu0 %v1741
      %v1743 = vpop.xlane.xlu0 %1742
      %v1744 = vsel %vm614, %v1732, 0.0
      %1745 = vadd.xlane.f32.xlu0 %v1744
      %v1746 = vpop.xlane.xlu0 %1745
      %v1747 = vsel %vm614, %v1733, 0.0
      %1748 = vadd.xlane.f32.xlu0 %v1747
      %v1749 = vpop.xlane.xlu0 %1748
      %v1750 = vsel %vm614, %v1734, 0.0
      %1751 = vadd.xlane.f32.xlu0 %v1750
      %v1752 = vpop.xlane.xlu0 %1751
      %v1753 = vsel %vm614, %v1735, 0.0
      %1754 = vadd.xlane.f32.xlu0 %v1753
      %v1755 = vpop.xlane.xlu0 %1754
      %v1756 = vsel %vm614, %v1736, 0.0
      %1757 = vadd.xlane.f32.xlu0 %v1756
      %v1758 = vpop.xlane.xlu0 %1757
      %v1759 = vsel %vm614, %v1737, 0.0
      %1760 = vadd.xlane.f32.xlu0 %v1759
      %v1761 = vpop.xlane.xlu0 %1760
      %v1762 = vsel %vm614, %v1738, 0.0
      %1763 = vadd.xlane.f32.xlu0 %v1762
      %v1764 = vpop.xlane.xlu0 %1763
      %v1765 = vmul.f32 %v1743, %v639
      %v1766 = vmul.f32 %v1746, %v639
      %v1767 = vmul.f32 %v1749, %v639
      %v1768 = vmul.f32 %v1752, %v639
      %v1769 = vmul.f32 %v1755, %v639
      %v1770 = vmul.f32 %v1758, %v639
      %v1771 = vmul.f32 %v1761, %v639
      %v1772 = vmul.f32 %v1764, %v639
      %v1773 = vsub.f32 %v1731, %v1765
      %v1774 = vsub.f32 %v1732, %v1766
      %v1775 = vsub.f32 %v1733, %v1767
      %v1776 = vsub.f32 %v1734, %v1768
      %v1777 = vsub.f32 %v1735, %v1769
      %v1778 = vsub.f32 %v1736, %v1770
      %v1779 = vsub.f32 %v1737, %v1771
      %v1780 = vsub.f32 %v1738, %v1772
      %v1781 = vmul.f32 %v1773, %v1773
      %v1782 = vmul.f32 %v1774, %v1774
      %v1783 = vmul.f32 %v1775, %v1775
      %v1784 = vmul.f32 %v1776, %v1776
      %v1785 = vmul.f32 %v1777, %v1777
      %v1786 = vmul.f32 %v1778, %v1778
      %v1787 = vmul.f32 %v1779, %v1779
      %v1788 = vmul.f32 %v1780, %v1780
      %v1789 = vsel %vm614, %v1781, 0.0
      %1790 = vadd.xlane.f32.xlu0 %v1789
      %v1791 = vpop.xlane.xlu0 %1790
      %v1792 = vsel %vm614, %v1782, 0.0
      %1793 = vadd.xlane.f32.xlu0 %v1792
      %v1794 = vpop.xlane.xlu0 %1793
      %v1795 = vsel %vm614, %v1783, 0.0
      %1796 = vadd.xlane.f32.xlu0 %v1795
      %v1797 = vpop.xlane.xlu0 %1796
      %v1798 = vsel %vm614, %v1784, 0.0
      %1799 = vadd.xlane.f32.xlu0 %v1798
      %v1800 = vpop.xlane.xlu0 %1799
      %v1801 = vsel %vm614, %v1785, 0.0
      %1802 = vadd.xlane.f32.xlu0 %v1801
      %v1803 = vpop.xlane.xlu0 %1802
      %v1804 = vsel %vm614, %v1786, 0.0
      %1805 = vadd.xlane.f32.xlu0 %v1804
      %v1806 = vpop.xlane.xlu0 %1805
      %v1807 = vsel %vm614, %v1787, 0.0
      %1808 = vadd.xlane.f32.xlu0 %v1807
      %v1809 = vpop.xlane.xlu0 %1808
      %v1810 = vsel %vm614, %v1788, 0.0
      %1811 = vadd.xlane.f32.xlu0 %v1810
      %v1812 = vpop.xlane.xlu0 %1811
      %v1813 = vmul.f32 %v1791, %v639
      %v1814 = vmul.f32 %v1794, %v639
      %v1815 = vmul.f32 %v1797, %v639
      %v1816 = vmul.f32 %v1800, %v639
      %v1817 = vmul.f32 %v1803, %v639
      %v1818 = vmul.f32 %v1806, %v639
      %v1819 = vmul.f32 %v1809, %v639
      %v1820 = vmul.f32 %v1812, %v639
      %v1821 = vadd.f32 %v1813, 1e-05
      %v1822 = vadd.f32 %v1814, 1e-05
      %v1823 = vadd.f32 %v1815, 1e-05
      %v1824 = vadd.f32 %v1816, 1e-05
      %v1825 = vadd.f32 %v1817, 1e-05
      %v1826 = vadd.f32 %v1818, 1e-05
      %v1827 = vadd.f32 %v1819, 1e-05
      %v1828 = vadd.f32 %v1820, 1e-05
      %v1829 = vrsqrt.pop %v1821
      %v1830 = vrsqrt.pop %v1822
      %v1831 = vrsqrt.pop %v1823
      %v1832 = vrsqrt.pop %v1824
      %v1833 = vrsqrt.pop %v1825
      %v1834 = vrsqrt.pop %v1826
      %v1835 = vrsqrt.pop %v1827
      %v1836 = vrsqrt.pop %v1828
      %v1837 = vmul.f32 %v1773, %v1829
      %v1838 = vmul.f32 %v1774, %v1830
      %v1839 = vmul.f32 %v1775, %v1831
      %v1840 = vmul.f32 %v1776, %v1832
      %v1841 = vmul.f32 %v1777, %v1833
      %v1842 = vmul.f32 %v1778, %v1834
      %v1843 = vmul.f32 %v1779, %v1835
      %v1844 = vmul.f32 %v1780, %v1836
      %v1846 = vlaneseq
      %v1847 = vshrl.u32 %v1846, 7
      %v1848 = vsub.s32 0, %v1847
      %v1849 = vrot.slane %v1739, %v1848
      %v1851 = vmul.f32 %v1837, %v1849
      %v1852 = vmul.f32 %v1838, %v1849
      %v1853 = vmul.f32 %v1839, %v1849
      %v1854 = vmul.f32 %v1840, %v1849
      %v1855 = vmul.f32 %v1841, %v1849
      %v1856 = vmul.f32 %v1842, %v1849
      %v1857 = vmul.f32 %v1843, %v1849
      %v1858 = vmul.f32 %v1844, %v1849
      %v1860 = vlaneseq
      %v1861 = vshrl.u32 %v1860, 7
      %v1862 = vsub.s32 0, %v1861
      %v1863 = vrot.slane %v1740, %v1862
      %v1865 = vadd.f32 %v1851, %v1863
      %v1866 = vadd.f32 %v1852, %v1863
      %v1867 = vadd.f32 %v1853, %v1863
      %v1868 = vadd.f32 %v1854, %v1863
      %v1869 = vadd.f32 %v1855, %v1863
      %v1870 = vadd.f32 %v1856, %v1863
      %v1871 = vadd.f32 %v1857, %v1863
      %v1872 = vadd.f32 %v1858, %v1863
      %v1873 = vpack.c.bf16 %v1866, %v1865
      %v1874 = vpack.c.bf16 %v1868, %v1867
      %v1875 = vpack.c.bf16 %v1870, %v1869
      %v1876 = vpack.c.bf16 %v1872, %v1871
      %v1877 = vld [vmem:[%s15] sm:$0xf]
      %v1878 = vld [vmem:[%s15 + $0x4] sm:$0xf]
      %v1879 = vld [vmem:[%s15 + $0x8] sm:$0xf]
      %v1880 = vld [vmem:[%s15 + $0xc] sm:$0xf]
      %v1881 = vld [vmem:[%s16] sm:$0x1]
      %v1883 = vlaneseq
      %v1884 = vshrl.u32 %v1883, 7
      %v1885 = vsub.s32 0, %v1884
      %v1886 = vrot.slane %v1881, %v1885
      %v1892 = vunpack.c.l.b16 %v1877
      %v1893 = vunpack.c.l.b16 %v1878
      %v1894 = vunpack.c.l.b16 %v1879
      %v1895 = vunpack.c.l.b16 %v1880
      %v1896 = vpack.c.b16 %v1893, %v1892
      %v1897 = vpack.c.b16 %v1895, %v1894
      %v1901 = vsel %vm614, %v1873, 0
      %v1904 = vsel %vm614, %v1874, 0
      %v1907 = vsel %vm614, %v1875, 0
      %v1910 = vsel %vm614, %v1876, 0
      %1912 = vmatprep.subr.bf16.mxu0 0
      %1913 = vmatpush1.bf16.msra.mxu0 %v1896
      %1914 = vmatprep.subr.bf16.mxu0 0
      %1915 = vmatpush1.bf16.msra.mxu0 %v1897
      %1916 = vmatprep.subr.bf16.mxu0 0
      %1917 = vmatpush1.bf16.msra.mxu0 0
      %1918 = vmatprep.subr.bf16.mxu0 0
      %1919 = vmatpush1.bf16.msra.mxu0 0
      %1920 = vmatprep.subr.bf16.mxu0 0
      %1921 = vmatpush1.bf16.msra.mxu0 0
      %1922 = vmatprep.subr.bf16.mxu0 0
      %1923 = vmatpush1.bf16.msra.mxu0 0
      %1924 = vmatprep.subr.bf16.mxu0 0
      %1925 = vmatpush1.bf16.msra.mxu0 0
      %1926 = vmatprep.subr.bf16.mxu0 0
      %1927 = vmatpush1.bf16.msra.mxu0 0
      %1928 = vmatprep.subr.bf16.mxu0 0
      %1929 = vmatpush1.bf16.msra.mxu0 0
      %1930 = vmatprep.subr.bf16.mxu0 0
      %1931 = vmatpush1.bf16.msra.mxu0 0
      %1932 = vmatprep.subr.bf16.mxu0 0
      %1933 = vmatpush1.bf16.msra.mxu0 0
      %1934 = vmatprep.subr.bf16.mxu0 0
      %1935 = vmatpush1.bf16.msra.mxu0 0
      %1936 = vmatprep.subr.bf16.mxu0 0
      %1937 = vmatpush1.bf16.msra.mxu0 0
      %1938 = vmatprep.subr.bf16.mxu0 0
      %1939 = vmatpush1.bf16.msra.mxu0 0
      %1940 = vmatprep.subr.bf16.mxu0 0
      %1941 = vmatpush1.bf16.msra.mxu0 0
      %1942 = vmatprep.subr.bf16.mxu0 0
      %1943 = vmatpush1.bf16.msra.mxu0 0
      %1944 = vmatprep.mubr.bf16.mxu0 0
      %1945 = vmatmul.mubr.bf16.gmra.mrb[0].mxu0 %v1901
      %v1946 = vpop.f32.mrb[0].mxu0
      %v1947 = vadd.f32 %v1886, %v1946
      %v1948 = vpop.f32.mrb[0].mxu0
      %v1949 = vpop.f32.mrb[0].mxu0
      %v1950 = vadd.f32 %v1886, %v1949
      %v1951 = vpop.f32.mrb[0].mxu0
      %1952 = vmatprep.mubr.bf16.mxu0 0
      %1953 = vmatmul.mubr.bf16.gmra.mrb[0].mxu0 %v1904
      %v1954 = vpop.f32.mrb[0].mxu0
      %v1955 = vadd.f32 %v1886, %v1954
      %v1956 = vpop.f32.mrb[0].mxu0
      %v1957 = vpop.f32.mrb[0].mxu0
      %v1958 = vadd.f32 %v1886, %v1957
      %v1959 = vpop.f32.mrb[0].mxu0
      %1960 = vmatprep.mubr.bf16.mxu0 0
      %1961 = vmatmul.mubr.bf16.gmra.mrb[0].mxu0 %v1907
      %v1962 = vpop.f32.mrb[0].mxu0
      %v1963 = vadd.f32 %v1886, %v1962
      %v1964 = vpop.f32.mrb[0].mxu0
      %v1965 = vpop.f32.mrb[0].mxu0
      %v1966 = vadd.f32 %v1886, %v1965
      %v1967 = vpop.f32.mrb[0].mxu0
      %1968 = vmatprep.mubr.bf16.mxu0 0
      %1969 = vmatmul.mubr.bf16.gmra.mrb[0].mxu0 %v1910
      %v1970 = vpop.f32.mrb[0].mxu0
      %v1971 = vadd.f32 %v1886, %v1970
      %v1972 = vpop.f32.mrb[0].mxu0
      %v1973 = vpop.f32.mrb[0].mxu0
      %v1974 = vadd.f32 %v1886, %v1973
      %v1975 = vpop.f32.mrb[0].mxu0
      %1976 = vdwg.mxu0
      %v1977 = vmul.f32 %v1947, 0.5
      %v1978 = vmul.f32 %v1950, 0.5
      %v1979 = vmul.f32 %v1955, 0.5
      %v1980 = vmul.f32 %v1958, 0.5
      %v1981 = vmul.f32 %v1963, 0.5
      %v1982 = vmul.f32 %v1966, 0.5
      %v1983 = vmul.f32 %v1971, 0.5
      %v1984 = vmul.f32 %v1974, 0.5
      %v1985 = vmul.f32 %v1947, 0.044715
      %v1986 = vmul.f32 %v1950, 0.044715
      %v1987 = vmul.f32 %v1955, 0.044715
      %v1988 = vmul.f32 %v1958, 0.044715
      %v1989 = vmul.f32 %v1963, 0.044715
      %v1990 = vmul.f32 %v1966, 0.044715
      %v1991 = vmul.f32 %v1971, 0.044715
      %v1992 = vmul.f32 %v1974, 0.044715
      %v1993 = vmul.f32 %v1985, %v1947
      %v1994 = vmul.f32 %v1986, %v1950
      %v1995 = vmul.f32 %v1987, %v1955
      %v1996 = vmul.f32 %v1988, %v1958
      %v1997 = vmul.f32 %v1989, %v1963
      %v1998 = vmul.f32 %v1990, %v1966
      %v1999 = vmul.f32 %v1991, %v1971
      %v2000 = vmul.f32 %v1992, %v1974
      %v2001 = vmul.f32 %v1993, %v1947
      %v2002 = vmul.f32 %v1994, %v1950
      %v2003 = vmul.f32 %v1995, %v1955
      %v2004 = vmul.f32 %v1996, %v1958
      %v2005 = vmul.f32 %v1997, %v1963
      %v2006 = vmul.f32 %v1998, %v1966
      %v2007 = vmul.f32 %v1999, %v1971
      %v2008 = vmul.f32 %v2000, %v1974
      %v2009 = vadd.f32 %v1947, %v2001
      %v2010 = vadd.f32 %v1950, %v2002
      %v2011 = vadd.f32 %v1955, %v2003
      %v2012 = vadd.f32 %v1958, %v2004
      %v2013 = vadd.f32 %v1963, %v2005
      %v2014 = vadd.f32 %v1966, %v2006
      %v2015 = vadd.f32 %v1971, %v2007
      %v2016 = vadd.f32 %v1974, %v2008
      %v2017 = vmul.f32 %v2009, 0.7978846
      %v2018 = vmul.f32 %v2010, 0.7978846
      %v2019 = vmul.f32 %v2011, 0.7978846
      %v2020 = vmul.f32 %v2012, 0.7978846
      %v2021 = vmul.f32 %v2013, 0.7978846
      %v2022 = vmul.f32 %v2014, 0.7978846
      %v2023 = vmul.f32 %v2015, 0.7978846
      %v2024 = vmul.f32 %v2016, 0.7978846
      %v2025 = vtanh.pop %v2017
      %v2026 = vtanh.pop %v2018
      %v2027 = vtanh.pop %v2019
      %v2028 = vtanh.pop %v2020
      %v2029 = vtanh.pop %v2021
      %v2030 = vtanh.pop %v2022
      %v2031 = vtanh.pop %v2023
      %v2032 = vtanh.pop %v2024
      %v2033 = vadd.f32 %v2025, 1.0
      %v2034 = vadd.f32 %v2026, 1.0
      %v2035 = vadd.f32 %v2027, 1.0
      %v2036 = vadd.f32 %v2028, 1.0
      %v2037 = vadd.f32 %v2029, 1.0
      %v2038 = vadd.f32 %v2030, 1.0
      %v2039 = vadd.f32 %v2031, 1.0
      %v2040 = vadd.f32 %v2032, 1.0
      %v2041 = vmul.f32 %v1977, %v2033
      %v2042 = vmul.f32 %v1978, %v2034
      %v2043 = vmul.f32 %v1979, %v2035
      %v2044 = vmul.f32 %v1980, %v2036
      %v2045 = vmul.f32 %v1981, %v2037
      %v2046 = vmul.f32 %v1982, %v2038
      %v2047 = vmul.f32 %v1983, %v2039
      %v2048 = vmul.f32 %v1984, %v2040
      %v2049 = vpack.c.bf16 %v2042, %v2041
      %v2050 = vpack.c.bf16 %v2044, %v2043
      %v2051 = vpack.c.bf16 %v2046, %v2045
      %v2052 = vpack.c.bf16 %v2048, %v2047
      %v2053 = vld [vmem:[%s17] sm:$0xf]
      %v2054 = vld [vmem:[%s17 + $0x4] sm:$0xf]
      %v2055 = vld [vmem:[%s17 + $0x8] sm:$0xf]
      %v2056 = vld [vmem:[%s17 + $0xc] sm:$0xf]
      %v2057 = vld [vmem:[%s17 + $0x10] sm:$0xf]
      %v2058 = vld [vmem:[%s17 + $0x14] sm:$0xf]
      %v2059 = vld [vmem:[%s17 + $0x18] sm:$0xf]
      %v2060 = vld [vmem:[%s17 + $0x1c] sm:$0xf]
      %v2061 = vld [vmem:[%s17 + $0x20] sm:$0xf]
      %v2062 = vld [vmem:[%s17 + $0x24] sm:$0xf]
      %v2063 = vld [vmem:[%s17 + $0x28] sm:$0xf]
      %v2064 = vld [vmem:[%s17 + $0x2c] sm:$0xf]
      %v2065 = vld [vmem:[%s17 + $0x30] sm:$0xf]
      %v2066 = vld [vmem:[%s17 + $0x34] sm:$0xf]
      %v2067 = vld [vmem:[%s17 + $0x38] sm:$0xf]
      %v2068 = vld [vmem:[%s17 + $0x3c] sm:$0xf]
      %v2069 = vld [vmem:[%s18] sm:$0x1]
      %v2071 = vlaneseq
      %v2072 = vshrl.u32 %v2071, 7
      %v2073 = vsub.s32 0, %v2072
      %v2074 = vrot.slane %v2069, %v2073
      %v2092 = vunpack.c.l.b16 %v2053
      %v2093 = vunpack.c.l.b16 %v2054
      %v2094 = vunpack.c.l.b16 %v2055
      %v2095 = vunpack.c.l.b16 %v2056
      %v2096 = vunpack.c.l.b16 %v2057
      %v2097 = vunpack.c.l.b16 %v2058
      %v2098 = vunpack.c.l.b16 %v2059
      %v2099 = vunpack.c.l.b16 %v2060
      %v2100 = vunpack.c.l.b16 %v2061
      %v2101 = vunpack.c.l.b16 %v2062
      %v2102 = vunpack.c.l.b16 %v2063
      %v2103 = vunpack.c.l.b16 %v2064
      %v2104 = vunpack.c.l.b16 %v2065
      %v2105 = vunpack.c.l.b16 %v2066
      %v2106 = vunpack.c.l.b16 %v2067
      %v2107 = vunpack.c.l.b16 %v2068
      %v2108 = vpack.c.b16 %v2093, %v2092
      %v2109 = vpack.c.b16 %v2095, %v2094
      %v2110 = vpack.c.b16 %v2097, %v2096
      %v2111 = vpack.c.b16 %v2099, %v2098
      %v2112 = vpack.c.b16 %v2101, %v2100
      %v2113 = vpack.c.b16 %v2103, %v2102
      %v2114 = vpack.c.b16 %v2105, %v2104
      %v2115 = vpack.c.b16 %v2107, %v2106
      %2124 = vmatprep.subr.bf16.mxu0 0
      %2125 = vmatpush1.bf16.msra.mxu0 %v2108
      %2126 = vmatprep.subr.bf16.mxu0 0
      %2127 = vmatpush1.bf16.msra.mxu0 %v2109
      %2128 = vmatprep.subr.bf16.mxu0 0
      %2129 = vmatpush1.bf16.msra.mxu0 %v2110
      %2130 = vmatprep.subr.bf16.mxu0 0
      %2131 = vmatpush1.bf16.msra.mxu0 %v2111
      %2132 = vmatprep.subr.bf16.mxu0 0
      %2133 = vmatpush1.bf16.msra.mxu0 %v2112
      %2134 = vmatprep.subr.bf16.mxu0 0
      %2135 = vmatpush1.bf16.msra.mxu0 %v2113
      %2136 = vmatprep.subr.bf16.mxu0 0
      %2137 = vmatpush1.bf16.msra.mxu0 %v2114
      %2138 = vmatprep.subr.bf16.mxu0 0
      %2139 = vmatpush1.bf16.msra.mxu0 %v2115
      %2140 = vmatprep.subr.bf16.mxu0 0
      %2141 = vmatpush1.bf16.msra.mxu0 0
      %2142 = vmatprep.subr.bf16.mxu0 0
      %2143 = vmatpush1.bf16.msra.mxu0 0
      %2144 = vmatprep.subr.bf16.mxu0 0
      %2145 = vmatpush1.bf16.msra.mxu0 0
      %2146 = vmatprep.subr.bf16.mxu0 0
      %2147 = vmatpush1.bf16.msra.mxu0 0
      %2148 = vmatprep.subr.bf16.mxu0 0
      %2149 = vmatpush1.bf16.msra.mxu0 0
      %2150 = vmatprep.subr.bf16.mxu0 0
      %2151 = vmatpush1.bf16.msra.mxu0 0
      %2152 = vmatprep.subr.bf16.mxu0 0
      %2153 = vmatpush1.bf16.msra.mxu0 0
      %2154 = vmatprep.subr.bf16.mxu0 0
      %2155 = vmatpush1.bf16.msra.mxu0 0
      %2156 = vmatprep.mubr.bf16.mxu0 0
      %2157 = vmatmul.mubr.bf16.gmra.mrb[0].mxu0 %v2049
      %v2158 = vpop.f32.mrb[0].mxu0
      %v2159 = vadd.f32 %v2074, %v2158
      %v2160 = vpop.f32.mrb[0].mxu0
      %v2161 = vpop.f32.mrb[0].mxu0
      %v2162 = vadd.f32 %v2074, %v2161
      %v2163 = vpop.f32.mrb[0].mxu0
      %2164 = vmatprep.mubr.bf16.mxu0 0
      %2165 = vmatmul.mubr.bf16.gmra.mrb[0].mxu0 %v2050
      %v2166 = vpop.f32.mrb[0].mxu0
      %v2167 = vadd.f32 %v2074, %v2166
      %v2168 = vpop.f32.mrb[0].mxu0
      %v2169 = vpop.f32.mrb[0].mxu0
      %v2170 = vadd.f32 %v2074, %v2169
      %v2171 = vpop.f32.mrb[0].mxu0
      %2172 = vmatprep.mubr.bf16.mxu0 0
      %2173 = vmatmul.mubr.bf16.gmra.mrb[0].mxu0 %v2051
      %v2174 = vpop.f32.mrb[0].mxu0
      %v2175 = vadd.f32 %v2074, %v2174
      %v2176 = vpop.f32.mrb[0].mxu0
      %v2177 = vpop.f32.mrb[0].mxu0
      %v2178 = vadd.f32 %v2074, %v2177
      %v2179 = vpop.f32.mrb[0].mxu0
      %2180 = vmatprep.mubr.bf16.mxu0 0
      %2181 = vmatmul.mubr.bf16.gmra.mrb[0].mxu0 %v2052
      %v2182 = vpop.f32.mrb[0].mxu0
      %v2183 = vadd.f32 %v2074, %v2182
      %v2184 = vpop.f32.mrb[0].mxu0
      %v2185 = vpop.f32.mrb[0].mxu0
      %v2186 = vadd.f32 %v2074, %v2185
      %v2187 = vpop.f32.mrb[0].mxu0
      %2188 = vdwg.mxu0
      %v2189 = vadd.f32 %v1731, %v2159
      %v2190 = vadd.f32 %v1732, %v2162
      %v2191 = vadd.f32 %v1733, %v2167
      %v2192 = vadd.f32 %v1734, %v2170
      %v2193 = vadd.f32 %v1735, %v2175
      %v2194 = vadd.f32 %v1736, %v2178
      %v2195 = vadd.f32 %v1737, %v2183
      %v2196 = vadd.f32 %v1738, %v2186
      %2197 = vst.msk [vmem:[%s602] sm:$0xff] %vm614, %v2189
      %2198 = vst.msk [vmem:[%s602 + $0x8] sm:$0xff] %vm614, %v2190
      %2199 = vst.msk [vmem:[%s602 + $0x10] sm:$0xff] %vm614, %v2191
      %2200 = vst.msk [vmem:[%s602 + $0x18] sm:$0xff] %vm614, %v2192
      %2201 = vst.msk [vmem:[%s602 + $0x20] sm:$0xff] %vm614, %v2193
      %2202 = vst.msk [vmem:[%s602 + $0x28] sm:$0xff] %vm614, %v2194
      %2203 = vst.msk [vmem:[%s602 + $0x30] sm:$0xff] %vm614, %v2195
      %2204 = vst.msk [vmem:[%s602 + $0x38] sm:$0xff] %vm614, %v2196
      %p2205 = scmp.lt.s32.totalorder %s30, 1
      %s2206 = scalar_select %p2205, %s30, 1
      %s2207 = smul.addr %s2206, 8
      %s2208 = smul.addr %s2207, 8
      %s2209 = scalar_lea.vmem %s19, %s2208
      // Predicated region
      $region97: #{swin_unet_forward.14} parent=95 // pred_check
        %p2210 = pneg %p452
      $region98: #{swin_unet_forward.14} parent=95 // pred_check_branch
        %2212 = sbr.rel (%p2210) target = $region100
      $region99: #{swin_unet_forward.14} parent=95 // pred_region
        _
      $region100: #{swin_unet_forward.14} parent=95 // pred_fallthru
        _
    $region96: #{swin_unet_forward.14} parent=5 // pred_fallthru
      _
    %p2213 = scmp.le.s32.totalorder 2, %s25
    // Predicated region
    $region101: #{swin_unet_forward.14} parent=5 // pred_check
      %p2214 = pneg %p2213
    $region102: #{swin_unet_forward.14} parent=5 // pred_check_branch
      %2216 = sbr.rel (%p2214) target = $region104
    $region103: #{swin_unet_forward.14} parent=5 // pred_region
      %s2217 = ssub.s32 %s25, 2
      // Predicated region
      $region105: #{swin_unet_forward.14} parent=103 // pred_check
        %p2218 = pneg %p458
      $region106: #{swin_unet_forward.14} parent=103 // pred_check_branch
        %2220 = sbr.rel (%p2218) target = $region108
      $region107: #{swin_unet_forward.14} parent=103 // pred_region
        %p2221 = scmp.lt.s32.totalorder %s31, 1
        %s2222 = scalar_select %p2221, %s31, 1
        %s2223 = smul.addr %s2222, 8
        %s2224 = smul.addr %s2223, 8
        %s2225 = scalar_lea.vmem %s19, %s2224
      $region108: #{swin_unet_forward.14} parent=103 // pred_fallthru
        _
    $region104: #{swin_unet_forward.14} parent=5 // pred_fallthru
      _
  $region6: #{swin_unet_forward.14} parent=0 // loop_footer
    %s29 = sadd.s32 1, %s25
  $region7: #{swin_unet_forward.14} parent=0 // loop_footer_branch
    %24 = sbr.rel target = $region3
  $region8: #{swin_unet_forward.14} parent=0 // loop_exit
    _

// kernel: swin_unet_forward.19
$region0: #{swin_unet_forward.19}
  #allocation0 [shape = 'u32[]', space=smem, size = 0x4, offset = 0x4, fixed_abs, tag = 'smem constant byte address 0x4 - core index']
  #allocation1 [shape = 'u32[144,128]{1,0:T(1,128)}', space=vmem, size = 0x12000, scoped, tag = 'internal scratch']
  %s0 = inlined_call_operand.vmem [shape: f32[32,64], index: 0, kind: input, shape index: {}]
  %s1 = inlined_call_operand.vmem [shape: f32[1,64], index: 1, kind: input, shape index: {}]
  %s2 = inlined_call_operand.vmem [shape: f32[1,64], index: 2, kind: input, shape index: {}]
  %s3 = inlined_call_operand.vmem [shape: bf16[64,128], index: 3, kind: input, shape index: {}]
  %s4 = inlined_call_operand.vmem [shape: f32[32,128], index: 4, kind: output, shape index: {}]
  %s5 = sld [smem:[#allocation0]]
  $region26: #{swin_unet_forward.19} parent=0
    _
  %s7 = ssub.s32 1, %s5
  %s8 = scalar_select 0, %s7, %s5
  // Predicated region
  $region2: #{swin_unet_forward.19} parent=0 // pred_check
    _
  $region3: #{swin_unet_forward.19} parent=0 // pred_check_branch
    %10 = sbr.rel (0) target = $region5
  $region4: #{swin_unet_forward.19} parent=0 // pred_region
    _
  $region5: #{swin_unet_forward.19} parent=0 // pred_fallthru
    _
  // Predicated region
  $region6: #{swin_unet_forward.19} parent=0 // pred_check
    _
  $region7: #{swin_unet_forward.19} parent=0 // pred_check_branch
    %12 = sbr.rel (0) target = $region9
  $region8: #{swin_unet_forward.19} parent=0 // pred_region
    _
  $region9: #{swin_unet_forward.19} parent=0 // pred_fallthru
    _
  // Predicated region
  $region10: #{swin_unet_forward.19} parent=0 // pred_check
    _
  $region11: #{swin_unet_forward.19} parent=0 // pred_check_branch
    %14 = sbr.rel (0) target = $region13
  $region12: #{swin_unet_forward.19} parent=0 // pred_region
    _
  $region13: #{swin_unet_forward.19} parent=0 // pred_fallthru
    _
  // Predicated region
  $region14: #{swin_unet_forward.19} parent=0 // pred_check
    _
  $region15: #{swin_unet_forward.19} parent=0 // pred_check_branch
    %16 = sbr.rel (0) target = $region17
  $region16: #{swin_unet_forward.19} parent=0 // pred_region
    _
  $region17: #{swin_unet_forward.19} parent=0 // pred_fallthru
    _
  %v18 = vld [vmem:[%s0] sm:$0xff]
  %v19 = vld [vmem:[%s0 + $0x8] sm:$0xff]
  %v20 = vld [vmem:[%s0 + $0x10] sm:$0xff]
  %v21 = vld [vmem:[%s0 + $0x18] sm:$0xff]
  %v22 = vld [vmem:[%s1] sm:$0x1]
  %v23 = vld [vmem:[%s2] sm:$0x1]
  %vm24 = vcmask 523264
  %v25 = vsel %vm24, %v18, 0.0
  %26 = vadd.xlane.f32.xlu0 %v25
  %v27 = vpop.xlane.xlu0 %26
  %v28 = vsel %vm24, %v19, 0.0
  %29 = vadd.xlane.f32.xlu0 %v28
  %v30 = vpop.xlane.xlu0 %29
  %v31 = vsel %vm24, %v20, 0.0
  %32 = vadd.xlane.f32.xlu0 %v31
  %v33 = vpop.xlane.xlu0 %32
  %v34 = vsel %vm24, %v21, 0.0
  %35 = vadd.xlane.f32.xlu0 %v34
  %v36 = vpop.xlane.xlu0 %35
  %v37 = vrcp.pop 64.0
  %v38 = vmul.f32 %v27, %v37
  %v39 = vmul.f32 %v30, %v37
  %v40 = vmul.f32 %v33, %v37
  %v41 = vmul.f32 %v36, %v37
  %v42 = vsub.f32 %v18, %v38
  %v43 = vsub.f32 %v19, %v39
  %v44 = vsub.f32 %v20, %v40
  %v45 = vsub.f32 %v21, %v41
  %v46 = vmul.f32 %v42, %v42
  %v47 = vmul.f32 %v43, %v43
  %v48 = vmul.f32 %v44, %v44
  %v49 = vmul.f32 %v45, %v45
  %v50 = vsel %vm24, %v46, 0.0
  %51 = vadd.xlane.f32.xlu0 %v50
  %v52 = vpop.xlane.xlu0 %51
  %v53 = vsel %vm24, %v47, 0.0
  %54 = vadd.xlane.f32.xlu0 %v53
  %v55 = vpop.xlane.xlu0 %54
  %v56 = vsel %vm24, %v48, 0.0
  %57 = vadd.xlane.f32.xlu0 %v56
  %v58 = vpop.xlane.xlu0 %57
  %v59 = vsel %vm24, %v49, 0.0
  %60 = vadd.xlane.f32.xlu0 %v59
  %v61 = vpop.xlane.xlu0 %60
  %v62 = vmul.f32 %v52, %v37
  %v63 = vmul.f32 %v55, %v37
  %v64 = vmul.f32 %v58, %v37
  %v65 = vmul.f32 %v61, %v37
  %v66 = vadd.f32 %v62, 1e-05
  %v67 = vadd.f32 %v63, 1e-05
  %v68 = vadd.f32 %v64, 1e-05
  %v69 = vadd.f32 %v65, 1e-05
  %v70 = vrsqrt.pop %v66
  %v71 = vrsqrt.pop %v67
  %v72 = vrsqrt.pop %v68
  %v73 = vrsqrt.pop %v69
  %v74 = vmul.f32 %v42, %v70
  %v75 = vmul.f32 %v43, %v71
  %v76 = vmul.f32 %v44, %v72
  %v77 = vmul.f32 %v45, %v73
  %v79 = vlaneseq
  %v80 = vshrl.u32 %v79, 7
  %v81 = vsub.s32 0, %v80
  %v82 = vrot.slane %v22, %v81
  %v84 = vmul.f32 %v74, %v82
  %v85 = vmul.f32 %v75, %v82
  %v86 = vmul.f32 %v76, %v82
  %v87 = vmul.f32 %v77, %v82
  %v89 = vlaneseq
  %v90 = vshrl.u32 %v89, 7
  %v91 = vsub.s32 0, %v90
  %v92 = vrot.slane %v23, %v91
  %v94 = vadd.f32 %v84, %v92
  %v95 = vadd.f32 %v85, %v92
  %v96 = vadd.f32 %v86, %v92
  %v97 = vadd.f32 %v87, %v92
  %v98 = vpack.c.bf16 %v95, %v94
  %v99 = vpack.c.bf16 %v97, %v96
  %v100 = vld [vmem:[%s3] sm:$0xf]
  %v101 = vld [vmem:[%s3 + $0x4] sm:$0xf]
  %v102 = vld [vmem:[%s3 + $0x8] sm:$0xf]
  %v103 = vld [vmem:[%s3 + $0xc] sm:$0xf]
  %v104 = vld [vmem:[%s3 + $0x10] sm:$0xf]
  %v105 = vld [vmem:[%s3 + $0x14] sm:$0xf]
  %v106 = vld [vmem:[%s3 + $0x18] sm:$0xf]
  %v107 = vld [vmem:[%s3 + $0x1c] sm:$0xf]
  %v116 = vunpack.c.l.b16 %v100
  %v117 = vunpack.c.l.b16 %v101
  %v118 = vunpack.c.l.b16 %v102
  %v119 = vunpack.c.l.b16 %v103
  %v120 = vunpack.c.l.b16 %v104
  %v121 = vunpack.c.l.b16 %v105
  %v122 = vunpack.c.l.b16 %v106
  %v123 = vunpack.c.l.b16 %v107
  %v124 = vpack.c.b16 %v117, %v116
  %v125 = vpack.c.b16 %v119, %v118
  %v126 = vpack.c.b16 %v121, %v120
  %v127 = vpack.c.b16 %v123, %v122
  %v133 = vsel %vm24, %v98, 0
  %v136 = vsel %vm24, %v99, 0
  %138 = vmatprep.subr.bf16.mxu0 0
  %139 = vmatpush1.bf16.msra.mxu0 %v124
  %140 = vmatprep.subr.bf16.mxu0 0
  %141 = vmatpush1.bf16.msra.mxu0 %v125
  %142 = vmatprep.subr.bf16.mxu0 0
  %143 = vmatpush1.bf16.msra.mxu0 %v126
  %144 = vmatprep.subr.bf16.mxu0 0
  %145 = vmatpush1.bf16.msra.mxu0 %v127
  %146 = vmatprep.subr.bf16.mxu0 0
  %147 = vmatpush1.bf16.msra.mxu0 0
  %148 = vmatprep.subr.bf16.mxu0 0
  %149 = vmatpush1.bf16.msra.mxu0 0
  %150 = vmatprep.subr.bf16.mxu0 0
  %151 = vmatpush1.bf16.msra.mxu0 0
  %152 = vmatprep.subr.bf16.mxu0 0
  %153 = vmatpush1.bf16.msra.mxu0 0
  %154 = vmatprep.subr.bf16.mxu0 0
  %155 = vmatpush1.bf16.msra.mxu0 0
  %156 = vmatprep.subr.bf16.mxu0 0
  %157 = vmatpush1.bf16.msra.mxu0 0
  %158 = vmatprep.subr.bf16.mxu0 0
  %159 = vmatpush1.bf16.msra.mxu0 0
  %160 = vmatprep.subr.bf16.mxu0 0
  %161 = vmatpush1.bf16.msra.mxu0 0
  %162 = vmatprep.subr.bf16.mxu0 0
  %163 = vmatpush1.bf16.msra.mxu0 0
  %164 = vmatprep.subr.bf16.mxu0 0
  %165 = vmatpush1.bf16.msra.mxu0 0
  %166 = vmatprep.subr.bf16.mxu0 0
  %167 = vmatpush1.bf16.msra.mxu0 0
  %168 = vmatprep.subr.bf16.mxu0 0
  %169 = vmatpush1.bf16.msra.mxu0 0
  %170 = vmatprep.mubr.bf16.mxu0 0
  %171 = vmatmul.mubr.bf16.gmra.mrb[0].mxu0 %v133
  %v172 = vpop.f32.mrb[0].mxu0
  %v173 = vadd.f32 0.0, %v172
  %v174 = vpop.f32.mrb[0].mxu0
  %v175 = vpop.f32.mrb[0].mxu0
  %v176 = vadd.f32 0.0, %v175
  %v177 = vpop.f32.mrb[0].mxu0
  %178 = vmatprep.mubr.bf16.mxu0 0
  %179 = vmatmul.mubr.bf16.gmra.mrb[0].mxu0 %v136
  %v180 = vpop.f32.mrb[0].mxu0
  %v181 = vadd.f32 0.0, %v180
  %v182 = vpop.f32.mrb[0].mxu0
  %v183 = vpop.f32.mrb[0].mxu0
  %v184 = vadd.f32 0.0, %v183
  %v185 = vpop.f32.mrb[0].mxu0
  %186 = vdwg.mxu0
  %187 = vst [vmem:[%s4] sm:$0xff] %v173
  %188 = vst [vmem:[%s4 + $0x8] sm:$0xff] %v176
  %189 = vst [vmem:[%s4 + $0x10] sm:$0xff] %v181
  %190 = vst [vmem:[%s4 + $0x18] sm:$0xff] %v184
  // Predicated region
  $region18: #{swin_unet_forward.19} parent=0 // pred_check
    _
  $region19: #{swin_unet_forward.19} parent=0 // pred_check_branch
    %192 = sbr.rel (0) target = $region21
  $region20: #{swin_unet_forward.19} parent=0 // pred_region
    _
  $region21: #{swin_unet_forward.19} parent=0 // pred_fallthru
    _
  // Predicated region
  $region22: #{swin_unet_forward.19} parent=0 // pred_check
    _
  $region23: #{swin_unet_forward.19} parent=0 // pred_check_branch
    %194 = sbr.rel (0) target = $region25
  $region24: #{swin_unet_forward.19} parent=0 // pred_region
    _
  $region25: #{swin_unet_forward.19} parent=0 // pred_fallthru
    _

// kernel: swin_unet_forward.17
$region0: #{swin_unet_forward.17}
  #allocation0 [shape = 'u32[]', space=smem, size = 0x4, offset = 0x4, fixed_abs, tag = 'smem constant byte address 0x4 - core index']
  #allocation1 [shape = 'u32[144,128]{1,0:T(1,128)}', space=vmem, size = 0x12000, scoped, tag = 'internal scratch']
  %s0 = inlined_call_operand.vmem [shape: f32[2,16,64], index: 0, kind: input, shape index: {}]
  %s1 = inlined_call_operand.vmem [shape: f32[1,64], index: 1, kind: input, shape index: {}]
  %s2 = inlined_call_operand.vmem [shape: f32[1,64], index: 2, kind: input, shape index: {}]
  %s3 = inlined_call_operand.vmem [shape: bf16[64,64], index: 3, kind: input, shape index: {}]
  %s4 = inlined_call_operand.vmem [shape: f32[1,64], index: 4, kind: input, shape index: {}]
  %s5 = inlined_call_operand.vmem [shape: bf16[64,64], index: 5, kind: input, shape index: {}]
  %s6 = inlined_call_operand.vmem [shape: f32[1,64], index: 6, kind: input, shape index: {}]
  %s7 = inlined_call_operand.vmem [shape: bf16[64,64], index: 7, kind: input, shape index: {}]
  %s8 = inlined_call_operand.vmem [shape: f32[1,64], index: 8, kind: input, shape index: {}]
  %s9 = inlined_call_operand.vmem [shape: f32[4,64], index: 9, kind: input, shape index: {}]
  %s10 = inlined_call_operand.vmem [shape: f32[4,16,16], index: 10, kind: input, shape index: {}]
  %s11 = inlined_call_operand.vmem [shape: bf16[64,64], index: 11, kind: input, shape index: {}]
  %s12 = inlined_call_operand.vmem [shape: f32[1,64], index: 12, kind: input, shape index: {}]
  %s13 = inlined_call_operand.vmem [shape: f32[1,64], index: 13, kind: input, shape index: {}]
  %s14 = inlined_call_operand.vmem [shape: f32[1,64], index: 14, kind: input, shape index: {}]
  %s15 = inlined_call_operand.vmem [shape: bf16[64,256], index: 15, kind: input, shape index: {}]
  %s16 = inlined_call_operand.vmem [shape: f32[1,256], index: 16, kind: input, shape index: {}]
  %s17 = inlined_call_operand.vmem [shape: bf16[256,64], index: 17, kind: input, shape index: {}]
  %s18 = inlined_call_operand.vmem [shape: f32[1,64], index: 18, kind: input, shape index: {}]
  %s19 = inlined_call_operand.vmem [shape: f32[2,16,64], index: 19, kind: output, shape index: {}]
  %s20 = sld [smem:[#allocation0]]
  $region109: #{swin_unet_forward.17} parent=0
    _
  %s22 = ssub.s32 1, %s20
  %s23 = scalar_select 0, %s22, %s20
  loop: start=0, step=1, limit=4
  $region2: #{swin_unet_forward.17} parent=0 // loop_pre_header
    _
  $region3: #{swin_unet_forward.17} parent=0 // loop_header
    %s25 = sphi 0, %s29
    %p26 = scmp.ge.s32.totalorder %s25, 4
    %s35 = sphi 0, %s37
    %s38 = sphi 0, %s35
    %s39 = sphi 0, %s38
    %s55 = sphi 0, %s39
    %s59 = sphi 0, %s59
    %s61 = sphi 0, %s59
    %s62 = sphi 0, %s61
    %s76 = sphi 0, %s62
    %s80 = sphi 0, %s80
    %s82 = sphi 0, %s80
    %s83 = sphi 0, %s82
    %s97 = sphi 0, %s83
    %s101 = sphi 0, %s101
    %s103 = sphi 0, %s101
    %s104 = sphi 0, %s103
    %s118 = sphi 0, %s104
    %s122 = sphi 0, %s122
    %s124 = sphi 0, %s122
    %s125 = sphi 0, %s124
    %s139 = sphi 0, %s125
    %s143 = sphi 0, %s143
    %s145 = sphi 0, %s143
    %s146 = sphi 0, %s145
    %s160 = sphi 0, %s146
    %s164 = sphi 0, %s164
    %s166 = sphi 0, %s164
    %s167 = sphi 0, %s166
    %s181 = sphi 0, %s167
    %s185 = sphi 0, %s185
    %s187 = sphi 0, %s185
    %s188 = sphi 0, %s187
    %s202 = sphi 0, %s188
    %s206 = sphi 0, %s206
    %s208 = sphi 0, %s206
    %s209 = sphi 0, %s208
    %s223 = sphi 0, %s209
    %s227 = sphi 0, %s227
    %s229 = sphi 0, %s227
    %s230 = sphi 0, %s229
    %s244 = sphi 0, %s230
    %s248 = sphi 0, %s248
    %s250 = sphi 0, %s248
    %s251 = sphi 0, %s250
    %s265 = sphi 0, %s251
    %s269 = sphi 0, %s269
    %s271 = sphi 0, %s269
    %s272 = sphi 0, %s271
    %s286 = sphi 0, %s272
    %s290 = sphi 0, %s290
    %s292 = sphi 0, %s290
    %s293 = sphi 0, %s292
    %s307 = sphi 0, %s293
    %s311 = sphi 0, %s311
    %s313 = sphi 0, %s311
    %s314 = sphi 0, %s313
    %s328 = sphi 0, %s314
    %s332 = sphi 0, %s332
    %s334 = sphi 0, %s332
    %s335 = sphi 0, %s334
    %s349 = sphi 0, %s335
    %s353 = sphi 0, %s353
    %s355 = sphi 0, %s353
    %s356 = sphi 0, %s355
    %s370 = sphi 0, %s356
    %s374 = sphi 0, %s374
    %s376 = sphi 0, %s374
    %s377 = sphi 0, %s376
    %s391 = sphi 0, %s377
    %s395 = sphi 0, %s395
    %s397 = sphi 0, %s395
    %s398 = sphi 0, %s397
    %s412 = sphi 0, %s398
    %s416 = sphi 0, %s416
    %s418 = sphi 0, %s416
    %s419 = sphi 0, %s418
    %s433 = sphi 0, %s419
    %s439 = sphi 0, %s441
    %s442 = sphi 0, %s439
    %s443 = sphi 0, %s442
    %s459 = sphi 0, %s443
  $region4: #{swin_unet_forward.17} parent=0 // loop_header_branch
    %28 = sbr.rel (%p26) target = $region8
  $region5: #{swin_unet_forward.17} parent=0 // loop_body
    %s30 = ssub.s32 %s25, 1
    %s31 = ssub.s32 %s25, 2
    %s32 = sadd.s32 %s25, 1
    %s33 = ssub.s32 %s25, %s32
    %p34 = scmp.eq.s32.totalorder %s33, 0
    %s36 = sadd.s32 %s35, 1
    %s37 = scalar_select %p34, %s35, %s36
    %p40 = pneg %p34
    %p41 = scmp.eq.s32.totalorder %s25, 1
    %p42 = por %p40, %p41
    %p43 = scmp.ne.s32.totalorder %s35, %s38
    %p44 = scmp.eq.s32.totalorder %s25, 0
    %p45 = por %p43, %p44
    %p46 = scmp.ne.s32.totalorder %s35, %s38
    %p47 = scmp.eq.s32.totalorder %s30, 1
    %p48 = por %p46, %p47
    %p49 = scmp.ne.s32.totalorder %s38, %s39
    %p50 = scmp.eq.s32.totalorder %s30, 0
    %p51 = por %p49, %p50
    %p52 = scmp.ne.s32.totalorder %s38, %s39
    %p53 = scmp.eq.s32.totalorder %s31, 1
    %p54 = por %p52, %p53
    %p56 = scmp.ne.s32.totalorder %s39, %s55
    %p57 = scmp.eq.s32.totalorder %s31, 0
    %p58 = por %p56, %p57
    %s60 = sadd.s32 %s59, 1
    %p63 = scmp.eq.s32.totalorder %s25, 1
    %p64 = scmp.ne.s32.totalorder %s59, %s61
    %p65 = scmp.eq.s32.totalorder %s25, 0
    %p66 = por %p64, %p65
    %p67 = scmp.ne.s32.totalorder %s59, %s61
    %p68 = scmp.eq.s32.totalorder %s30, 1
    %p69 = por %p67, %p68
    %p70 = scmp.ne.s32.totalorder %s61, %s62
    %p71 = scmp.eq.s32.totalorder %s30, 0
    %p72 = por %p70, %p71
    %p73 = scmp.ne.s32.totalorder %s61, %s62
    %p74 = scmp.eq.s32.totalorder %s31, 1
    %p75 = por %p73, %p74
    %p77 = scmp.ne.s32.totalorder %s62, %s76
    %p78 = scmp.eq.s32.totalorder %s31, 0
    %p79 = por %p77, %p78
    %s81 = sadd.s32 %s80, 1
    %p84 = scmp.eq.s32.totalorder %s25, 1
    %p85 = scmp.ne.s32.totalorder %s80, %s82
    %p86 = scmp.eq.s32.totalorder %s25, 0
    %p87 = por %p85, %p86
    %p88 = scmp.ne.s32.totalorder %s80, %s82
    %p89 = scmp.eq.s32.totalorder %s30, 1
    %p90 = por %p88, %p89
    %p91 = scmp.ne.s32.totalorder %s82, %s83
    %p92 = scmp.eq.s32.totalorder %s30, 0
    %p93 = por %p91, %p92
    %p94 = scmp.ne.s32.totalorder %s82, %s83
    %p95 = scmp.eq.s32.totalorder %s31, 1
    %p96 = por %p94, %p95
    %p98 = scmp.ne.s32.totalorder %s83, %s97
    %p99 = scmp.eq.s32.totalorder %s31, 0
    %p100 = por %p98, %p99
    %s102 = sadd.s32 %s101, 1
    %p105 = scmp.eq.s32.totalorder %s25, 1
    %p106 = scmp.ne.s32.totalorder %s101, %s103
    %p107 = scmp.eq.s32.totalorder %s25, 0
    %p108 = por %p106, %p107
    %p109 = scmp.ne.s32.totalorder %s101, %s103
    %p110 = scmp.eq.s32.totalorder %s30, 1
    %p111 = por %p109, %p110
    %p112 = scmp.ne.s32.totalorder %s103, %s104
    %p113 = scmp.eq.s32.totalorder %s30, 0
    %p114 = por %p112, %p113
    %p115 = scmp.ne.s32.totalorder %s103, %s104
    %p116 = scmp.eq.s32.totalorder %s31, 1
    %p117 = por %p115, %p116
    %p119 = scmp.ne.s32.totalorder %s104, %s118
    %p120 = scmp.eq.s32.totalorder %s31, 0
    %p121 = por %p119, %p120
    %s123 = sadd.s32 %s122, 1
    %p126 = scmp.eq.s32.totalorder %s25, 1
    %p127 = scmp.ne.s32.totalorder %s122, %s124
    %p128 = scmp.eq.s32.totalorder %s25, 0
    %p129 = por %p127, %p128
    %p130 = scmp.ne.s32.totalorder %s122, %s124
    %p131 = scmp.eq.s32.totalorder %s30, 1
    %p132 = por %p130, %p131
    %p133 = scmp.ne.s32.totalorder %s124, %s125
    %p134 = scmp.eq.s32.totalorder %s30, 0
    %p135 = por %p133, %p134
    %p136 = scmp.ne.s32.totalorder %s124, %s125
    %p137 = scmp.eq.s32.totalorder %s31, 1
    %p138 = por %p136, %p137
    %p140 = scmp.ne.s32.totalorder %s125, %s139
    %p141 = scmp.eq.s32.totalorder %s31, 0
    %p142 = por %p140, %p141
    %s144 = sadd.s32 %s143, 1
    %p147 = scmp.eq.s32.totalorder %s25, 1
    %p148 = scmp.ne.s32.totalorder %s143, %s145
    %p149 = scmp.eq.s32.totalorder %s25, 0
    %p150 = por %p148, %p149
    %p151 = scmp.ne.s32.totalorder %s143, %s145
    %p152 = scmp.eq.s32.totalorder %s30, 1
    %p153 = por %p151, %p152
    %p154 = scmp.ne.s32.totalorder %s145, %s146
    %p155 = scmp.eq.s32.totalorder %s30, 0
    %p156 = por %p154, %p155
    %p157 = scmp.ne.s32.totalorder %s145, %s146
    %p158 = scmp.eq.s32.totalorder %s31, 1
    %p159 = por %p157, %p158
    %p161 = scmp.ne.s32.totalorder %s146, %s160
    %p162 = scmp.eq.s32.totalorder %s31, 0
    %p163 = por %p161, %p162
    %s165 = sadd.s32 %s164, 1
    %p168 = scmp.eq.s32.totalorder %s25, 1
    %p169 = scmp.ne.s32.totalorder %s164, %s166
    %p170 = scmp.eq.s32.totalorder %s25, 0
    %p171 = por %p169, %p170
    %p172 = scmp.ne.s32.totalorder %s164, %s166
    %p173 = scmp.eq.s32.totalorder %s30, 1
    %p174 = por %p172, %p173
    %p175 = scmp.ne.s32.totalorder %s166, %s167
    %p176 = scmp.eq.s32.totalorder %s30, 0
    %p177 = por %p175, %p176
    %p178 = scmp.ne.s32.totalorder %s166, %s167
    %p179 = scmp.eq.s32.totalorder %s31, 1
    %p180 = por %p178, %p179
    %p182 = scmp.ne.s32.totalorder %s167, %s181
    %p183 = scmp.eq.s32.totalorder %s31, 0
    %p184 = por %p182, %p183
    %s186 = sadd.s32 %s185, 1
    %p189 = scmp.eq.s32.totalorder %s25, 1
    %p190 = scmp.ne.s32.totalorder %s185, %s187
    %p191 = scmp.eq.s32.totalorder %s25, 0
    %p192 = por %p190, %p191
    %p193 = scmp.ne.s32.totalorder %s185, %s187
    %p194 = scmp.eq.s32.totalorder %s30, 1
    %p195 = por %p193, %p194
    %p196 = scmp.ne.s32.totalorder %s187, %s188
    %p197 = scmp.eq.s32.totalorder %s30, 0
    %p198 = por %p196, %p197
    %p199 = scmp.ne.s32.totalorder %s187, %s188
    %p200 = scmp.eq.s32.totalorder %s31, 1
    %p201 = por %p199, %p200
    %p203 = scmp.ne.s32.totalorder %s188, %s202
    %p204 = scmp.eq.s32.totalorder %s31, 0
    %p205 = por %p203, %p204
    %s207 = sadd.s32 %s206, 1
    %p210 = scmp.eq.s32.totalorder %s25, 1
    %p211 = scmp.ne.s32.totalorder %s206, %s208
    %p212 = scmp.eq.s32.totalorder %s25, 0
    %p213 = por %p211, %p212
    %p214 = scmp.ne.s32.totalorder %s206, %s208
    %p215 = scmp.eq.s32.totalorder %s30, 1
    %p216 = por %p214, %p215
    %p217 = scmp.ne.s32.totalorder %s208, %s209
    %p218 = scmp.eq.s32.totalorder %s30, 0
    %p219 = por %p217, %p218
    %p220 = scmp.ne.s32.totalorder %s208, %s209
    %p221 = scmp.eq.s32.totalorder %s31, 1
    %p222 = por %p220, %p221
    %p224 = scmp.ne.s32.totalorder %s209, %s223
    %p225 = scmp.eq.s32.totalorder %s31, 0
    %p226 = por %p224, %p225
    %s228 = sadd.s32 %s227, 1
    %p231 = scmp.eq.s32.totalorder %s25, 1
    %p232 = scmp.ne.s32.totalorder %s227, %s229
    %p233 = scmp.eq.s32.totalorder %s25, 0
    %p234 = por %p232, %p233
    %p235 = scmp.ne.s32.totalorder %s227, %s229
    %p236 = scmp.eq.s32.totalorder %s30, 1
    %p237 = por %p235, %p236
    %p238 = scmp.ne.s32.totalorder %s229, %s230
    %p239 = scmp.eq.s32.totalorder %s30, 0
    %p240 = por %p238, %p239
    %p241 = scmp.ne.s32.totalorder %s229, %s230
    %p242 = scmp.eq.s32.totalorder %s31, 1
    %p243 = por %p241, %p242
    %p245 = scmp.ne.s32.totalorder %s230, %s244
    %p246 = scmp.eq.s32.totalorder %s31, 0
    %p247 = por %p245, %p246
    %s249 = sadd.s32 %s248, 1
    %p252 = scmp.eq.s32.totalorder %s25, 1
    %p253 = scmp.ne.s32.totalorder %s248, %s250
    %p254 = scmp.eq.s32.totalorder %s25, 0
    %p255 = por %p253, %p254
    %p256 = scmp.ne.s32.totalorder %s248, %s250
    %p257 = scmp.eq.s32.totalorder %s30, 1
    %p258 = por %p256, %p257
    %p259 = scmp.ne.s32.totalorder %s250, %s251
    %p260 = scmp.eq.s32.totalorder %s30, 0
    %p261 = por %p259, %p260
    %p262 = scmp.ne.s32.totalorder %s250, %s251
    %p263 = scmp.eq.s32.totalorder %s31, 1
    %p264 = por %p262, %p263
    %p266 = scmp.ne.s32.totalorder %s251, %s265
    %p267 = scmp.eq.s32.totalorder %s31, 0
    %p268 = por %p266, %p267
    %s270 = sadd.s32 %s269, 1
    %p273 = scmp.eq.s32.totalorder %s25, 1
    %p274 = scmp.ne.s32.totalorder %s269, %s271
    %p275 = scmp.eq.s32.totalorder %s25, 0
    %p276 = por %p274, %p275
    %p277 = scmp.ne.s32.totalorder %s269, %s271
    %p278 = scmp.eq.s32.totalorder %s30, 1
    %p279 = por %p277, %p278
    %p280 = scmp.ne.s32.totalorder %s271, %s272
    %p281 = scmp.eq.s32.totalorder %s30, 0
    %p282 = por %p280, %p281
    %p283 = scmp.ne.s32.totalorder %s271, %s272
    %p284 = scmp.eq.s32.totalorder %s31, 1
    %p285 = por %p283, %p284
    %p287 = scmp.ne.s32.totalorder %s272, %s286
    %p288 = scmp.eq.s32.totalorder %s31, 0
    %p289 = por %p287, %p288
    %s291 = sadd.s32 %s290, 1
    %p294 = scmp.eq.s32.totalorder %s25, 1
    %p295 = scmp.ne.s32.totalorder %s290, %s292
    %p296 = scmp.eq.s32.totalorder %s25, 0
    %p297 = por %p295, %p296
    %p298 = scmp.ne.s32.totalorder %s290, %s292
    %p299 = scmp.eq.s32.totalorder %s30, 1
    %p300 = por %p298, %p299
    %p301 = scmp.ne.s32.totalorder %s292, %s293
    %p302 = scmp.eq.s32.totalorder %s30, 0
    %p303 = por %p301, %p302
    %p304 = scmp.ne.s32.totalorder %s292, %s293
    %p305 = scmp.eq.s32.totalorder %s31, 1
    %p306 = por %p304, %p305
    %p308 = scmp.ne.s32.totalorder %s293, %s307
    %p309 = scmp.eq.s32.totalorder %s31, 0
    %p310 = por %p308, %p309
    %s312 = sadd.s32 %s311, 1
    %p315 = scmp.eq.s32.totalorder %s25, 1
    %p316 = scmp.ne.s32.totalorder %s311, %s313
    %p317 = scmp.eq.s32.totalorder %s25, 0
    %p318 = por %p316, %p317
    %p319 = scmp.ne.s32.totalorder %s311, %s313
    %p320 = scmp.eq.s32.totalorder %s30, 1
    %p321 = por %p319, %p320
    %p322 = scmp.ne.s32.totalorder %s313, %s314
    %p323 = scmp.eq.s32.totalorder %s30, 0
    %p324 = por %p322, %p323
    %p325 = scmp.ne.s32.totalorder %s313, %s314
    %p326 = scmp.eq.s32.totalorder %s31, 1
    %p327 = por %p325, %p326
    %p329 = scmp.ne.s32.totalorder %s314, %s328
    %p330 = scmp.eq.s32.totalorder %s31, 0
    %p331 = por %p329, %p330
    %s333 = sadd.s32 %s332, 1
    %p336 = scmp.eq.s32.totalorder %s25, 1
    %p337 = scmp.ne.s32.totalorder %s332, %s334
    %p338 = scmp.eq.s32.totalorder %s25, 0
    %p339 = por %p337, %p338
    %p340 = scmp.ne.s32.totalorder %s332, %s334
    %p341 = scmp.eq.s32.totalorder %s30, 1
    %p342 = por %p340, %p341
    %p343 = scmp.ne.s32.totalorder %s334, %s335
    %p344 = scmp.eq.s32.totalorder %s30, 0
    %p345 = por %p343, %p344
    %p346 = scmp.ne.s32.totalorder %s334, %s335
    %p347 = scmp.eq.s32.totalorder %s31, 1
    %p348 = por %p346, %p347
    %p350 = scmp.ne.s32.totalorder %s335, %s349
    %p351 = scmp.eq.s32.totalorder %s31, 0
    %p352 = por %p350, %p351
    %s354 = sadd.s32 %s353, 1
    %p357 = scmp.eq.s32.totalorder %s25, 1
    %p358 = scmp.ne.s32.totalorder %s353, %s355
    %p359 = scmp.eq.s32.totalorder %s25, 0
    %p360 = por %p358, %p359
    %p361 = scmp.ne.s32.totalorder %s353, %s355
    %p362 = scmp.eq.s32.totalorder %s30, 1
    %p363 = por %p361, %p362
    %p364 = scmp.ne.s32.totalorder %s355, %s356
    %p365 = scmp.eq.s32.totalorder %s30, 0
    %p366 = por %p364, %p365
    %p367 = scmp.ne.s32.totalorder %s355, %s356
    %p368 = scmp.eq.s32.totalorder %s31, 1
    %p369 = por %p367, %p368
    %p371 = scmp.ne.s32.totalorder %s356, %s370
    %p372 = scmp.eq.s32.totalorder %s31, 0
    %p373 = por %p371, %p372
    %s375 = sadd.s32 %s374, 1
    %p378 = scmp.eq.s32.totalorder %s25, 1
    %p379 = scmp.ne.s32.totalorder %s374, %s376
    %p380 = scmp.eq.s32.totalorder %s25, 0
    %p381 = por %p379, %p380
    %p382 = scmp.ne.s32.totalorder %s374, %s376
    %p383 = scmp.eq.s32.totalorder %s30, 1
    %p384 = por %p382, %p383
    %p385 = scmp.ne.s32.totalorder %s376, %s377
    %p386 = scmp.eq.s32.totalorder %s30, 0
    %p387 = por %p385, %p386
    %p388 = scmp.ne.s32.totalorder %s376, %s377
    %p389 = scmp.eq.s32.totalorder %s31, 1
    %p390 = por %p388, %p389
    %p392 = scmp.ne.s32.totalorder %s377, %s391
    %p393 = scmp.eq.s32.totalorder %s31, 0
    %p394 = por %p392, %p393
    %s396 = sadd.s32 %s395, 1
    %p399 = scmp.eq.s32.totalorder %s25, 1
    %p400 = scmp.ne.s32.totalorder %s395, %s397
    %p401 = scmp.eq.s32.totalorder %s25, 0
    %p402 = por %p400, %p401
    %p403 = scmp.ne.s32.totalorder %s395, %s397
    %p404 = scmp.eq.s32.totalorder %s30, 1
    %p405 = por %p403, %p404
    %p406 = scmp.ne.s32.totalorder %s397, %s398
    %p407 = scmp.eq.s32.totalorder %s30, 0
    %p408 = por %p406, %p407
    %p409 = scmp.ne.s32.totalorder %s397, %s398
    %p410 = scmp.eq.s32.totalorder %s31, 1
    %p411 = por %p409, %p410
    %p413 = scmp.ne.s32.totalorder %s398, %s412
    %p414 = scmp.eq.s32.totalorder %s31, 0
    %p415 = por %p413, %p414
    %s417 = sadd.s32 %s416, 1
    %p420 = scmp.eq.s32.totalorder %s25, 1
    %p421 = scmp.ne.s32.totalorder %s416, %s418
    %p422 = scmp.eq.s32.totalorder %s25, 0
    %p423 = por %p421, %p422
    %p424 = scmp.ne.s32.totalorder %s416, %s418
    %p425 = scmp.eq.s32.totalorder %s30, 1
    %p426 = por %p424, %p425
    %p427 = scmp.ne.s32.totalorder %s418, %s419
    %p428 = scmp.eq.s32.totalorder %s30, 0
    %p429 = por %p427, %p428
    %p430 = scmp.ne.s32.totalorder %s418, %s419
    %p431 = scmp.eq.s32.totalorder %s31, 1
    %p432 = por %p430, %p431
    %p434 = scmp.ne.s32.totalorder %s419, %s433
    %p435 = scmp.eq.s32.totalorder %s31, 0
    %p436 = por %p434, %p435
    %s437 = ssub.s32 %s25, %s32
    %p438 = scmp.eq.s32.totalorder %s437, 0
    %s440 = sadd.s32 %s439, 1
    %s441 = scalar_select %p438, %s439, %s440
    %p444 = pneg %p438
    %p445 = scmp.eq.s32.totalorder %s25, 1
    %p446 = por %p444, %p445
    %p447 = scmp.ne.s32.totalorder %s439, %s442
    %p448 = scmp.eq.s32.totalorder %s25, 0
    %p449 = por %p447, %p448
    %p450 = scmp.ne.s32.totalorder %s439, %s442
    %p451 = scmp.eq.s32.totalorder %s30, 1
    %p452 = por %p450, %p451
    %p453 = scmp.ne.s32.totalorder %s442, %s443
    %p454 = scmp.eq.s32.totalorder %s30, 0
    %p455 = por %p453, %p454
    %p456 = scmp.ne.s32.totalorder %s442, %s443
    %p457 = scmp.eq.s32.totalorder %s31, 1
    %p458 = por %p456, %p457
    %p460 = scmp.ne.s32.totalorder %s443, %s459
    %p461 = scmp.eq.s32.totalorder %s31, 0
    %p462 = por %p460, %p461
    %p463 = scmp.le.s32.totalorder 1, %s25
    %p464 = scmp.lt.s32.totalorder %s25, 3
    %p465 = pnand %p463, %p464
    %p466 = pneg %p465
    // Predicated region
    $region9: #{swin_unet_forward.17} parent=5 // pred_check
      _
    $region10: #{swin_unet_forward.17} parent=5 // pred_check_branch
      %468 = sbr.rel (%p465) target = $region12
    $region11: #{swin_unet_forward.17} parent=5 // pred_region
      %s469 = ssub.s32 %s25, 1
      // Predicated region
      $region13: #{swin_unet_forward.17} parent=11 // pred_check
        %p470 = pneg %p72
      $region14: #{swin_unet_forward.17} parent=11 // pred_check_branch
        %472 = sbr.rel (%p470) target = $region16
      $region15: #{swin_unet_forward.17} parent=11 // pred_region
        _
      $region16: #{swin_unet_forward.17} parent=11 // pred_fallthru
        _
      // Predicated region
      $region17: #{swin_unet_forward.17} parent=11 // pred_check
        %p473 = pneg %p93
      $region18: #{swin_unet_forward.17} parent=11 // pred_check_branch
        %475 = sbr.rel (%p473) target = $region20
      $region19: #{swin_unet_forward.17} parent=11 // pred_region
        _
      $region20: #{swin_unet_forward.17} parent=11 // pred_fallthru
        _
      // Predicated region
      $region21: #{swin_unet_forward.17} parent=11 // pred_check
        %p476 = pneg %p114
      $region22: #{swin_unet_forward.17} parent=11 // pred_check_branch
        %478 = sbr.rel (%p476) target = $region24
      $region23: #{swin_unet_forward.17} parent=11 // pred_region
        _
      $region24: #{swin_unet_forward.17} parent=11 // pred_fallthru
        _
      // Predicated region
      $region25: #{swin_unet_forward.17} parent=11 // pred_check
        %p479 = pneg %p135
      $region26: #{swin_unet_forward.17} parent=11 // pred_check_branch
        %481 = sbr.rel (%p479) target = $region28
      $region27: #{swin_unet_forward.17} parent=11 // pred_region
        _
      $region28: #{swin_unet_forward.17} parent=11 // pred_fallthru
        _
      // Predicated region
      $region29: #{swin_unet_forward.17} parent=11 // pred_check
        %p482 = pneg %p156
      $region30: #{swin_unet_forward.17} parent=11 // pred_check_branch
        %484 = sbr.rel (%p482) target = $region32
      $region31: #{swin_unet_forward.17} parent=11 // pred_region
        _
      $region32: #{swin_unet_forward.17} parent=11 // pred_fallthru
        _
      // Predicated region
      $region33: #{swin_unet_forward.17} parent=11 // pred_check
        %p485 = pneg %p177
      $region34: #{swin_unet_forward.17} parent=11 // pred_check_branch
        %487 = sbr.rel (%p485) target = $region36
      $region35: #{swin_unet_forward.17} parent=11 // pred_region
        _
      $region36: #{swin_unet_forward.17} parent=11 // pred_fallthru
        _
      // Predicated region
      $region37: #{swin_unet_forward.17} parent=11 // pred_check
        %p488 = pneg %p198
      $region38: #{swin_unet_forward.17} parent=11 // pred_check_branch
        %490 = sbr.rel (%p488) target = $region40
      $region39: #{swin_unet_forward.17} parent=11 // pred_region
        _
      $region40: #{swin_unet_forward.17} parent=11 // pred_fallthru
        _
      // Predicated region
      $region41: #{swin_unet_forward.17} parent=11 // pred_check
        %p491 = pneg %p219
      $region42: #{swin_unet_forward.17} parent=11 // pred_check_branch
        %493 = sbr.rel (%p491) target = $region44
      $region43: #{swin_unet_forward.17} parent=11 // pred_region
        _
      $region44: #{swin_unet_forward.17} parent=11 // pred_fallthru
        _
      // Predicated region
      $region45: #{swin_unet_forward.17} parent=11 // pred_check
        %p494 = pneg %p240
      $region46: #{swin_unet_forward.17} parent=11 // pred_check_branch
        %496 = sbr.rel (%p494) target = $region48
      $region47: #{swin_unet_forward.17} parent=11 // pred_region
        _
      $region48: #{swin_unet_forward.17} parent=11 // pred_fallthru
        _
      // Predicated region
      $region49: #{swin_unet_forward.17} parent=11 // pred_check
        %p497 = pneg %p261
      $region50: #{swin_unet_forward.17} parent=11 // pred_check_branch
        %499 = sbr.rel (%p497) target = $region52
      $region51: #{swin_unet_forward.17} parent=11 // pred_region
        _
      $region52: #{swin_unet_forward.17} parent=11 // pred_fallthru
        _
      // Predicated region
      $region53: #{swin_unet_forward.17} parent=11 // pred_check
        %p500 = pneg %p282
      $region54: #{swin_unet_forward.17} parent=11 // pred_check_branch
        %502 = sbr.rel (%p500) target = $region56
      $region55: #{swin_unet_forward.17} parent=11 // pred_region
        _
      $region56: #{swin_unet_forward.17} parent=11 // pred_fallthru
        _
      // Predicated region
      $region57: #{swin_unet_forward.17} parent=11 // pred_check
        %p503 = pneg %p303
      $region58: #{swin_unet_forward.17} parent=11 // pred_check_branch
        %505 = sbr.rel (%p503) target = $region60
      $region59: #{swin_unet_forward.17} parent=11 // pred_region
        _
      $region60: #{swin_unet_forward.17} parent=11 // pred_fallthru
        _
      // Predicated region
      $region61: #{swin_unet_forward.17} parent=11 // pred_check
        %p506 = pneg %p324
      $region62: #{swin_unet_forward.17} parent=11 // pred_check_branch
        %508 = sbr.rel (%p506) target = $region64
      $region63: #{swin_unet_forward.17} parent=11 // pred_region
        _
      $region64: #{swin_unet_forward.17} parent=11 // pred_fallthru
        _
      // Predicated region
      $region65: #{swin_unet_forward.17} parent=11 // pred_check
        %p509 = pneg %p345
      $region66: #{swin_unet_forward.17} parent=11 // pred_check_branch
        %511 = sbr.rel (%p509) target = $region68
      $region67: #{swin_unet_forward.17} parent=11 // pred_region
        _
      $region68: #{swin_unet_forward.17} parent=11 // pred_fallthru
        _
      // Predicated region
      $region69: #{swin_unet_forward.17} parent=11 // pred_check
        %p512 = pneg %p366
      $region70: #{swin_unet_forward.17} parent=11 // pred_check_branch
        %514 = sbr.rel (%p512) target = $region72
      $region71: #{swin_unet_forward.17} parent=11 // pred_region
        _
      $region72: #{swin_unet_forward.17} parent=11 // pred_fallthru
        _
      // Predicated region
      $region73: #{swin_unet_forward.17} parent=11 // pred_check
        %p515 = pneg %p387
      $region74: #{swin_unet_forward.17} parent=11 // pred_check_branch
        %517 = sbr.rel (%p515) target = $region76
      $region75: #{swin_unet_forward.17} parent=11 // pred_region
        _
      $region76: #{swin_unet_forward.17} parent=11 // pred_fallthru
        _
      // Predicated region
      $region77: #{swin_unet_forward.17} parent=11 // pred_check
        %p518 = pneg %p408
      $region78: #{swin_unet_forward.17} parent=11 // pred_check_branch
        %520 = sbr.rel (%p518) target = $region80
      $region79: #{swin_unet_forward.17} parent=11 // pred_region
        _
      $region80: #{swin_unet_forward.17} parent=11 // pred_fallthru
        _
      // Predicated region
      $region81: #{swin_unet_forward.17} parent=11 // pred_check
        %p521 = pneg %p429
      $region82: #{swin_unet_forward.17} parent=11 // pred_check_branch
        %523 = sbr.rel (%p521) target = $region84
      $region83: #{swin_unet_forward.17} parent=11 // pred_region
        _
      $region84: #{swin_unet_forward.17} parent=11 // pred_fallthru
        _
    $region12: #{swin_unet_forward.17} parent=5 // pred_fallthru
      _
    %p524 = scmp.lt.s32.totalorder %s25, 2
    // Predicated region
    $region85: #{swin_unet_forward.17} parent=5 // pred_check
      %p525 = pneg %p524
    $region86: #{swin_unet_forward.17} parent=5 // pred_check_branch
      %527 = sbr.rel (%p525) target = $region88
    $region87: #{swin_unet_forward.17} parent=5 // pred_region
      // Predicated region
      $region89: #{swin_unet_forward.17} parent=87 // pred_check
        %p528 = pneg %p45
      $region90: #{swin_unet_forward.17} parent=87 // pred_check_branch
        %530 = sbr.rel (%p528) target = $region92
      $region91: #{swin_unet_forward.17} parent=87 // pred_region
        %p531 = scmp.lt.s32.totalorder %s25, 1
        %s532 = scalar_select %p531, %s25, 1
        %s533 = smul.addr %s532, 2
        %s534 = smul.addr %s533, 8
        %s535 = scalar_lea.vmem %s0, %s534
      $region92: #{swin_unet_forward.17} parent=87 // pred_fallthru
        _
    $region88: #{swin_unet_forward.17} parent=5 // pred_fallthru
      _
    %p536 = scmp.le.s32.totalorder 1, %s25
    %p537 = scmp.lt.s32.totalorder %s25, 3
    %p538 = pnand %p536, %p537
    %p539 = pneg %p538
    // Predicated region
    $region93: #{swin_unet_forward.17} parent=5 // pred_check
      _
    $region94: #{swin_unet_forward.17} parent=5 // pred_check_branch
      %541 = sbr.rel (%p538) target = $region96
    $region95: #{swin_unet_forward.17} parent=5 // pred_region
      %s542 = ssub.s32 %s25, 1
      %p543 = scmp.lt.s32.totalorder %s30, 1
      %s544 = scalar_select %p543, %s30, 1
      %s545 = smul.addr %s544, 2
      %s546 = smul.addr %s545, 8
      %s547 = scalar_lea.vmem %s0, %s546
      %p548 = pneg %p51
      %p549 = pneg %p48
      %p550 = pneg %p72
      %p551 = pneg %p69
      %p552 = pneg %p93
      %p553 = pneg %p90
      %p554 = pneg %p114
      %p555 = pneg %p111
      %p556 = pneg %p135
      %p557 = pneg %p132
      %p558 = pneg %p156
      %p559 = pneg %p153
      %p560 = pneg %p177
      %p561 = pneg %p174
      %p562 = pneg %p198
      %p563 = pneg %p195
      %p564 = pneg %p219
      %p565 = pneg %p216
      %p566 = pneg %p240
      %p567 = pneg %p237
      %p568 = pneg %p261
      %p569 = pneg %p258
      %p570 = pneg %p282
      %p571 = pneg %p279
      %p572 = pneg %p303
      %p573 = pneg %p300
      %p574 = pneg %p324
      %p575 = pneg %p321
      %p576 = pneg %p345
      %p577 = pneg %p342
      %p578 = pneg %p366
      %p579 = pneg %p363
      %p580 = pneg %p387
      %p581 = pneg %p384
      %p582 = pneg %p408
      %p583 = pneg %p405
      %p584 = pneg %p429
      %p585 = pneg %p426
      %p586 = pneg %p455
      %p587 = pneg %p452
      %p588 = scmp.lt.s32.totalorder %s30, 1
      %s589 = scalar_select %p588, %s30, 1
      %s590 = smul.addr %s589, 2
      %s591 = smul.addr %s590, 8
      %s592 = scalar_lea.vmem %s19, %s591
      %p593 = scmp.lt.s32.totalorder %s30, 1
      %s594 = scalar_select %p593, %s30, 1
      %s595 = smul.addr %s594, 2
      %s596 = smul.addr %s595, 8
      %s597 = scalar_lea.vmem %s0, %s596
      %p598 = scmp.lt.s32.totalorder %s30, 1
      %s599 = scalar_select %p598, %s30, 1
      %s600 = smul.addr %s599, 2
      %s601 = smul.addr %s600, 8
      %s602 = scalar_lea.vmem %s19, %s601
      %v604 = vld [vmem:[%s597] sm:$0xff]
      %v605 = vld [vmem:[%s597 + $0x8] sm:$0xff]
      %v606 = vld [vmem:[%s1] sm:$0x1]
      %v607 = vld [vmem:[%s2] sm:$0x1]
      %vm608 = vcmask 523264
      %v609 = vsel %vm608, %v604, 0.0
      %610 = vadd.xlane.f32.xlu0 %v609
      %v611 = vpop.xlane.xlu0 %610
      %v612 = vsel %vm608, %v605, 0.0
      %613 = vadd.xlane.f32.xlu0 %v612
      %v614 = vpop.xlane.xlu0 %613
      %v615 = vrcp.pop 64.0
      %v616 = vmul.f32 %v611, %v615
      %v617 = vmul.f32 %v614, %v615
      %v618 = vsub.f32 %v604, %v616
      %v619 = vsub.f32 %v605, %v617
      %v620 = vmul.f32 %v618, %v618
      %v621 = vmul.f32 %v619, %v619
      %v622 = vsel %vm608, %v620, 0.0
      %623 = vadd.xlane.f32.xlu0 %v622
      %v624 = vpop.xlane.xlu0 %623
      %v625 = vsel %vm608, %v621, 0.0
      %626 = vadd.xlane.f32.xlu0 %v625
      %v627 = vpop.xlane.xlu0 %626
      %v628 = vmul.f32 %v624, %v615
      %v629 = vmul.f32 %v627, %v615
      %v630 = vadd.f32 %v628, 1e-05
      %v631 = vadd.f32 %v629, 1e-05
      %v632 = vrsqrt.pop %v630
      %v633 = vrsqrt.pop %v631
      %v634 = vmul.f32 %v618, %v632
      %v635 = vmul.f32 %v619, %v633
      %v637 = vlaneseq
      %v638 = vshrl.u32 %v637, 7
      %v639 = vsub.s32 0, %v638
      %v640 = vrot.slane %v606, %v639
      %v642 = vmul.f32 %v634, %v640
      %v643 = vmul.f32 %v635, %v640
      %v645 = vlaneseq
      %v646 = vshrl.u32 %v645, 7
      %v647 = vsub.s32 0, %v646
      %v648 = vrot.slane %v607, %v647
      %v650 = vadd.f32 %v642, %v648
      %v651 = vadd.f32 %v643, %v648
      %v652 = vpack.c.bf16 %v651, %v650
      %v653 = vld [vmem:[%s3] sm:$0xf]
      %v654 = vld [vmem:[%s3 + $0x4] sm:$0xf]
      %v655 = vld [vmem:[%s3 + $0x8] sm:$0xf]
      %v656 = vld [vmem:[%s3 + $0xc] sm:$0xf]
      %v657 = vld [vmem:[%s3 + $0x10] sm:$0xf]
      %v658 = vld [vmem:[%s3 + $0x14] sm:$0xf]
      %v659 = vld [vmem:[%s3 + $0x18] sm:$0xf]
      %v660 = vld [vmem:[%s3 + $0x1c] sm:$0xf]
      %v661 = vld [vmem:[%s4] sm:$0x1]
      %v663 = vlaneseq
      %v664 = vshrl.u32 %v663, 7
      %v665 = vsub.s32 0, %v664
      %v666 = vrot.slane %v661, %v665
      %v676 = vunpack.c.l.b16 %v653
      %v677 = vunpack.c.l.b16 %v654
      %v678 = vunpack.c.l.b16 %v655
      %v679 = vunpack.c.l.b16 %v656
      %v680 = vunpack.c.l.b16 %v657
      %v681 = vunpack.c.l.b16 %v658
      %v682 = vunpack.c.l.b16 %v659
      %v683 = vunpack.c.l.b16 %v660
      %v684 = vpack.c.b16 %v677, %v676
      %v685 = vpack.c.b16 %v679, %v678
      %v686 = vpack.c.b16 %v681, %v680
      %v687 = vpack.c.b16 %v683, %v682
      %v693 = vsel %vm608, %v652, 0
      %695 = vmatprep.subr.bf16.mxu0 0
      %696 = vmatpush1.bf16.msra.mxu0 %v684
      %697 = vmatprep.subr.bf16.mxu0 0
      %698 = vmatpush1.bf16.msra.mxu0 %v685
      %699 = vmatprep.subr.bf16.mxu0 0
      %700 = vmatpush1.bf16.msra.mxu0 %v686
      %701 = vmatprep.subr.bf16.mxu0 0
      %702 = vmatpush1.bf16.msra.mxu0 %v687
      %703 = vmatprep.subr.bf16.mxu0 0
      %704 = vmatpush1.bf16.msra.mxu0 0
      %705 = vmatprep.subr.bf16.mxu0 0
      %706 = vmatpush1.bf16.msra.mxu0 0
      %707 = vmatprep.subr.bf16.mxu0 0
      %708 = vmatpush1.bf16.msra.mxu0 0
      %709 = vmatprep.subr.bf16.mxu0 0
      %710 = vmatpush1.bf16.msra.mxu0 0
      %711 = vmatprep.subr.bf16.mxu0 0
      %712 = vmatpush1.bf16.msra.mxu0 0
      %713 = vmatprep.subr.bf16.mxu0 0
      %714 = vmatpush1.bf16.msra.mxu0 0
      %715 = vmatprep.subr.bf16.mxu0 0
      %716 = vmatpush1.bf16.msra.mxu0 0
      %717 = vmatprep.subr.bf16.mxu0 0
      %718 = vmatpush1.bf16.msra.mxu0 0
      %719 = vmatprep.subr.bf16.mxu0 0
      %720 = vmatpush1.bf16.msra.mxu0 0
      %721 = vmatprep.subr.bf16.mxu0 0
      %722 = vmatpush1.bf16.msra.mxu0 0
      %723 = vmatprep.subr.bf16.mxu0 0
      %724 = vmatpush1.bf16.msra.mxu0 0
      %725 = vmatprep.subr.bf16.mxu0 0
      %726 = vmatpush1.bf16.msra.mxu0 0
      %727 = vmatprep.mubr.bf16.mxu0 0
      %728 = vmatmul.mubr.bf16.gmra.mrb[0].mxu0 %v693
      %v729 = vpop.f32.mrb[0].mxu0
      %v730 = vadd.f32 %v666, %v729
      %v731 = vpop.f32.mrb[0].mxu0
      %v732 = vpop.f32.mrb[0].mxu0
      %v733 = vadd.f32 %v666, %v732
      %v734 = vpop.f32.mrb[0].mxu0
      %735 = vdwg.mxu0
      %v736 = vld [vmem:[%s5] sm:$0xf]
      %v737 = vld [vmem:[%s5 + $0x4] sm:$0xf]
      %v738 = vld [vmem:[%s5 + $0x8] sm:$0xf]
      %v739 = vld [vmem:[%s5 + $0xc] sm:$0xf]
      %v740 = vld [vmem:[%s5 + $0x10] sm:$0xf]
      %v741 = vld [vmem:[%s5 + $0x14] sm:$0xf]
      %v742 = vld [vmem:[%s5 + $0x18] sm:$0xf]
      %v743 = vld [vmem:[%s5 + $0x1c] sm:$0xf]
      %v744 = vld [vmem:[%s6] sm:$0x1]
      %v746 = vlaneseq
      %v747 = vshrl.u32 %v746, 7
      %v748 = vsub.s32 0, %v747
      %v749 = vrot.slane %v744, %v748
      %v759 = vunpack.c.l.b16 %v736
      %v760 = vunpack.c.l.b16 %v737
      %v761 = vunpack.c.l.b16 %v738
      %v762 = vunpack.c.l.b16 %v739
      %v763 = vunpack.c.l.b16 %v740
      %v764 = vunpack.c.l.b16 %v741
      %v765 = vunpack.c.l.b16 %v742
      %v766 = vunpack.c.l.b16 %v743
      %v767 = vpack.c.b16 %v760, %v759
      %v768 = vpack.c.b16 %v762, %v761
      %v769 = vpack.c.b16 %v764, %v763
      %v770 = vpack.c.b16 %v766, %v765
      %775 = vmatprep.subr.bf16.mxu0 0
      %776 = vmatpush1.bf16.msra.mxu0 %v767
      %777 = vmatprep.subr.bf16.mxu0 0
      %778 = vmatpush1.bf16.msra.mxu0 %v768
      %779 = vmatprep.subr.bf16.mxu0 0
      %780 = vmatpush1.bf16.msra.mxu0 %v769
      %781 = vmatprep.subr.bf16.mxu0 0
      %782 = vmatpush1.bf16.msra.mxu0 %v770
      %783 = vmatprep.subr.bf16.mxu0 0
      %784 = vmatpush1.bf16.msra.mxu0 0
      %785 = vmatprep.subr.bf16.mxu0 0
      %786 = vmatpush1.bf16.msra.mxu0 0
      %787 = vmatprep.subr.bf16.mxu0 0
      %788 = vmatpush1.bf16.msra.mxu0 0
      %789 = vmatprep.subr.bf16.mxu0 0
      %790 = vmatpush1.bf16.msra.mxu0 0
      %791 = vmatprep.subr.bf16.mxu0 0
      %792 = vmatpush1.bf16.msra.mxu0 0
      %793 = vmatprep.subr.bf16.mxu0 0
      %794 = vmatpush1.bf16.msra.mxu0 0
      %795 = vmatprep.subr.bf16.mxu0 0
      %796 = vmatpush1.bf16.msra.mxu0 0
      %797 = vmatprep.subr.bf16.mxu0 0
      %798 = vmatpush1.bf16.msra.mxu0 0
      %799 = vmatprep.subr.bf16.mxu0 0
      %800 = vmatpush1.bf16.msra.mxu0 0
      %801 = vmatprep.subr.bf16.mxu0 0
      %802 = vmatpush1.bf16.msra.mxu0 0
      %803 = vmatprep.subr.bf16.mxu0 0
      %804 = vmatpush1.bf16.msra.mxu0 0
      %805 = vmatprep.subr.bf16.mxu0 0
      %806 = vmatpush1.bf16.msra.mxu0 0
      %807 = vmatprep.mubr.bf16.mxu0 0
      %808 = vmatmul.mubr.bf16.gmra.mrb[0].mxu0 %v693
      %v809 = vpop.f32.mrb[0].mxu0
      %v810 = vadd.f32 %v749, %v809
      %v811 = vpop.f32.mrb[0].mxu0
      %v812 = vpop.f32.mrb[0].mxu0
      %v813 = vadd.f32 %v749, %v812
      %v814 = vpop.f32.mrb[0].mxu0
      %815 = vdwg.mxu0
      %v816 = vld [vmem:[%s7] sm:$0xf]
      %v817 = vld [vmem:[%s7 + $0x4] sm:$0xf]
      %v818 = vld [vmem:[%s7 + $0x8] sm:$0xf]
      %v819 = vld [vmem:[%s7 + $0xc] sm:$0xf]
      %v820 = vld [vmem:[%s7 + $0x10] sm:$0xf]
      %v821 = vld [vmem:[%s7 + $0x14] sm:$0xf]
      %v822 = vld [vmem:[%s7 + $0x18] sm:$0xf]
      %v823 = vld [vmem:[%s7 + $0x1c] sm:$0xf]
      %v824 = vld [vmem:[%s8] sm:$0x1]
      %v826 = vlaneseq
      %v827 = vshrl.u32 %v826, 7
      %v828 = vsub.s32 0, %v827
      %v829 = vrot.slane %v824, %v828
      %v839 = vunpack.c.l.b16 %v816
      %v840 = vunpack.c.l.b16 %v817
      %v841 = vunpack.c.l.b16 %v818
      %v842 = vunpack.c.l.b16 %v819
      %v843 = vunpack.c.l.b16 %v820
      %v844 = vunpack.c.l.b16 %v821
      %v845 = vunpack.c.l.b16 %v822
      %v846 = vunpack.c.l.b16 %v823
      %v847 = vpack.c.b16 %v840, %v839
      %v848 = vpack.c.b16 %v842, %v841
      %v849 = vpack.c.b16 %v844, %v843
      %v850 = vpack.c.b16 %v846, %v845
      %855 = vmatprep.subr.bf16.mxu0 0
      %856 = vmatpush1.bf16.msra.mxu0 %v847
      %857 = vmatprep.subr.bf16.mxu0 0
      %858 = vmatpush1.bf16.msra.mxu0 %v848
      %859 = vmatprep.subr.bf16.mxu0 0
      %860 = vmatpush1.bf16.msra.mxu0 %v849
      %861 = vmatprep.subr.bf16.mxu0 0
      %862 = vmatpush1.bf16.msra.mxu0 %v850
      %863 = vmatprep.subr.bf16.mxu0 0
      %864 = vmatpush1.bf16.msra.mxu0 0
      %865 = vmatprep.subr.bf16.mxu0 0
      %866 = vmatpush1.bf16.msra.mxu0 0
      %867 = vmatprep.subr.bf16.mxu0 0
      %868 = vmatpush1.bf16.msra.mxu0 0
      %869 = vmatprep.subr.bf16.mxu0 0
      %870 = vmatpush1.bf16.msra.mxu0 0
      %871 = vmatprep.subr.bf16.mxu0 0
      %872 = vmatpush1.bf16.msra.mxu0 0
      %873 = vmatprep.subr.bf16.mxu0 0
      %874 = vmatpush1.bf16.msra.mxu0 0
      %875 = vmatprep.subr.bf16.mxu0 0
      %876 = vmatpush1.bf16.msra.mxu0 0
      %877 = vmatprep.subr.bf16.mxu0 0
      %878 = vmatpush1.bf16.msra.mxu0 0
      %879 = vmatprep.subr.bf16.mxu0 0
      %880 = vmatpush1.bf16.msra.mxu0 0
      %881 = vmatprep.subr.bf16.mxu0 0
      %882 = vmatpush1.bf16.msra.mxu0 0
      %883 = vmatprep.subr.bf16.mxu0 0
      %884 = vmatpush1.bf16.msra.mxu0 0
      %885 = vmatprep.subr.bf16.mxu0 0
      %886 = vmatpush1.bf16.msra.mxu0 0
      %887 = vmatprep.mubr.bf16.mxu0 0
      %888 = vmatmul.mubr.bf16.gmra.mrb[0].mxu0 %v693
      %v889 = vpop.f32.mrb[0].mxu0
      %v890 = vadd.f32 %v829, %v889
      %v891 = vpop.f32.mrb[0].mxu0
      %v892 = vpop.f32.mrb[0].mxu0
      %v893 = vadd.f32 %v829, %v892
      %v894 = vpop.f32.mrb[0].mxu0
      %895 = vdwg.mxu0
      %v896 = vld [vmem:[%s9] sm:$0xf]
      %v897 = vpack.c.bf16 %v813, %v810
      %v898 = vlaneseq
      %v899 = vshrl.u32 %v898, 7
      %v900 = vsub.s32 0, %v899
      %v901 = vrot.slane %v896, %v900
      %v902 = vmul.f32 %v730, %v901
      %v903 = vmul.f32 %v733, %v901
      %v904 = vmul.f32 %v902, 0.25
      %v905 = vmul.f32 %v903, 0.25
      %v906 = vpack.c.bf16 %v905, %v904
      %v907 = vld [vmem:[%s10] sm:$0xff]
      %v908 = vld [vmem:[%s10 + $0x8] sm:$0xff]
      %v910 = vsel %vm608, %v906, 0
      %v913 = vsel %vm608, %v897, 0
      %915 = vmatprep.subr.bf16.mxu0 0
      %916 = vmatpush1.bf16.xpose.msra.mxu0 %v913
      %917 = vmatprep.subr.bf16.mxu0 0
      %918 = vmatpush1.bf16.xpose.msra.mxu0 0
      %919 = vmatprep.subr.bf16.mxu0 0
      %920 = vmatpush1.bf16.xpose.msra.mxu0 0
      %921 = vmatprep.subr.bf16.mxu0 0
      %922 = vmatpush1.bf16.xpose.msra.mxu0 0
      %923 = vmatprep.subr.bf16.mxu0 0
      %924 = vmatpush1.bf16.xpose.msra.mxu0 0
      %925 = vmatprep.subr.bf16.mxu0 0
      %926 = vmatpush1.bf16.xpose.msra.mxu0 0
      %927 = vmatprep.subr.bf16.mxu0 0
      %928 = vmatpush1.bf16.xpose.msra.mxu0 0
      %929 = vmatprep.subr.bf16.mxu0 0
      %930 = vmatpush1.bf16.xpose.msra.mxu0 0
      %931 = vmatprep.subr.bf16.mxu0 0
      %932 = vmatpush1.bf16.xpose.msra.mxu0 0
      %933 = vmatprep.subr.bf16.mxu0 0
      %934 = vmatpush1.bf16.xpose.msra.mxu0 0
      %935 = vmatprep.subr.bf16.mxu0 0
      %936 = vmatpush1.bf16.xpose.msra.mxu0 0
      %937 = vmatprep.subr.bf16.mxu0 0
      %938 = vmatpush1.bf16.xpose.msra.mxu0 0
      %939 = vmatprep.subr.bf16.mxu0 0
      %940 = vmatpush1.bf16.xpose.msra.mxu0 0
      %941 = vmatprep.subr.bf16.mxu0 0
      %942 = vmatpush1.bf16.xpose.msra.mxu0 0
      %943 = vmatprep.subr.bf16.mxu0 0
      %944 = vmatpush1.bf16.xpose.msra.mxu0 0
      %945 = vmatprep.subr.bf16.mxu0 0
      %946 = vmatpush1.bf16.xpose.msra.mxu0 0
      %947 = vmatprep.mubr.bf16.mxu0 0
      %948 = vmatmul.mubr.bf16.gmra.mrb[0].mxu0 %v910
      %v949 = vpop.f32.mrb[0].mxu0
      %v950 = vadd.f32 %v907, %v949
      %v951 = vpop.f32.mrb[0].mxu0
      %v952 = vpop.f32.mrb[0].mxu0
      %v953 = vadd.f32 %v908, %v952
      %v954 = vpop.f32.mrb[0].mxu0
      %955 = vdwg.mxu0
      %vm956 = vcmask 130048
      %v957 = vsel %vm956, %v950, -inf
      %958 = vmax.xlane.f32.xlu0 %v957
      %v959 = vpop.xlane.xlu0 %958
      %v960 = vsel %vm956, %v953, -inf
      %961 = vmax.xlane.f32.xlu0 %v960
      %v962 = vpop.xlane.xlu0 %961
      %v963 = vsub.f32 %v950, %v959
      %v964 = vsub.f32 %v953, %v962
      %v965 = vmul.f32 %v963, 1.442695
      %v966 = vpow.pop %v965
      %v967 = vmul.f32 %v964, 1.442695
      %v968 = vpow.pop %v967
      %v969 = vsel %vm956, %v966, 0.0
      %970 = vadd.xlane.f32.xlu0 %v969
      %v971 = vpop.xlane.xlu0 %970
      %v972 = vsel %vm956, %v968, 0.0
      %973 = vadd.xlane.f32.xlu0 %v972
      %v974 = vpop.xlane.xlu0 %973
      %v975 = vrcp.pop %v971
      %v976 = vrcp.pop %v974
      %v977 = vmul.f32 %v966, %v975
      %v978 = vmul.f32 %v968, %v976
      %v979 = vmul.f32 %v890, %v901
      %v980 = vmul.f32 %v893, %v901
      %v981 = vpack.c.bf16 %v980, %v979
      %v982 = vpack.c.bf16 %v978, %v977
      %v983 = vlaneseq
      %v984 = vshrl.u32 %v983, 7
      %v985 = vsub.s32 1, %v984
      %v986 = vrot.slane %v896, %v985
      %v987 = vmul.f32 %v730, %v986
      %v988 = vmul.f32 %v733, %v986
      %v989 = vmul.f32 %v987, 0.25
      %v990 = vmul.f32 %v988, 0.25
      %v991 = vpack.c.bf16 %v990, %v989
      %s992 = scalar_lea.vmem %s10, 16
      %v993 = vld [vmem:[%s992] sm:$0xff]
      %v994 = vld [vmem:[%s992 + $0x8] sm:$0xff]
      %v996 = vsel %vm608, %v991, 0
      %998 = vmatprep.subr.bf16.mxu0 0
      %999 = vmatpush1.bf16.xpose.msra.mxu0 %v913
      %1000 = vmatprep.subr.bf16.mxu0 0
      %1001 = vmatpush1.bf16.xpose.msra.mxu0 0
      %1002 = vmatprep.subr.bf16.mxu0 0
      %1003 = vmatpush1.bf16.xpose.msra.mxu0 0
      %1004 = vmatprep.subr.bf16.mxu0 0
      %1005 = vmatpush1.bf16.xpose.msra.mxu0 0
      %1006 = vmatprep.subr.bf16.mxu0 0
      %1007 = vmatpush1.bf16.xpose.msra.mxu0 0
      %1008 = vmatprep.subr.bf16.mxu0 0
      %1009 = vmatpush1.bf16.xpose.msra.mxu0 0
      %1010 = vmatprep.subr.bf16.mxu0 0
      %1011 = vmatpush1.bf16.xpose.msra.mxu0 0
      %1012 = vmatprep.subr.bf16.mxu0 0
      %1013 = vmatpush1.bf16.xpose.msra.mxu0 0
      %1014 = vmatprep.subr.bf16.mxu0 0
      %1015 = vmatpush1.bf16.xpose.msra.mxu0 0
      %1016 = vmatprep.subr.bf16.mxu0 0
      %1017 = vmatpush1.bf16.xpose.msra.mxu0 0
      %1018 = vmatprep.subr.bf16.mxu0 0
      %1019 = vmatpush1.bf16.xpose.msra.mxu0 0
      %1020 = vmatprep.subr.bf16.mxu0 0
      %1021 = vmatpush1.bf16.xpose.msra.mxu0 0
      %1022 = vmatprep.subr.bf16.mxu0 0
      %1023 = vmatpush1.bf16.xpose.msra.mxu0 0
      %1024 = vmatprep.subr.bf16.mxu0 0
      %1025 = vmatpush1.bf16.xpose.msra.mxu0 0
      %1026 = vmatprep.subr.bf16.mxu0 0
      %1027 = vmatpush1.bf16.xpose.msra.mxu0 0
      %1028 = vmatprep.subr.bf16.mxu0 0
      %1029 = vmatpush1.bf16.xpose.msra.mxu0 0
      %1030 = vmatprep.mubr.bf16.mxu0 0
      %1031 = vmatmul.mubr.bf16.gmra.mrb[0].mxu0 %v996
      %v1032 = vpop.f32.mrb[0].mxu0
      %v1033 = vadd.f32 %v993, %v1032
      %v1034 = vpop.f32.mrb[0].mxu0
      %v1035 = vpop.f32.mrb[0].mxu0
      %v1036 = vadd.f32 %v994, %v1035
      %v1037 = vpop.f32.mrb[0].mxu0
      %1038 = vdwg.mxu0
      %v1039 = vsel %vm956, %v1033, -inf
      %1040 = vmax.xlane.f32.xlu0 %v1039
      %v1041 = vpop.xlane.xlu0 %1040
      %v1042 = vsel %vm956, %v1036, -inf
      %1043 = vmax.xlane.f32.xlu0 %v1042
      %v1044 = vpop.xlane.xlu0 %1043
      %v1045 = vsub.f32 %v1033, %v1041
      %v1046 = vsub.f32 %v1036, %v1044
      %v1047 = vmul.f32 %v1045, 1.442695
      %v1048 = vpow.pop %v1047
      %v1049 = vmul.f32 %v1046, 1.442695
      %v1050 = vpow.pop %v1049
      %v1051 = vsel %vm956, %v1048, 0.0
      %1052 = vadd.xlane.f32.xlu0 %v1051
      %v1053 = vpop.xlane.xlu0 %1052
      %v1054 = vsel %vm956, %v1050, 0.0
      %1055 = vadd.xlane.f32.xlu0 %v1054
      %v1056 = vpop.xlane.xlu0 %1055
      %v1057 = vrcp.pop %v1053
      %v1058 = vrcp.pop %v1056
      %v1059 = vmul.f32 %v1048, %v1057
      %v1060 = vmul.f32 %v1050, %v1058
      %v1061 = vmul.f32 %v890, %v986
      %v1062 = vmul.f32 %v893, %v986
      %v1063 = vpack.c.bf16 %v1062, %v1061
      %v1064 = vpack.c.bf16 %v1060, %v1059
      %v1066 = vsel %vm956, %v1064, 0
      %1068 = vmatprep.subr.bf16.mxu0 0
      %1069 = vmatpush1.bf16.msra.mxu0 %v1063
      %1070 = vmatprep.subr.bf16.mxu0 0
      %1071 = vmatpush1.bf16.msra.mxu0 0
      %1072 = vmatprep.subr.bf16.mxu0 0
      %1073 = vmatpush1.bf16.msra.mxu0 0
      %1074 = vmatprep.subr.bf16.mxu0 0
      %1075 = vmatpush1.bf16.msra.mxu0 0
      %1076 = vmatprep.subr.bf16.mxu0 0
      %1077 = vmatpush1.bf16.msra.mxu0 0
      %1078 = vmatprep.subr.bf16.mxu0 0
      %1079 = vmatpush1.bf16.msra.mxu0 0
      %1080 = vmatprep.subr.bf16.mxu0 0
      %1081 = vmatpush1.bf16.msra.mxu0 0
      %1082 = vmatprep.subr.bf16.mxu0 0
      %1083 = vmatpush1.bf16.msra.mxu0 0
      %1084 = vmatprep.subr.bf16.mxu0 0
      %1085 = vmatpush1.bf16.msra.mxu0 0
      %1086 = vmatprep.subr.bf16.mxu0 0
      %1087 = vmatpush1.bf16.msra.mxu0 0
      %1088 = vmatprep.subr.bf16.mxu0 0
      %1089 = vmatpush1.bf16.msra.mxu0 0
      %1090 = vmatprep.subr.bf16.mxu0 0
      %1091 = vmatpush1.bf16.msra.mxu0 0
      %1092 = vmatprep.subr.bf16.mxu0 0
      %1093 = vmatpush1.bf16.msra.mxu0 0
      %1094 = vmatprep.subr.bf16.mxu0 0
      %1095 = vmatpush1.bf16.msra.mxu0 0
      %1096 = vmatprep.subr.bf16.mxu0 0
      %1097 = vmatpush1.bf16.msra.mxu0 0
      %1098 = vmatprep.subr.bf16.mxu0 0
      %1099 = vmatpush1.bf16.msra.mxu0 0
      %1100 = vmatprep.mubr.bf16.mxu0 0
      %1101 = vmatmul.mubr.bf16.gmra.mrb[0].mxu0 %v1066
      %v1102 = vpop.f32.mrb[0].mxu0
      %v1103 = vadd.f32 0.0, %v1102
      %v1104 = vpop.f32.mrb[0].mxu0
      %v1105 = vpop.f32.mrb[0].mxu0
      %v1106 = vadd.f32 0.0, %v1105
      %v1107 = vpop.f32.mrb[0].mxu0
      %1108 = vdwg.mxu0
      %v1110 = vsel %vm956, %v982, 0
      %1112 = vmatprep.subr.bf16.mxu0 0
      %1113 = vmatpush1.bf16.msra.mxu0 %v981
      %1114 = vmatprep.subr.bf16.mxu0 0
      %1115 = vmatpush1.bf16.msra.mxu0 0
      %1116 = vmatprep.subr.bf16.mxu0 0
      %1117 = vmatpush1.bf16.msra.mxu0 0
      %1118 = vmatprep.subr.bf16.mxu0 0
      %1119 = vmatpush1.bf16.msra.mxu0 0
      %1120 = vmatprep.subr.bf16.mxu0 0
      %1121 = vmatpush1.bf16.msra.mxu0 0
      %1122 = vmatprep.subr.bf16.mxu0 0
      %1123 = vmatpush1.bf16.msra.mxu0 0
      %1124 = vmatprep.subr.bf16.mxu0 0
      %1125 = vmatpush1.bf16.msra.mxu0 0
      %1126 = vmatprep.subr.bf16.mxu0 0
      %1127 = vmatpush1.bf16.msra.mxu0 0
      %1128 = vmatprep.subr.bf16.mxu0 0
      %1129 = vmatpush1.bf16.msra.mxu0 0
      %1130 = vmatprep.subr.bf16.mxu0 0
      %1131 = vmatpush1.bf16.msra.mxu0 0
      %1132 = vmatprep.subr.bf16.mxu0 0
      %1133 = vmatpush1.bf16.msra.mxu0 0
      %1134 = vmatprep.subr.bf16.mxu0 0
      %1135 = vmatpush1.bf16.msra.mxu0 0
      %1136 = vmatprep.subr.bf16.mxu0 0
      %1137 = vmatpush1.bf16.msra.mxu0 0
      %1138 = vmatprep.subr.bf16.mxu0 0
      %1139 = vmatpush1.bf16.msra.mxu0 0
      %1140 = vmatprep.subr.bf16.mxu0 0
      %1141 = vmatpush1.bf16.msra.mxu0 0
      %1142 = vmatprep.subr.bf16.mxu0 0
      %1143 = vmatpush1.bf16.msra.mxu0 0
      %1144 = vmatprep.mubr.bf16.mxu0 0
      %1145 = vmatmul.mubr.bf16.gmra.mrb[0].mxu0 %v1110
      %v1146 = vpop.f32.mrb[0].mxu0
      %v1147 = vadd.f32 %v1103, %v1146
      %v1148 = vpop.f32.mrb[0].mxu0
      %v1149 = vpop.f32.mrb[0].mxu0
      %v1150 = vadd.f32 %v1106, %v1149
      %v1151 = vpop.f32.mrb[0].mxu0
      %1152 = vdwg.mxu0
      %v1153 = vlaneseq
      %v1154 = vshrl.u32 %v1153, 7
      %v1155 = vsub.s32 2, %v1154
      %v1156 = vrot.slane %v896, %v1155
      %v1157 = vmul.f32 %v730, %v1156
      %v1158 = vmul.f32 %v733, %v1156
      %v1159 = vmul.f32 %v1157, 0.25
      %v1160 = vmul.f32 %v1158, 0.25
      %v1161 = vpack.c.bf16 %v1160, %v1159
      %s1162 = scalar_lea.vmem %s10, 32
      %v1163 = vld [vmem:[%s1162] sm:$0xff]
      %v1164 = vld [vmem:[%s1162 + $0x8] sm:$0xff]
      %v1166 = vsel %vm608, %v1161, 0
      %1168 = vmatprep.subr.bf16.mxu0 0
      %1169 = vmatpush1.bf16.xpose.msra.mxu0 %v913
      %1170 = vmatprep.subr.bf16.mxu0 0
      %1171 = vmatpush1.bf16.xpose.msra.mxu0 0
      %1172 = vmatprep.subr.bf16.mxu0 0
      %1173 = vmatpush1.bf16.xpose.msra.mxu0 0
      %1174 = vmatprep.subr.bf16.mxu0 0
      %1175 = vmatpush1.bf16.xpose.msra.mxu0 0
      %1176 = vmatprep.subr.bf16.mxu0 0
      %1177 = vmatpush1.bf16.xpose.msra.mxu0 0
      %1178 = vmatprep.subr.bf16.mxu0 0
      %1179 = vmatpush1.bf16.xpose.msra.mxu0 0
      %1180 = vmatprep.subr.bf16.mxu0 0
      %1181 = vmatpush1.bf16.xpose.msra.mxu0 0
      %1182 = vmatprep.subr.bf16.mxu0 0
      %1183 = vmatpush1.bf16.xpose.msra.mxu0 0
      %1184 = vmatprep.subr.bf16.mxu0 0
      %1185 = vmatpush1.bf16.xpose.msra.mxu0 0
      %1186 = vmatprep.subr.bf16.mxu0 0
      %1187 = vmatpush1.bf16.xpose.msra.mxu0 0
      %1188 = vmatprep.subr.bf16.mxu0 0
      %1189 = vmatpush1.bf16.xpose.msra.mxu0 0
      %1190 = vmatprep.subr.bf16.mxu0 0
      %1191 = vmatpush1.bf16.xpose.msra.mxu0 0
      %1192 = vmatprep.subr.bf16.mxu0 0
      %1193 = vmatpush1.bf16.xpose.msra.mxu0 0
      %1194 = vmatprep.subr.bf16.mxu0 0
      %1195 = vmatpush1.bf16.xpose.msra.mxu0 0
      %1196 = vmatprep.subr.bf16.mxu0 0
      %1197 = vmatpush1.bf16.xpose.msra.mxu0 0
      %1198 = vmatprep.subr.bf16.mxu0 0
      %1199 = vmatpush1.bf16.xpose.msra.mxu0 0
      %1200 = vmatprep.mubr.bf16.mxu0 0
      %1201 = vmatmul.mubr.bf16.gmra.mrb[0].mxu0 %v1166
      %v1202 = vpop.f32.mrb[0].mxu0
      %v1203 = vadd.f32 %v1163, %v1202
      %v1204 = vpop.f32.mrb[0].mxu0
      %v1205 = vpop.f32.mrb[0].mxu0
      %v1206 = vadd.f32 %v1164, %v1205
      %v1207 = vpop.f32.mrb[0].mxu0
      %1208 = vdwg.mxu0
      %v1209 = vsel %vm956, %v1203, -inf
      %1210 = vmax.xlane.f32.xlu0 %v1209
      %v1211 = vpop.xlane.xlu0 %1210
      %v1212 = vsel %vm956, %v1206, -inf
      %1213 = vmax.xlane.f32.xlu0 %v1212
      %v1214 = vpop.xlane.xlu0 %1213
      %v1215 = vsub.f32 %v1203, %v1211
      %v1216 = vsub.f32 %v1206, %v1214
      %v1217 = vmul.f32 %v1215, 1.442695
      %v1218 = vpow.pop %v1217
      %v1219 = vmul.f32 %v1216, 1.442695
      %v1220 = vpow.pop %v1219
      %v1221 = vsel %vm956, %v1218, 0.0
      %1222 = vadd.xlane.f32.xlu0 %v1221
      %v1223 = vpop.xlane.xlu0 %1222
      %v1224 = vsel %vm956, %v1220, 0.0
      %1225 = vadd.xlane.f32.xlu0 %v1224
      %v1226 = vpop.xlane.xlu0 %1225
      %v1227 = vrcp.pop %v1223
      %v1228 = vrcp.pop %v1226
      %v1229 = vmul.f32 %v1218, %v1227
      %v1230 = vmul.f32 %v1220, %v1228
      %v1231 = vmul.f32 %v890, %v1156
      %v1232 = vmul.f32 %v893, %v1156
      %v1233 = vpack.c.bf16 %v1232, %v1231
      %v1234 = vpack.c.bf16 %v1230, %v1229
      %v1236 = vsel %vm956, %v1234, 0
      %1238 = vmatprep.subr.bf16.mxu0 0
      %1239 = vmatpush1.bf16.msra.mxu0 %v1233
      %1240 = vmatprep.subr.bf16.mxu0 0
      %1241 = vmatpush1.bf16.msra.mxu0 0
      %1242 = vmatprep.subr.bf16.mxu0 0
      %1243 = vmatpush1.bf16.msra.mxu0 0
      %1244 = vmatprep.subr.bf16.mxu0 0
      %1245 = vmatpush1.bf16.msra.mxu0 0
      %1246 = vmatprep.subr.bf16.mxu0 0
      %1247 = vmatpush1.bf16.msra.mxu0 0
      %1248 = vmatprep.subr.bf16.mxu0 0
      %1249 = vmatpush1.bf16.msra.mxu0 0
      %1250 = vmatprep.subr.bf16.mxu0 0
      %1251 = vmatpush1.bf16.msra.mxu0 0
      %1252 = vmatprep.subr.bf16.mxu0 0
      %1253 = vmatpush1.bf16.msra.mxu0 0
      %1254 = vmatprep.subr.bf16.mxu0 0
      %1255 = vmatpush1.bf16.msra.mxu0 0
      %1256 = vmatprep.subr.bf16.mxu0 0
      %1257 = vmatpush1.bf16.msra.mxu0 0
      %1258 = vmatprep.subr.bf16.mxu0 0
      %1259 = vmatpush1.bf16.msra.mxu0 0
      %1260 = vmatprep.subr.bf16.mxu0 0
      %1261 = vmatpush1.bf16.msra.mxu0 0
      %1262 = vmatprep.subr.bf16.mxu0 0
      %1263 = vmatpush1.bf16.msra.mxu0 0
      %1264 = vmatprep.subr.bf16.mxu0 0
      %1265 = vmatpush1.bf16.msra.mxu0 0
      %1266 = vmatprep.subr.bf16.mxu0 0
      %1267 = vmatpush1.bf16.msra.mxu0 0
      %1268 = vmatprep.subr.bf16.mxu0 0
      %1269 = vmatpush1.bf16.msra.mxu0 0
      %1270 = vmatprep.mubr.bf16.mxu0 0
      %1271 = vmatmul.mubr.bf16.gmra.mrb[0].mxu0 %v1236
      %v1272 = vpop.f32.mrb[0].mxu0
      %v1273 = vadd.f32 0.0, %v1272
      %v1274 = vpop.f32.mrb[0].mxu0
      %v1275 = vpop.f32.mrb[0].mxu0
      %v1276 = vadd.f32 0.0, %v1275
      %v1277 = vpop.f32.mrb[0].mxu0
      %1278 = vdwg.mxu0
      %v1279 = vadd.f32 %v1147, %v1273
      %v1280 = vadd.f32 %v1150, %v1276
      %v1281 = vlaneseq
      %v1282 = vshrl.u32 %v1281, 7
      %v1283 = vsub.s32 3, %v1282
      %v1284 = vrot.slane %v896, %v1283
      %v1285 = vmul.f32 %v730, %v1284
      %v1286 = vmul.f32 %v733, %v1284
      %v1287 = vmul.f32 %v1285, 0.25
      %v1288 = vmul.f32 %v1286, 0.25
      %v1289 = vpack.c.bf16 %v1288, %v1287
      %s1290 = scalar_lea.vmem %s10, 48
      %v1291 = vld [vmem:[%s1290] sm:$0xff]
      %v1292 = vld [vmem:[%s1290 + $0x8] sm:$0xff]
      %v1294 = vsel %vm608, %v1289, 0
      %1296 = vmatprep.subr.bf16.mxu0 0
      %1297 = vmatpush1.bf16.xpose.msra.mxu0 %v913
      %1298 = vmatprep.subr.bf16.mxu0 0
      %1299 = vmatpush1.bf16.xpose.msra.mxu0 0
      %1300 = vmatprep.subr.bf16.mxu0 0
      %1301 = vmatpush1.bf16.xpose.msra.mxu0 0
      %1302 = vmatprep.subr.bf16.mxu0 0
      %1303 = vmatpush1.bf16.xpose.msra.mxu0 0
      %1304 = vmatprep.subr.bf16.mxu0 0
      %1305 = vmatpush1.bf16.xpose.msra.mxu0 0
      %1306 = vmatprep.subr.bf16.mxu0 0
      %1307 = vmatpush1.bf16.xpose.msra.mxu0 0
      %1308 = vmatprep.subr.bf16.mxu0 0
      %1309 = vmatpush1.bf16.xpose.msra.mxu0 0
      %1310 = vmatprep.subr.bf16.mxu0 0
      %1311 = vmatpush1.bf16.xpose.msra.mxu0 0
      %1312 = vmatprep.subr.bf16.mxu0 0
      %1313 = vmatpush1.bf16.xpose.msra.mxu0 0
      %1314 = vmatprep.subr.bf16.mxu0 0
      %1315 = vmatpush1.bf16.xpose.msra.mxu0 0
      %1316 = vmatprep.subr.bf16.mxu0 0
      %1317 = vmatpush1.bf16.xpose.msra.mxu0 0
      %1318 = vmatprep.subr.bf16.mxu0 0
      %1319 = vmatpush1.bf16.xpose.msra.mxu0 0
      %1320 = vmatprep.subr.bf16.mxu0 0
      %1321 = vmatpush1.bf16.xpose.msra.mxu0 0
      %1322 = vmatprep.subr.bf16.mxu0 0
      %1323 = vmatpush1.bf16.xpose.msra.mxu0 0
      %1324 = vmatprep.subr.bf16.mxu0 0
      %1325 = vmatpush1.bf16.xpose.msra.mxu0 0
      %1326 = vmatprep.subr.bf16.mxu0 0
      %1327 = vmatpush1.bf16.xpose.msra.mxu0 0
      %1328 = vmatprep.mubr.bf16.mxu0 0
      %1329 = vmatmul.mubr.bf16.gmra.mrb[0].mxu0 %v1294
      %v1330 = vpop.f32.mrb[0].mxu0
      %v1331 = vadd.f32 %v1291, %v1330
      %v1332 = vpop.f32.mrb[0].mxu0
      %v1333 = vpop.f32.mrb[0].mxu0
      %v1334 = vadd.f32 %v1292, %v1333
      %v1335 = vpop.f32.mrb[0].mxu0
      %1336 = vdwg.mxu0
      %v1337 = vsel %vm956, %v1331, -inf
      %1338 = vmax.xlane.f32.xlu0 %v1337
      %v1339 = vpop.xlane.xlu0 %1338
      %v1340 = vsel %vm956, %v1334, -inf
      %1341 = vmax.xlane.f32.xlu0 %v1340
      %v1342 = vpop.xlane.xlu0 %1341
      %v1343 = vsub.f32 %v1331, %v1339
      %v1344 = vsub.f32 %v1334, %v1342
      %v1345 = vmul.f32 %v1343, 1.442695
      %v1346 = vpow.pop %v1345
      %v1347 = vmul.f32 %v1344, 1.442695
      %v1348 = vpow.pop %v1347
      %v1349 = vsel %vm956, %v1346, 0.0
      %1350 = vadd.xlane.f32.xlu0 %v1349
      %v1351 = vpop.xlane.xlu0 %1350
      %v1352 = vsel %vm956, %v1348, 0.0
      %1353 = vadd.xlane.f32.xlu0 %v1352
      %v1354 = vpop.xlane.xlu0 %1353
      %v1355 = vrcp.pop %v1351
      %v1356 = vrcp.pop %v1354
      %v1357 = vmul.f32 %v1346, %v1355
      %v1358 = vmul.f32 %v1348, %v1356
      %v1359 = vmul.f32 %v890, %v1284
      %v1360 = vmul.f32 %v893, %v1284
      %v1361 = vpack.c.bf16 %v1360, %v1359
      %v1362 = vpack.c.bf16 %v1358, %v1357
      %v1364 = vsel %vm956, %v1362, 0
      %1366 = vmatprep.subr.bf16.mxu0 0
      %1367 = vmatpush1.bf16.msra.mxu0 %v1361
      %1368 = vmatprep.subr.bf16.mxu0 0
      %1369 = vmatpush1.bf16.msra.mxu0 0
      %1370 = vmatprep.subr.bf16.mxu0 0
      %1371 = vmatpush1.bf16.msra.mxu0 0
      %1372 = vmatprep.subr.bf16.mxu0 0
      %1373 = vmatpush1.bf16.msra.mxu0 0
      %1374 = vmatprep.subr.bf16.mxu0 0
      %1375 = vmatpush1.bf16.msra.mxu0 0
      %1376 = vmatprep.subr.bf16.mxu0 0
      %1377 = vmatpush1.bf16.msra.mxu0 0
      %1378 = vmatprep.subr.bf16.mxu0 0
      %1379 = vmatpush1.bf16.msra.mxu0 0
      %1380 = vmatprep.subr.bf16.mxu0 0
      %1381 = vmatpush1.bf16.msra.mxu0 0
      %1382 = vmatprep.subr.bf16.mxu0 0
      %1383 = vmatpush1.bf16.msra.mxu0 0
      %1384 = vmatprep.subr.bf16.mxu0 0
      %1385 = vmatpush1.bf16.msra.mxu0 0
      %1386 = vmatprep.subr.bf16.mxu0 0
      %1387 = vmatpush1.bf16.msra.mxu0 0
      %1388 = vmatprep.subr.bf16.mxu0 0
      %1389 = vmatpush1.bf16.msra.mxu0 0
      %1390 = vmatprep.subr.bf16.mxu0 0
      %1391 = vmatpush1.bf16.msra.mxu0 0
      %1392 = vmatprep.subr.bf16.mxu0 0
      %1393 = vmatpush1.bf16.msra.mxu0 0
      %1394 = vmatprep.subr.bf16.mxu0 0
      %1395 = vmatpush1.bf16.msra.mxu0 0
      %1396 = vmatprep.subr.bf16.mxu0 0
      %1397 = vmatpush1.bf16.msra.mxu0 0
      %1398 = vmatprep.mubr.bf16.mxu0 0
      %1399 = vmatmul.mubr.bf16.gmra.mrb[0].mxu0 %v1364
      %v1400 = vpop.f32.mrb[0].mxu0
      %v1401 = vadd.f32 0.0, %v1400
      %v1402 = vpop.f32.mrb[0].mxu0
      %v1403 = vpop.f32.mrb[0].mxu0
      %v1404 = vadd.f32 0.0, %v1403
      %v1405 = vpop.f32.mrb[0].mxu0
      %1406 = vdwg.mxu0
      %v1407 = vadd.f32 %v1279, %v1401
      %v1408 = vadd.f32 %v1280, %v1404
      %v1409 = vpack.c.bf16 %v1408, %v1407
      %v1410 = vld [vmem:[%s11] sm:$0xf]
      %v1411 = vld [vmem:[%s11 + $0x4] sm:$0xf]
      %v1412 = vld [vmem:[%s11 + $0x8] sm:$0xf]
      %v1413 = vld [vmem:[%s11 + $0xc] sm:$0xf]
      %v1414 = vld [vmem:[%s11 + $0x10] sm:$0xf]
      %v1415 = vld [vmem:[%s11 + $0x14] sm:$0xf]
      %v1416 = vld [vmem:[%s11 + $0x18] sm:$0xf]
      %v1417 = vld [vmem:[%s11 + $0x1c] sm:$0xf]
      %v1418 = vld [vmem:[%s12] sm:$0x1]
      %v1420 = vlaneseq
      %v1421 = vshrl.u32 %v1420, 7
      %v1422 = vsub.s32 0, %v1421
      %v1423 = vrot.slane %v1418, %v1422
      %v1433 = vunpack.c.l.b16 %v1410
      %v1434 = vunpack.c.l.b16 %v1411
      %v1435 = vunpack.c.l.b16 %v1412
      %v1436 = vunpack.c.l.b16 %v1413
      %v1437 = vunpack.c.l.b16 %v1414
      %v1438 = vunpack.c.l.b16 %v1415
      %v1439 = vunpack.c.l.b16 %v1416
      %v1440 = vunpack.c.l.b16 %v1417
      %v1441 = vpack.c.b16 %v1434, %v1433
      %v1442 = vpack.c.b16 %v1436, %v1435
      %v1443 = vpack.c.b16 %v1438, %v1437
      %v1444 = vpack.c.b16 %v1440, %v1439
      %v1450 = vsel %vm608, %v1409, 0
      %1452 = vmatprep.subr.bf16.mxu0 0
      %1453 = vmatpush1.bf16.msra.mxu0 %v1441
      %1454 = vmatprep.subr.bf16.mxu0 0
      %1455 = vmatpush1.bf16.msra.mxu0 %v1442
      %1456 = vmatprep.subr.bf16.mxu0 0
      %1457 = vmatpush1.bf16.msra.mxu0 %v1443
      %1458 = vmatprep.subr.bf16.mxu0 0
      %1459 = vmatpush1.bf16.msra.mxu0 %v1444
      %1460 = vmatprep.subr.bf16.mxu0 0
      %1461 = vmatpush1.bf16.msra.mxu0 0
      %1462 = vmatprep.subr.bf16.mxu0 0
      %1463 = vmatpush1.bf16.msra.mxu0 0
      %1464 = vmatprep.subr.bf16.mxu0 0
      %1465 = vmatpush1.bf16.msra.mxu0 0
      %1466 = vmatprep.subr.bf16.mxu0 0
      %1467 = vmatpush1.bf16.msra.mxu0 0
      %1468 = vmatprep.subr.bf16.mxu0 0
      %1469 = vmatpush1.bf16.msra.mxu0 0
      %1470 = vmatprep.subr.bf16.mxu0 0
      %1471 = vmatpush1.bf16.msra.mxu0 0
      %1472 = vmatprep.subr.bf16.mxu0 0
      %1473 = vmatpush1.bf16.msra.mxu0 0
      %1474 = vmatprep.subr.bf16.mxu0 0
      %1475 = vmatpush1.bf16.msra.mxu0 0
      %1476 = vmatprep.subr.bf16.mxu0 0
      %1477 = vmatpush1.bf16.msra.mxu0 0
      %1478 = vmatprep.subr.bf16.mxu0 0
      %1479 = vmatpush1.bf16.msra.mxu0 0
      %1480 = vmatprep.subr.bf16.mxu0 0
      %1481 = vmatpush1.bf16.msra.mxu0 0
      %1482 = vmatprep.subr.bf16.mxu0 0
      %1483 = vmatpush1.bf16.msra.mxu0 0
      %1484 = vmatprep.mubr.bf16.mxu0 0
      %1485 = vmatmul.mubr.bf16.gmra.mrb[0].mxu0 %v1450
      %v1486 = vpop.f32.mrb[0].mxu0
      %v1487 = vadd.f32 %v1423, %v1486
      %v1488 = vpop.f32.mrb[0].mxu0
      %v1489 = vpop.f32.mrb[0].mxu0
      %v1490 = vadd.f32 %v1423, %v1489
      %v1491 = vpop.f32.mrb[0].mxu0
      %1492 = vdwg.mxu0
      %v1493 = vadd.f32 %v604, %v1487
      %v1494 = vadd.f32 %v605, %v1490
      %v1495 = vld [vmem:[%s13] sm:$0x1]
      %v1496 = vld [vmem:[%s14] sm:$0x1]
      %v1497 = vsel %vm608, %v1493, 0.0
      %1498 = vadd.xlane.f32.xlu0 %v1497
      %v1499 = vpop.xlane.xlu0 %1498
      %v1500 = vsel %vm608, %v1494, 0.0
      %1501 = vadd.xlane.f32.xlu0 %v1500
      %v1502 = vpop.xlane.xlu0 %1501
      %v1503 = vmul.f32 %v1499, %v615
      %v1504 = vmul.f32 %v1502, %v615
      %v1505 = vsub.f32 %v1493, %v1503
      %v1506 = vsub.f32 %v1494, %v1504
      %v1507 = vmul.f32 %v1505, %v1505
      %v1508 = vmul.f32 %v1506, %v1506
      %v1509 = vsel %vm608, %v1507, 0.0
      %1510 = vadd.xlane.f32.xlu0 %v1509
      %v1511 = vpop.xlane.xlu0 %1510
      %v1512 = vsel %vm608, %v1508, 0.0
      %1513 = vadd.xlane.f32.xlu0 %v1512
      %v1514 = vpop.xlane.xlu0 %1513
      %v1515 = vmul.f32 %v1511, %v615
      %v1516 = vmul.f32 %v1514, %v615
      %v1517 = vadd.f32 %v1515, 1e-05
      %v1518 = vadd.f32 %v1516, 1e-05
      %v1519 = vrsqrt.pop %v1517
      %v1520 = vrsqrt.pop %v1518
      %v1521 = vmul.f32 %v1505, %v1519
      %v1522 = vmul.f32 %v1506, %v1520
      %v1524 = vlaneseq
      %v1525 = vshrl.u32 %v1524, 7
      %v1526 = vsub.s32 0, %v1525
      %v1527 = vrot.slane %v1495, %v1526
      %v1529 = vmul.f32 %v1521, %v1527
      %v1530 = vmul.f32 %v1522, %v1527
      %v1532 = vlaneseq
      %v1533 = vshrl.u32 %v1532, 7
      %v1534 = vsub.s32 0, %v1533
      %v1535 = vrot.slane %v1496, %v1534
      %v1537 = vadd.f32 %v1529, %v1535
      %v1538 = vadd.f32 %v1530, %v1535
      %v1539 = vpack.c.bf16 %v1538, %v1537
      %v1540 = vld [vmem:[%s15] sm:$0xff]
      %v1541 = vld [vmem:[%s15 + $0x8] sm:$0xff]
      %v1542 = vld [vmem:[%s15 + $0x10] sm:$0xff]
      %v1543 = vld [vmem:[%s15 + $0x18] sm:$0xff]
      %v1544 = vld [vmem:[%s15 + $0x20] sm:$0xff]
      %v1545 = vld [vmem:[%s15 + $0x28] sm:$0xff]
      %v1546 = vld [vmem:[%s15 + $0x30] sm:$0xff]
      %v1547 = vld [vmem:[%s15 + $0x38] sm:$0xff]
      %v1548 = vld [vmem:[%s16] sm:$0x3]
      %v1550 = vlaneseq
      %v1551 = vshrl.u32 %v1550, 7
      %v1552 = vsub.s32 0, %v1551
      %v1553 = vrot.slane %v1548, %v1552
      %v1554 = vlaneseq
      %v1555 = vshrl.u32 %v1554, 7
      %v1556 = vsub.s32 1, %v1555
      %v1557 = vrot.slane %v1548, %v1556
      %v1568 = vunpack.c.l.b16 %v1540
      %v1569 = vunpack.c.h.b16 %v1540
      %v1570 = vunpack.c.l.b16 %v1541
      %v1571 = vunpack.c.h.b16 %v1541
      %v1572 = vunpack.c.l.b16 %v1542
      %v1573 = vunpack.c.h.b16 %v1542
      %v1574 = vunpack.c.l.b16 %v1543
      %v1575 = vunpack.c.h.b16 %v1543
      %v1576 = vunpack.c.l.b16 %v1544
      %v1577 = vunpack.c.h.b16 %v1544
      %v1578 = vunpack.c.l.b16 %v1545
      %v1579 = vunpack.c.h.b16 %v1545
      %v1580 = vunpack.c.l.b16 %v1546
      %v1581 = vunpack.c.h.b16 %v1546
      %v1582 = vunpack.c.l.b16 %v1547
      %v1583 = vunpack.c.h.b16 %v1547
      %v1584 = vpack.c.b16 %v1570, %v1568
      %v1585 = vpack.c.b16 %v1571, %v1569
      %v1586 = vpack.c.b16 %v1574, %v1572
      %v1587 = vpack.c.b16 %v1575, %v1573
      %v1588 = vpack.c.b16 %v1578, %v1576
      %v1589 = vpack.c.b16 %v1579, %v1577
      %v1590 = vpack.c.b16 %v1582, %v1580
      %v1591 = vpack.c.b16 %v1583, %v1581
      %v1601 = vsel %vm608, %v1539, 0
      %1603 = vmatprep.subr.bf16.mxu0 %v1585
      %1604 = vmatpush1.bf16.msra.mxu0 %v1584
      %1605 = vmatprep.subr.bf16.mxu0 %v1587
      %1606 = vmatpush1.bf16.msra.mxu0 %v1586
      %1607 = vmatprep.subr.bf16.mxu0 %v1589
      %1608 = vmatpush1.bf16.msra.mxu0 %v1588
      %1609 = vmatprep.subr.bf16.mxu0 %v1591
      %1610 = vmatpush1.bf16.msra.mxu0 %v1590
      %1611 = vmatprep.subr.bf16.mxu0 0
      %1612 = vmatpush1.bf16.msra.mxu0 0
      %1613 = vmatprep.subr.bf16.mxu0 0
      %1614 = vmatpush1.bf16.msra.mxu0 0
      %1615 = vmatprep.subr.bf16.mxu0 0
      %1616 = vmatpush1.bf16.msra.mxu0 0
      %1617 = vmatprep.subr.bf16.mxu0 0
      %1618 = vmatpush1.bf16.msra.mxu0 0
      %1619 = vmatprep.subr.bf16.mxu0 0
      %1620 = vmatpush1.bf16.msra.mxu0 0
      %1621 = vmatprep.subr.bf16.mxu0 0
      %1622 = vmatpush1.bf16.msra.mxu0 0
      %1623 = vmatprep.subr.bf16.mxu0 0
      %1624 = vmatpush1.bf16.msra.mxu0 0
      %1625 = vmatprep.subr.bf16.mxu0 0
      %1626 = vmatpush1.bf16.msra.mxu0 0
      %1627 = vmatprep.subr.bf16.mxu0 0
      %1628 = vmatpush1.bf16.msra.mxu0 0
      %1629 = vmatprep.subr.bf16.mxu0 0
      %1630 = vmatpush1.bf16.msra.mxu0 0
      %1631 = vmatprep.subr.bf16.mxu0 0
      %1632 = vmatpush1.bf16.msra.mxu0 0
      %1633 = vmatprep.subr.bf16.mxu0 0
      %1634 = vmatpush1.bf16.msra.mxu0 0
      %1635 = vmatprep.mubr.bf16.mxu0 0
      %1636 = vmatmul.mubr.bf16.gmra.mrb[0].mxu0 %v1601
      %v1637 = vpop.f32.mrb[0].mxu0
      %v1638 = vadd.f32 %v1553, %v1637
      %v1639 = vpop.f32.mrb[0].mxu0
      %v1640 = vadd.f32 %v1557, %v1639
      %v1641 = vpop.f32.mrb[0].mxu0
      %v1642 = vadd.f32 %v1553, %v1641
      %v1643 = vpop.f32.mrb[0].mxu0
      %v1644 = vadd.f32 %v1557, %v1643
      %1645 = vdwg.mxu0
      %v1646 = vmul.f32 %v1638, 0.5
      %v1647 = vmul.f32 %v1640, 0.5
      %v1648 = vmul.f32 %v1642, 0.5
      %v1649 = vmul.f32 %v1644, 0.5
      %v1650 = vmul.f32 %v1638, 0.044715
      %v1651 = vmul.f32 %v1640, 0.044715
      %v1652 = vmul.f32 %v1642, 0.044715
      %v1653 = vmul.f32 %v1644, 0.044715
      %v1654 = vmul.f32 %v1650, %v1638
      %v1655 = vmul.f32 %v1651, %v1640
      %v1656 = vmul.f32 %v1652, %v1642
      %v1657 = vmul.f32 %v1653, %v1644
      %v1658 = vmul.f32 %v1654, %v1638
      %v1659 = vmul.f32 %v1655, %v1640
      %v1660 = vmul.f32 %v1656, %v1642
      %v1661 = vmul.f32 %v1657, %v1644
      %v1662 = vadd.f32 %v1638, %v1658
      %v1663 = vadd.f32 %v1640, %v1659
      %v1664 = vadd.f32 %v1642, %v1660
      %v1665 = vadd.f32 %v1644, %v1661
      %v1666 = vmul.f32 %v1662, 0.7978846
      %v1667 = vmul.f32 %v1663, 0.7978846
      %v1668 = vmul.f32 %v1664, 0.7978846
      %v1669 = vmul.f32 %v1665, 0.7978846
      %v1670 = vtanh.pop %v1666
      %v1671 = vtanh.pop %v1667
      %v1672 = vtanh.pop %v1668
      %v1673 = vtanh.pop %v1669
      %v1674 = vadd.f32 %v1670, 1.0
      %v1675 = vadd.f32 %v1671, 1.0
      %v1676 = vadd.f32 %v1672, 1.0
      %v1677 = vadd.f32 %v1673, 1.0
      %v1678 = vmul.f32 %v1646, %v1674
      %v1679 = vmul.f32 %v1647, %v1675
      %v1680 = vmul.f32 %v1648, %v1676
      %v1681 = vmul.f32 %v1649, %v1677
      %v1682 = vpack.c.bf16 %v1680, %v1678
      %v1683 = vpack.c.bf16 %v1681, %v1679
      %v1684 = vld [vmem:[%s17] sm:$0xf]
      %v1685 = vld [vmem:[%s17 + $0x4] sm:$0xf]
      %v1686 = vld [vmem:[%s17 + $0x8] sm:$0xf]
      %v1687 = vld [vmem:[%s17 + $0xc] sm:$0xf]
      %v1688 = vld [vmem:[%s17 + $0x10] sm:$0xf]
      %v1689 = vld [vmem:[%s17 + $0x14] sm:$0xf]
      %v1690 = vld [vmem:[%s17 + $0x18] sm:$0xf]
      %v1691 = vld [vmem:[%s17 + $0x1c] sm:$0xf]
      %v1692 = vld [vmem:[%s17 + $0x20] sm:$0xf]
      %v1693 = vld [vmem:[%s17 + $0x24] sm:$0xf]
      %v1694 = vld [vmem:[%s17 + $0x28] sm:$0xf]
      %v1695 = vld [vmem:[%s17 + $0x2c] sm:$0xf]
      %v1696 = vld [vmem:[%s17 + $0x30] sm:$0xf]
      %v1697 = vld [vmem:[%s17 + $0x34] sm:$0xf]
      %v1698 = vld [vmem:[%s17 + $0x38] sm:$0xf]
      %v1699 = vld [vmem:[%s17 + $0x3c] sm:$0xf]
      %v1700 = vld [vmem:[%s17 + $0x40] sm:$0xf]
      %v1701 = vld [vmem:[%s17 + $0x44] sm:$0xf]
      %v1702 = vld [vmem:[%s17 + $0x48] sm:$0xf]
      %v1703 = vld [vmem:[%s17 + $0x4c] sm:$0xf]
      %v1704 = vld [vmem:[%s17 + $0x50] sm:$0xf]
      %v1705 = vld [vmem:[%s17 + $0x54] sm:$0xf]
      %v1706 = vld [vmem:[%s17 + $0x58] sm:$0xf]
      %v1707 = vld [vmem:[%s17 + $0x5c] sm:$0xf]
      %v1708 = vld [vmem:[%s17 + $0x60] sm:$0xf]
      %v1709 = vld [vmem:[%s17 + $0x64] sm:$0xf]
      %v1710 = vld [vmem:[%s17 + $0x68] sm:$0xf]
      %v1711 = vld [vmem:[%s17 + $0x6c] sm:$0xf]
      %v1712 = vld [vmem:[%s17 + $0x70] sm:$0xf]
      %v1713 = vld [vmem:[%s17 + $0x74] sm:$0xf]
      %v1714 = vld [vmem:[%s17 + $0x78] sm:$0xf]
      %v1715 = vld [vmem:[%s17 + $0x7c] sm:$0xf]
      %v1716 = vld [vmem:[%s18] sm:$0x1]
      %v1718 = vlaneseq
      %v1719 = vshrl.u32 %v1718, 7
      %v1720 = vsub.s32 0, %v1719
      %v1721 = vrot.slane %v1716, %v1720
      %v1755 = vunpack.c.l.b16 %v1684
      %v1756 = vunpack.c.l.b16 %v1685
      %v1757 = vunpack.c.l.b16 %v1686
      %v1758 = vunpack.c.l.b16 %v1687
      %v1759 = vunpack.c.l.b16 %v1688
      %v1760 = vunpack.c.l.b16 %v1689
      %v1761 = vunpack.c.l.b16 %v1690
      %v1762 = vunpack.c.l.b16 %v1691
      %v1763 = vunpack.c.l.b16 %v1692
      %v1764 = vunpack.c.l.b16 %v1693
      %v1765 = vunpack.c.l.b16 %v1694
      %v1766 = vunpack.c.l.b16 %v1695
      %v1767 = vunpack.c.l.b16 %v1696
      %v1768 = vunpack.c.l.b16 %v1697
      %v1769 = vunpack.c.l.b16 %v1698
      %v1770 = vunpack.c.l.b16 %v1699
      %v1771 = vunpack.c.l.b16 %v1700
      %v1772 = vunpack.c.l.b16 %v1701
      %v1773 = vunpack.c.l.b16 %v1702
      %v1774 = vunpack.c.l.b16 %v1703
      %v1775 = vunpack.c.l.b16 %v1704
      %v1776 = vunpack.c.l.b16 %v1705
      %v1777 = vunpack.c.l.b16 %v1706
      %v1778 = vunpack.c.l.b16 %v1707
      %v1779 = vunpack.c.l.b16 %v1708
      %v1780 = vunpack.c.l.b16 %v1709
      %v1781 = vunpack.c.l.b16 %v1710
      %v1782 = vunpack.c.l.b16 %v1711
      %v1783 = vunpack.c.l.b16 %v1712
      %v1784 = vunpack.c.l.b16 %v1713
      %v1785 = vunpack.c.l.b16 %v1714
      %v1786 = vunpack.c.l.b16 %v1715
      %v1787 = vpack.c.b16 %v1756, %v1755
      %v1788 = vpack.c.b16 %v1758, %v1757
      %v1789 = vpack.c.b16 %v1760, %v1759
      %v1790 = vpack.c.b16 %v1762, %v1761
      %v1791 = vpack.c.b16 %v1764, %v1763
      %v1792 = vpack.c.b16 %v1766, %v1765
      %v1793 = vpack.c.b16 %v1768, %v1767
      %v1794 = vpack.c.b16 %v1770, %v1769
      %v1795 = vpack.c.b16 %v1772, %v1771
      %v1796 = vpack.c.b16 %v1774, %v1773
      %v1797 = vpack.c.b16 %v1776, %v1775
      %v1798 = vpack.c.b16 %v1778, %v1777
      %v1799 = vpack.c.b16 %v1780, %v1779
      %v1800 = vpack.c.b16 %v1782, %v1781
      %v1801 = vpack.c.b16 %v1784, %v1783
      %v1802 = vpack.c.b16 %v1786, %v1785
      %1819 = vmatprep.subr.bf16.mxu0 0
      %1820 = vmatpush1.bf16.msra.mxu0 %v1787
      %1821 = vmatprep.subr.bf16.mxu0 0
      %1822 = vmatpush1.bf16.msra.mxu0 %v1788
      %1823 = vmatprep.subr.bf16.mxu0 0
      %1824 = vmatpush1.bf16.msra.mxu0 %v1789
      %1825 = vmatprep.subr.bf16.mxu0 0
      %1826 = vmatpush1.bf16.msra.mxu0 %v1790
      %1827 = vmatprep.subr.bf16.mxu0 0
      %1828 = vmatpush1.bf16.msra.mxu0 %v1791
      %1829 = vmatprep.subr.bf16.mxu0 0
      %1830 = vmatpush1.bf16.msra.mxu0 %v1792
      %1831 = vmatprep.subr.bf16.mxu0 0
      %1832 = vmatpush1.bf16.msra.mxu0 %v1793
      %1833 = vmatprep.subr.bf16.mxu0 0
      %1834 = vmatpush1.bf16.msra.mxu0 %v1794
      %1835 = vmatprep.subr.bf16.mxu0 0
      %1836 = vmatpush1.bf16.msra.mxu0 %v1795
      %1837 = vmatprep.subr.bf16.mxu0 0
      %1838 = vmatpush1.bf16.msra.mxu0 %v1796
      %1839 = vmatprep.subr.bf16.mxu0 0
      %1840 = vmatpush1.bf16.msra.mxu0 %v1797
      %1841 = vmatprep.subr.bf16.mxu0 0
      %1842 = vmatpush1.bf16.msra.mxu0 %v1798
      %1843 = vmatprep.subr.bf16.mxu0 0
      %1844 = vmatpush1.bf16.msra.mxu0 %v1799
      %1845 = vmatprep.subr.bf16.mxu0 0
      %1846 = vmatpush1.bf16.msra.mxu0 %v1800
      %1847 = vmatprep.subr.bf16.mxu0 0
      %1848 = vmatpush1.bf16.msra.mxu0 %v1801
      %1849 = vmatprep.subr.bf16.mxu0 0
      %1850 = vmatpush1.bf16.msra.mxu0 %v1802
      %1851 = vmatprep.mubr.bf16.mxu0 %v1683
      %1852 = vmatmul.mubr.bf16.gmra.mrb[0].mxu0 %v1682
      %v1853 = vpop.f32.mrb[0].mxu0
      %v1854 = vadd.f32 %v1721, %v1853
      %v1855 = vpop.f32.mrb[0].mxu0
      %v1856 = vpop.f32.mrb[0].mxu0
      %v1857 = vadd.f32 %v1721, %v1856
      %v1858 = vpop.f32.mrb[0].mxu0
      %1859 = vdwg.mxu0
      %v1860 = vadd.f32 %v1493, %v1854
      %v1861 = vadd.f32 %v1494, %v1857
      %1862 = vst.msk [vmem:[%s602] sm:$0xff] %vm608, %v1860
      %1863 = vst.msk [vmem:[%s602 + $0x8] sm:$0xff] %vm608, %v1861
      %p1864 = scmp.lt.s32.totalorder %s30, 1
      %s1865 = scalar_select %p1864, %s30, 1
      %s1866 = smul.addr %s1865, 2
      %s1867 = smul.addr %s1866, 8
      %s1868 = scalar_lea.vmem %s19, %s1867
      // Predicated region
      $region97: #{swin_unet_forward.17} parent=95 // pred_check
        %p1869 = pneg %p452
      $region98: #{swin_unet_forward.17} parent=95 // pred_check_branch
        %1871 = sbr.rel (%p1869) target = $region100
      $region99: #{swin_unet_forward.17} parent=95 // pred_region
        _
      $region100: #{swin_unet_forward.17} parent=95 // pred_fallthru
        _
    $region96: #{swin_unet_forward.17} parent=5 // pred_fallthru
      _
    %p1872 = scmp.le.s32.totalorder 2, %s25
    // Predicated region
    $region101: #{swin_unet_forward.17} parent=5 // pred_check
      %p1873 = pneg %p1872
    $region102: #{swin_unet_forward.17} parent=5 // pred_check_branch
      %1875 = sbr.rel (%p1873) target = $region104
    $region103: #{swin_unet_forward.17} parent=5 // pred_region
      %s1876 = ssub.s32 %s25, 2
      // Predicated region
      $region105: #{swin_unet_forward.17} parent=103 // pred_check
        %p1877 = pneg %p458
      $region106: #{swin_unet_forward.17} parent=103 // pred_check_branch
        %1879 = sbr.rel (%p1877) target = $region108
      $region107: #{swin_unet_forward.17} parent=103 // pred_region
        %p1880 = scmp.lt.s32.totalorder %s31, 1
        %s1881 = scalar_select %p1880, %s31, 1
        %s1882 = smul.addr %s1881, 2
        %s1883 = smul.addr %s1882, 8
        %s1884 = scalar_lea.vmem %s19, %s1883
      $region108: #{swin_unet_forward.17} parent=103 // pred_fallthru
        _
    $region104: #{swin_unet_forward.17} parent=5 // pred_fallthru
      _
  $region6: #{swin_unet_forward.17} parent=0 // loop_footer
    %s29 = sadd.s32 1, %s25
  $region7: #{swin_unet_forward.17} parent=0 // loop_footer_branch
    %24 = sbr.rel target = $region3
  $region8: #{swin_unet_forward.17} parent=0 // loop_exit
    _

// kernel: swin_unet_forward.20
$region0: #{swin_unet_forward.20}
  #allocation0 [shape = 'u32[]', space=smem, size = 0x4, offset = 0x4, fixed_abs, tag = 'smem constant byte address 0x4 - core index']
  #allocation1 [shape = 'u32[144,128]{1,0:T(1,128)}', space=vmem, size = 0x12000, scoped, tag = 'internal scratch']
  %s0 = inlined_call_operand.vmem [shape: f32[128,32], index: 0, kind: input, shape index: {}]
  %s1 = inlined_call_operand.vmem [shape: f32[1,32], index: 1, kind: input, shape index: {}]
  %s2 = inlined_call_operand.vmem [shape: f32[1,32], index: 2, kind: input, shape index: {}]
  %s3 = inlined_call_operand.vmem [shape: f32[128,32], index: 3, kind: output, shape index: {}]
  %s4 = sld [smem:[#allocation0]]
  $region22: #{swin_unet_forward.20} parent=0
    _
  %s6 = ssub.s32 1, %s4
  %s7 = scalar_select 0, %s6, %s4
  // Predicated region
  $region2: #{swin_unet_forward.20} parent=0 // pred_check
    _
  $region3: #{swin_unet_forward.20} parent=0 // pred_check_branch
    %9 = sbr.rel (0) target = $region5
  $region4: #{swin_unet_forward.20} parent=0 // pred_region
    _
  $region5: #{swin_unet_forward.20} parent=0 // pred_fallthru
    _
  // Predicated region
  $region6: #{swin_unet_forward.20} parent=0 // pred_check
    _
  $region7: #{swin_unet_forward.20} parent=0 // pred_check_branch
    %11 = sbr.rel (0) target = $region9
  $region8: #{swin_unet_forward.20} parent=0 // pred_region
    _
  $region9: #{swin_unet_forward.20} parent=0 // pred_fallthru
    _
  // Predicated region
  $region10: #{swin_unet_forward.20} parent=0 // pred_check
    _
  $region11: #{swin_unet_forward.20} parent=0 // pred_check_branch
    %13 = sbr.rel (0) target = $region13
  $region12: #{swin_unet_forward.20} parent=0 // pred_region
    _
  $region13: #{swin_unet_forward.20} parent=0 // pred_fallthru
    _
  %v14 = vld [vmem:[%s0] sm:$0xff]
  %v15 = vld [vmem:[%s0 + $0x8] sm:$0xff]
  %v16 = vld [vmem:[%s0 + $0x10] sm:$0xff]
  %v17 = vld [vmem:[%s0 + $0x18] sm:$0xff]
  %v18 = vld [vmem:[%s0 + $0x20] sm:$0xff]
  %v19 = vld [vmem:[%s0 + $0x28] sm:$0xff]
  %v20 = vld [vmem:[%s0 + $0x30] sm:$0xff]
  %v21 = vld [vmem:[%s0 + $0x38] sm:$0xff]
  %v22 = vld [vmem:[%s0 + $0x40] sm:$0xff]
  %v23 = vld [vmem:[%s0 + $0x48] sm:$0xff]
  %v24 = vld [vmem:[%s0 + $0x50] sm:$0xff]
  %v25 = vld [vmem:[%s0 + $0x58] sm:$0xff]
  %v26 = vld [vmem:[%s0 + $0x60] sm:$0xff]
  %v27 = vld [vmem:[%s0 + $0x68] sm:$0xff]
  %v28 = vld [vmem:[%s0 + $0x70] sm:$0xff]
  %v29 = vld [vmem:[%s0 + $0x78] sm:$0xff]
  %v30 = vld [vmem:[%s1] sm:$0x1]
  %v31 = vld [vmem:[%s2] sm:$0x1]
  %vm32 = vcmask 261120
  %v33 = vsel %vm32, %v14, 0.0
  %34 = vadd.xlane.f32.xlu0 %v33
  %v35 = vpop.xlane.xlu0 %34
  %v36 = vsel %vm32, %v15, 0.0
  %37 = vadd.xlane.f32.xlu0 %v36
  %v38 = vpop.xlane.xlu0 %37
  %v39 = vsel %vm32, %v16, 0.0
  %40 = vadd.xlane.f32.xlu0 %v39
  %v41 = vpop.xlane.xlu0 %40
  %v42 = vsel %vm32, %v17, 0.0
  %43 = vadd.xlane.f32.xlu0 %v42
  %v44 = vpop.xlane.xlu0 %43
  %v45 = vsel %vm32, %v18, 0.0
  %46 = vadd.xlane.f32.xlu0 %v45
  %v47 = vpop.xlane.xlu0 %46
  %v48 = vsel %vm32, %v19, 0.0
  %49 = vadd.xlane.f32.xlu0 %v48
  %v50 = vpop.xlane.xlu0 %49
  %v51 = vsel %vm32, %v20, 0.0
  %52 = vadd.xlane.f32.xlu0 %v51
  %v53 = vpop.xlane.xlu0 %52
  %v54 = vsel %vm32, %v21, 0.0
  %55 = vadd.xlane.f32.xlu0 %v54
  %v56 = vpop.xlane.xlu0 %55
  %v57 = vsel %vm32, %v22, 0.0
  %58 = vadd.xlane.f32.xlu0 %v57
  %v59 = vpop.xlane.xlu0 %58
  %v60 = vsel %vm32, %v23, 0.0
  %61 = vadd.xlane.f32.xlu0 %v60
  %v62 = vpop.xlane.xlu0 %61
  %v63 = vsel %vm32, %v24, 0.0
  %64 = vadd.xlane.f32.xlu0 %v63
  %v65 = vpop.xlane.xlu0 %64
  %v66 = vsel %vm32, %v25, 0.0
  %67 = vadd.xlane.f32.xlu0 %v66
  %v68 = vpop.xlane.xlu0 %67
  %v69 = vsel %vm32, %v26, 0.0
  %70 = vadd.xlane.f32.xlu0 %v69
  %v71 = vpop.xlane.xlu0 %70
  %v72 = vsel %vm32, %v27, 0.0
  %73 = vadd.xlane.f32.xlu0 %v72
  %v74 = vpop.xlane.xlu0 %73
  %v75 = vsel %vm32, %v28, 0.0
  %76 = vadd.xlane.f32.xlu0 %v75
  %v77 = vpop.xlane.xlu0 %76
  %v78 = vsel %vm32, %v29, 0.0
  %79 = vadd.xlane.f32.xlu0 %v78
  %v80 = vpop.xlane.xlu0 %79
  %v81 = vrcp.pop 32.0
  %v82 = vmul.f32 %v35, %v81
  %v83 = vmul.f32 %v38, %v81
  %v84 = vmul.f32 %v41, %v81
  %v85 = vmul.f32 %v44, %v81
  %v86 = vmul.f32 %v47, %v81
  %v87 = vmul.f32 %v50, %v81
  %v88 = vmul.f32 %v53, %v81
  %v89 = vmul.f32 %v56, %v81
  %v90 = vmul.f32 %v59, %v81
  %v91 = vmul.f32 %v62, %v81
  %v92 = vmul.f32 %v65, %v81
  %v93 = vmul.f32 %v68, %v81
  %v94 = vmul.f32 %v71, %v81
  %v95 = vmul.f32 %v74, %v81
  %v96 = vmul.f32 %v77, %v81
  %v97 = vmul.f32 %v80, %v81
  %v98 = vsub.f32 %v14, %v82
  %v99 = vsub.f32 %v15, %v83
  %v100 = vsub.f32 %v16, %v84
  %v101 = vsub.f32 %v17, %v85
  %v102 = vsub.f32 %v18, %v86
  %v103 = vsub.f32 %v19, %v87
  %v104 = vsub.f32 %v20, %v88
  %v105 = vsub.f32 %v21, %v89
  %v106 = vsub.f32 %v22, %v90
  %v107 = vsub.f32 %v23, %v91
  %v108 = vsub.f32 %v24, %v92
  %v109 = vsub.f32 %v25, %v93
  %v110 = vsub.f32 %v26, %v94
  %v111 = vsub.f32 %v27, %v95
  %v112 = vsub.f32 %v28, %v96
  %v113 = vsub.f32 %v29, %v97
  %v114 = vmul.f32 %v98, %v98
  %v115 = vmul.f32 %v99, %v99
  %v116 = vmul.f32 %v100, %v100
  %v117 = vmul.f32 %v101, %v101
  %v118 = vmul.f32 %v102, %v102
  %v119 = vmul.f32 %v103, %v103
  %v120 = vmul.f32 %v104, %v104
  %v121 = vmul.f32 %v105, %v105
  %v122 = vmul.f32 %v106, %v106
  %v123 = vmul.f32 %v107, %v107
  %v124 = vmul.f32 %v108, %v108
  %v125 = vmul.f32 %v109, %v109
  %v126 = vmul.f32 %v110, %v110
  %v127 = vmul.f32 %v111, %v111
  %v128 = vmul.f32 %v112, %v112
  %v129 = vmul.f32 %v113, %v113
  %v130 = vsel %vm32, %v114, 0.0
  %131 = vadd.xlane.f32.xlu0 %v130
  %v132 = vpop.xlane.xlu0 %131
  %v133 = vsel %vm32, %v115, 0.0
  %134 = vadd.xlane.f32.xlu0 %v133
  %v135 = vpop.xlane.xlu0 %134
  %v136 = vsel %vm32, %v116, 0.0
  %137 = vadd.xlane.f32.xlu0 %v136
  %v138 = vpop.xlane.xlu0 %137
  %v139 = vsel %vm32, %v117, 0.0
  %140 = vadd.xlane.f32.xlu0 %v139
  %v141 = vpop.xlane.xlu0 %140
  %v142 = vsel %vm32, %v118, 0.0
  %143 = vadd.xlane.f32.xlu0 %v142
  %v144 = vpop.xlane.xlu0 %143
  %v145 = vsel %vm32, %v119, 0.0
  %146 = vadd.xlane.f32.xlu0 %v145
  %v147 = vpop.xlane.xlu0 %146
  %v148 = vsel %vm32, %v120, 0.0
  %149 = vadd.xlane.f32.xlu0 %v148
  %v150 = vpop.xlane.xlu0 %149
  %v151 = vsel %vm32, %v121, 0.0
  %152 = vadd.xlane.f32.xlu0 %v151
  %v153 = vpop.xlane.xlu0 %152
  %v154 = vsel %vm32, %v122, 0.0
  %155 = vadd.xlane.f32.xlu0 %v154
  %v156 = vpop.xlane.xlu0 %155
  %v157 = vsel %vm32, %v123, 0.0
  %158 = vadd.xlane.f32.xlu0 %v157
  %v159 = vpop.xlane.xlu0 %158
  %v160 = vsel %vm32, %v124, 0.0
  %161 = vadd.xlane.f32.xlu0 %v160
  %v162 = vpop.xlane.xlu0 %161
  %v163 = vsel %vm32, %v125, 0.0
  %164 = vadd.xlane.f32.xlu0 %v163
  %v165 = vpop.xlane.xlu0 %164
  %v166 = vsel %vm32, %v126, 0.0
  %167 = vadd.xlane.f32.xlu0 %v166
  %v168 = vpop.xlane.xlu0 %167
  %v169 = vsel %vm32, %v127, 0.0
  %170 = vadd.xlane.f32.xlu0 %v169
  %v171 = vpop.xlane.xlu0 %170
  %v172 = vsel %vm32, %v128, 0.0
  %173 = vadd.xlane.f32.xlu0 %v172
  %v174 = vpop.xlane.xlu0 %173
  %v175 = vsel %vm32, %v129, 0.0
  %176 = vadd.xlane.f32.xlu0 %v175
  %v177 = vpop.xlane.xlu0 %176
  %v178 = vmul.f32 %v132, %v81
  %v179 = vmul.f32 %v135, %v81
  %v180 = vmul.f32 %v138, %v81
  %v181 = vmul.f32 %v141, %v81
  %v182 = vmul.f32 %v144, %v81
  %v183 = vmul.f32 %v147, %v81
  %v184 = vmul.f32 %v150, %v81
  %v185 = vmul.f32 %v153, %v81
  %v186 = vmul.f32 %v156, %v81
  %v187 = vmul.f32 %v159, %v81
  %v188 = vmul.f32 %v162, %v81
  %v189 = vmul.f32 %v165, %v81
  %v190 = vmul.f32 %v168, %v81
  %v191 = vmul.f32 %v171, %v81
  %v192 = vmul.f32 %v174, %v81
  %v193 = vmul.f32 %v177, %v81
  %v194 = vadd.f32 %v178, 1e-05
  %v195 = vadd.f32 %v179, 1e-05
  %v196 = vadd.f32 %v180, 1e-05
  %v197 = vadd.f32 %v181, 1e-05
  %v198 = vadd.f32 %v182, 1e-05
  %v199 = vadd.f32 %v183, 1e-05
  %v200 = vadd.f32 %v184, 1e-05
  %v201 = vadd.f32 %v185, 1e-05
  %v202 = vadd.f32 %v186, 1e-05
  %v203 = vadd.f32 %v187, 1e-05
  %v204 = vadd.f32 %v188, 1e-05
  %v205 = vadd.f32 %v189, 1e-05
  %v206 = vadd.f32 %v190, 1e-05
  %v207 = vadd.f32 %v191, 1e-05
  %v208 = vadd.f32 %v192, 1e-05
  %v209 = vadd.f32 %v193, 1e-05
  %v210 = vrsqrt.pop %v194
  %v211 = vrsqrt.pop %v195
  %v212 = vrsqrt.pop %v196
  %v213 = vrsqrt.pop %v197
  %v214 = vrsqrt.pop %v198
  %v215 = vrsqrt.pop %v199
  %v216 = vrsqrt.pop %v200
  %v217 = vrsqrt.pop %v201
  %v218 = vrsqrt.pop %v202
  %v219 = vrsqrt.pop %v203
  %v220 = vrsqrt.pop %v204
  %v221 = vrsqrt.pop %v205
  %v222 = vrsqrt.pop %v206
  %v223 = vrsqrt.pop %v207
  %v224 = vrsqrt.pop %v208
  %v225 = vrsqrt.pop %v209
  %v226 = vmul.f32 %v98, %v210
  %v227 = vmul.f32 %v99, %v211
  %v228 = vmul.f32 %v100, %v212
  %v229 = vmul.f32 %v101, %v213
  %v230 = vmul.f32 %v102, %v214
  %v231 = vmul.f32 %v103, %v215
  %v232 = vmul.f32 %v104, %v216
  %v233 = vmul.f32 %v105, %v217
  %v234 = vmul.f32 %v106, %v218
  %v235 = vmul.f32 %v107, %v219
  %v236 = vmul.f32 %v108, %v220
  %v237 = vmul.f32 %v109, %v221
  %v238 = vmul.f32 %v110, %v222
  %v239 = vmul.f32 %v111, %v223
  %v240 = vmul.f32 %v112, %v224
  %v241 = vmul.f32 %v113, %v225
  %v243 = vlaneseq
  %v244 = vshrl.u32 %v243, 7
  %v245 = vsub.s32 0, %v244
  %v246 = vrot.slane %v30, %v245
  %v248 = vmul.f32 %v226, %v246
  %v249 = vmul.f32 %v227, %v246
  %v250 = vmul.f32 %v228, %v246
  %v251 = vmul.f32 %v229, %v246
  %v252 = vmul.f32 %v230, %v246
  %v253 = vmul.f32 %v231, %v246
  %v254 = vmul.f32 %v232, %v246
  %v255 = vmul.f32 %v233, %v246
  %v256 = vmul.f32 %v234, %v246
  %v257 = vmul.f32 %v235, %v246
  %v258 = vmul.f32 %v236, %v246
  %v259 = vmul.f32 %v237, %v246
  %v260 = vmul.f32 %v238, %v246
  %v261 = vmul.f32 %v239, %v246
  %v262 = vmul.f32 %v240, %v246
  %v263 = vmul.f32 %v241, %v246
  %v265 = vlaneseq
  %v266 = vshrl.u32 %v265, 7
  %v267 = vsub.s32 0, %v266
  %v268 = vrot.slane %v31, %v267
  %v270 = vadd.f32 %v248, %v268
  %v271 = vadd.f32 %v249, %v268
  %v272 = vadd.f32 %v250, %v268
  %v273 = vadd.f32 %v251, %v268
  %v274 = vadd.f32 %v252, %v268
  %v275 = vadd.f32 %v253, %v268
  %v276 = vadd.f32 %v254, %v268
  %v277 = vadd.f32 %v255, %v268
  %v278 = vadd.f32 %v256, %v268
  %v279 = vadd.f32 %v257, %v268
  %v280 = vadd.f32 %v258, %v268
  %v281 = vadd.f32 %v259, %v268
  %v282 = vadd.f32 %v260, %v268
  %v283 = vadd.f32 %v261, %v268
  %v284 = vadd.f32 %v262, %v268
  %v285 = vadd.f32 %v263, %v268
  %286 = vst.msk [vmem:[%s3] sm:$0xff] %vm32, %v270
  %287 = vst.msk [vmem:[%s3 + $0x8] sm:$0xff] %vm32, %v271
  %288 = vst.msk [vmem:[%s3 + $0x10] sm:$0xff] %vm32, %v272
  %289 = vst.msk [vmem:[%s3 + $0x18] sm:$0xff] %vm32, %v273
  %290 = vst.msk [vmem:[%s3 + $0x20] sm:$0xff] %vm32, %v274
  %291 = vst.msk [vmem:[%s3 + $0x28] sm:$0xff] %vm32, %v275
  %292 = vst.msk [vmem:[%s3 + $0x30] sm:$0xff] %vm32, %v276
  %293 = vst.msk [vmem:[%s3 + $0x38] sm:$0xff] %vm32, %v277
  %294 = vst.msk [vmem:[%s3 + $0x40] sm:$0xff] %vm32, %v278
  %295 = vst.msk [vmem:[%s3 + $0x48] sm:$0xff] %vm32, %v279
  %296 = vst.msk [vmem:[%s3 + $0x50] sm:$0xff] %vm32, %v280
  %297 = vst.msk [vmem:[%s3 + $0x58] sm:$0xff] %vm32, %v281
  %298 = vst.msk [vmem:[%s3 + $0x60] sm:$0xff] %vm32, %v282
  %299 = vst.msk [vmem:[%s3 + $0x68] sm:$0xff] %vm32, %v283
  %300 = vst.msk [vmem:[%s3 + $0x70] sm:$0xff] %vm32, %v284
  %301 = vst.msk [vmem:[%s3 + $0x78] sm:$0xff] %vm32, %v285
  // Predicated region
  $region14: #{swin_unet_forward.20} parent=0 // pred_check
    _
  $region15: #{swin_unet_forward.20} parent=0 // pred_check_branch
    %303 = sbr.rel (0) target = $region17
  $region16: #{swin_unet_forward.20} parent=0 // pred_region
    _
  $region17: #{swin_unet_forward.20} parent=0 // pred_fallthru
    _
  // Predicated region
  $region18: #{swin_unet_forward.20} parent=0 // pred_check
    _
  $region19: #{swin_unet_forward.20} parent=0 // pred_check_branch
    %305 = sbr.rel (0) target = $region21
  $region20: #{swin_unet_forward.20} parent=0 // pred_region
    _
  $region21: #{swin_unet_forward.20} parent=0 // pred_fallthru
    _

// kernel: swin_unet_forward.21
$region0: #{swin_unet_forward.21}
  #allocation0 [shape = 'u32[]', space=smem, size = 0x4, offset = 0x4, fixed_abs, tag = 'smem constant byte address 0x4 - core index']
  #allocation1 [shape = 'u32[144,128]{1,0:T(1,128)}', space=vmem, size = 0x12000, scoped, tag = 'internal scratch']
  %s0 = inlined_call_operand.vmem [shape: f32[128,64], index: 0, kind: input, shape index: {}]
  %s1 = inlined_call_operand.vmem [shape: bf16[64,32], index: 1, kind: input, shape index: {}]
  %s2 = inlined_call_operand.vmem [shape: f32[1,32], index: 2, kind: input, shape index: {}]
  %s3 = inlined_call_operand.vmem [shape: f32[128,32], index: 3, kind: output, shape index: {}]
  %s4 = sld [smem:[#allocation0]]
  $region22: #{swin_unet_forward.21} parent=0
    _
  %s6 = ssub.s32 1, %s4
  %s7 = scalar_select 0, %s6, %s4
  // Predicated region
  $region2: #{swin_unet_forward.21} parent=0 // pred_check
    _
  $region3: #{swin_unet_forward.21} parent=0 // pred_check_branch
    %9 = sbr.rel (0) target = $region5
  $region4: #{swin_unet_forward.21} parent=0 // pred_region
    _
  $region5: #{swin_unet_forward.21} parent=0 // pred_fallthru
    _
  // Predicated region
  $region6: #{swin_unet_forward.21} parent=0 // pred_check
    _
  $region7: #{swin_unet_forward.21} parent=0 // pred_check_branch
    %11 = sbr.rel (0) target = $region9
  $region8: #{swin_unet_forward.21} parent=0 // pred_region
    _
  $region9: #{swin_unet_forward.21} parent=0 // pred_fallthru
    _
  // Predicated region
  $region10: #{swin_unet_forward.21} parent=0 // pred_check
    _
  $region11: #{swin_unet_forward.21} parent=0 // pred_check_branch
    %13 = sbr.rel (0) target = $region13
  $region12: #{swin_unet_forward.21} parent=0 // pred_region
    _
  $region13: #{swin_unet_forward.21} parent=0 // pred_fallthru
    _
  %v15 = vld [vmem:[%s0] sm:$0xff]
  %v16 = vld [vmem:[%s0 + $0x8] sm:$0xff]
  %v17 = vld [vmem:[%s0 + $0x10] sm:$0xff]
  %v18 = vld [vmem:[%s0 + $0x18] sm:$0xff]
  %v19 = vld [vmem:[%s0 + $0x20] sm:$0xff]
  %v20 = vld [vmem:[%s0 + $0x28] sm:$0xff]
  %v21 = vld [vmem:[%s0 + $0x30] sm:$0xff]
  %v22 = vld [vmem:[%s0 + $0x38] sm:$0xff]
  %v23 = vld [vmem:[%s0 + $0x40] sm:$0xff]
  %v24 = vld [vmem:[%s0 + $0x48] sm:$0xff]
  %v25 = vld [vmem:[%s0 + $0x50] sm:$0xff]
  %v26 = vld [vmem:[%s0 + $0x58] sm:$0xff]
  %v27 = vld [vmem:[%s0 + $0x60] sm:$0xff]
  %v28 = vld [vmem:[%s0 + $0x68] sm:$0xff]
  %v29 = vld [vmem:[%s0 + $0x70] sm:$0xff]
  %v30 = vld [vmem:[%s0 + $0x78] sm:$0xff]
  %v31 = vpack.c.bf16 %v16, %v15
  %v32 = vpack.c.bf16 %v18, %v17
  %v33 = vpack.c.bf16 %v20, %v19
  %v34 = vpack.c.bf16 %v22, %v21
  %v35 = vpack.c.bf16 %v24, %v23
  %v36 = vpack.c.bf16 %v26, %v25
  %v37 = vpack.c.bf16 %v28, %v27
  %v38 = vpack.c.bf16 %v30, %v29
  %v39 = vld [vmem:[%s1] sm:$0xf]
  %v40 = vld [vmem:[%s1 + $0x4] sm:$0xf]
  %v41 = vld [vmem:[%s1 + $0x8] sm:$0xf]
  %v42 = vld [vmem:[%s1 + $0xc] sm:$0xf]
  %v43 = vld [vmem:[%s1 + $0x10] sm:$0xf]
  %v44 = vld [vmem:[%s1 + $0x14] sm:$0xf]
  %v45 = vld [vmem:[%s1 + $0x18] sm:$0xf]
  %v46 = vld [vmem:[%s1 + $0x1c] sm:$0xf]
  %v47 = vld [vmem:[%s2] sm:$0x1]
  %v49 = vlaneseq
  %v50 = vshrl.u32 %v49, 7
  %v51 = vsub.s32 0, %v50
  %v52 = vrot.slane %v47, %v51
  %v62 = vunpack.c.l.b16 %v39
  %v63 = vunpack.c.l.b16 %v40
  %v64 = vunpack.c.l.b16 %v41
  %v65 = vunpack.c.l.b16 %v42
  %v66 = vunpack.c.l.b16 %v43
  %v67 = vunpack.c.l.b16 %v44
  %v68 = vunpack.c.l.b16 %v45
  %v69 = vunpack.c.l.b16 %v46
  %v70 = vpack.c.b16 %v63, %v62
  %v71 = vpack.c.b16 %v65, %v64
  %v72 = vpack.c.b16 %v67, %v66
  %v73 = vpack.c.b16 %v69, %v68
  %vm78 = vcmask 523264
  %v80 = vsel %vm78, %v31, 0
  %v83 = vsel %vm78, %v32, 0
  %v86 = vsel %vm78, %v33, 0
  %v89 = vsel %vm78, %v34, 0
  %v92 = vsel %vm78, %v35, 0
  %v95 = vsel %vm78, %v36, 0
  %v98 = vsel %vm78, %v37, 0
  %v101 = vsel %vm78, %v38, 0
  %103 = vmatprep.subr.bf16.mxu0 0
  %104 = vmatpush1.bf16.msra.mxu0 %v70
  %105 = vmatprep.subr.bf16.mxu0 0
  %106 = vmatpush1.bf16.msra.mxu0 %v71
  %107 = vmatprep.subr.bf16.mxu0 0
  %108 = vmatpush1.bf16.msra.mxu0 %v72
  %109 = vmatprep.subr.bf16.mxu0 0
  %110 = vmatpush1.bf16.msra.mxu0 %v73
  %111 = vmatprep.subr.bf16.mxu0 0
  %112 = vmatpush1.bf16.msra.mxu0 0
  %113 = vmatprep.subr.bf16.mxu0 0
  %114 = vmatpush1.bf16.msra.mxu0 0
  %115 = vmatprep.subr.bf16.mxu0 0
  %116 = vmatpush1.bf16.msra.mxu0 0
  %117 = vmatprep.subr.bf16.mxu0 0
  %118 = vmatpush1.bf16.msra.mxu0 0
  %119 = vmatprep.subr.bf16.mxu0 0
  %120 = vmatpush1.bf16.msra.mxu0 0
  %121 = vmatprep.subr.bf16.mxu0 0
  %122 = vmatpush1.bf16.msra.mxu0 0
  %123 = vmatprep.subr.bf16.mxu0 0
  %124 = vmatpush1.bf16.msra.mxu0 0
  %125 = vmatprep.subr.bf16.mxu0 0
  %126 = vmatpush1.bf16.msra.mxu0 0
  %127 = vmatprep.subr.bf16.mxu0 0
  %128 = vmatpush1.bf16.msra.mxu0 0
  %129 = vmatprep.subr.bf16.mxu0 0
  %130 = vmatpush1.bf16.msra.mxu0 0
  %131 = vmatprep.subr.bf16.mxu0 0
  %132 = vmatpush1.bf16.msra.mxu0 0
  %133 = vmatprep.subr.bf16.mxu0 0
  %134 = vmatpush1.bf16.msra.mxu0 0
  %135 = vmatprep.mubr.bf16.mxu0 0
  %136 = vmatmul.mubr.bf16.gmra.mrb[0].mxu0 %v80
  %v137 = vpop.f32.mrb[0].mxu0
  %v138 = vadd.f32 %v52, %v137
  %v139 = vpop.f32.mrb[0].mxu0
  %v140 = vpop.f32.mrb[0].mxu0
  %v141 = vadd.f32 %v52, %v140
  %v142 = vpop.f32.mrb[0].mxu0
  %143 = vmatprep.mubr.bf16.mxu0 0
  %144 = vmatmul.mubr.bf16.gmra.mrb[0].mxu0 %v83
  %v145 = vpop.f32.mrb[0].mxu0
  %v146 = vadd.f32 %v52, %v145
  %v147 = vpop.f32.mrb[0].mxu0
  %v148 = vpop.f32.mrb[0].mxu0
  %v149 = vadd.f32 %v52, %v148
  %v150 = vpop.f32.mrb[0].mxu0
  %151 = vmatprep.mubr.bf16.mxu0 0
  %152 = vmatmul.mubr.bf16.gmra.mrb[0].mxu0 %v86
  %v153 = vpop.f32.mrb[0].mxu0
  %v154 = vadd.f32 %v52, %v153
  %v155 = vpop.f32.mrb[0].mxu0
  %v156 = vpop.f32.mrb[0].mxu0
  %v157 = vadd.f32 %v52, %v156
  %v158 = vpop.f32.mrb[0].mxu0
  %159 = vmatprep.mubr.bf16.mxu0 0
  %160 = vmatmul.mubr.bf16.gmra.mrb[0].mxu0 %v89
  %v161 = vpop.f32.mrb[0].mxu0
  %v162 = vadd.f32 %v52, %v161
  %v163 = vpop.f32.mrb[0].mxu0
  %v164 = vpop.f32.mrb[0].mxu0
  %v165 = vadd.f32 %v52, %v164
  %v166 = vpop.f32.mrb[0].mxu0
  %167 = vmatprep.mubr.bf16.mxu0 0
  %168 = vmatmul.mubr.bf16.gmra.mrb[0].mxu0 %v92
  %v169 = vpop.f32.mrb[0].mxu0
  %v170 = vadd.f32 %v52, %v169
  %v171 = vpop.f32.mrb[0].mxu0
  %v172 = vpop.f32.mrb[0].mxu0
  %v173 = vadd.f32 %v52, %v172
  %v174 = vpop.f32.mrb[0].mxu0
  %175 = vmatprep.mubr.bf16.mxu0 0
  %176 = vmatmul.mubr.bf16.gmra.mrb[0].mxu0 %v95
  %v177 = vpop.f32.mrb[0].mxu0
  %v178 = vadd.f32 %v52, %v177
  %v179 = vpop.f32.mrb[0].mxu0
  %v180 = vpop.f32.mrb[0].mxu0
  %v181 = vadd.f32 %v52, %v180
  %v182 = vpop.f32.mrb[0].mxu0
  %183 = vmatprep.mubr.bf16.mxu0 0
  %184 = vmatmul.mubr.bf16.gmra.mrb[0].mxu0 %v98
  %v185 = vpop.f32.mrb[0].mxu0
  %v186 = vadd.f32 %v52, %v185
  %v187 = vpop.f32.mrb[0].mxu0
  %v188 = vpop.f32.mrb[0].mxu0
  %v189 = vadd.f32 %v52, %v188
  %v190 = vpop.f32.mrb[0].mxu0
  %191 = vmatprep.mubr.bf16.mxu0 0
  %192 = vmatmul.mubr.bf16.gmra.mrb[0].mxu0 %v101
  %v193 = vpop.f32.mrb[0].mxu0
  %v194 = vadd.f32 %v52, %v193
  %v195 = vpop.f32.mrb[0].mxu0
  %v196 = vpop.f32.mrb[0].mxu0
  %v197 = vadd.f32 %v52, %v196
  %v198 = vpop.f32.mrb[0].mxu0
  %199 = vdwg.mxu0
  %vm200 = vcmask 261120
  %201 = vst.msk [vmem:[%s3] sm:$0xff] %vm200, %v138
  %202 = vst.msk [vmem:[%s3 + $0x8] sm:$0xff] %vm200, %v141
  %203 = vst.msk [vmem:[%s3 + $0x10] sm:$0xff] %vm200, %v146
  %204 = vst.msk [vmem:[%s3 + $0x18] sm:$0xff] %vm200, %v149
  %205 = vst.msk [vmem:[%s3 + $0x20] sm:$0xff] %vm200, %v154
  %206 = vst.msk [vmem:[%s3 + $0x28] sm:$0xff] %vm200, %v157
  %207 = vst.msk [vmem:[%s3 + $0x30] sm:$0xff] %vm200, %v162
  %208 = vst.msk [vmem:[%s3 + $0x38] sm:$0xff] %vm200, %v165
  %209 = vst.msk [vmem:[%s3 + $0x40] sm:$0xff] %vm200, %v170
  %210 = vst.msk [vmem:[%s3 + $0x48] sm:$0xff] %vm200, %v173
  %211 = vst.msk [vmem:[%s3 + $0x50] sm:$0xff] %vm200, %v178
  %212 = vst.msk [vmem:[%s3 + $0x58] sm:$0xff] %vm200, %v181
  %213 = vst.msk [vmem:[%s3 + $0x60] sm:$0xff] %vm200, %v186
  %214 = vst.msk [vmem:[%s3 + $0x68] sm:$0xff] %vm200, %v189
  %215 = vst.msk [vmem:[%s3 + $0x70] sm:$0xff] %vm200, %v194
  %216 = vst.msk [vmem:[%s3 + $0x78] sm:$0xff] %vm200, %v197
  // Predicated region
  $region14: #{swin_unet_forward.21} parent=0 // pred_check
    _
  $region15: #{swin_unet_forward.21} parent=0 // pred_check_branch
    %218 = sbr.rel (0) target = $region17
  $region16: #{swin_unet_forward.21} parent=0 // pred_region
    _
  $region17: #{swin_unet_forward.21} parent=0 // pred_fallthru
    _
  // Predicated region
  $region18: #{swin_unet_forward.21} parent=0 // pred_check
    _
  $region19: #{swin_unet_forward.21} parent=0 // pred_check_branch
    %220 = sbr.rel (0) target = $region21
  $region20: #{swin_unet_forward.21} parent=0 // pred_region
    _
  $region21: #{swin_unet_forward.21} parent=0 // pred_fallthru
    _

// kernel: swin_unet_forward.24
$region0: #{swin_unet_forward.24}
  #allocation0 [shape = 'u32[]', space=smem, size = 0x4, offset = 0x4, fixed_abs, tag = 'smem constant byte address 0x4 - core index']
  #allocation1 [shape = 'u32[144,128]{1,0:T(1,128)}', space=vmem, size = 0x12000, scoped, tag = 'internal scratch']
  %s0 = inlined_call_operand.vmem [shape: f32[128,32], index: 0, kind: input, shape index: {}]
  %s1 = inlined_call_operand.vmem [shape: f32[1,32], index: 1, kind: input, shape index: {}]
  %s2 = inlined_call_operand.vmem [shape: f32[1,32], index: 2, kind: input, shape index: {}]
  %s3 = inlined_call_operand.vmem [shape: bf16[32,512], index: 3, kind: input, shape index: {}]
  %s4 = inlined_call_operand.vmem [shape: f32[128,512], index: 4, kind: output, shape index: {}]
  %s5 = sld [smem:[#allocation0]]
  $region26: #{swin_unet_forward.24} parent=0
    _
  %s7 = ssub.s32 1, %s5
  %s8 = scalar_select 0, %s7, %s5
  // Predicated region
  $region2: #{swin_unet_forward.24} parent=0 // pred_check
    _
  $region3: #{swin_unet_forward.24} parent=0 // pred_check_branch
    %10 = sbr.rel (0) target = $region5
  $region4: #{swin_unet_forward.24} parent=0 // pred_region
    _
  $region5: #{swin_unet_forward.24} parent=0 // pred_fallthru
    _
  // Predicated region
  $region6: #{swin_unet_forward.24} parent=0 // pred_check
    _
  $region7: #{swin_unet_forward.24} parent=0 // pred_check_branch
    %12 = sbr.rel (0) target = $region9
  $region8: #{swin_unet_forward.24} parent=0 // pred_region
    _
  $region9: #{swin_unet_forward.24} parent=0 // pred_fallthru
    _
  // Predicated region
  $region10: #{swin_unet_forward.24} parent=0 // pred_check
    _
  $region11: #{swin_unet_forward.24} parent=0 // pred_check_branch
    %14 = sbr.rel (0) target = $region13
  $region12: #{swin_unet_forward.24} parent=0 // pred_region
    _
  $region13: #{swin_unet_forward.24} parent=0 // pred_fallthru
    _
  // Predicated region
  $region14: #{swin_unet_forward.24} parent=0 // pred_check
    _
  $region15: #{swin_unet_forward.24} parent=0 // pred_check_branch
    %16 = sbr.rel (0) target = $region17
  $region16: #{swin_unet_forward.24} parent=0 // pred_region
    _
  $region17: #{swin_unet_forward.24} parent=0 // pred_fallthru
    _
  %v18 = vld [vmem:[%s0] sm:$0xff]
  %v19 = vld [vmem:[%s0 + $0x8] sm:$0xff]
  %v20 = vld [vmem:[%s0 + $0x10] sm:$0xff]
  %v21 = vld [vmem:[%s0 + $0x18] sm:$0xff]
  %v22 = vld [vmem:[%s0 + $0x20] sm:$0xff]
  %v23 = vld [vmem:[%s0 + $0x28] sm:$0xff]
  %v24 = vld [vmem:[%s0 + $0x30] sm:$0xff]
  %v25 = vld [vmem:[%s0 + $0x38] sm:$0xff]
  %v26 = vld [vmem:[%s0 + $0x40] sm:$0xff]
  %v27 = vld [vmem:[%s0 + $0x48] sm:$0xff]
  %v28 = vld [vmem:[%s0 + $0x50] sm:$0xff]
  %v29 = vld [vmem:[%s0 + $0x58] sm:$0xff]
  %v30 = vld [vmem:[%s0 + $0x60] sm:$0xff]
  %v31 = vld [vmem:[%s0 + $0x68] sm:$0xff]
  %v32 = vld [vmem:[%s0 + $0x70] sm:$0xff]
  %v33 = vld [vmem:[%s0 + $0x78] sm:$0xff]
  %v34 = vld [vmem:[%s1] sm:$0x1]
  %v35 = vld [vmem:[%s2] sm:$0x1]
  %vm36 = vcmask 261120
  %v37 = vsel %vm36, %v18, 0.0
  %38 = vadd.xlane.f32.xlu0 %v37
  %v39 = vpop.xlane.xlu0 %38
  %v40 = vsel %vm36, %v19, 0.0
  %41 = vadd.xlane.f32.xlu0 %v40
  %v42 = vpop.xlane.xlu0 %41
  %v43 = vsel %vm36, %v20, 0.0
  %44 = vadd.xlane.f32.xlu0 %v43
  %v45 = vpop.xlane.xlu0 %44
  %v46 = vsel %vm36, %v21, 0.0
  %47 = vadd.xlane.f32.xlu0 %v46
  %v48 = vpop.xlane.xlu0 %47
  %v49 = vsel %vm36, %v22, 0.0
  %50 = vadd.xlane.f32.xlu0 %v49
  %v51 = vpop.xlane.xlu0 %50
  %v52 = vsel %vm36, %v23, 0.0
  %53 = vadd.xlane.f32.xlu0 %v52
  %v54 = vpop.xlane.xlu0 %53
  %v55 = vsel %vm36, %v24, 0.0
  %56 = vadd.xlane.f32.xlu0 %v55
  %v57 = vpop.xlane.xlu0 %56
  %v58 = vsel %vm36, %v25, 0.0
  %59 = vadd.xlane.f32.xlu0 %v58
  %v60 = vpop.xlane.xlu0 %59
  %v61 = vsel %vm36, %v26, 0.0
  %62 = vadd.xlane.f32.xlu0 %v61
  %v63 = vpop.xlane.xlu0 %62
  %v64 = vsel %vm36, %v27, 0.0
  %65 = vadd.xlane.f32.xlu0 %v64
  %v66 = vpop.xlane.xlu0 %65
  %v67 = vsel %vm36, %v28, 0.0
  %68 = vadd.xlane.f32.xlu0 %v67
  %v69 = vpop.xlane.xlu0 %68
  %v70 = vsel %vm36, %v29, 0.0
  %71 = vadd.xlane.f32.xlu0 %v70
  %v72 = vpop.xlane.xlu0 %71
  %v73 = vsel %vm36, %v30, 0.0
  %74 = vadd.xlane.f32.xlu0 %v73
  %v75 = vpop.xlane.xlu0 %74
  %v76 = vsel %vm36, %v31, 0.0
  %77 = vadd.xlane.f32.xlu0 %v76
  %v78 = vpop.xlane.xlu0 %77
  %v79 = vsel %vm36, %v32, 0.0
  %80 = vadd.xlane.f32.xlu0 %v79
  %v81 = vpop.xlane.xlu0 %80
  %v82 = vsel %vm36, %v33, 0.0
  %83 = vadd.xlane.f32.xlu0 %v82
  %v84 = vpop.xlane.xlu0 %83
  %v85 = vrcp.pop 32.0
  %v86 = vmul.f32 %v39, %v85
  %v87 = vmul.f32 %v42, %v85
  %v88 = vmul.f32 %v45, %v85
  %v89 = vmul.f32 %v48, %v85
  %v90 = vmul.f32 %v51, %v85
  %v91 = vmul.f32 %v54, %v85
  %v92 = vmul.f32 %v57, %v85
  %v93 = vmul.f32 %v60, %v85
  %v94 = vmul.f32 %v63, %v85
  %v95 = vmul.f32 %v66, %v85
  %v96 = vmul.f32 %v69, %v85
  %v97 = vmul.f32 %v72, %v85
  %v98 = vmul.f32 %v75, %v85
  %v99 = vmul.f32 %v78, %v85
  %v100 = vmul.f32 %v81, %v85
  %v101 = vmul.f32 %v84, %v85
  %v102 = vsub.f32 %v18, %v86
  %v103 = vsub.f32 %v19, %v87
  %v104 = vsub.f32 %v20, %v88
  %v105 = vsub.f32 %v21, %v89
  %v106 = vsub.f32 %v22, %v90
  %v107 = vsub.f32 %v23, %v91
  %v108 = vsub.f32 %v24, %v92
  %v109 = vsub.f32 %v25, %v93
  %v110 = vsub.f32 %v26, %v94
  %v111 = vsub.f32 %v27, %v95
  %v112 = vsub.f32 %v28, %v96
  %v113 = vsub.f32 %v29, %v97
  %v114 = vsub.f32 %v30, %v98
  %v115 = vsub.f32 %v31, %v99
  %v116 = vsub.f32 %v32, %v100
  %v117 = vsub.f32 %v33, %v101
  %v118 = vmul.f32 %v102, %v102
  %v119 = vmul.f32 %v103, %v103
  %v120 = vmul.f32 %v104, %v104
  %v121 = vmul.f32 %v105, %v105
  %v122 = vmul.f32 %v106, %v106
  %v123 = vmul.f32 %v107, %v107
  %v124 = vmul.f32 %v108, %v108
  %v125 = vmul.f32 %v109, %v109
  %v126 = vmul.f32 %v110, %v110
  %v127 = vmul.f32 %v111, %v111
  %v128 = vmul.f32 %v112, %v112
  %v129 = vmul.f32 %v113, %v113
  %v130 = vmul.f32 %v114, %v114
  %v131 = vmul.f32 %v115, %v115
  %v132 = vmul.f32 %v116, %v116
  %v133 = vmul.f32 %v117, %v117
  %v134 = vsel %vm36, %v118, 0.0
  %135 = vadd.xlane.f32.xlu0 %v134
  %v136 = vpop.xlane.xlu0 %135
  %v137 = vsel %vm36, %v119, 0.0
  %138 = vadd.xlane.f32.xlu0 %v137
  %v139 = vpop.xlane.xlu0 %138
  %v140 = vsel %vm36, %v120, 0.0
  %141 = vadd.xlane.f32.xlu0 %v140
  %v142 = vpop.xlane.xlu0 %141
  %v143 = vsel %vm36, %v121, 0.0
  %144 = vadd.xlane.f32.xlu0 %v143
  %v145 = vpop.xlane.xlu0 %144
  %v146 = vsel %vm36, %v122, 0.0
  %147 = vadd.xlane.f32.xlu0 %v146
  %v148 = vpop.xlane.xlu0 %147
  %v149 = vsel %vm36, %v123, 0.0
  %150 = vadd.xlane.f32.xlu0 %v149
  %v151 = vpop.xlane.xlu0 %150
  %v152 = vsel %vm36, %v124, 0.0
  %153 = vadd.xlane.f32.xlu0 %v152
  %v154 = vpop.xlane.xlu0 %153
  %v155 = vsel %vm36, %v125, 0.0
  %156 = vadd.xlane.f32.xlu0 %v155
  %v157 = vpop.xlane.xlu0 %156
  %v158 = vsel %vm36, %v126, 0.0
  %159 = vadd.xlane.f32.xlu0 %v158
  %v160 = vpop.xlane.xlu0 %159
  %v161 = vsel %vm36, %v127, 0.0
  %162 = vadd.xlane.f32.xlu0 %v161
  %v163 = vpop.xlane.xlu0 %162
  %v164 = vsel %vm36, %v128, 0.0
  %165 = vadd.xlane.f32.xlu0 %v164
  %v166 = vpop.xlane.xlu0 %165
  %v167 = vsel %vm36, %v129, 0.0
  %168 = vadd.xlane.f32.xlu0 %v167
  %v169 = vpop.xlane.xlu0 %168
  %v170 = vsel %vm36, %v130, 0.0
  %171 = vadd.xlane.f32.xlu0 %v170
  %v172 = vpop.xlane.xlu0 %171
  %v173 = vsel %vm36, %v131, 0.0
  %174 = vadd.xlane.f32.xlu0 %v173
  %v175 = vpop.xlane.xlu0 %174
  %v176 = vsel %vm36, %v132, 0.0
  %177 = vadd.xlane.f32.xlu0 %v176
  %v178 = vpop.xlane.xlu0 %177
  %v179 = vsel %vm36, %v133, 0.0
  %180 = vadd.xlane.f32.xlu0 %v179
  %v181 = vpop.xlane.xlu0 %180
  %v182 = vmul.f32 %v136, %v85
  %v183 = vmul.f32 %v139, %v85
  %v184 = vmul.f32 %v142, %v85
  %v185 = vmul.f32 %v145, %v85
  %v186 = vmul.f32 %v148, %v85
  %v187 = vmul.f32 %v151, %v85
  %v188 = vmul.f32 %v154, %v85
  %v189 = vmul.f32 %v157, %v85
  %v190 = vmul.f32 %v160, %v85
  %v191 = vmul.f32 %v163, %v85
  %v192 = vmul.f32 %v166, %v85
  %v193 = vmul.f32 %v169, %v85
  %v194 = vmul.f32 %v172, %v85
  %v195 = vmul.f32 %v175, %v85
  %v196 = vmul.f32 %v178, %v85
  %v197 = vmul.f32 %v181, %v85
  %v198 = vadd.f32 %v182, 1e-05
  %v199 = vadd.f32 %v183, 1e-05
  %v200 = vadd.f32 %v184, 1e-05
  %v201 = vadd.f32 %v185, 1e-05
  %v202 = vadd.f32 %v186, 1e-05
  %v203 = vadd.f32 %v187, 1e-05
  %v204 = vadd.f32 %v188, 1e-05
  %v205 = vadd.f32 %v189, 1e-05
  %v206 = vadd.f32 %v190, 1e-05
  %v207 = vadd.f32 %v191, 1e-05
  %v208 = vadd.f32 %v192, 1e-05
  %v209 = vadd.f32 %v193, 1e-05
  %v210 = vadd.f32 %v194, 1e-05
  %v211 = vadd.f32 %v195, 1e-05
  %v212 = vadd.f32 %v196, 1e-05
  %v213 = vadd.f32 %v197, 1e-05
  %v214 = vrsqrt.pop %v198
  %v215 = vrsqrt.pop %v199
  %v216 = vrsqrt.pop %v200
  %v217 = vrsqrt.pop %v201
  %v218 = vrsqrt.pop %v202
  %v219 = vrsqrt.pop %v203
  %v220 = vrsqrt.pop %v204
  %v221 = vrsqrt.pop %v205
  %v222 = vrsqrt.pop %v206
  %v223 = vrsqrt.pop %v207
  %v224 = vrsqrt.pop %v208
  %v225 = vrsqrt.pop %v209
  %v226 = vrsqrt.pop %v210
  %v227 = vrsqrt.pop %v211
  %v228 = vrsqrt.pop %v212
  %v229 = vrsqrt.pop %v213
  %v230 = vmul.f32 %v102, %v214
  %v231 = vmul.f32 %v103, %v215
  %v232 = vmul.f32 %v104, %v216
  %v233 = vmul.f32 %v105, %v217
  %v234 = vmul.f32 %v106, %v218
  %v235 = vmul.f32 %v107, %v219
  %v236 = vmul.f32 %v108, %v220
  %v237 = vmul.f32 %v109, %v221
  %v238 = vmul.f32 %v110, %v222
  %v239 = vmul.f32 %v111, %v223
  %v240 = vmul.f32 %v112, %v224
  %v241 = vmul.f32 %v113, %v225
  %v242 = vmul.f32 %v114, %v226
  %v243 = vmul.f32 %v115, %v227
  %v244 = vmul.f32 %v116, %v228
  %v245 = vmul.f32 %v117, %v229
  %v247 = vlaneseq
  %v248 = vshrl.u32 %v247, 7
  %v249 = vsub.s32 0, %v248
  %v250 = vrot.slane %v34, %v249
  %v252 = vmul.f32 %v230, %v250
  %v253 = vmul.f32 %v231, %v250
  %v254 = vmul.f32 %v232, %v250
  %v255 = vmul.f32 %v233, %v250
  %v256 = vmul.f32 %v234, %v250
  %v257 = vmul.f32 %v235, %v250
  %v258 = vmul.f32 %v236, %v250
  %v259 = vmul.f32 %v237, %v250
  %v260 = vmul.f32 %v238, %v250
  %v261 = vmul.f32 %v239, %v250
  %v262 = vmul.f32 %v240, %v250
  %v263 = vmul.f32 %v241, %v250
  %v264 = vmul.f32 %v242, %v250
  %v265 = vmul.f32 %v243, %v250
  %v266 = vmul.f32 %v244, %v250
  %v267 = vmul.f32 %v245, %v250
  %v269 = vlaneseq
  %v270 = vshrl.u32 %v269, 7
  %v271 = vsub.s32 0, %v270
  %v272 = vrot.slane %v35, %v271
  %v274 = vadd.f32 %v252, %v272
  %v275 = vadd.f32 %v253, %v272
  %v276 = vadd.f32 %v254, %v272
  %v277 = vadd.f32 %v255, %v272
  %v278 = vadd.f32 %v256, %v272
  %v279 = vadd.f32 %v257, %v272
  %v280 = vadd.f32 %v258, %v272
  %v281 = vadd.f32 %v259, %v272
  %v282 = vadd.f32 %v260, %v272
  %v283 = vadd.f32 %v261, %v272
  %v284 = vadd.f32 %v262, %v272
  %v285 = vadd.f32 %v263, %v272
  %v286 = vadd.f32 %v264, %v272
  %v287 = vadd.f32 %v265, %v272
  %v288 = vadd.f32 %v266, %v272
  %v289 = vadd.f32 %v267, %v272
  %v290 = vpack.c.bf16 %v275, %v274
  %v291 = vpack.c.bf16 %v277, %v276
  %v292 = vpack.c.bf16 %v279, %v278
  %v293 = vpack.c.bf16 %v281, %v280
  %v294 = vpack.c.bf16 %v283, %v282
  %v295 = vpack.c.bf16 %v285, %v284
  %v296 = vpack.c.bf16 %v287, %v286
  %v297 = vpack.c.bf16 %v289, %v288
  %v298 = vld [vmem:[%s3] sm:$0xff]
  %v299 = vld [vmem:[%s3 + $0x8] sm:$0xff]
  %v300 = vld [vmem:[%s3 + $0x10] sm:$0xff]
  %v301 = vld [vmem:[%s3 + $0x18] sm:$0xff]
  %v302 = vld [vmem:[%s3 + $0x20] sm:$0xff]
  %v303 = vld [vmem:[%s3 + $0x28] sm:$0xff]
  %v304 = vld [vmem:[%s3 + $0x30] sm:$0xff]
  %v305 = vld [vmem:[%s3 + $0x38] sm:$0xff]
  %v314 = vunpack.c.l.b16 %v298
  %v315 = vunpack.c.h.b16 %v298
  %v316 = vunpack.c.l.b16 %v299
  %v317 = vunpack.c.h.b16 %v299
  %v318 = vunpack.c.l.b16 %v300
  %v319 = vunpack.c.h.b16 %v300
  %v320 = vunpack.c.l.b16 %v301
  %v321 = vunpack.c.h.b16 %v301
  %v322 = vunpack.c.l.b16 %v302
  %v323 = vunpack.c.h.b16 %v302
  %v324 = vunpack.c.l.b16 %v303
  %v325 = vunpack.c.h.b16 %v303
  %v326 = vunpack.c.l.b16 %v304
  %v327 = vunpack.c.h.b16 %v304
  %v328 = vunpack.c.l.b16 %v305
  %v329 = vunpack.c.h.b16 %v305
  %v330 = vpack.c.b16 %v318, %v314
  %v331 = vpack.c.b16 %v319, %v315
  %v332 = vpack.c.b16 %v320, %v316
  %v333 = vpack.c.b16 %v321, %v317
  %v334 = vpack.c.b16 %v326, %v322
  %v335 = vpack.c.b16 %v327, %v323
  %v336 = vpack.c.b16 %v328, %v324
  %v337 = vpack.c.b16 %v329, %v325
  %v347 = vsel %vm36, %v290, 0
  %v350 = vsel %vm36, %v291, 0
  %v353 = vsel %vm36, %v292, 0
  %v356 = vsel %vm36, %v293, 0
  %v359 = vsel %vm36, %v294, 0
  %v362 = vsel %vm36, %v295, 0
  %v365 = vsel %vm36, %v296, 0
  %v368 = vsel %vm36, %v297, 0
  %370 = vmatprep.subr.bf16.mxu0 %v331
  %371 = vmatpush1.bf16.msra.mxu0 %v330
  %372 = vmatprep.subr.bf16.mxu0 %v335
  %373 = vmatpush1.bf16.msra.mxu0 %v334
  %374 = vmatprep.subr.bf16.mxu0 0
  %375 = vmatpush1.bf16.msra.mxu0 0
  %376 = vmatprep.subr.bf16.mxu0 0
  %377 = vmatpush1.bf16.msra.mxu0 0
  %378 = vmatprep.subr.bf16.mxu0 0
  %379 = vmatpush1.bf16.msra.mxu0 0
  %380 = vmatprep.subr.bf16.mxu0 0
  %381 = vmatpush1.bf16.msra.mxu0 0
  %382 = vmatprep.subr.bf16.mxu0 0
  %383 = vmatpush1.bf16.msra.mxu0 0
  %384 = vmatprep.subr.bf16.mxu0 0
  %385 = vmatpush1.bf16.msra.mxu0 0
  %386 = vmatprep.subr.bf16.mxu0 0
  %387 = vmatpush1.bf16.msra.mxu0 0
  %388 = vmatprep.subr.bf16.mxu0 0
  %389 = vmatpush1.bf16.msra.mxu0 0
  %390 = vmatprep.subr.bf16.mxu0 0
  %391 = vmatpush1.bf16.msra.mxu0 0
  %392 = vmatprep.subr.bf16.mxu0 0
  %393 = vmatpush1.bf16.msra.mxu0 0
  %394 = vmatprep.subr.bf16.mxu0 0
  %395 = vmatpush1.bf16.msra.mxu0 0
  %396 = vmatprep.subr.bf16.mxu0 0
  %397 = vmatpush1.bf16.msra.mxu0 0
  %398 = vmatprep.subr.bf16.mxu0 0
  %399 = vmatpush1.bf16.msra.mxu0 0
  %400 = vmatprep.subr.bf16.mxu0 0
  %401 = vmatpush1.bf16.msra.mxu0 0
  %402 = vmatprep.mubr.bf16.mxu0 0
  %403 = vmatmul.mubr.bf16.gmra.mrb[0].mxu0 %v347
  %v404 = vpop.f32.mrb[0].mxu0
  %v405 = vadd.f32 0.0, %v404
  %v406 = vpop.f32.mrb[0].mxu0
  %v407 = vadd.f32 0.0, %v406
  %v408 = vpop.f32.mrb[0].mxu0
  %v409 = vadd.f32 0.0, %v408
  %v410 = vpop.f32.mrb[0].mxu0
  %v411 = vadd.f32 0.0, %v410
  %412 = vmatprep.mubr.bf16.mxu0 0
  %413 = vmatmul.mubr.bf16.gmra.mrb[0].mxu0 %v350
  %v414 = vpop.f32.mrb[0].mxu0
  %v415 = vadd.f32 0.0, %v414
  %v416 = vpop.f32.mrb[0].mxu0
  %v417 = vadd.f32 0.0, %v416
  %v418 = vpop.f32.mrb[0].mxu0
  %v419 = vadd.f32 0.0, %v418
  %v420 = vpop.f32.mrb[0].mxu0
  %v421 = vadd.f32 0.0, %v420
  %422 = vmatprep.mubr.bf16.mxu0 0
  %423 = vmatmul.mubr.bf16.gmra.mrb[0].mxu0 %v353
  %v424 = vpop.f32.mrb[0].mxu0
  %v425 = vadd.f32 0.0, %v424
  %v426 = vpop.f32.mrb[0].mxu0
  %v427 = vadd.f32 0.0, %v426
  %v428 = vpop.f32.mrb[0].mxu0
  %v429 = vadd.f32 0.0, %v428
  %v430 = vpop.f32.mrb[0].mxu0
  %v431 = vadd.f32 0.0, %v430
  %432 = vmatprep.mubr.bf16.mxu0 0
  %433 = vmatmul.mubr.bf16.gmra.mrb[0].mxu0 %v356
  %v434 = vpop.f32.mrb[0].mxu0
  %v435 = vadd.f32 0.0, %v434
  %v436 = vpop.f32.mrb[0].mxu0
  %v437 = vadd.f32 0.0, %v436
  %v438 = vpop.f32.mrb[0].mxu0
  %v439 = vadd.f32 0.0, %v438
  %v440 = vpop.f32.mrb[0].mxu0
  %v441 = vadd.f32 0.0, %v440
  %442 = vmatprep.mubr.bf16.mxu0 0
  %443 = vmatmul.mubr.bf16.gmra.mrb[0].mxu0 %v359
  %v444 = vpop.f32.mrb[0].mxu0
  %v445 = vadd.f32 0.0, %v444
  %v446 = vpop.f32.mrb[0].mxu0
  %v447 = vadd.f32 0.0, %v446
  %v448 = vpop.f32.mrb[0].mxu0
  %v449 = vadd.f32 0.0, %v448
  %v450 = vpop.f32.mrb[0].mxu0
  %v451 = vadd.f32 0.0, %v450
  %452 = vmatprep.mubr.bf16.mxu0 0
  %453 = vmatmul.mubr.bf16.gmra.mrb[0].mxu0 %v362
  %v454 = vpop.f32.mrb[0].mxu0
  %v455 = vadd.f32 0.0, %v454
  %v456 = vpop.f32.mrb[0].mxu0
  %v457 = vadd.f32 0.0, %v456
  %v458 = vpop.f32.mrb[0].mxu0
  %v459 = vadd.f32 0.0, %v458
  %v460 = vpop.f32.mrb[0].mxu0
  %v461 = vadd.f32 0.0, %v460
  %462 = vmatprep.mubr.bf16.mxu0 0
  %463 = vmatmul.mubr.bf16.gmra.mrb[0].mxu0 %v365
  %v464 = vpop.f32.mrb[0].mxu0
  %v465 = vadd.f32 0.0, %v464
  %v466 = vpop.f32.mrb[0].mxu0
  %v467 = vadd.f32 0.0, %v466
  %v468 = vpop.f32.mrb[0].mxu0
  %v469 = vadd.f32 0.0, %v468
  %v470 = vpop.f32.mrb[0].mxu0
  %v471 = vadd.f32 0.0, %v470
  %472 = vmatprep.mubr.bf16.mxu0 0
  %473 = vmatmul.mubr.bf16.gmra.mrb[0].mxu0 %v368
  %v474 = vpop.f32.mrb[0].mxu0
  %v475 = vadd.f32 0.0, %v474
  %v476 = vpop.f32.mrb[0].mxu0
  %v477 = vadd.f32 0.0, %v476
  %v478 = vpop.f32.mrb[0].mxu0
  %v479 = vadd.f32 0.0, %v478
  %v480 = vpop.f32.mrb[0].mxu0
  %v481 = vadd.f32 0.0, %v480
  %482 = vdwg.mxu0
  %483 = vmatprep.subr.bf16.mxu0 %v333
  %484 = vmatpush1.bf16.msra.mxu0 %v332
  %485 = vmatprep.subr.bf16.mxu0 %v337
  %486 = vmatpush1.bf16.msra.mxu0 %v336
  %487 = vmatprep.subr.bf16.mxu0 0
  %488 = vmatpush1.bf16.msra.mxu0 0
  %489 = vmatprep.subr.bf16.mxu0 0
  %490 = vmatpush1.bf16.msra.mxu0 0
  %491 = vmatprep.subr.bf16.mxu0 0
  %492 = vmatpush1.bf16.msra.mxu0 0
  %493 = vmatprep.subr.bf16.mxu0 0
  %494 = vmatpush1.bf16.msra.mxu0 0
  %495 = vmatprep.subr.bf16.mxu0 0
  %496 = vmatpush1.bf16.msra.mxu0 0
  %497 = vmatprep.subr.bf16.mxu0 0
  %498 = vmatpush1.bf16.msra.mxu0 0
  %499 = vmatprep.subr.bf16.mxu0 0
  %500 = vmatpush1.bf16.msra.mxu0 0
  %501 = vmatprep.subr.bf16.mxu0 0
  %502 = vmatpush1.bf16.msra.mxu0 0
  %503 = vmatprep.subr.bf16.mxu0 0
  %504 = vmatpush1.bf16.msra.mxu0 0
  %505 = vmatprep.subr.bf16.mxu0 0
  %506 = vmatpush1.bf16.msra.mxu0 0
  %507 = vmatprep.subr.bf16.mxu0 0
  %508 = vmatpush1.bf16.msra.mxu0 0
  %509 = vmatprep.subr.bf16.mxu0 0
  %510 = vmatpush1.bf16.msra.mxu0 0
  %511 = vmatprep.subr.bf16.mxu0 0
  %512 = vmatpush1.bf16.msra.mxu0 0
  %513 = vmatprep.subr.bf16.mxu0 0
  %514 = vmatpush1.bf16.msra.mxu0 0
  %515 = vmatprep.mubr.bf16.mxu0 0
  %516 = vmatmul.mubr.bf16.gmra.mrb[0].mxu0 %v347
  %v517 = vpop.f32.mrb[0].mxu0
  %v518 = vadd.f32 0.0, %v517
  %v519 = vpop.f32.mrb[0].mxu0
  %v520 = vadd.f32 0.0, %v519
  %v521 = vpop.f32.mrb[0].mxu0
  %v522 = vadd.f32 0.0, %v521
  %v523 = vpop.f32.mrb[0].mxu0
  %v524 = vadd.f32 0.0, %v523
  %525 = vmatprep.mubr.bf16.mxu0 0
  %526 = vmatmul.mubr.bf16.gmra.mrb[0].mxu0 %v350
  %v527 = vpop.f32.mrb[0].mxu0
  %v528 = vadd.f32 0.0, %v527
  %v529 = vpop.f32.mrb[0].mxu0
  %v530 = vadd.f32 0.0, %v529
  %v531 = vpop.f32.mrb[0].mxu0
  %v532 = vadd.f32 0.0, %v531
  %v533 = vpop.f32.mrb[0].mxu0
  %v534 = vadd.f32 0.0, %v533
  %535 = vmatprep.mubr.bf16.mxu0 0
  %536 = vmatmul.mubr.bf16.gmra.mrb[0].mxu0 %v353
  %v537 = vpop.f32.mrb[0].mxu0
  %v538 = vadd.f32 0.0, %v537
  %v539 = vpop.f32.mrb[0].mxu0
  %v540 = vadd.f32 0.0, %v539
  %v541 = vpop.f32.mrb[0].mxu0
  %v542 = vadd.f32 0.0, %v541
  %v543 = vpop.f32.mrb[0].mxu0
  %v544 = vadd.f32 0.0, %v543
  %545 = vmatprep.mubr.bf16.mxu0 0
  %546 = vmatmul.mubr.bf16.gmra.mrb[0].mxu0 %v356
  %v547 = vpop.f32.mrb[0].mxu0
  %v548 = vadd.f32 0.0, %v547
  %v549 = vpop.f32.mrb[0].mxu0
  %v550 = vadd.f32 0.0, %v549
  %v551 = vpop.f32.mrb[0].mxu0
  %v552 = vadd.f32 0.0, %v551
  %v553 = vpop.f32.mrb[0].mxu0
  %v554 = vadd.f32 0.0, %v553
  %555 = vmatprep.mubr.bf16.mxu0 0
  %556 = vmatmul.mubr.bf16.gmra.mrb[0].mxu0 %v359
  %v557 = vpop.f32.mrb[0].mxu0
  %v558 = vadd.f32 0.0, %v557
  %v559 = vpop.f32.mrb[0].mxu0
  %v560 = vadd.f32 0.0, %v559
  %v561 = vpop.f32.mrb[0].mxu0
  %v562 = vadd.f32 0.0, %v561
  %v563 = vpop.f32.mrb[0].mxu0
  %v564 = vadd.f32 0.0, %v563
  %565 = vmatprep.mubr.bf16.mxu0 0
  %566 = vmatmul.mubr.bf16.gmra.mrb[0].mxu0 %v362
  %v567 = vpop.f32.mrb[0].mxu0
  %v568 = vadd.f32 0.0, %v567
  %v569 = vpop.f32.mrb[0].mxu0
  %v570 = vadd.f32 0.0, %v569
  %v571 = vpop.f32.mrb[0].mxu0
  %v572 = vadd.f32 0.0, %v571
  %v573 = vpop.f32.mrb[0].mxu0
  %v574 = vadd.f32 0.0, %v573
  %575 = vmatprep.mubr.bf16.mxu0 0
  %576 = vmatmul.mubr.bf16.gmra.mrb[0].mxu0 %v365
  %v577 = vpop.f32.mrb[0].mxu0
  %v578 = vadd.f32 0.0, %v577
  %v579 = vpop.f32.mrb[0].mxu0
  %v580 = vadd.f32 0.0, %v579
  %v581 = vpop.f32.mrb[0].mxu0
  %v582 = vadd.f32 0.0, %v581
  %v583 = vpop.f32.mrb[0].mxu0
  %v584 = vadd.f32 0.0, %v583
  %585 = vmatprep.mubr.bf16.mxu0 0
  %586 = vmatmul.mubr.bf16.gmra.mrb[0].mxu0 %v368
  %v587 = vpop.f32.mrb[0].mxu0
  %v588 = vadd.f32 0.0, %v587
  %v589 = vpop.f32.mrb[0].mxu0
  %v590 = vadd.f32 0.0, %v589
  %v591 = vpop.f32.mrb[0].mxu0
  %v592 = vadd.f32 0.0, %v591
  %v593 = vpop.f32.mrb[0].mxu0
  %v594 = vadd.f32 0.0, %v593
  %595 = vdwg.mxu0
  %596 = vst [vmem:[%s4] sm:$0xff] %v405
  %597 = vst [vmem:[%s4 + $0x8] sm:$0xff] %v407
  %598 = vst [vmem:[%s4 + $0x10] sm:$0xff] %v518
  %599 = vst [vmem:[%s4 + $0x18] sm:$0xff] %v520
  %600 = vst [vmem:[%s4 + $0x20] sm:$0xff] %v409
  %601 = vst [vmem:[%s4 + $0x28] sm:$0xff] %v411
  %602 = vst [vmem:[%s4 + $0x30] sm:$0xff] %v522
  %603 = vst [vmem:[%s4 + $0x38] sm:$0xff] %v524
  %604 = vst [vmem:[%s4 + $0x40] sm:$0xff] %v415
  %605 = vst [vmem:[%s4 + $0x48] sm:$0xff] %v417
  %606 = vst [vmem:[%s4 + $0x50] sm:$0xff] %v528
  %607 = vst [vmem:[%s4 + $0x58] sm:$0xff] %v530
  %608 = vst [vmem:[%s4 + $0x60] sm:$0xff] %v419
  %609 = vst [vmem:[%s4 + $0x68] sm:$0xff] %v421
  %610 = vst [vmem:[%s4 + $0x70] sm:$0xff] %v532
  %611 = vst [vmem:[%s4 + $0x78] sm:$0xff] %v534
  %612 = vst [vmem:[%s4 + $0x80] sm:$0xff] %v425
  %613 = vst [vmem:[%s4 + $0x88] sm:$0xff] %v427
  %614 = vst [vmem:[%s4 + $0x90] sm:$0xff] %v538
  %615 = vst [vmem:[%s4 + $0x98] sm:$0xff] %v540
  %616 = vst [vmem:[%s4 + $0xa0] sm:$0xff] %v429
  %617 = vst [vmem:[%s4 + $0xa8] sm:$0xff] %v431
  %618 = vst [vmem:[%s4 + $0xb0] sm:$0xff] %v542
  %619 = vst [vmem:[%s4 + $0xb8] sm:$0xff] %v544
  %620 = vst [vmem:[%s4 + $0xc0] sm:$0xff] %v435
  %621 = vst [vmem:[%s4 + $0xc8] sm:$0xff] %v437
  %622 = vst [vmem:[%s4 + $0xd0] sm:$0xff] %v548
  %623 = vst [vmem:[%s4 + $0xd8] sm:$0xff] %v550
  %624 = vst [vmem:[%s4 + $0xe0] sm:$0xff] %v439
  %625 = vst [vmem:[%s4 + $0xe8] sm:$0xff] %v441
  %626 = vst [vmem:[%s4 + $0xf0] sm:$0xff] %v552
  %627 = vst [vmem:[%s4 + $0xf8] sm:$0xff] %v554
  %628 = vst [vmem:[%s4 + $0x100] sm:$0xff] %v445
  %629 = vst [vmem:[%s4 + $0x108] sm:$0xff] %v447
  %630 = vst [vmem:[%s4 + $0x110] sm:$0xff] %v558
  %631 = vst [vmem:[%s4 + $0x118] sm:$0xff] %v560
  %632 = vst [vmem:[%s4 + $0x120] sm:$0xff] %v449
  %633 = vst [vmem:[%s4 + $0x128] sm:$0xff] %v451
  %634 = vst [vmem:[%s4 + $0x130] sm:$0xff] %v562
  %635 = vst [vmem:[%s4 + $0x138] sm:$0xff] %v564
  %636 = vst [vmem:[%s4 + $0x140] sm:$0xff] %v455
  %637 = vst [vmem:[%s4 + $0x148] sm:$0xff] %v457
  %638 = vst [vmem:[%s4 + $0x150] sm:$0xff] %v568
  %639 = vst [vmem:[%s4 + $0x158] sm:$0xff] %v570
  %640 = vst [vmem:[%s4 + $0x160] sm:$0xff] %v459
  %641 = vst [vmem:[%s4 + $0x168] sm:$0xff] %v461
  %642 = vst [vmem:[%s4 + $0x170] sm:$0xff] %v572
  %643 = vst [vmem:[%s4 + $0x178] sm:$0xff] %v574
  %644 = vst [vmem:[%s4 + $0x180] sm:$0xff] %v465
  %645 = vst [vmem:[%s4 + $0x188] sm:$0xff] %v467
  %646 = vst [vmem:[%s4 + $0x190] sm:$0xff] %v578
  %647 = vst [vmem:[%s4 + $0x198] sm:$0xff] %v580
  %648 = vst [vmem:[%s4 + $0x1a0] sm:$0xff] %v469
  %649 = vst [vmem:[%s4 + $0x1a8] sm:$0xff] %v471
  %650 = vst [vmem:[%s4 + $0x1b0] sm:$0xff] %v582
  %651 = vst [vmem:[%s4 + $0x1b8] sm:$0xff] %v584
  %652 = vst [vmem:[%s4 + $0x1c0] sm:$0xff] %v475
  %653 = vst [vmem:[%s4 + $0x1c8] sm:$0xff] %v477
  %654 = vst [vmem:[%s4 + $0x1d0] sm:$0xff] %v588
  %655 = vst [vmem:[%s4 + $0x1d8] sm:$0xff] %v590
  %656 = vst [vmem:[%s4 + $0x1e0] sm:$0xff] %v479
  %657 = vst [vmem:[%s4 + $0x1e8] sm:$0xff] %v481
  %658 = vst [vmem:[%s4 + $0x1f0] sm:$0xff] %v592
  %659 = vst [vmem:[%s4 + $0x1f8] sm:$0xff] %v594
  // Predicated region
  $region18: #{swin_unet_forward.24} parent=0 // pred_check
    _
  $region19: #{swin_unet_forward.24} parent=0 // pred_check_branch
    %661 = sbr.rel (0) target = $region21
  $region20: #{swin_unet_forward.24} parent=0 // pred_region
    _
  $region21: #{swin_unet_forward.24} parent=0 // pred_fallthru
    _
  // Predicated region
  $region22: #{swin_unet_forward.24} parent=0 // pred_check
    _
  $region23: #{swin_unet_forward.24} parent=0 // pred_check_branch
    %663 = sbr.rel (0) target = $region25
  $region24: #{swin_unet_forward.24} parent=0 // pred_region
    _
  $region25: #{swin_unet_forward.24} parent=0 // pred_fallthru
    _

// kernel: swin_unet_forward.25
$region0: #{swin_unet_forward.25}
  #allocation0 [shape = 'u32[]', space=smem, size = 0x4, offset = 0x4, fixed_abs, tag = 'smem constant byte address 0x4 - core index']
  #allocation1 [shape = 'u32[144,128]{1,0:T(1,128)}', space=vmem, size = 0x12000, scoped, tag = 'internal scratch']
  %s0 = inlined_call_operand.vmem [shape: f32[2048,32], index: 0, kind: input, shape index: {}]
  %s1 = inlined_call_operand.vmem [shape: f32[1,32], index: 1, kind: input, shape index: {}]
  %s2 = inlined_call_operand.vmem [shape: f32[1,32], index: 2, kind: input, shape index: {}]
  %s3 = inlined_call_operand.vmem [shape: bf16[32,3], index: 3, kind: input, shape index: {}]
  %s4 = inlined_call_operand.vmem [shape: f32[2048,3], index: 4, kind: output, shape index: {}]
  %s5 = sld [smem:[#allocation0]]
  $region49: #{swin_unet_forward.25} parent=0
    _
  %s7 = ssub.s32 1, %s5
  %s8 = scalar_select 0, %s7, %s5
  loop: start=0, step=1, limit=6
  $region2: #{swin_unet_forward.25} parent=0 // loop_pre_header
    _
  $region3: #{swin_unet_forward.25} parent=0 // loop_header
    %s10 = sphi 0, %s14
    %p11 = scmp.ge.s32.totalorder %s10, 6
    %s20 = sphi 0, %s22
    %s23 = sphi 0, %s20
    %s24 = sphi 0, %s23
    %s40 = sphi 0, %s24
    %s44 = sphi 0, %s44
    %s46 = sphi 0, %s44
    %s47 = sphi 0, %s46
    %s61 = sphi 0, %s47
    %s65 = sphi 0, %s65
    %s67 = sphi 0, %s65
    %s68 = sphi 0, %s67
    %s82 = sphi 0, %s68
    %s86 = sphi 0, %s86
    %s88 = sphi 0, %s86
    %s89 = sphi 0, %s88
    %s103 = sphi 0, %s89
    %s109 = sphi 0, %s111
    %s112 = sphi 0, %s109
    %s113 = sphi 0, %s112
    %s129 = sphi 0, %s113
  $region4: #{swin_unet_forward.25} parent=0 // loop_header_branch
    %13 = sbr.rel (%p11) target = $region8
  $region5: #{swin_unet_forward.25} parent=0 // loop_body
    %s15 = ssub.s32 %s10, 1
    %s16 = ssub.s32 %s10, 2
    %s17 = sadd.s32 %s10, 1
    %s18 = ssub.s32 %s10, %s17
    %p19 = scmp.eq.s32.totalorder %s18, 0
    %s21 = sadd.s32 %s20, 1
    %s22 = scalar_select %p19, %s20, %s21
    %p25 = pneg %p19
    %p26 = scmp.eq.s32.totalorder %s10, 3
    %p27 = por %p25, %p26
    %p28 = scmp.ne.s32.totalorder %s20, %s23
    %p29 = scmp.eq.s32.totalorder %s10, 0
    %p30 = por %p28, %p29
    %p31 = scmp.ne.s32.totalorder %s20, %s23
    %p32 = scmp.eq.s32.totalorder %s15, 3
    %p33 = por %p31, %p32
    %p34 = scmp.ne.s32.totalorder %s23, %s24
    %p35 = scmp.eq.s32.totalorder %s15, 0
    %p36 = por %p34, %p35
    %p37 = scmp.ne.s32.totalorder %s23, %s24
    %p38 = scmp.eq.s32.totalorder %s16, 3
    %p39 = por %p37, %p38
    %p41 = scmp.ne.s32.totalorder %s24, %s40
    %p42 = scmp.eq.s32.totalorder %s16, 0
    %p43 = por %p41, %p42
    %s45 = sadd.s32 %s44, 1
    %p48 = scmp.eq.s32.totalorder %s10, 3
    %p49 = scmp.ne.s32.totalorder %s44, %s46
    %p50 = scmp.eq.s32.totalorder %s10, 0
    %p51 = por %p49, %p50
    %p52 = scmp.ne.s32.totalorder %s44, %s46
    %p53 = scmp.eq.s32.totalorder %s15, 3
    %p54 = por %p52, %p53
    %p55 = scmp.ne.s32.totalorder %s46, %s47
    %p56 = scmp.eq.s32.totalorder %s15, 0
    %p57 = por %p55, %p56
    %p58 = scmp.ne.s32.totalorder %s46, %s47
    %p59 = scmp.eq.s32.totalorder %s16, 3
    %p60 = por %p58, %p59
    %p62 = scmp.ne.s32.totalorder %s47, %s61
    %p63 = scmp.eq.s32.totalorder %s16, 0
    %p64 = por %p62, %p63
    %s66 = sadd.s32 %s65, 1
    %p69 = scmp.eq.s32.totalorder %s10, 3
    %p70 = scmp.ne.s32.totalorder %s65, %s67
    %p71 = scmp.eq.s32.totalorder %s10, 0
    %p72 = por %p70, %p71
    %p73 = scmp.ne.s32.totalorder %s65, %s67
    %p74 = scmp.eq.s32.totalorder %s15, 3
    %p75 = por %p73, %p74
    %p76 = scmp.ne.s32.totalorder %s67, %s68
    %p77 = scmp.eq.s32.totalorder %s15, 0
    %p78 = por %p76, %p77
    %p79 = scmp.ne.s32.totalorder %s67, %s68
    %p80 = scmp.eq.s32.totalorder %s16, 3
    %p81 = por %p79, %p80
    %p83 = scmp.ne.s32.totalorder %s68, %s82
    %p84 = scmp.eq.s32.totalorder %s16, 0
    %p85 = por %p83, %p84
    %s87 = sadd.s32 %s86, 1
    %p90 = scmp.eq.s32.totalorder %s10, 3
    %p91 = scmp.ne.s32.totalorder %s86, %s88
    %p92 = scmp.eq.s32.totalorder %s10, 0
    %p93 = por %p91, %p92
    %p94 = scmp.ne.s32.totalorder %s86, %s88
    %p95 = scmp.eq.s32.totalorder %s15, 3
    %p96 = por %p94, %p95
    %p97 = scmp.ne.s32.totalorder %s88, %s89
    %p98 = scmp.eq.s32.totalorder %s15, 0
    %p99 = por %p97, %p98
    %p100 = scmp.ne.s32.totalorder %s88, %s89
    %p101 = scmp.eq.s32.totalorder %s16, 3
    %p102 = por %p100, %p101
    %p104 = scmp.ne.s32.totalorder %s89, %s103
    %p105 = scmp.eq.s32.totalorder %s16, 0
    %p106 = por %p104, %p105
    %s107 = ssub.s32 %s10, %s17
    %p108 = scmp.eq.s32.totalorder %s107, 0
    %s110 = sadd.s32 %s109, 1
    %s111 = scalar_select %p108, %s109, %s110
    %p114 = pneg %p108
    %p115 = scmp.eq.s32.totalorder %s10, 3
    %p116 = por %p114, %p115
    %p117 = scmp.ne.s32.totalorder %s109, %s112
    %p118 = scmp.eq.s32.totalorder %s10, 0
    %p119 = por %p117, %p118
    %p120 = scmp.ne.s32.totalorder %s109, %s112
    %p121 = scmp.eq.s32.totalorder %s15, 3
    %p122 = por %p120, %p121
    %p123 = scmp.ne.s32.totalorder %s112, %s113
    %p124 = scmp.eq.s32.totalorder %s15, 0
    %p125 = por %p123, %p124
    %p126 = scmp.ne.s32.totalorder %s112, %s113
    %p127 = scmp.eq.s32.totalorder %s16, 3
    %p128 = por %p126, %p127
    %p130 = scmp.ne.s32.totalorder %s113, %s129
    %p131 = scmp.eq.s32.totalorder %s16, 0
    %p132 = por %p130, %p131
    %p133 = scmp.le.s32.totalorder 1, %s10
    %p134 = scmp.lt.s32.totalorder %s10, 5
    %p135 = pnand %p133, %p134
    %p136 = pneg %p135
    // Predicated region
    $region9: #{swin_unet_forward.25} parent=5 // pred_check
      _
    $region10: #{swin_unet_forward.25} parent=5 // pred_check_branch
      %138 = sbr.rel (%p135) target = $region12
    $region11: #{swin_unet_forward.25} parent=5 // pred_region
      %s139 = ssub.s32 %s10, 1
      // Predicated region
      $region13: #{swin_unet_forward.25} parent=11 // pred_check
        %p140 = pneg %p57
      $region14: #{swin_unet_forward.25} parent=11 // pred_check_branch
        %142 = sbr.rel (%p140) target = $region16
      $region15: #{swin_unet_forward.25} parent=11 // pred_region
        _
      $region16: #{swin_unet_forward.25} parent=11 // pred_fallthru
        _
      // Predicated region
      $region17: #{swin_unet_forward.25} parent=11 // pred_check
        %p143 = pneg %p78
      $region18: #{swin_unet_forward.25} parent=11 // pred_check_branch
        %145 = sbr.rel (%p143) target = $region20
      $region19: #{swin_unet_forward.25} parent=11 // pred_region
        _
      $region20: #{swin_unet_forward.25} parent=11 // pred_fallthru
        _
      // Predicated region
      $region21: #{swin_unet_forward.25} parent=11 // pred_check
        %p146 = pneg %p99
      $region22: #{swin_unet_forward.25} parent=11 // pred_check_branch
        %148 = sbr.rel (%p146) target = $region24
      $region23: #{swin_unet_forward.25} parent=11 // pred_region
        _
      $region24: #{swin_unet_forward.25} parent=11 // pred_fallthru
        _
    $region12: #{swin_unet_forward.25} parent=5 // pred_fallthru
      _
    %p149 = scmp.lt.s32.totalorder %s10, 4
    // Predicated region
    $region25: #{swin_unet_forward.25} parent=5 // pred_check
      %p150 = pneg %p149
    $region26: #{swin_unet_forward.25} parent=5 // pred_check_branch
      %152 = sbr.rel (%p150) target = $region28
    $region27: #{swin_unet_forward.25} parent=5 // pred_region
      // Predicated region
      $region29: #{swin_unet_forward.25} parent=27 // pred_check
        %p153 = pneg %p30
      $region30: #{swin_unet_forward.25} parent=27 // pred_check_branch
        %155 = sbr.rel (%p153) target = $region32
      $region31: #{swin_unet_forward.25} parent=27 // pred_region
        %s156 = smul.u32 64, %s10
        %p157 = scmp.lt.s32.totalorder %s156, 255
        %s158 = scalar_select %p157, %s156, 255
        %s159 = smul.addr %s158, 8
        %s160 = scalar_lea.vmem %s0, %s159
        %s161 = smul.u32 64, %s10
      $region32: #{swin_unet_forward.25} parent=27 // pred_fallthru
        _
    $region28: #{swin_unet_forward.25} parent=5 // pred_fallthru
      _
    %p162 = scmp.le.s32.totalorder 1, %s10
    %p163 = scmp.lt.s32.totalorder %s10, 5
    %p164 = pnand %p162, %p163
    %p165 = pneg %p164
    // Predicated region
    $region33: #{swin_unet_forward.25} parent=5 // pred_check
      _
    $region34: #{swin_unet_forward.25} parent=5 // pred_check_branch
      %167 = sbr.rel (%p164) target = $region36
    $region35: #{swin_unet_forward.25} parent=5 // pred_region
      %s168 = ssub.s32 %s10, 1
      %s169 = smul.u32 64, %s15
      %p170 = scmp.lt.s32.totalorder %s169, 255
      %s171 = scalar_select %p170, %s169, 255
      %s172 = smul.addr %s171, 8
      %s173 = scalar_lea.vmem %s0, %s172
      %p174 = pneg %p36
      %p175 = pneg %p33
      %p176 = pneg %p57
      %p177 = pneg %p54
      %p178 = pneg %p78
      %p179 = pneg %p75
      %p180 = pneg %p99
      %p181 = pneg %p96
      %p182 = pneg %p125
      %p183 = pneg %p122
      %s184 = smul.u32 64, %s15
      %p185 = scmp.lt.s32.totalorder %s184, 255
      %s186 = scalar_select %p185, %s184, 255
      %s187 = smul.addr %s186, 8
      %s188 = scalar_lea.vmem %s4, %s187
      %s189 = smul.u32 64, %s15
      %p190 = scmp.lt.s32.totalorder %s189, 255
      %s191 = scalar_select %p190, %s189, 255
      %s192 = smul.addr %s191, 8
      %s193 = scalar_lea.vmem %s0, %s192
      %s194 = smul.u32 64, %s15
      %s195 = smul.u32 64, %s15
      %p196 = scmp.lt.s32.totalorder %s195, 255
      %s197 = scalar_select %p196, %s195, 255
      %s198 = smul.addr %s197, 8
      %s199 = scalar_lea.vmem %s4, %s198
      %s200 = smul.u32 64, %s15
      %v202 = vld [vmem:[%s193] sm:$0xff]
      %v203 = vld [vmem:[%s193 + $0x8] sm:$0xff]
      %v204 = vld [vmem:[%s193 + $0x10] sm:$0xff]
      %v205 = vld [vmem:[%s193 + $0x18] sm:$0xff]
      %v206 = vld [vmem:[%s193 + $0x20] sm:$0xff]
      %v207 = vld [vmem:[%s193 + $0x28] sm:$0xff]
      %v208 = vld [vmem:[%s193 + $0x30] sm:$0xff]
      %v209 = vld [vmem:[%s193 + $0x38] sm:$0xff]
      %v210 = vld [vmem:[%s193 + $0x40] sm:$0xff]
      %v211 = vld [vmem:[%s193 + $0x48] sm:$0xff]
      %v212 = vld [vmem:[%s193 + $0x50] sm:$0xff]
      %v213 = vld [vmem:[%s193 + $0x58] sm:$0xff]
      %v214 = vld [vmem:[%s193 + $0x60] sm:$0xff]
      %v215 = vld [vmem:[%s193 + $0x68] sm:$0xff]
      %v216 = vld [vmem:[%s193 + $0x70] sm:$0xff]
      %v217 = vld [vmem:[%s193 + $0x78] sm:$0xff]
      %v218 = vld [vmem:[%s193 + $0x80] sm:$0xff]
      %v219 = vld [vmem:[%s193 + $0x88] sm:$0xff]
      %v220 = vld [vmem:[%s193 + $0x90] sm:$0xff]
      %v221 = vld [vmem:[%s193 + $0x98] sm:$0xff]
      %v222 = vld [vmem:[%s193 + $0xa0] sm:$0xff]
      %v223 = vld [vmem:[%s193 + $0xa8] sm:$0xff]
      %v224 = vld [vmem:[%s193 + $0xb0] sm:$0xff]
      %v225 = vld [vmem:[%s193 + $0xb8] sm:$0xff]
      %v226 = vld [vmem:[%s193 + $0xc0] sm:$0xff]
      %v227 = vld [vmem:[%s193 + $0xc8] sm:$0xff]
      %v228 = vld [vmem:[%s193 + $0xd0] sm:$0xff]
      %v229 = vld [vmem:[%s193 + $0xd8] sm:$0xff]
      %v230 = vld [vmem:[%s193 + $0xe0] sm:$0xff]
      %v231 = vld [vmem:[%s193 + $0xe8] sm:$0xff]
      %v232 = vld [vmem:[%s193 + $0xf0] sm:$0xff]
      %v233 = vld [vmem:[%s193 + $0xf8] sm:$0xff]
      %v234 = vld [vmem:[%s193 + $0x100] sm:$0xff]
      %v235 = vld [vmem:[%s193 + $0x108] sm:$0xff]
      %v236 = vld [vmem:[%s193 + $0x110] sm:$0xff]
      %v237 = vld [vmem:[%s193 + $0x118] sm:$0xff]
      %v238 = vld [vmem:[%s193 + $0x120] sm:$0xff]
      %v239 = vld [vmem:[%s193 + $0x128] sm:$0xff]
      %v240 = vld [vmem:[%s193 + $0x130] sm:$0xff]
      %v241 = vld [vmem:[%s193 + $0x138] sm:$0xff]
      %v242 = vld [vmem:[%s193 + $0x140] sm:$0xff]
      %v243 = vld [vmem:[%s193 + $0x148] sm:$0xff]
      %v244 = vld [vmem:[%s193 + $0x150] sm:$0xff]
      %v245 = vld [vmem:[%s193 + $0x158] sm:$0xff]
      %v246 = vld [vmem:[%s193 + $0x160] sm:$0xff]
      %v247 = vld [vmem:[%s193 + $0x168] sm:$0xff]
      %v248 = vld [vmem:[%s193 + $0x170] sm:$0xff]
      %v249 = vld [vmem:[%s193 + $0x178] sm:$0xff]
      %v250 = vld [vmem:[%s193 + $0x180] sm:$0xff]
      %v251 = vld [vmem:[%s193 + $0x188] sm:$0xff]
      %v252 = vld [vmem:[%s193 + $0x190] sm:$0xff]
      %v253 = vld [vmem:[%s193 + $0x198] sm:$0xff]
      %v254 = vld [vmem:[%s193 + $0x1a0] sm:$0xff]
      %v255 = vld [vmem:[%s193 + $0x1a8] sm:$0xff]
      %v256 = vld [vmem:[%s193 + $0x1b0] sm:$0xff]
      %v257 = vld [vmem:[%s193 + $0x1b8] sm:$0xff]
      %v258 = vld [vmem:[%s193 + $0x1c0] sm:$0xff]
      %v259 = vld [vmem:[%s193 + $0x1c8] sm:$0xff]
      %v260 = vld [vmem:[%s193 + $0x1d0] sm:$0xff]
      %v261 = vld [vmem:[%s193 + $0x1d8] sm:$0xff]
      %v262 = vld [vmem:[%s193 + $0x1e0] sm:$0xff]
      %v263 = vld [vmem:[%s193 + $0x1e8] sm:$0xff]
      %v264 = vld [vmem:[%s193 + $0x1f0] sm:$0xff]
      %v265 = vld [vmem:[%s193 + $0x1f8] sm:$0xff]
      %v266 = vld [vmem:[%s1] sm:$0x1]
      %v267 = vld [vmem:[%s2] sm:$0x1]
      %vm268 = vcmask 261120
      %v269 = vsel %vm268, %v202, 0.0
      %270 = vadd.xlane.f32.xlu0 %v269
      %v271 = vpop.xlane.xlu0 %270
      %v272 = vsel %vm268, %v203, 0.0
      %273 = vadd.xlane.f32.xlu0 %v272
      %v274 = vpop.xlane.xlu0 %273
      %v275 = vsel %vm268, %v204, 0.0
      %276 = vadd.xlane.f32.xlu0 %v275
      %v277 = vpop.xlane.xlu0 %276
      %v278 = vsel %vm268, %v205, 0.0
      %279 = vadd.xlane.f32.xlu0 %v278
      %v280 = vpop.xlane.xlu0 %279
      %v281 = vsel %vm268, %v206, 0.0
      %282 = vadd.xlane.f32.xlu0 %v281
      %v283 = vpop.xlane.xlu0 %282
      %v284 = vsel %vm268, %v207, 0.0
      %285 = vadd.xlane.f32.xlu0 %v284
      %v286 = vpop.xlane.xlu0 %285
      %v287 = vsel %vm268, %v208, 0.0
      %288 = vadd.xlane.f32.xlu0 %v287
      %v289 = vpop.xlane.xlu0 %288
      %v290 = vsel %vm268, %v209, 0.0
      %291 = vadd.xlane.f32.xlu0 %v290
      %v292 = vpop.xlane.xlu0 %291
      %v293 = vsel %vm268, %v210, 0.0
      %294 = vadd.xlane.f32.xlu0 %v293
      %v295 = vpop.xlane.xlu0 %294
      %v296 = vsel %vm268, %v211, 0.0
      %297 = vadd.xlane.f32.xlu0 %v296
      %v298 = vpop.xlane.xlu0 %297
      %v299 = vsel %vm268, %v212, 0.0
      %300 = vadd.xlane.f32.xlu0 %v299
      %v301 = vpop.xlane.xlu0 %300
      %v302 = vsel %vm268, %v213, 0.0
      %303 = vadd.xlane.f32.xlu0 %v302
      %v304 = vpop.xlane.xlu0 %303
      %v305 = vsel %vm268, %v214, 0.0
      %306 = vadd.xlane.f32.xlu0 %v305
      %v307 = vpop.xlane.xlu0 %306
      %v308 = vsel %vm268, %v215, 0.0
      %309 = vadd.xlane.f32.xlu0 %v308
      %v310 = vpop.xlane.xlu0 %309
      %v311 = vsel %vm268, %v216, 0.0
      %312 = vadd.xlane.f32.xlu0 %v311
      %v313 = vpop.xlane.xlu0 %312
      %v314 = vsel %vm268, %v217, 0.0
      %315 = vadd.xlane.f32.xlu0 %v314
      %v316 = vpop.xlane.xlu0 %315
      %v317 = vsel %vm268, %v218, 0.0
      %318 = vadd.xlane.f32.xlu0 %v317
      %v319 = vpop.xlane.xlu0 %318
      %v320 = vsel %vm268, %v219, 0.0
      %321 = vadd.xlane.f32.xlu0 %v320
      %v322 = vpop.xlane.xlu0 %321
      %v323 = vsel %vm268, %v220, 0.0
      %324 = vadd.xlane.f32.xlu0 %v323
      %v325 = vpop.xlane.xlu0 %324
      %v326 = vsel %vm268, %v221, 0.0
      %327 = vadd.xlane.f32.xlu0 %v326
      %v328 = vpop.xlane.xlu0 %327
      %v329 = vsel %vm268, %v222, 0.0
      %330 = vadd.xlane.f32.xlu0 %v329
      %v331 = vpop.xlane.xlu0 %330
      %v332 = vsel %vm268, %v223, 0.0
      %333 = vadd.xlane.f32.xlu0 %v332
      %v334 = vpop.xlane.xlu0 %333
      %v335 = vsel %vm268, %v224, 0.0
      %336 = vadd.xlane.f32.xlu0 %v335
      %v337 = vpop.xlane.xlu0 %336
      %v338 = vsel %vm268, %v225, 0.0
      %339 = vadd.xlane.f32.xlu0 %v338
      %v340 = vpop.xlane.xlu0 %339
      %v341 = vsel %vm268, %v226, 0.0
      %342 = vadd.xlane.f32.xlu0 %v341
      %v343 = vpop.xlane.xlu0 %342
      %v344 = vsel %vm268, %v227, 0.0
      %345 = vadd.xlane.f32.xlu0 %v344
      %v346 = vpop.xlane.xlu0 %345
      %v347 = vsel %vm268, %v228, 0.0
      %348 = vadd.xlane.f32.xlu0 %v347
      %v349 = vpop.xlane.xlu0 %348
      %v350 = vsel %vm268, %v229, 0.0
      %351 = vadd.xlane.f32.xlu0 %v350
      %v352 = vpop.xlane.xlu0 %351
      %v353 = vsel %vm268, %v230, 0.0
      %354 = vadd.xlane.f32.xlu0 %v353
      %v355 = vpop.xlane.xlu0 %354
      %v356 = vsel %vm268, %v231, 0.0
      %357 = vadd.xlane.f32.xlu0 %v356
      %v358 = vpop.xlane.xlu0 %357
      %v359 = vsel %vm268, %v232, 0.0
      %360 = vadd.xlane.f32.xlu0 %v359
      %v361 = vpop.xlane.xlu0 %360
      %v362 = vsel %vm268, %v233, 0.0
      %363 = vadd.xlane.f32.xlu0 %v362
      %v364 = vpop.xlane.xlu0 %363
      %v365 = vsel %vm268, %v234, 0.0
      %366 = vadd.xlane.f32.xlu0 %v365
      %v367 = vpop.xlane.xlu0 %366
      %v368 = vsel %vm268, %v235, 0.0
      %369 = vadd.xlane.f32.xlu0 %v368
      %v370 = vpop.xlane.xlu0 %369
      %v371 = vsel %vm268, %v236, 0.0
      %372 = vadd.xlane.f32.xlu0 %v371
      %v373 = vpop.xlane.xlu0 %372
      %v374 = vsel %vm268, %v237, 0.0
      %375 = vadd.xlane.f32.xlu0 %v374
      %v376 = vpop.xlane.xlu0 %375
      %v377 = vsel %vm268, %v238, 0.0
      %378 = vadd.xlane.f32.xlu0 %v377
      %v379 = vpop.xlane.xlu0 %378
      %v380 = vsel %vm268, %v239, 0.0
      %381 = vadd.xlane.f32.xlu0 %v380
      %v382 = vpop.xlane.xlu0 %381
      %v383 = vsel %vm268, %v240, 0.0
      %384 = vadd.xlane.f32.xlu0 %v383
      %v385 = vpop.xlane.xlu0 %384
      %v386 = vsel %vm268, %v241, 0.0
      %387 = vadd.xlane.f32.xlu0 %v386
      %v388 = vpop.xlane.xlu0 %387
      %v389 = vsel %vm268, %v242, 0.0
      %390 = vadd.xlane.f32.xlu0 %v389
      %v391 = vpop.xlane.xlu0 %390
      %v392 = vsel %vm268, %v243, 0.0
      %393 = vadd.xlane.f32.xlu0 %v392
      %v394 = vpop.xlane.xlu0 %393
      %v395 = vsel %vm268, %v244, 0.0
      %396 = vadd.xlane.f32.xlu0 %v395
      %v397 = vpop.xlane.xlu0 %396
      %v398 = vsel %vm268, %v245, 0.0
      %399 = vadd.xlane.f32.xlu0 %v398
      %v400 = vpop.xlane.xlu0 %399
      %v401 = vsel %vm268, %v246, 0.0
      %402 = vadd.xlane.f32.xlu0 %v401
      %v403 = vpop.xlane.xlu0 %402
      %v404 = vsel %vm268, %v247, 0.0
      %405 = vadd.xlane.f32.xlu0 %v404
      %v406 = vpop.xlane.xlu0 %405
      %v407 = vsel %vm268, %v248, 0.0
      %408 = vadd.xlane.f32.xlu0 %v407
      %v409 = vpop.xlane.xlu0 %408
      %v410 = vsel %vm268, %v249, 0.0
      %411 = vadd.xlane.f32.xlu0 %v410
      %v412 = vpop.xlane.xlu0 %411
      %v413 = vsel %vm268, %v250, 0.0
      %414 = vadd.xlane.f32.xlu0 %v413
      %v415 = vpop.xlane.xlu0 %414
      %v416 = vsel %vm268, %v251, 0.0
      %417 = vadd.xlane.f32.xlu0 %v416
      %v418 = vpop.xlane.xlu0 %417
      %v419 = vsel %vm268, %v252, 0.0
      %420 = vadd.xlane.f32.xlu0 %v419
      %v421 = vpop.xlane.xlu0 %420
      %v422 = vsel %vm268, %v253, 0.0
      %423 = vadd.xlane.f32.xlu0 %v422
      %v424 = vpop.xlane.xlu0 %423
      %v425 = vsel %vm268, %v254, 0.0
      %426 = vadd.xlane.f32.xlu0 %v425
      %v427 = vpop.xlane.xlu0 %426
      %v428 = vsel %vm268, %v255, 0.0
      %429 = vadd.xlane.f32.xlu0 %v428
      %v430 = vpop.xlane.xlu0 %429
      %v431 = vsel %vm268, %v256, 0.0
      %432 = vadd.xlane.f32.xlu0 %v431
      %v433 = vpop.xlane.xlu0 %432
      %v434 = vsel %vm268, %v257, 0.0
      %435 = vadd.xlane.f32.xlu0 %v434
      %v436 = vpop.xlane.xlu0 %435
      %v437 = vsel %vm268, %v258, 0.0
      %438 = vadd.xlane.f32.xlu0 %v437
      %v439 = vpop.xlane.xlu0 %438
      %v440 = vsel %vm268, %v259, 0.0
      %441 = vadd.xlane.f32.xlu0 %v440
      %v442 = vpop.xlane.xlu0 %441
      %v443 = vsel %vm268, %v260, 0.0
      %444 = vadd.xlane.f32.xlu0 %v443
      %v445 = vpop.xlane.xlu0 %444
      %v446 = vsel %vm268, %v261, 0.0
      %447 = vadd.xlane.f32.xlu0 %v446
      %v448 = vpop.xlane.xlu0 %447
      %v449 = vsel %vm268, %v262, 0.0
      %450 = vadd.xlane.f32.xlu0 %v449
      %v451 = vpop.xlane.xlu0 %450
      %v452 = vsel %vm268, %v263, 0.0
      %453 = vadd.xlane.f32.xlu0 %v452
      %v454 = vpop.xlane.xlu0 %453
      %v455 = vsel %vm268, %v264, 0.0
      %456 = vadd.xlane.f32.xlu0 %v455
      %v457 = vpop.xlane.xlu0 %456
      %v458 = vsel %vm268, %v265, 0.0
      %459 = vadd.xlane.f32.xlu0 %v458
      %v460 = vpop.xlane.xlu0 %459
      %v461 = vrcp.pop 32.0
      %v462 = vmul.f32 %v271, %v461
      %v463 = vmul.f32 %v274, %v461
      %v464 = vmul.f32 %v277, %v461
      %v465 = vmul.f32 %v280, %v461
      %v466 = vmul.f32 %v283, %v461
      %v467 = vmul.f32 %v286, %v461
      %v468 = vmul.f32 %v289, %v461
      %v469 = vmul.f32 %v292, %v461
      %v470 = vmul.f32 %v295, %v461
      %v471 = vmul.f32 %v298, %v461
      %v472 = vmul.f32 %v301, %v461
      %v473 = vmul.f32 %v304, %v461
      %v474 = vmul.f32 %v307, %v461
      %v475 = vmul.f32 %v310, %v461
      %v476 = vmul.f32 %v313, %v461
      %v477 = vmul.f32 %v316, %v461
      %v478 = vmul.f32 %v319, %v461
      %v479 = vmul.f32 %v322, %v461
      %v480 = vmul.f32 %v325, %v461
      %v481 = vmul.f32 %v328, %v461
      %v482 = vmul.f32 %v331, %v461
      %v483 = vmul.f32 %v334, %v461
      %v484 = vmul.f32 %v337, %v461
      %v485 = vmul.f32 %v340, %v461
      %v486 = vmul.f32 %v343, %v461
      %v487 = vmul.f32 %v346, %v461
      %v488 = vmul.f32 %v349, %v461
      %v489 = vmul.f32 %v352, %v461
      %v490 = vmul.f32 %v355, %v461
      %v491 = vmul.f32 %v358, %v461
      %v492 = vmul.f32 %v361, %v461
      %v493 = vmul.f32 %v364, %v461
      %v494 = vmul.f32 %v367, %v461
      %v495 = vmul.f32 %v370, %v461
      %v496 = vmul.f32 %v373, %v461
      %v497 = vmul.f32 %v376, %v461
      %v498 = vmul.f32 %v379, %v461
      %v499 = vmul.f32 %v382, %v461
      %v500 = vmul.f32 %v385, %v461
      %v501 = vmul.f32 %v388, %v461
      %v502 = vmul.f32 %v391, %v461
      %v503 = vmul.f32 %v394, %v461
      %v504 = vmul.f32 %v397, %v461
      %v505 = vmul.f32 %v400, %v461
      %v506 = vmul.f32 %v403, %v461
      %v507 = vmul.f32 %v406, %v461
      %v508 = vmul.f32 %v409, %v461
      %v509 = vmul.f32 %v412, %v461
      %v510 = vmul.f32 %v415, %v461
      %v511 = vmul.f32 %v418, %v461
      %v512 = vmul.f32 %v421, %v461
      %v513 = vmul.f32 %v424, %v461
      %v514 = vmul.f32 %v427, %v461
      %v515 = vmul.f32 %v430, %v461
      %v516 = vmul.f32 %v433, %v461
      %v517 = vmul.f32 %v436, %v461
      %v518 = vmul.f32 %v439, %v461
      %v519 = vmul.f32 %v442, %v461
      %v520 = vmul.f32 %v445, %v461
      %v521 = vmul.f32 %v448, %v461
      %v522 = vmul.f32 %v451, %v461
      %v523 = vmul.f32 %v454, %v461
      %v524 = vmul.f32 %v457, %v461
      %v525 = vmul.f32 %v460, %v461
      %v526 = vsub.f32 %v202, %v462
      %v527 = vsub.f32 %v203, %v463
      %v528 = vsub.f32 %v204, %v464
      %v529 = vsub.f32 %v205, %v465
      %v530 = vsub.f32 %v206, %v466
      %v531 = vsub.f32 %v207, %v467
      %v532 = vsub.f32 %v208, %v468
      %v533 = vsub.f32 %v209, %v469
      %v534 = vsub.f32 %v210, %v470
      %v535 = vsub.f32 %v211, %v471
      %v536 = vsub.f32 %v212, %v472
      %v537 = vsub.f32 %v213, %v473
      %v538 = vsub.f32 %v214, %v474
      %v539 = vsub.f32 %v215, %v475
      %v540 = vsub.f32 %v216, %v476
      %v541 = vsub.f32 %v217, %v477
      %v542 = vsub.f32 %v218, %v478
      %v543 = vsub.f32 %v219, %v479
      %v544 = vsub.f32 %v220, %v480
      %v545 = vsub.f32 %v221, %v481
      %v546 = vsub.f32 %v222, %v482
      %v547 = vsub.f32 %v223, %v483
      %v548 = vsub.f32 %v224, %v484
      %v549 = vsub.f32 %v225, %v485
      %v550 = vsub.f32 %v226, %v486
      %v551 = vsub.f32 %v227, %v487
      %v552 = vsub.f32 %v228, %v488
      %v553 = vsub.f32 %v229, %v489
      %v554 = vsub.f32 %v230, %v490
      %v555 = vsub.f32 %v231, %v491
      %v556 = vsub.f32 %v232, %v492
      %v557 = vsub.f32 %v233, %v493
      %v558 = vsub.f32 %v234, %v494
      %v559 = vsub.f32 %v235, %v495
      %v560 = vsub.f32 %v236, %v496
      %v561 = vsub.f32 %v237, %v497
      %v562 = vsub.f32 %v238, %v498
      %v563 = vsub.f32 %v239, %v499
      %v564 = vsub.f32 %v240, %v500
      %v565 = vsub.f32 %v241, %v501
      %v566 = vsub.f32 %v242, %v502
      %v567 = vsub.f32 %v243, %v503
      %v568 = vsub.f32 %v244, %v504
      %v569 = vsub.f32 %v245, %v505
      %v570 = vsub.f32 %v246, %v506
      %v571 = vsub.f32 %v247, %v507
      %v572 = vsub.f32 %v248, %v508
      %v573 = vsub.f32 %v249, %v509
      %v574 = vsub.f32 %v250, %v510
      %v575 = vsub.f32 %v251, %v511
      %v576 = vsub.f32 %v252, %v512
      %v577 = vsub.f32 %v253, %v513
      %v578 = vsub.f32 %v254, %v514
      %v579 = vsub.f32 %v255, %v515
      %v580 = vsub.f32 %v256, %v516
      %v581 = vsub.f32 %v257, %v517
      %v582 = vsub.f32 %v258, %v518
      %v583 = vsub.f32 %v259, %v519
      %v584 = vsub.f32 %v260, %v520
      %v585 = vsub.f32 %v261, %v521
      %v586 = vsub.f32 %v262, %v522
      %v587 = vsub.f32 %v263, %v523
      %v588 = vsub.f32 %v264, %v524
      %v589 = vsub.f32 %v265, %v525
      %v590 = vmul.f32 %v526, %v526
      %v591 = vmul.f32 %v527, %v527
      %v592 = vmul.f32 %v528, %v528
      %v593 = vmul.f32 %v529, %v529
      %v594 = vmul.f32 %v530, %v530
      %v595 = vmul.f32 %v531, %v531
      %v596 = vmul.f32 %v532, %v532
      %v597 = vmul.f32 %v533, %v533
      %v598 = vmul.f32 %v534, %v534
      %v599 = vmul.f32 %v535, %v535
      %v600 = vmul.f32 %v536, %v536
      %v601 = vmul.f32 %v537, %v537
      %v602 = vmul.f32 %v538, %v538
      %v603 = vmul.f32 %v539, %v539
      %v604 = vmul.f32 %v540, %v540
      %v605 = vmul.f32 %v541, %v541
      %v606 = vmul.f32 %v542, %v542
      %v607 = vmul.f32 %v543, %v543
      %v608 = vmul.f32 %v544, %v544
      %v609 = vmul.f32 %v545, %v545
      %v610 = vmul.f32 %v546, %v546
      %v611 = vmul.f32 %v547, %v547
      %v612 = vmul.f32 %v548, %v548
      %v613 = vmul.f32 %v549, %v549
      %v614 = vmul.f32 %v550, %v550
      %v615 = vmul.f32 %v551, %v551
      %v616 = vmul.f32 %v552, %v552
      %v617 = vmul.f32 %v553, %v553
      %v618 = vmul.f32 %v554, %v554
      %v619 = vmul.f32 %v555, %v555
      %v620 = vmul.f32 %v556, %v556
      %v621 = vmul.f32 %v557, %v557
      %v622 = vmul.f32 %v558, %v558
      %v623 = vmul.f32 %v559, %v559
      %v624 = vmul.f32 %v560, %v560
      %v625 = vmul.f32 %v561, %v561
      %v626 = vmul.f32 %v562, %v562
      %v627 = vmul.f32 %v563, %v563
      %v628 = vmul.f32 %v564, %v564
      %v629 = vmul.f32 %v565, %v565
      %v630 = vmul.f32 %v566, %v566
      %v631 = vmul.f32 %v567, %v567
      %v632 = vmul.f32 %v568, %v568
      %v633 = vmul.f32 %v569, %v569
      %v634 = vmul.f32 %v570, %v570
      %v635 = vmul.f32 %v571, %v571
      %v636 = vmul.f32 %v572, %v572
      %v637 = vmul.f32 %v573, %v573
      %v638 = vmul.f32 %v574, %v574
      %v639 = vmul.f32 %v575, %v575
      %v640 = vmul.f32 %v576, %v576
      %v641 = vmul.f32 %v577, %v577
      %v642 = vmul.f32 %v578, %v578
      %v643 = vmul.f32 %v579, %v579
      %v644 = vmul.f32 %v580, %v580
      %v645 = vmul.f32 %v581, %v581
      %v646 = vmul.f32 %v582, %v582
      %v647 = vmul.f32 %v583, %v583
      %v648 = vmul.f32 %v584, %v584
      %v649 = vmul.f32 %v585, %v585
      %v650 = vmul.f32 %v586, %v586
      %v651 = vmul.f32 %v587, %v587
      %v652 = vmul.f32 %v588, %v588
      %v653 = vmul.f32 %v589, %v589
      %v654 = vsel %vm268, %v590, 0.0
      %655 = vadd.xlane.f32.xlu0 %v654
      %v656 = vpop.xlane.xlu0 %655
      %v657 = vsel %vm268, %v591, 0.0
      %658 = vadd.xlane.f32.xlu0 %v657
      %v659 = vpop.xlane.xlu0 %658
      %v660 = vsel %vm268, %v592, 0.0
      %661 = vadd.xlane.f32.xlu0 %v660
      %v662 = vpop.xlane.xlu0 %661
      %v663 = vsel %vm268, %v593, 0.0
      %664 = vadd.xlane.f32.xlu0 %v663
      %v665 = vpop.xlane.xlu0 %664
      %v666 = vsel %vm268, %v594, 0.0
      %667 = vadd.xlane.f32.xlu0 %v666
      %v668 = vpop.xlane.xlu0 %667
      %v669 = vsel %vm268, %v595, 0.0
      %670 = vadd.xlane.f32.xlu0 %v669
      %v671 = vpop.xlane.xlu0 %670
      %v672 = vsel %vm268, %v596, 0.0
      %673 = vadd.xlane.f32.xlu0 %v672
      %v674 = vpop.xlane.xlu0 %673
      %v675 = vsel %vm268, %v597, 0.0
      %676 = vadd.xlane.f32.xlu0 %v675
      %v677 = vpop.xlane.xlu0 %676
      %v678 = vsel %vm268, %v598, 0.0
      %679 = vadd.xlane.f32.xlu0 %v678
      %v680 = vpop.xlane.xlu0 %679
      %v681 = vsel %vm268, %v599, 0.0
      %682 = vadd.xlane.f32.xlu0 %v681
      %v683 = vpop.xlane.xlu0 %682
      %v684 = vsel %vm268, %v600, 0.0
      %685 = vadd.xlane.f32.xlu0 %v684
      %v686 = vpop.xlane.xlu0 %685
      %v687 = vsel %vm268, %v601, 0.0
      %688 = vadd.xlane.f32.xlu0 %v687
      %v689 = vpop.xlane.xlu0 %688
      %v690 = vsel %vm268, %v602, 0.0
      %691 = vadd.xlane.f32.xlu0 %v690
      %v692 = vpop.xlane.xlu0 %691
      %v693 = vsel %vm268, %v603, 0.0
      %694 = vadd.xlane.f32.xlu0 %v693
      %v695 = vpop.xlane.xlu0 %694
      %v696 = vsel %vm268, %v604, 0.0
      %697 = vadd.xlane.f32.xlu0 %v696
      %v698 = vpop.xlane.xlu0 %697
      %v699 = vsel %vm268, %v605, 0.0
      %700 = vadd.xlane.f32.xlu0 %v699
      %v701 = vpop.xlane.xlu0 %700
      %v702 = vsel %vm268, %v606, 0.0
      %703 = vadd.xlane.f32.xlu0 %v702
      %v704 = vpop.xlane.xlu0 %703
      %v705 = vsel %vm268, %v607, 0.0
      %706 = vadd.xlane.f32.xlu0 %v705
      %v707 = vpop.xlane.xlu0 %706
      %v708 = vsel %vm268, %v608, 0.0
      %709 = vadd.xlane.f32.xlu0 %v708
      %v710 = vpop.xlane.xlu0 %709
      %v711 = vsel %vm268, %v609, 0.0
      %712 = vadd.xlane.f32.xlu0 %v711
      %v713 = vpop.xlane.xlu0 %712
      %v714 = vsel %vm268, %v610, 0.0
      %715 = vadd.xlane.f32.xlu0 %v714
      %v716 = vpop.xlane.xlu0 %715
      %v717 = vsel %vm268, %v611, 0.0
      %718 = vadd.xlane.f32.xlu0 %v717
      %v719 = vpop.xlane.xlu0 %718
      %v720 = vsel %vm268, %v612, 0.0
      %721 = vadd.xlane.f32.xlu0 %v720
      %v722 = vpop.xlane.xlu0 %721
      %v723 = vsel %vm268, %v613, 0.0
      %724 = vadd.xlane.f32.xlu0 %v723
      %v725 = vpop.xlane.xlu0 %724
      %v726 = vsel %vm268, %v614, 0.0
      %727 = vadd.xlane.f32.xlu0 %v726
      %v728 = vpop.xlane.xlu0 %727
      %v729 = vsel %vm268, %v615, 0.0
      %730 = vadd.xlane.f32.xlu0 %v729
      %v731 = vpop.xlane.xlu0 %730
      %v732 = vsel %vm268, %v616, 0.0
      %733 = vadd.xlane.f32.xlu0 %v732
      %v734 = vpop.xlane.xlu0 %733
      %v735 = vsel %vm268, %v617, 0.0
      %736 = vadd.xlane.f32.xlu0 %v735
      %v737 = vpop.xlane.xlu0 %736
      %v738 = vsel %vm268, %v618, 0.0
      %739 = vadd.xlane.f32.xlu0 %v738
      %v740 = vpop.xlane.xlu0 %739
      %v741 = vsel %vm268, %v619, 0.0
      %742 = vadd.xlane.f32.xlu0 %v741
      %v743 = vpop.xlane.xlu0 %742
      %v744 = vsel %vm268, %v620, 0.0
      %745 = vadd.xlane.f32.xlu0 %v744
      %v746 = vpop.xlane.xlu0 %745
      %v747 = vsel %vm268, %v621, 0.0
      %748 = vadd.xlane.f32.xlu0 %v747
      %v749 = vpop.xlane.xlu0 %748
      %v750 = vsel %vm268, %v622, 0.0
      %751 = vadd.xlane.f32.xlu0 %v750
      %v752 = vpop.xlane.xlu0 %751
      %v753 = vsel %vm268, %v623, 0.0
      %754 = vadd.xlane.f32.xlu0 %v753
      %v755 = vpop.xlane.xlu0 %754
      %v756 = vsel %vm268, %v624, 0.0
      %757 = vadd.xlane.f32.xlu0 %v756
      %v758 = vpop.xlane.xlu0 %757
      %v759 = vsel %vm268, %v625, 0.0
      %760 = vadd.xlane.f32.xlu0 %v759
      %v761 = vpop.xlane.xlu0 %760
      %v762 = vsel %vm268, %v626, 0.0
      %763 = vadd.xlane.f32.xlu0 %v762
      %v764 = vpop.xlane.xlu0 %763
      %v765 = vsel %vm268, %v627, 0.0
      %766 = vadd.xlane.f32.xlu0 %v765
      %v767 = vpop.xlane.xlu0 %766
      %v768 = vsel %vm268, %v628, 0.0
      %769 = vadd.xlane.f32.xlu0 %v768
      %v770 = vpop.xlane.xlu0 %769
      %v771 = vsel %vm268, %v629, 0.0
      %772 = vadd.xlane.f32.xlu0 %v771
      %v773 = vpop.xlane.xlu0 %772
      %v774 = vsel %vm268, %v630, 0.0
      %775 = vadd.xlane.f32.xlu0 %v774
      %v776 = vpop.xlane.xlu0 %775
      %v777 = vsel %vm268, %v631, 0.0
      %778 = vadd.xlane.f32.xlu0 %v777
      %v779 = vpop.xlane.xlu0 %778
      %v780 = vsel %vm268, %v632, 0.0
      %781 = vadd.xlane.f32.xlu0 %v780
      %v782 = vpop.xlane.xlu0 %781
      %v783 = vsel %vm268, %v633, 0.0
      %784 = vadd.xlane.f32.xlu0 %v783
      %v785 = vpop.xlane.xlu0 %784
      %v786 = vsel %vm268, %v634, 0.0
      %787 = vadd.xlane.f32.xlu0 %v786
      %v788 = vpop.xlane.xlu0 %787
      %v789 = vsel %vm268, %v635, 0.0
      %790 = vadd.xlane.f32.xlu0 %v789
      %v791 = vpop.xlane.xlu0 %790
      %v792 = vsel %vm268, %v636, 0.0
      %793 = vadd.xlane.f32.xlu0 %v792
      %v794 = vpop.xlane.xlu0 %793
      %v795 = vsel %vm268, %v637, 0.0
      %796 = vadd.xlane.f32.xlu0 %v795
      %v797 = vpop.xlane.xlu0 %796
      %v798 = vsel %vm268, %v638, 0.0
      %799 = vadd.xlane.f32.xlu0 %v798
      %v800 = vpop.xlane.xlu0 %799
      %v801 = vsel %vm268, %v639, 0.0
      %802 = vadd.xlane.f32.xlu0 %v801
      %v803 = vpop.xlane.xlu0 %802
      %v804 = vsel %vm268, %v640, 0.0
      %805 = vadd.xlane.f32.xlu0 %v804
      %v806 = vpop.xlane.xlu0 %805
      %v807 = vsel %vm268, %v641, 0.0
      %808 = vadd.xlane.f32.xlu0 %v807
      %v809 = vpop.xlane.xlu0 %808
      %v810 = vsel %vm268, %v642, 0.0
      %811 = vadd.xlane.f32.xlu0 %v810
      %v812 = vpop.xlane.xlu0 %811
      %v813 = vsel %vm268, %v643, 0.0
      %814 = vadd.xlane.f32.xlu0 %v813
      %v815 = vpop.xlane.xlu0 %814
      %v816 = vsel %vm268, %v644, 0.0
      %817 = vadd.xlane.f32.xlu0 %v816
      %v818 = vpop.xlane.xlu0 %817
      %v819 = vsel %vm268, %v645, 0.0
      %820 = vadd.xlane.f32.xlu0 %v819
      %v821 = vpop.xlane.xlu0 %820
      %v822 = vsel %vm268, %v646, 0.0
      %823 = vadd.xlane.f32.xlu0 %v822
      %v824 = vpop.xlane.xlu0 %823
      %v825 = vsel %vm268, %v647, 0.0
      %826 = vadd.xlane.f32.xlu0 %v825
      %v827 = vpop.xlane.xlu0 %826
      %v828 = vsel %vm268, %v648, 0.0
      %829 = vadd.xlane.f32.xlu0 %v828
      %v830 = vpop.xlane.xlu0 %829
      %v831 = vsel %vm268, %v649, 0.0
      %832 = vadd.xlane.f32.xlu0 %v831
      %v833 = vpop.xlane.xlu0 %832
      %v834 = vsel %vm268, %v650, 0.0
      %835 = vadd.xlane.f32.xlu0 %v834
      %v836 = vpop.xlane.xlu0 %835
      %v837 = vsel %vm268, %v651, 0.0
      %838 = vadd.xlane.f32.xlu0 %v837
      %v839 = vpop.xlane.xlu0 %838
      %v840 = vsel %vm268, %v652, 0.0
      %841 = vadd.xlane.f32.xlu0 %v840
      %v842 = vpop.xlane.xlu0 %841
      %v843 = vsel %vm268, %v653, 0.0
      %844 = vadd.xlane.f32.xlu0 %v843
      %v845 = vpop.xlane.xlu0 %844
      %v846 = vmul.f32 %v656, %v461
      %v847 = vmul.f32 %v659, %v461
      %v848 = vmul.f32 %v662, %v461
      %v849 = vmul.f32 %v665, %v461
      %v850 = vmul.f32 %v668, %v461
      %v851 = vmul.f32 %v671, %v461
      %v852 = vmul.f32 %v674, %v461
      %v853 = vmul.f32 %v677, %v461
      %v854 = vmul.f32 %v680, %v461
      %v855 = vmul.f32 %v683, %v461
      %v856 = vmul.f32 %v686, %v461
      %v857 = vmul.f32 %v689, %v461
      %v858 = vmul.f32 %v692, %v461
      %v859 = vmul.f32 %v695, %v461
      %v860 = vmul.f32 %v698, %v461
      %v861 = vmul.f32 %v701, %v461
      %v862 = vmul.f32 %v704, %v461
      %v863 = vmul.f32 %v707, %v461
      %v864 = vmul.f32 %v710, %v461
      %v865 = vmul.f32 %v713, %v461
      %v866 = vmul.f32 %v716, %v461
      %v867 = vmul.f32 %v719, %v461
      %v868 = vmul.f32 %v722, %v461
      %v869 = vmul.f32 %v725, %v461
      %v870 = vmul.f32 %v728, %v461
      %v871 = vmul.f32 %v731, %v461
      %v872 = vmul.f32 %v734, %v461
      %v873 = vmul.f32 %v737, %v461
      %v874 = vmul.f32 %v740, %v461
      %v875 = vmul.f32 %v743, %v461
      %v876 = vmul.f32 %v746, %v461
      %v877 = vmul.f32 %v749, %v461
      %v878 = vmul.f32 %v752, %v461
      %v879 = vmul.f32 %v755, %v461
      %v880 = vmul.f32 %v758, %v461
      %v881 = vmul.f32 %v761, %v461
      %v882 = vmul.f32 %v764, %v461
      %v883 = vmul.f32 %v767, %v461
      %v884 = vmul.f32 %v770, %v461
      %v885 = vmul.f32 %v773, %v461
      %v886 = vmul.f32 %v776, %v461
      %v887 = vmul.f32 %v779, %v461
      %v888 = vmul.f32 %v782, %v461
      %v889 = vmul.f32 %v785, %v461
      %v890 = vmul.f32 %v788, %v461
      %v891 = vmul.f32 %v791, %v461
      %v892 = vmul.f32 %v794, %v461
      %v893 = vmul.f32 %v797, %v461
      %v894 = vmul.f32 %v800, %v461
      %v895 = vmul.f32 %v803, %v461
      %v896 = vmul.f32 %v806, %v461
      %v897 = vmul.f32 %v809, %v461
      %v898 = vmul.f32 %v812, %v461
      %v899 = vmul.f32 %v815, %v461
      %v900 = vmul.f32 %v818, %v461
      %v901 = vmul.f32 %v821, %v461
      %v902 = vmul.f32 %v824, %v461
      %v903 = vmul.f32 %v827, %v461
      %v904 = vmul.f32 %v830, %v461
      %v905 = vmul.f32 %v833, %v461
      %v906 = vmul.f32 %v836, %v461
      %v907 = vmul.f32 %v839, %v461
      %v908 = vmul.f32 %v842, %v461
      %v909 = vmul.f32 %v845, %v461
      %v910 = vadd.f32 %v846, 1e-05
      %v911 = vadd.f32 %v847, 1e-05
      %v912 = vadd.f32 %v848, 1e-05
      %v913 = vadd.f32 %v849, 1e-05
      %v914 = vadd.f32 %v850, 1e-05
      %v915 = vadd.f32 %v851, 1e-05
      %v916 = vadd.f32 %v852, 1e-05
      %v917 = vadd.f32 %v853, 1e-05
      %v918 = vadd.f32 %v854, 1e-05
      %v919 = vadd.f32 %v855, 1e-05
      %v920 = vadd.f32 %v856, 1e-05
      %v921 = vadd.f32 %v857, 1e-05
      %v922 = vadd.f32 %v858, 1e-05
      %v923 = vadd.f32 %v859, 1e-05
      %v924 = vadd.f32 %v860, 1e-05
      %v925 = vadd.f32 %v861, 1e-05
      %v926 = vadd.f32 %v862, 1e-05
      %v927 = vadd.f32 %v863, 1e-05
      %v928 = vadd.f32 %v864, 1e-05
      %v929 = vadd.f32 %v865, 1e-05
      %v930 = vadd.f32 %v866, 1e-05
      %v931 = vadd.f32 %v867, 1e-05
      %v932 = vadd.f32 %v868, 1e-05
      %v933 = vadd.f32 %v869, 1e-05
      %v934 = vadd.f32 %v870, 1e-05
      %v935 = vadd.f32 %v871, 1e-05
      %v936 = vadd.f32 %v872, 1e-05
      %v937 = vadd.f32 %v873, 1e-05
      %v938 = vadd.f32 %v874, 1e-05
      %v939 = vadd.f32 %v875, 1e-05
      %v940 = vadd.f32 %v876, 1e-05
      %v941 = vadd.f32 %v877, 1e-05
      %v942 = vadd.f32 %v878, 1e-05
      %v943 = vadd.f32 %v879, 1e-05
      %v944 = vadd.f32 %v880, 1e-05
      %v945 = vadd.f32 %v881, 1e-05
      %v946 = vadd.f32 %v882, 1e-05
      %v947 = vadd.f32 %v883, 1e-05
      %v948 = vadd.f32 %v884, 1e-05
      %v949 = vadd.f32 %v885, 1e-05
      %v950 = vadd.f32 %v886, 1e-05
      %v951 = vadd.f32 %v887, 1e-05
      %v952 = vadd.f32 %v888, 1e-05
      %v953 = vadd.f32 %v889, 1e-05
      %v954 = vadd.f32 %v890, 1e-05
      %v955 = vadd.f32 %v891, 1e-05
      %v956 = vadd.f32 %v892, 1e-05
      %v957 = vadd.f32 %v893, 1e-05
      %v958 = vadd.f32 %v894, 1e-05
      %v959 = vadd.f32 %v895, 1e-05
      %v960 = vadd.f32 %v896, 1e-05
      %v961 = vadd.f32 %v897, 1e-05
      %v962 = vadd.f32 %v898, 1e-05
      %v963 = vadd.f32 %v899, 1e-05
      %v964 = vadd.f32 %v900, 1e-05
      %v965 = vadd.f32 %v901, 1e-05
      %v966 = vadd.f32 %v902, 1e-05
      %v967 = vadd.f32 %v903, 1e-05
      %v968 = vadd.f32 %v904, 1e-05
      %v969 = vadd.f32 %v905, 1e-05
      %v970 = vadd.f32 %v906, 1e-05
      %v971 = vadd.f32 %v907, 1e-05
      %v972 = vadd.f32 %v908, 1e-05
      %v973 = vadd.f32 %v909, 1e-05
      %v974 = vrsqrt.pop %v910
      %v975 = vrsqrt.pop %v911
      %v976 = vrsqrt.pop %v912
      %v977 = vrsqrt.pop %v913
      %v978 = vrsqrt.pop %v914
      %v979 = vrsqrt.pop %v915
      %v980 = vrsqrt.pop %v916
      %v981 = vrsqrt.pop %v917
      %v982 = vrsqrt.pop %v918
      %v983 = vrsqrt.pop %v919
      %v984 = vrsqrt.pop %v920
      %v985 = vrsqrt.pop %v921
      %v986 = vrsqrt.pop %v922
      %v987 = vrsqrt.pop %v923
      %v988 = vrsqrt.pop %v924
      %v989 = vrsqrt.pop %v925
      %v990 = vrsqrt.pop %v926
      %v991 = vrsqrt.pop %v927
      %v992 = vrsqrt.pop %v928
      %v993 = vrsqrt.pop %v929
      %v994 = vrsqrt.pop %v930
      %v995 = vrsqrt.pop %v931
      %v996 = vrsqrt.pop %v932
      %v997 = vrsqrt.pop %v933
      %v998 = vrsqrt.pop %v934
      %v999 = vrsqrt.pop %v935
      %v1000 = vrsqrt.pop %v936
      %v1001 = vrsqrt.pop %v937
      %v1002 = vrsqrt.pop %v938
      %v1003 = vrsqrt.pop %v939
      %v1004 = vrsqrt.pop %v940
      %v1005 = vrsqrt.pop %v941
      %v1006 = vrsqrt.pop %v942
      %v1007 = vrsqrt.pop %v943
      %v1008 = vrsqrt.pop %v944
      %v1009 = vrsqrt.pop %v945
      %v1010 = vrsqrt.pop %v946
      %v1011 = vrsqrt.pop %v947
      %v1012 = vrsqrt.pop %v948
      %v1013 = vrsqrt.pop %v949
      %v1014 = vrsqrt.pop %v950
      %v1015 = vrsqrt.pop %v951
      %v1016 = vrsqrt.pop %v952
      %v1017 = vrsqrt.pop %v953
      %v1018 = vrsqrt.pop %v954
      %v1019 = vrsqrt.pop %v955
      %v1020 = vrsqrt.pop %v956
      %v1021 = vrsqrt.pop %v957
      %v1022 = vrsqrt.pop %v958
      %v1023 = vrsqrt.pop %v959
      %v1024 = vrsqrt.pop %v960
      %v1025 = vrsqrt.pop %v961
      %v1026 = vrsqrt.pop %v962
      %v1027 = vrsqrt.pop %v963
      %v1028 = vrsqrt.pop %v964
      %v1029 = vrsqrt.pop %v965
      %v1030 = vrsqrt.pop %v966
      %v1031 = vrsqrt.pop %v967
      %v1032 = vrsqrt.pop %v968
      %v1033 = vrsqrt.pop %v969
      %v1034 = vrsqrt.pop %v970
      %v1035 = vrsqrt.pop %v971
      %v1036 = vrsqrt.pop %v972
      %v1037 = vrsqrt.pop %v973
      %v1038 = vmul.f32 %v526, %v974
      %v1039 = vmul.f32 %v527, %v975
      %v1040 = vmul.f32 %v528, %v976
      %v1041 = vmul.f32 %v529, %v977
      %v1042 = vmul.f32 %v530, %v978
      %v1043 = vmul.f32 %v531, %v979
      %v1044 = vmul.f32 %v532, %v980
      %v1045 = vmul.f32 %v533, %v981
      %v1046 = vmul.f32 %v534, %v982
      %v1047 = vmul.f32 %v535, %v983
      %v1048 = vmul.f32 %v536, %v984
      %v1049 = vmul.f32 %v537, %v985
      %v1050 = vmul.f32 %v538, %v986
      %v1051 = vmul.f32 %v539, %v987
      %v1052 = vmul.f32 %v540, %v988
      %v1053 = vmul.f32 %v541, %v989
      %v1054 = vmul.f32 %v542, %v990
      %v1055 = vmul.f32 %v543, %v991
      %v1056 = vmul.f32 %v544, %v992
      %v1057 = vmul.f32 %v545, %v993
      %v1058 = vmul.f32 %v546, %v994
      %v1059 = vmul.f32 %v547, %v995
      %v1060 = vmul.f32 %v548, %v996
      %v1061 = vmul.f32 %v549, %v997
      %v1062 = vmul.f32 %v550, %v998
      %v1063 = vmul.f32 %v551, %v999
      %v1064 = vmul.f32 %v552, %v1000
      %v1065 = vmul.f32 %v553, %v1001
      %v1066 = vmul.f32 %v554, %v1002
      %v1067 = vmul.f32 %v555, %v1003
      %v1068 = vmul.f32 %v556, %v1004
      %v1069 = vmul.f32 %v557, %v1005
      %v1070 = vmul.f32 %v558, %v1006
      %v1071 = vmul.f32 %v559, %v1007
      %v1072 = vmul.f32 %v560, %v1008
      %v1073 = vmul.f32 %v561, %v1009
      %v1074 = vmul.f32 %v562, %v1010
      %v1075 = vmul.f32 %v563, %v1011
      %v1076 = vmul.f32 %v564, %v1012
      %v1077 = vmul.f32 %v565, %v1013
      %v1078 = vmul.f32 %v566, %v1014
      %v1079 = vmul.f32 %v567, %v1015
      %v1080 = vmul.f32 %v568, %v1016
      %v1081 = vmul.f32 %v569, %v1017
      %v1082 = vmul.f32 %v570, %v1018
      %v1083 = vmul.f32 %v571, %v1019
      %v1084 = vmul.f32 %v572, %v1020
      %v1085 = vmul.f32 %v573, %v1021
      %v1086 = vmul.f32 %v574, %v1022
      %v1087 = vmul.f32 %v575, %v1023
      %v1088 = vmul.f32 %v576, %v1024
      %v1089 = vmul.f32 %v577, %v1025
      %v1090 = vmul.f32 %v578, %v1026
      %v1091 = vmul.f32 %v579, %v1027
      %v1092 = vmul.f32 %v580, %v1028
      %v1093 = vmul.f32 %v581, %v1029
      %v1094 = vmul.f32 %v582, %v1030
      %v1095 = vmul.f32 %v583, %v1031
      %v1096 = vmul.f32 %v584, %v1032
      %v1097 = vmul.f32 %v585, %v1033
      %v1098 = vmul.f32 %v586, %v1034
      %v1099 = vmul.f32 %v587, %v1035
      %v1100 = vmul.f32 %v588, %v1036
      %v1101 = vmul.f32 %v589, %v1037
      %v1103 = vlaneseq
      %v1104 = vshrl.u32 %v1103, 7
      %v1105 = vsub.s32 0, %v1104
      %v1106 = vrot.slane %v266, %v1105
      %v1108 = vmul.f32 %v1038, %v1106
      %v1109 = vmul.f32 %v1039, %v1106
      %v1110 = vmul.f32 %v1040, %v1106
      %v1111 = vmul.f32 %v1041, %v1106
      %v1112 = vmul.f32 %v1042, %v1106
      %v1113 = vmul.f32 %v1043, %v1106
      %v1114 = vmul.f32 %v1044, %v1106
      %v1115 = vmul.f32 %v1045, %v1106
      %v1116 = vmul.f32 %v1046, %v1106
      %v1117 = vmul.f32 %v1047, %v1106
      %v1118 = vmul.f32 %v1048, %v1106
      %v1119 = vmul.f32 %v1049, %v1106
      %v1120 = vmul.f32 %v1050, %v1106
      %v1121 = vmul.f32 %v1051, %v1106
      %v1122 = vmul.f32 %v1052, %v1106
      %v1123 = vmul.f32 %v1053, %v1106
      %v1124 = vmul.f32 %v1054, %v1106
      %v1125 = vmul.f32 %v1055, %v1106
      %v1126 = vmul.f32 %v1056, %v1106
      %v1127 = vmul.f32 %v1057, %v1106
      %v1128 = vmul.f32 %v1058, %v1106
      %v1129 = vmul.f32 %v1059, %v1106
      %v1130 = vmul.f32 %v1060, %v1106
      %v1131 = vmul.f32 %v1061, %v1106
      %v1132 = vmul.f32 %v1062, %v1106
      %v1133 = vmul.f32 %v1063, %v1106
      %v1134 = vmul.f32 %v1064, %v1106
      %v1135 = vmul.f32 %v1065, %v1106
      %v1136 = vmul.f32 %v1066, %v1106
      %v1137 = vmul.f32 %v1067, %v1106
      %v1138 = vmul.f32 %v1068, %v1106
      %v1139 = vmul.f32 %v1069, %v1106
      %v1140 = vmul.f32 %v1070, %v1106
      %v1141 = vmul.f32 %v1071, %v1106
      %v1142 = vmul.f32 %v1072, %v1106
      %v1143 = vmul.f32 %v1073, %v1106
      %v1144 = vmul.f32 %v1074, %v1106
      %v1145 = vmul.f32 %v1075, %v1106
      %v1146 = vmul.f32 %v1076, %v1106
      %v1147 = vmul.f32 %v1077, %v1106
      %v1148 = vmul.f32 %v1078, %v1106
      %v1149 = vmul.f32 %v1079, %v1106
      %v1150 = vmul.f32 %v1080, %v1106
      %v1151 = vmul.f32 %v1081, %v1106
      %v1152 = vmul.f32 %v1082, %v1106
      %v1153 = vmul.f32 %v1083, %v1106
      %v1154 = vmul.f32 %v1084, %v1106
      %v1155 = vmul.f32 %v1085, %v1106
      %v1156 = vmul.f32 %v1086, %v1106
      %v1157 = vmul.f32 %v1087, %v1106
      %v1158 = vmul.f32 %v1088, %v1106
      %v1159 = vmul.f32 %v1089, %v1106
      %v1160 = vmul.f32 %v1090, %v1106
      %v1161 = vmul.f32 %v1091, %v1106
      %v1162 = vmul.f32 %v1092, %v1106
      %v1163 = vmul.f32 %v1093, %v1106
      %v1164 = vmul.f32 %v1094, %v1106
      %v1165 = vmul.f32 %v1095, %v1106
      %v1166 = vmul.f32 %v1096, %v1106
      %v1167 = vmul.f32 %v1097, %v1106
      %v1168 = vmul.f32 %v1098, %v1106
      %v1169 = vmul.f32 %v1099, %v1106
      %v1170 = vmul.f32 %v1100, %v1106
      %v1171 = vmul.f32 %v1101, %v1106
      %v1173 = vlaneseq
      %v1174 = vshrl.u32 %v1173, 7
      %v1175 = vsub.s32 0, %v1174
      %v1176 = vrot.slane %v267, %v1175
      %v1178 = vadd.f32 %v1108, %v1176
      %v1179 = vadd.f32 %v1109, %v1176
      %v1180 = vadd.f32 %v1110, %v1176
      %v1181 = vadd.f32 %v1111, %v1176
      %v1182 = vadd.f32 %v1112, %v1176
      %v1183 = vadd.f32 %v1113, %v1176
      %v1184 = vadd.f32 %v1114, %v1176
      %v1185 = vadd.f32 %v1115, %v1176
      %v1186 = vadd.f32 %v1116, %v1176
      %v1187 = vadd.f32 %v1117, %v1176
      %v1188 = vadd.f32 %v1118, %v1176
      %v1189 = vadd.f32 %v1119, %v1176
      %v1190 = vadd.f32 %v1120, %v1176
      %v1191 = vadd.f32 %v1121, %v1176
      %v1192 = vadd.f32 %v1122, %v1176
      %v1193 = vadd.f32 %v1123, %v1176
      %v1194 = vadd.f32 %v1124, %v1176
      %v1195 = vadd.f32 %v1125, %v1176
      %v1196 = vadd.f32 %v1126, %v1176
      %v1197 = vadd.f32 %v1127, %v1176
      %v1198 = vadd.f32 %v1128, %v1176
      %v1199 = vadd.f32 %v1129, %v1176
      %v1200 = vadd.f32 %v1130, %v1176
      %v1201 = vadd.f32 %v1131, %v1176
      %v1202 = vadd.f32 %v1132, %v1176
      %v1203 = vadd.f32 %v1133, %v1176
      %v1204 = vadd.f32 %v1134, %v1176
      %v1205 = vadd.f32 %v1135, %v1176
      %v1206 = vadd.f32 %v1136, %v1176
      %v1207 = vadd.f32 %v1137, %v1176
      %v1208 = vadd.f32 %v1138, %v1176
      %v1209 = vadd.f32 %v1139, %v1176
      %v1210 = vadd.f32 %v1140, %v1176
      %v1211 = vadd.f32 %v1141, %v1176
      %v1212 = vadd.f32 %v1142, %v1176
      %v1213 = vadd.f32 %v1143, %v1176
      %v1214 = vadd.f32 %v1144, %v1176
      %v1215 = vadd.f32 %v1145, %v1176
      %v1216 = vadd.f32 %v1146, %v1176
      %v1217 = vadd.f32 %v1147, %v1176
      %v1218 = vadd.f32 %v1148, %v1176
      %v1219 = vadd.f32 %v1149, %v1176
      %v1220 = vadd.f32 %v1150, %v1176
      %v1221 = vadd.f32 %v1151, %v1176
      %v1222 = vadd.f32 %v1152, %v1176
      %v1223 = vadd.f32 %v1153, %v1176
      %v1224 = vadd.f32 %v1154, %v1176
      %v1225 = vadd.f32 %v1155, %v1176
      %v1226 = vadd.f32 %v1156, %v1176
      %v1227 = vadd.f32 %v1157, %v1176
      %v1228 = vadd.f32 %v1158, %v1176
      %v1229 = vadd.f32 %v1159, %v1176
      %v1230 = vadd.f32 %v1160, %v1176
      %v1231 = vadd.f32 %v1161, %v1176
      %v1232 = vadd.f32 %v1162, %v1176
      %v1233 = vadd.f32 %v1163, %v1176
      %v1234 = vadd.f32 %v1164, %v1176
      %v1235 = vadd.f32 %v1165, %v1176
      %v1236 = vadd.f32 %v1166, %v1176
      %v1237 = vadd.f32 %v1167, %v1176
      %v1238 = vadd.f32 %v1168, %v1176
      %v1239 = vadd.f32 %v1169, %v1176
      %v1240 = vadd.f32 %v1170, %v1176
      %v1241 = vadd.f32 %v1171, %v1176
      %v1242 = vpack.c.bf16 %v1179, %v1178
      %v1243 = vpack.c.bf16 %v1181, %v1180
      %v1244 = vpack.c.bf16 %v1183, %v1182
      %v1245 = vpack.c.bf16 %v1185, %v1184
      %v1246 = vpack.c.bf16 %v1187, %v1186
      %v1247 = vpack.c.bf16 %v1189, %v1188
      %v1248 = vpack.c.bf16 %v1191, %v1190
      %v1249 = vpack.c.bf16 %v1193, %v1192
      %v1250 = vpack.c.bf16 %v1195, %v1194
      %v1251 = vpack.c.bf16 %v1197, %v1196
      %v1252 = vpack.c.bf16 %v1199, %v1198
      %v1253 = vpack.c.bf16 %v1201, %v1200
      %v1254 = vpack.c.bf16 %v1203, %v1202
      %v1255 = vpack.c.bf16 %v1205, %v1204
      %v1256 = vpack.c.bf16 %v1207, %v1206
      %v1257 = vpack.c.bf16 %v1209, %v1208
      %v1258 = vpack.c.bf16 %v1211, %v1210
      %v1259 = vpack.c.bf16 %v1213, %v1212
      %v1260 = vpack.c.bf16 %v1215, %v1214
      %v1261 = vpack.c.bf16 %v1217, %v1216
      %v1262 = vpack.c.bf16 %v1219, %v1218
      %v1263 = vpack.c.bf16 %v1221, %v1220
      %v1264 = vpack.c.bf16 %v1223, %v1222
      %v1265 = vpack.c.bf16 %v1225, %v1224
      %v1266 = vpack.c.bf16 %v1227, %v1226
      %v1267 = vpack.c.bf16 %v1229, %v1228
      %v1268 = vpack.c.bf16 %v1231, %v1230
      %v1269 = vpack.c.bf16 %v1233, %v1232
      %v1270 = vpack.c.bf16 %v1235, %v1234
      %v1271 = vpack.c.bf16 %v1237, %v1236
      %v1272 = vpack.c.bf16 %v1239, %v1238
      %v1273 = vpack.c.bf16 %v1241, %v1240
      %v1274 = vld [vmem:[%s3] sm:$0xf]
      %v1275 = vld [vmem:[%s3 + $0x4] sm:$0xf]
      %v1276 = vld [vmem:[%s3 + $0x8] sm:$0xf]
      %v1277 = vld [vmem:[%s3 + $0xc] sm:$0xf]
      %v1282 = vunpack.c.l.b16 %v1274
      %v1283 = vunpack.c.l.b16 %v1275
      %v1284 = vunpack.c.l.b16 %v1276
      %v1285 = vunpack.c.l.b16 %v1277
      %v1286 = vpack.c.b16 %v1283, %v1282
      %v1287 = vpack.c.b16 %v1285, %v1284
      %v1291 = vsel %vm268, %v1242, 0
      %v1294 = vsel %vm268, %v1243, 0
      %v1297 = vsel %vm268, %v1244, 0
      %v1300 = vsel %vm268, %v1245, 0
      %v1303 = vsel %vm268, %v1246, 0
      %v1306 = vsel %vm268, %v1247, 0
      %v1309 = vsel %vm268, %v1248, 0
      %v1312 = vsel %vm268, %v1249, 0
      %v1315 = vsel %vm268, %v1250, 0
      %v1318 = vsel %vm268, %v1251, 0
      %v1321 = vsel %vm268, %v1252, 0
      %v1324 = vsel %vm268, %v1253, 0
      %v1327 = vsel %vm268, %v1254, 0
      %v1330 = vsel %vm268, %v1255, 0
      %v1333 = vsel %vm268, %v1256, 0
      %v1336 = vsel %vm268, %v1257, 0
      %v1339 = vsel %vm268, %v1258, 0
      %v1342 = vsel %vm268, %v1259, 0
      %v1345 = vsel %vm268, %v1260, 0
      %v1348 = vsel %vm268, %v1261, 0
      %v1351 = vsel %vm268, %v1262, 0
      %v1354 = vsel %vm268, %v1263, 0
      %v1357 = vsel %vm268, %v1264, 0
      %v1360 = vsel %vm268, %v1265, 0
      %v1363 = vsel %vm268, %v1266, 0
      %v1366 = vsel %vm268, %v1267, 0
      %v1369 = vsel %vm268, %v1268, 0
      %v1372 = vsel %vm268, %v1269, 0
      %v1375 = vsel %vm268, %v1270, 0
      %v1378 = vsel %vm268, %v1271, 0
      %v1381 = vsel %vm268, %v1272, 0
      %v1384 = vsel %vm268, %v1273, 0
      %1386 = vmatprep.subr.bf16.mxu0 0
      %1387 = vmatpush1.bf16.msra.mxu0 %v1286
      %1388 = vmatprep.subr.bf16.mxu0 0
      %1389 = vmatpush1.bf16.msra.mxu0 %v1287
      %1390 = vmatprep.subr.bf16.mxu0 0
      %1391 = vmatpush1.bf16.msra.mxu0 0
      %1392 = vmatprep.subr.bf16.mxu0 0
      %1393 = vmatpush1.bf16.msra.mxu0 0
      %1394 = vmatprep.subr.bf16.mxu0 0
      %1395 = vmatpush1.bf16.msra.mxu0 0
      %1396 = vmatprep.subr.bf16.mxu0 0
      %1397 = vmatpush1.bf16.msra.mxu0 0
      %1398 = vmatprep.subr.bf16.mxu0 0
      %1399 = vmatpush1.bf16.msra.mxu0 0
      %1400 = vmatprep.subr.bf16.mxu0 0
      %1401 = vmatpush1.bf16.msra.mxu0 0
      %1402 = vmatprep.subr.bf16.mxu0 0
      %1403 = vmatpush1.bf16.msra.mxu0 0
      %1404 = vmatprep.subr.bf16.mxu0 0
      %1405 = vmatpush1.bf16.msra.mxu0 0
      %1406 = vmatprep.subr.bf16.mxu0 0
      %1407 = vmatpush1.bf16.msra.mxu0 0
      %1408 = vmatprep.subr.bf16.mxu0 0
      %1409 = vmatpush1.bf16.msra.mxu0 0
      %1410 = vmatprep.subr.bf16.mxu0 0
      %1411 = vmatpush1.bf16.msra.mxu0 0
      %1412 = vmatprep.subr.bf16.mxu0 0
      %1413 = vmatpush1.bf16.msra.mxu0 0
      %1414 = vmatprep.subr.bf16.mxu0 0
      %1415 = vmatpush1.bf16.msra.mxu0 0
      %1416 = vmatprep.subr.bf16.mxu0 0
      %1417 = vmatpush1.bf16.msra.mxu0 0
      %1418 = vmatprep.mubr.bf16.mxu0 0
      %1419 = vmatmul.mubr.bf16.gmra.mrb[0].mxu0 %v1291
      %v1420 = vpop.f32.mrb[0].mxu0
      %v1421 = vadd.f32 0.0, %v1420
      %v1422 = vpop.f32.mrb[0].mxu0
      %v1423 = vpop.f32.mrb[0].mxu0
      %v1424 = vadd.f32 0.0, %v1423
      %v1425 = vpop.f32.mrb[0].mxu0
      %1426 = vmatprep.mubr.bf16.mxu0 0
      %1427 = vmatmul.mubr.bf16.gmra.mrb[0].mxu0 %v1294
      %v1428 = vpop.f32.mrb[0].mxu0
      %v1429 = vadd.f32 0.0, %v1428
      %v1430 = vpop.f32.mrb[0].mxu0
      %v1431 = vpop.f32.mrb[0].mxu0
      %v1432 = vadd.f32 0.0, %v1431
      %v1433 = vpop.f32.mrb[0].mxu0
      %1434 = vmatprep.mubr.bf16.mxu0 0
      %1435 = vmatmul.mubr.bf16.gmra.mrb[0].mxu0 %v1297
      %v1436 = vpop.f32.mrb[0].mxu0
      %v1437 = vadd.f32 0.0, %v1436
      %v1438 = vpop.f32.mrb[0].mxu0
      %v1439 = vpop.f32.mrb[0].mxu0
      %v1440 = vadd.f32 0.0, %v1439
      %v1441 = vpop.f32.mrb[0].mxu0
      %1442 = vmatprep.mubr.bf16.mxu0 0
      %1443 = vmatmul.mubr.bf16.gmra.mrb[0].mxu0 %v1300
      %v1444 = vpop.f32.mrb[0].mxu0
      %v1445 = vadd.f32 0.0, %v1444
      %v1446 = vpop.f32.mrb[0].mxu0
      %v1447 = vpop.f32.mrb[0].mxu0
      %v1448 = vadd.f32 0.0, %v1447
      %v1449 = vpop.f32.mrb[0].mxu0
      %1450 = vmatprep.mubr.bf16.mxu0 0
      %1451 = vmatmul.mubr.bf16.gmra.mrb[0].mxu0 %v1303
      %v1452 = vpop.f32.mrb[0].mxu0
      %v1453 = vadd.f32 0.0, %v1452
      %v1454 = vpop.f32.mrb[0].mxu0
      %v1455 = vpop.f32.mrb[0].mxu0
      %v1456 = vadd.f32 0.0, %v1455
      %v1457 = vpop.f32.mrb[0].mxu0
      %1458 = vmatprep.mubr.bf16.mxu0 0
      %1459 = vmatmul.mubr.bf16.gmra.mrb[0].mxu0 %v1306
      %v1460 = vpop.f32.mrb[0].mxu0
      %v1461 = vadd.f32 0.0, %v1460
      %v1462 = vpop.f32.mrb[0].mxu0
      %v1463 = vpop.f32.mrb[0].mxu0
      %v1464 = vadd.f32 0.0, %v1463
      %v1465 = vpop.f32.mrb[0].mxu0
      %1466 = vmatprep.mubr.bf16.mxu0 0
      %1467 = vmatmul.mubr.bf16.gmra.mrb[0].mxu0 %v1309
      %v1468 = vpop.f32.mrb[0].mxu0
      %v1469 = vadd.f32 0.0, %v1468
      %v1470 = vpop.f32.mrb[0].mxu0
      %v1471 = vpop.f32.mrb[0].mxu0
      %v1472 = vadd.f32 0.0, %v1471
      %v1473 = vpop.f32.mrb[0].mxu0
      %1474 = vmatprep.mubr.bf16.mxu0 0
      %1475 = vmatmul.mubr.bf16.gmra.mrb[0].mxu0 %v1312
      %v1476 = vpop.f32.mrb[0].mxu0
      %v1477 = vadd.f32 0.0, %v1476
      %v1478 = vpop.f32.mrb[0].mxu0
      %v1479 = vpop.f32.mrb[0].mxu0
      %v1480 = vadd.f32 0.0, %v1479
      %v1481 = vpop.f32.mrb[0].mxu0
      %1482 = vmatprep.mubr.bf16.mxu0 0
      %1483 = vmatmul.mubr.bf16.gmra.mrb[0].mxu0 %v1315
      %v1484 = vpop.f32.mrb[0].mxu0
      %v1485 = vadd.f32 0.0, %v1484
      %v1486 = vpop.f32.mrb[0].mxu0
      %v1487 = vpop.f32.mrb[0].mxu0
      %v1488 = vadd.f32 0.0, %v1487
      %v1489 = vpop.f32.mrb[0].mxu0
      %1490 = vmatprep.mubr.bf16.mxu0 0
      %1491 = vmatmul.mubr.bf16.gmra.mrb[0].mxu0 %v1318
      %v1492 = vpop.f32.mrb[0].mxu0
      %v1493 = vadd.f32 0.0, %v1492
      %v1494 = vpop.f32.mrb[0].mxu0
      %v1495 = vpop.f32.mrb[0].mxu0
      %v1496 = vadd.f32 0.0, %v1495
      %v1497 = vpop.f32.mrb[0].mxu0
      %1498 = vmatprep.mubr.bf16.mxu0 0
      %1499 = vmatmul.mubr.bf16.gmra.mrb[0].mxu0 %v1321
      %v1500 = vpop.f32.mrb[0].mxu0
      %v1501 = vadd.f32 0.0, %v1500
      %v1502 = vpop.f32.mrb[0].mxu0
      %v1503 = vpop.f32.mrb[0].mxu0
      %v1504 = vadd.f32 0.0, %v1503
      %v1505 = vpop.f32.mrb[0].mxu0
      %1506 = vmatprep.mubr.bf16.mxu0 0
      %1507 = vmatmul.mubr.bf16.gmra.mrb[0].mxu0 %v1324
      %v1508 = vpop.f32.mrb[0].mxu0
      %v1509 = vadd.f32 0.0, %v1508
      %v1510 = vpop.f32.mrb[0].mxu0
      %v1511 = vpop.f32.mrb[0].mxu0
      %v1512 = vadd.f32 0.0, %v1511
      %v1513 = vpop.f32.mrb[0].mxu0
      %1514 = vmatprep.mubr.bf16.mxu0 0
      %1515 = vmatmul.mubr.bf16.gmra.mrb[0].mxu0 %v1327
      %v1516 = vpop.f32.mrb[0].mxu0
      %v1517 = vadd.f32 0.0, %v1516
      %v1518 = vpop.f32.mrb[0].mxu0
      %v1519 = vpop.f32.mrb[0].mxu0
      %v1520 = vadd.f32 0.0, %v1519
      %v1521 = vpop.f32.mrb[0].mxu0
      %1522 = vmatprep.mubr.bf16.mxu0 0
      %1523 = vmatmul.mubr.bf16.gmra.mrb[0].mxu0 %v1330
      %v1524 = vpop.f32.mrb[0].mxu0
      %v1525 = vadd.f32 0.0, %v1524
      %v1526 = vpop.f32.mrb[0].mxu0
      %v1527 = vpop.f32.mrb[0].mxu0
      %v1528 = vadd.f32 0.0, %v1527
      %v1529 = vpop.f32.mrb[0].mxu0
      %1530 = vmatprep.mubr.bf16.mxu0 0
      %1531 = vmatmul.mubr.bf16.gmra.mrb[0].mxu0 %v1333
      %v1532 = vpop.f32.mrb[0].mxu0
      %v1533 = vadd.f32 0.0, %v1532
      %v1534 = vpop.f32.mrb[0].mxu0
      %v1535 = vpop.f32.mrb[0].mxu0
      %v1536 = vadd.f32 0.0, %v1535
      %v1537 = vpop.f32.mrb[0].mxu0
      %1538 = vmatprep.mubr.bf16.mxu0 0
      %1539 = vmatmul.mubr.bf16.gmra.mrb[0].mxu0 %v1336
      %v1540 = vpop.f32.mrb[0].mxu0
      %v1541 = vadd.f32 0.0, %v1540
      %v1542 = vpop.f32.mrb[0].mxu0
      %v1543 = vpop.f32.mrb[0].mxu0
      %v1544 = vadd.f32 0.0, %v1543
      %v1545 = vpop.f32.mrb[0].mxu0
      %1546 = vmatprep.mubr.bf16.mxu0 0
      %1547 = vmatmul.mubr.bf16.gmra.mrb[0].mxu0 %v1339
      %v1548 = vpop.f32.mrb[0].mxu0
      %v1549 = vadd.f32 0.0, %v1548
      %v1550 = vpop.f32.mrb[0].mxu0
      %v1551 = vpop.f32.mrb[0].mxu0
      %v1552 = vadd.f32 0.0, %v1551
      %v1553 = vpop.f32.mrb[0].mxu0
      %1554 = vmatprep.mubr.bf16.mxu0 0
      %1555 = vmatmul.mubr.bf16.gmra.mrb[0].mxu0 %v1342
      %v1556 = vpop.f32.mrb[0].mxu0
      %v1557 = vadd.f32 0.0, %v1556
      %v1558 = vpop.f32.mrb[0].mxu0
      %v1559 = vpop.f32.mrb[0].mxu0
      %v1560 = vadd.f32 0.0, %v1559
      %v1561 = vpop.f32.mrb[0].mxu0
      %1562 = vmatprep.mubr.bf16.mxu0 0
      %1563 = vmatmul.mubr.bf16.gmra.mrb[0].mxu0 %v1345
      %v1564 = vpop.f32.mrb[0].mxu0
      %v1565 = vadd.f32 0.0, %v1564
      %v1566 = vpop.f32.mrb[0].mxu0
      %v1567 = vpop.f32.mrb[0].mxu0
      %v1568 = vadd.f32 0.0, %v1567
      %v1569 = vpop.f32.mrb[0].mxu0
      %1570 = vmatprep.mubr.bf16.mxu0 0
      %1571 = vmatmul.mubr.bf16.gmra.mrb[0].mxu0 %v1348
      %v1572 = vpop.f32.mrb[0].mxu0
      %v1573 = vadd.f32 0.0, %v1572
      %v1574 = vpop.f32.mrb[0].mxu0
      %v1575 = vpop.f32.mrb[0].mxu0
      %v1576 = vadd.f32 0.0, %v1575
      %v1577 = vpop.f32.mrb[0].mxu0
      %1578 = vmatprep.mubr.bf16.mxu0 0
      %1579 = vmatmul.mubr.bf16.gmra.mrb[0].mxu0 %v1351
      %v1580 = vpop.f32.mrb[0].mxu0
      %v1581 = vadd.f32 0.0, %v1580
      %v1582 = vpop.f32.mrb[0].mxu0
      %v1583 = vpop.f32.mrb[0].mxu0
      %v1584 = vadd.f32 0.0, %v1583
      %v1585 = vpop.f32.mrb[0].mxu0
      %1586 = vmatprep.mubr.bf16.mxu0 0
      %1587 = vmatmul.mubr.bf16.gmra.mrb[0].mxu0 %v1354
      %v1588 = vpop.f32.mrb[0].mxu0
      %v1589 = vadd.f32 0.0, %v1588
      %v1590 = vpop.f32.mrb[0].mxu0
      %v1591 = vpop.f32.mrb[0].mxu0
      %v1592 = vadd.f32 0.0, %v1591
      %v1593 = vpop.f32.mrb[0].mxu0
      %1594 = vmatprep.mubr.bf16.mxu0 0
      %1595 = vmatmul.mubr.bf16.gmra.mrb[0].mxu0 %v1357
      %v1596 = vpop.f32.mrb[0].mxu0
      %v1597 = vadd.f32 0.0, %v1596
      %v1598 = vpop.f32.mrb[0].mxu0
      %v1599 = vpop.f32.mrb[0].mxu0
      %v1600 = vadd.f32 0.0, %v1599
      %v1601 = vpop.f32.mrb[0].mxu0
      %1602 = vmatprep.mubr.bf16.mxu0 0
      %1603 = vmatmul.mubr.bf16.gmra.mrb[0].mxu0 %v1360
      %v1604 = vpop.f32.mrb[0].mxu0
      %v1605 = vadd.f32 0.0, %v1604
      %v1606 = vpop.f32.mrb[0].mxu0
      %v1607 = vpop.f32.mrb[0].mxu0
      %v1608 = vadd.f32 0.0, %v1607
      %v1609 = vpop.f32.mrb[0].mxu0
      %1610 = vmatprep.mubr.bf16.mxu0 0
      %1611 = vmatmul.mubr.bf16.gmra.mrb[0].mxu0 %v1363
      %v1612 = vpop.f32.mrb[0].mxu0
      %v1613 = vadd.f32 0.0, %v1612
      %v1614 = vpop.f32.mrb[0].mxu0
      %v1615 = vpop.f32.mrb[0].mxu0
      %v1616 = vadd.f32 0.0, %v1615
      %v1617 = vpop.f32.mrb[0].mxu0
      %1618 = vmatprep.mubr.bf16.mxu0 0
      %1619 = vmatmul.mubr.bf16.gmra.mrb[0].mxu0 %v1366
      %v1620 = vpop.f32.mrb[0].mxu0
      %v1621 = vadd.f32 0.0, %v1620
      %v1622 = vpop.f32.mrb[0].mxu0
      %v1623 = vpop.f32.mrb[0].mxu0
      %v1624 = vadd.f32 0.0, %v1623
      %v1625 = vpop.f32.mrb[0].mxu0
      %1626 = vmatprep.mubr.bf16.mxu0 0
      %1627 = vmatmul.mubr.bf16.gmra.mrb[0].mxu0 %v1369
      %v1628 = vpop.f32.mrb[0].mxu0
      %v1629 = vadd.f32 0.0, %v1628
      %v1630 = vpop.f32.mrb[0].mxu0
      %v1631 = vpop.f32.mrb[0].mxu0
      %v1632 = vadd.f32 0.0, %v1631
      %v1633 = vpop.f32.mrb[0].mxu0
      %1634 = vmatprep.mubr.bf16.mxu0 0
      %1635 = vmatmul.mubr.bf16.gmra.mrb[0].mxu0 %v1372
      %v1636 = vpop.f32.mrb[0].mxu0
      %v1637 = vadd.f32 0.0, %v1636
      %v1638 = vpop.f32.mrb[0].mxu0
      %v1639 = vpop.f32.mrb[0].mxu0
      %v1640 = vadd.f32 0.0, %v1639
      %v1641 = vpop.f32.mrb[0].mxu0
      %1642 = vmatprep.mubr.bf16.mxu0 0
      %1643 = vmatmul.mubr.bf16.gmra.mrb[0].mxu0 %v1375
      %v1644 = vpop.f32.mrb[0].mxu0
      %v1645 = vadd.f32 0.0, %v1644
      %v1646 = vpop.f32.mrb[0].mxu0
      %v1647 = vpop.f32.mrb[0].mxu0
      %v1648 = vadd.f32 0.0, %v1647
      %v1649 = vpop.f32.mrb[0].mxu0
      %1650 = vmatprep.mubr.bf16.mxu0 0
      %1651 = vmatmul.mubr.bf16.gmra.mrb[0].mxu0 %v1378
      %v1652 = vpop.f32.mrb[0].mxu0
      %v1653 = vadd.f32 0.0, %v1652
      %v1654 = vpop.f32.mrb[0].mxu0
      %v1655 = vpop.f32.mrb[0].mxu0
      %v1656 = vadd.f32 0.0, %v1655
      %v1657 = vpop.f32.mrb[0].mxu0
      %1658 = vmatprep.mubr.bf16.mxu0 0
      %1659 = vmatmul.mubr.bf16.gmra.mrb[0].mxu0 %v1381
      %v1660 = vpop.f32.mrb[0].mxu0
      %v1661 = vadd.f32 0.0, %v1660
      %v1662 = vpop.f32.mrb[0].mxu0
      %v1663 = vpop.f32.mrb[0].mxu0
      %v1664 = vadd.f32 0.0, %v1663
      %v1665 = vpop.f32.mrb[0].mxu0
      %1666 = vmatprep.mubr.bf16.mxu0 0
      %1667 = vmatmul.mubr.bf16.gmra.mrb[0].mxu0 %v1384
      %v1668 = vpop.f32.mrb[0].mxu0
      %v1669 = vadd.f32 0.0, %v1668
      %v1670 = vpop.f32.mrb[0].mxu0
      %v1671 = vpop.f32.mrb[0].mxu0
      %v1672 = vadd.f32 0.0, %v1671
      %v1673 = vpop.f32.mrb[0].mxu0
      %1674 = vdwg.mxu0
      %vm1675 = vcmask 23552
      %1676 = vst.msk [vmem:[%s199] sm:$0xff] %vm1675, %v1421
      %1677 = vst.msk [vmem:[%s199 + $0x8] sm:$0xff] %vm1675, %v1424
      %1678 = vst.msk [vmem:[%s199 + $0x10] sm:$0xff] %vm1675, %v1429
      %1679 = vst.msk [vmem:[%s199 + $0x18] sm:$0xff] %vm1675, %v1432
      %1680 = vst.msk [vmem:[%s199 + $0x20] sm:$0xff] %vm1675, %v1437
      %1681 = vst.msk [vmem:[%s199 + $0x28] sm:$0xff] %vm1675, %v1440
      %1682 = vst.msk [vmem:[%s199 + $0x30] sm:$0xff] %vm1675, %v1445
      %1683 = vst.msk [vmem:[%s199 + $0x38] sm:$0xff] %vm1675, %v1448
      %1684 = vst.msk [vmem:[%s199 + $0x40] sm:$0xff] %vm1675, %v1453
      %1685 = vst.msk [vmem:[%s199 + $0x48] sm:$0xff] %vm1675, %v1456
      %1686 = vst.msk [vmem:[%s199 + $0x50] sm:$0xff] %vm1675, %v1461
      %1687 = vst.msk [vmem:[%s199 + $0x58] sm:$0xff] %vm1675, %v1464
      %1688 = vst.msk [vmem:[%s199 + $0x60] sm:$0xff] %vm1675, %v1469
      %1689 = vst.msk [vmem:[%s199 + $0x68] sm:$0xff] %vm1675, %v1472
      %1690 = vst.msk [vmem:[%s199 + $0x70] sm:$0xff] %vm1675, %v1477
      %1691 = vst.msk [vmem:[%s199 + $0x78] sm:$0xff] %vm1675, %v1480
      %1692 = vst.msk [vmem:[%s199 + $0x80] sm:$0xff] %vm1675, %v1485
      %1693 = vst.msk [vmem:[%s199 + $0x88] sm:$0xff] %vm1675, %v1488
      %1694 = vst.msk [vmem:[%s199 + $0x90] sm:$0xff] %vm1675, %v1493
      %1695 = vst.msk [vmem:[%s199 + $0x98] sm:$0xff] %vm1675, %v1496
      %1696 = vst.msk [vmem:[%s199 + $0xa0] sm:$0xff] %vm1675, %v1501
      %1697 = vst.msk [vmem:[%s199 + $0xa8] sm:$0xff] %vm1675, %v1504
      %1698 = vst.msk [vmem:[%s199 + $0xb0] sm:$0xff] %vm1675, %v1509
      %1699 = vst.msk [vmem:[%s199 + $0xb8] sm:$0xff] %vm1675, %v1512
      %1700 = vst.msk [vmem:[%s199 + $0xc0] sm:$0xff] %vm1675, %v1517
      %1701 = vst.msk [vmem:[%s199 + $0xc8] sm:$0xff] %vm1675, %v1520
      %1702 = vst.msk [vmem:[%s199 + $0xd0] sm:$0xff] %vm1675, %v1525
      %1703 = vst.msk [vmem:[%s199 + $0xd8] sm:$0xff] %vm1675, %v1528
      %1704 = vst.msk [vmem:[%s199 + $0xe0] sm:$0xff] %vm1675, %v1533
      %1705 = vst.msk [vmem:[%s199 + $0xe8] sm:$0xff] %vm1675, %v1536
      %1706 = vst.msk [vmem:[%s199 + $0xf0] sm:$0xff] %vm1675, %v1541
      %1707 = vst.msk [vmem:[%s199 + $0xf8] sm:$0xff] %vm1675, %v1544
      %1708 = vst.msk [vmem:[%s199 + $0x100] sm:$0xff] %vm1675, %v1549
      %1709 = vst.msk [vmem:[%s199 + $0x108] sm:$0xff] %vm1675, %v1552
      %1710 = vst.msk [vmem:[%s199 + $0x110] sm:$0xff] %vm1675, %v1557
      %1711 = vst.msk [vmem:[%s199 + $0x118] sm:$0xff] %vm1675, %v1560
      %1712 = vst.msk [vmem:[%s199 + $0x120] sm:$0xff] %vm1675, %v1565
      %1713 = vst.msk [vmem:[%s199 + $0x128] sm:$0xff] %vm1675, %v1568
      %1714 = vst.msk [vmem:[%s199 + $0x130] sm:$0xff] %vm1675, %v1573
      %1715 = vst.msk [vmem:[%s199 + $0x138] sm:$0xff] %vm1675, %v1576
      %1716 = vst.msk [vmem:[%s199 + $0x140] sm:$0xff] %vm1675, %v1581
      %1717 = vst.msk [vmem:[%s199 + $0x148] sm:$0xff] %vm1675, %v1584
      %1718 = vst.msk [vmem:[%s199 + $0x150] sm:$0xff] %vm1675, %v1589
      %1719 = vst.msk [vmem:[%s199 + $0x158] sm:$0xff] %vm1675, %v1592
      %1720 = vst.msk [vmem:[%s199 + $0x160] sm:$0xff] %vm1675, %v1597
      %1721 = vst.msk [vmem:[%s199 + $0x168] sm:$0xff] %vm1675, %v1600
      %1722 = vst.msk [vmem:[%s199 + $0x170] sm:$0xff] %vm1675, %v1605
      %1723 = vst.msk [vmem:[%s199 + $0x178] sm:$0xff] %vm1675, %v1608
      %1724 = vst.msk [vmem:[%s199 + $0x180] sm:$0xff] %vm1675, %v1613
      %1725 = vst.msk [vmem:[%s199 + $0x188] sm:$0xff] %vm1675, %v1616
      %1726 = vst.msk [vmem:[%s199 + $0x190] sm:$0xff] %vm1675, %v1621
      %1727 = vst.msk [vmem:[%s199 + $0x198] sm:$0xff] %vm1675, %v1624
      %1728 = vst.msk [vmem:[%s199 + $0x1a0] sm:$0xff] %vm1675, %v1629
      %1729 = vst.msk [vmem:[%s199 + $0x1a8] sm:$0xff] %vm1675, %v1632
      %1730 = vst.msk [vmem:[%s199 + $0x1b0] sm:$0xff] %vm1675, %v1637
      %1731 = vst.msk [vmem:[%s199 + $0x1b8] sm:$0xff] %vm1675, %v1640
      %1732 = vst.msk [vmem:[%s199 + $0x1c0] sm:$0xff] %vm1675, %v1645
      %1733 = vst.msk [vmem:[%s199 + $0x1c8] sm:$0xff] %vm1675, %v1648
      %1734 = vst.msk [vmem:[%s199 + $0x1d0] sm:$0xff] %vm1675, %v1653
      %1735 = vst.msk [vmem:[%s199 + $0x1d8] sm:$0xff] %vm1675, %v1656
      %1736 = vst.msk [vmem:[%s199 + $0x1e0] sm:$0xff] %vm1675, %v1661
      %1737 = vst.msk [vmem:[%s199 + $0x1e8] sm:$0xff] %vm1675, %v1664
      %1738 = vst.msk [vmem:[%s199 + $0x1f0] sm:$0xff] %vm1675, %v1669
      %1739 = vst.msk [vmem:[%s199 + $0x1f8] sm:$0xff] %vm1675, %v1672
      %s1740 = smul.u32 64, %s15
      %p1741 = scmp.lt.s32.totalorder %s1740, 255
      %s1742 = scalar_select %p1741, %s1740, 255
      %s1743 = smul.addr %s1742, 8
      %s1744 = scalar_lea.vmem %s4, %s1743
      // Predicated region
      $region37: #{swin_unet_forward.25} parent=35 // pred_check
        %p1745 = pneg %p122
      $region38: #{swin_unet_forward.25} parent=35 // pred_check_branch
        %1747 = sbr.rel (%p1745) target = $region40
      $region39: #{swin_unet_forward.25} parent=35 // pred_region
        %s1748 = smul.u32 64, %s15
      $region40: #{swin_unet_forward.25} parent=35 // pred_fallthru
        _
    $region36: #{swin_unet_forward.25} parent=5 // pred_fallthru
      _
    %p1749 = scmp.le.s32.totalorder 2, %s10
    // Predicated region
    $region41: #{swin_unet_forward.25} parent=5 // pred_check
      %p1750 = pneg %p1749
    $region42: #{swin_unet_forward.25} parent=5 // pred_check_branch
      %1752 = sbr.rel (%p1750) target = $region44
    $region43: #{swin_unet_forward.25} parent=5 // pred_region
      %s1753 = ssub.s32 %s10, 2
      // Predicated region
      $region45: #{swin_unet_forward.25} parent=43 // pred_check
        %p1754 = pneg %p128
      $region46: #{swin_unet_forward.25} parent=43 // pred_check_branch
        %1756 = sbr.rel (%p1754) target = $region48
      $region47: #{swin_unet_forward.25} parent=43 // pred_region
        %s1757 = smul.u32 64, %s16
        %p1758 = scmp.lt.s32.totalorder %s1757, 255
        %s1759 = scalar_select %p1758, %s1757, 255
        %s1760 = smul.addr %s1759, 8
        %s1761 = scalar_lea.vmem %s4, %s1760
      $region48: #{swin_unet_forward.25} parent=43 // pred_fallthru
        _
    $region44: #{swin_unet_forward.25} parent=5 // pred_fallthru
      _
  $region6: #{swin_unet_forward.25} parent=0 // loop_footer
    %s14 = sadd.s32 1, %s10
  $region7: #{swin_unet_forward.25} parent=0 // loop_footer_branch
    %9 = sbr.rel target = $region3
  $region8: #{swin_unet_forward.25} parent=0 // loop_exit
    _

</llo_original>
